<compile_context>
chip_gen: v6e
topology: v6e:2x2x1
jax: 0.10.0
libtpu: 0.0.40
codegen_flags: <defaults>
</compile_context>

<pallas_src>
import functools
import math

import jax
import jax.numpy as jnp
from jax.experimental import pallas as pl
from jax.experimental.pallas import tpu as pltpu

EPS = 1e-5  # nn.InstanceNorm2d default


# ----------------------------------------------------------------------------
# Fused Pallas kernel: pad+conv1+IN+ReLU  ->  pad+conv2+IN  ->  +x
# ----------------------------------------------------------------------------
def _make_fused_kernel(H: int, W: int, k: int, C: int):
    p = k >> 1
    Hp, Wp = H + 2 * p, W + 2 * p
    HW = H * W
    inv_hw = 1.0 / float(HW)

    def reflect_pad_into(pad32_ref, padbf_ref, interior):
        """Write (H,W,C) f32 `interior` reflect-padded into the scratches."""
        pad32_ref[p:p + H, p:p + W, :] = interior
        for r in range(p):            # mirror rows (H axis) first ...
            pad32_ref[p - 1 - r:p - r, :, :] = pad32_ref[p + 1 + r:p + 2 + r, :, :]
            pad32_ref[p + H + r:p + H + r + 1, :, :] = (
                pad32_ref[p + H - 2 - r:p + H - 1 - r, :, :])
        for r in range(p):            # ... then columns (fixes corners too)
            pad32_ref[:, p - 1 - r:p - r, :] = pad32_ref[:, p + 1 + r:p + 2 + r, :]
            pad32_ref[:, p + W + r:p + W + r + 1, :] = (
                pad32_ref[:, p + W - 2 - r:p + W - 1 - r, :])
        # One full-tile cast: every tap below loads bf16 (half the VMEM load
        # bytes, zero per-tap casts) while stats / residual stay f32.
        padbf_ref[...] = pad32_ref[...].astype(jnp.bfloat16)

    def conv_taps(padbf_ref, w_ref):
        """sum_{kh,kw} pad[kh:kh+H, kw:kw+W, :] @ w[kh*k+kw] -> (H*W, C) f32."""
        acc = jnp.zeros((HW, C), jnp.float32)
        for kh in range(k):
            for kw in range(k):
                lhs = padbf_ref[kh:kh + H, kw:kw + W, :].reshape(HW, C)  # bf16
                acc = acc + jnp.dot(lhs, w_ref[kh * k + kw],
                                    preferred_element_type=jnp.float32)
        return acc

    def instance_norm(acc, gamma, beta):
        """Per-channel stats over the spatial axis (axis 0); gamma folded."""
        mean = jnp.sum(acc, axis=0, keepdims=True) * inv_hw          # (1, C)
        ex2 = jnp.sum(acc * acc, axis=0, keepdims=True) * inv_hw     # (1, C)
        var = jnp.maximum(ex2 - mean * mean, 0.0)
        scale = gamma * jax.lax.rsqrt(var + EPS)                     # (1, C)
        shift = beta - mean * scale
        return acc * scale + shift                                   # mul + add

    def kernel(x_ref, w1_ref, w2_ref, prm_ref, o_ref, pad32_ref, padbf_ref):
        # ---- ConvLayer #1: reflect-pad -> conv -> InstanceNorm -> ReLU -----
        reflect_pad_into(pad32_ref, padbf_ref, x_ref[...])
        y1 = instance_norm(conv_taps(padbf_ref, w1_ref),
                           prm_ref[0:1, :], prm_ref[1:2, :])
        y1 = jnp.maximum(y1, 0.0)

        # ---- ConvLayer #2 (same scratch reused; never leaves the chip) -----
        reflect_pad_into(pad32_ref, padbf_ref, y1.reshape(H, W, C))
        y2 = instance_norm(conv_taps(padbf_ref, w2_ref),
                           prm_ref[2:3, :], prm_ref[3:4, :])

        # ---- residual (f32 path) -------------------------------------------
        o_ref[...] = (y2.reshape(H, W, C) + x_ref[...]).astype(o_ref.dtype)

    return kernel, Hp, Wp


def _fused_res_layer(x_nhwc, w1t, w2t, prm, *, k):
    N, H, W, C = x_nhwc.shape
    kk = k * k
    kernel, Hp, Wp = _make_fused_kernel(H, W, k, C)
    return pl.pallas_call(
        kernel,
        out_shape=jax.ShapeDtypeStruct((N, H, W, C), jnp.float32),
        grid_spec=pltpu.PrefetchScalarGridSpec(
            num_scalar_prefetch=0,
            grid=(N,),
            in_specs=[
                pl.BlockSpec((pl.Squeezed(), H, W, C), lambda n: (n, 0, 0, 0)),
                pl.BlockSpec((kk, C, C), lambda n: (0, 0, 0)),   # weights resident
                pl.BlockSpec((kk, C, C), lambda n: (0, 0, 0)),
                pl.BlockSpec((4, C), lambda n: (0, 0)),          # packed gamma/beta
            ],
            out_specs=pl.BlockSpec((pl.Squeezed(), H, W, C),
                                   lambda n: (n, 0, 0, 0)),
            scratch_shapes=[pltpu.VMEM((Hp, Wp, C), jnp.float32),    # padded f32
                            pltpu.VMEM((Hp, Wp, C), jnp.bfloat16)],  # bf16 staging
        ),
        compiler_params=pltpu.CompilerParams(
            dimension_semantics=("parallel",)),
    )(x_nhwc, w1t, w2t, prm)


# ----------------------------------------------------------------------------
# ResLayer forward (wrapper: layout plumbing only)
# ----------------------------------------------------------------------------
@functools.partial(jax.jit, static_argnames=("ksize",))
def res_layer_forward(x, params, *, ksize):
    N, C, H, W = x.shape

    # Channels-last: C on the 128-lane axis, W on sublanes, H on the outer dim.
    x_nhwc = jnp.transpose(x, (0, 2, 3, 1))

    # (O, I, kh, kw) -> (k*k, I, O) per-tap matrices; bf16 for single-pass MXU.
    def prep_w(w):
        return (jnp.transpose(w, (2, 3, 1, 0))
                .reshape(ksize * ksize, C, C).astype(jnp.bfloat16))

    w1t, w2t = prep_w(params["w1"]), prep_w(params["w2"])

    # Conv biases intentionally not passed: the InstanceNorm mean subtraction
    # cancels a per-channel constant exactly (dead compute removed).
    prm = jnp.stack([params["g1"], params["beta1"],
                     params["g2"], params["beta2"]], axis=0).astype(jnp.float32)

    out_nhwc = _fused_res_layer(x_nhwc, w1t, w2t, prm, k=ksize)
    return jnp.transpose(out_nhwc, (0, 3, 1, 2))


# ----------------------------------------------------------------------------
# Pure-JAX reference (f32, HIGHEST precision, with conv bias) for the check
# ----------------------------------------------------------------------------
def _ref_forward(x, params, ksize):
    p = ksize >> 1

    def conv_in(inp, w, b, g, beta, relu):
        xp = jnp.pad(inp, ((0, 0), (0, 0), (p, p), (p, p)), mode="reflect")
        y = jax.lax.conv_general_dilated(
            xp, w, (1, 1), "VALID",
            dimension_numbers=("NCHW", "OIHW", "NCHW"),
            precision=jax.lax.Precision.HIGHEST)
        y = y + b[None, :, None, None]
        mean = y.mean(axis=(2, 3), keepdims=True)
        var = ((y - mean) ** 2).mean(axis=(2, 3), keepdims=True)
        y = (y - mean) * jax.lax.rsqrt(var + EPS)
        y = g[None, :, None, None] * y + beta[None, :, None, None]
        return jnp.maximum(y, 0.0) if relu else y

    h = conv_in(x, params["w1"], params["b1"], params["g1"], params["beta1"], True)
    y = conv_in(h, params["w2"], params["b2"], params["g2"], params["beta2"], False)
    return y + x


# ----------------------------------------------------------------------------
# Main
# ----------------------------------------------------------------------------
if __name__ == "__main__":
    N, C, H, W = 2, 4, 16, 16
    K = 3  # kernel_size

    key = jax.random.PRNGKey(0)
    ks = jax.random.split(key, 9)
    fan_in = C * K * K
    scale = 1.0 / math.sqrt(fan_in)

    params = {
        "w1": jax.random.normal(ks[0], (C, C, K, K), jnp.float32) * scale,
        "b1": jax.random.normal(ks[1], (C,), jnp.float32) * 0.1,
        "g1": 1.0 + 0.1 * jax.random.normal(ks[2], (C,), jnp.float32),
        "beta1": 0.1 * jax.random.normal(ks[3], (C,), jnp.float32),
        "w2": jax.random.normal(ks[4], (C, C, K, K), jnp.float32) * scale,
        "b2": jax.random.normal(ks[5], (C,), jnp.float32) * 0.1,
        "g2": 1.0 + 0.1 * jax.random.normal(ks[6], (C,), jnp.float32),
        "beta2": 0.1 * jax.random.normal(ks[7], (C,), jnp.float32),
    }
    x = jax.random.normal(ks[8], (N, C, H, W), jnp.float32)

    out = jax.block_until_ready(res_layer_forward(x, params, ksize=K))
    ref = jax.block_until_ready(_ref_forward(x, params, K))

    assert out.shape == (N, C, H, W)
    max_err = float(jnp.max(jnp.abs(out - ref)))
    # bf16 single-pass matmuls => relaxed (but still tight) tolerance vs f32 ref.
    assert bool(jnp.allclose(out, ref, atol=5e-2, rtol=5e-2)), \
        f"mismatch vs reference: {max_err}"

    print("KERNEL_OK")
</pallas_src>

<mosaic_0001>
module attributes {stable_mosaic.version = 11 : i64} {
  func.func @kernel(%arg0: i32, %arg1: memref<1x16x16x4xf32, #tpu.memory_space<vmem>>, %arg2: memref<9x4x4xbf16, #tpu.memory_space<vmem>>, %arg3: memref<9x4x4xbf16, #tpu.memory_space<vmem>>, %arg4: memref<4x4xf32, #tpu.memory_space<vmem>>, %arg5: memref<1x16x16x4xf32, #tpu.memory_space<vmem>>, %arg6: memref<18x18x4xf32, #tpu.memory_space<vmem>>, %arg7: memref<18x18x4xbf16, #tpu.memory_space<vmem>>) attributes {dimension_semantics = [#tpu.dimension_semantics<parallel>], iteration_bounds = array<i64: 2>, scalar_prefetch = 0 : i64, scratch_operands = 2 : i64, tpu.core_type = #tpu.core_type<tc>, window_params = [{transform_indices = @transform_0, window_bounds = array<i64: 1, 16, 16, 4>}, {pipeline_mode = #tpu.pipeline_mode<synchronous>, transform_indices = @transform_1, window_bounds = array<i64: 9, 4, 4>}, {pipeline_mode = #tpu.pipeline_mode<synchronous>, transform_indices = @transform_2, window_bounds = array<i64: 9, 4, 4>}, {pipeline_mode = #tpu.pipeline_mode<synchronous>, transform_indices = @transform_3, window_bounds = array<i64: 4, 4>}, {transform_indices = @transform_4, window_bounds = array<i64: 1, 16, 16, 4>}]} {
    %c0 = arith.constant 0 : index
    %c0_0 = arith.constant 0 : index
    %c0_1 = arith.constant 0 : index
    %c0_2 = arith.constant 0 : index
    %0 = vector.load %arg1[%c0, %c0_0, %c0_1, %c0_2] : memref<1x16x16x4xf32, #tpu.memory_space<vmem>>, vector<1x16x16x4xf32>
    %1 = vector.shape_cast %0 : vector<1x16x16x4xf32> to vector<16x16x4xf32>
    %c1 = arith.constant 1 : index
    %c1_3 = arith.constant 1 : index
    %c0_4 = arith.constant 0 : index
    %2 = vector.load %arg6[%c1, %c1_3, %c0_4] : memref<18x18x4xf32, #tpu.memory_space<vmem>>, vector<16x16x4xf32>
    tpu.vector_store %arg6[%c1, %c1_3, %c0_4], %1 {strides = array<i32>} : memref<18x18x4xf32, #tpu.memory_space<vmem>>, vector<16x16x4xf32>,
    %c2 = arith.constant 2 : index
    %c0_5 = arith.constant 0 : index
    %c0_6 = arith.constant 0 : index
    %3 = vector.load %arg6[%c2, %c0_5, %c0_6] : memref<18x18x4xf32, #tpu.memory_space<vmem>>, vector<1x18x4xf32>
    %c0_7 = arith.constant 0 : index
    %c0_8 = arith.constant 0 : index
    %c0_9 = arith.constant 0 : index
    %4 = vector.load %arg6[%c0_7, %c0_8, %c0_9] : memref<18x18x4xf32, #tpu.memory_space<vmem>>, vector<1x18x4xf32>
    tpu.vector_store %arg6[%c0_7, %c0_8, %c0_9], %3 {strides = array<i32>} : memref<18x18x4xf32, #tpu.memory_space<vmem>>, vector<1x18x4xf32>,
    %c15 = arith.constant 15 : index
    %c0_10 = arith.constant 0 : index
    %c0_11 = arith.constant 0 : index
    %5 = vector.load %arg6[%c15, %c0_10, %c0_11] : memref<18x18x4xf32, #tpu.memory_space<vmem>>, vector<1x18x4xf32>
    %c17 = arith.constant 17 : index
    %c0_12 = arith.constant 0 : index
    %c0_13 = arith.constant 0 : index
    %6 = vector.load %arg6[%c17, %c0_12, %c0_13] : memref<18x18x4xf32, #tpu.memory_space<vmem>>, vector<1x18x4xf32>
    tpu.vector_store %arg6[%c17, %c0_12, %c0_13], %5 {strides = array<i32>} : memref<18x18x4xf32, #tpu.memory_space<vmem>>, vector<1x18x4xf32>,
    %c0_14 = arith.constant 0 : index
    %c2_15 = arith.constant 2 : index
    %c0_16 = arith.constant 0 : index
    %7 = vector.load %arg6[%c0_14, %c2_15, %c0_16] : memref<18x18x4xf32, #tpu.memory_space<vmem>>, vector<18x1x4xf32>
    %c0_17 = arith.constant 0 : index
    %c0_18 = arith.constant 0 : index
    %c0_19 = arith.constant 0 : index
    %8 = vector.load %arg6[%c0_17, %c0_18, %c0_19] : memref<18x18x4xf32, #tpu.memory_space<vmem>>, vector<18x1x4xf32>
    tpu.vector_store %arg6[%c0_17, %c0_18, %c0_19], %7 {strides = array<i32>} : memref<18x18x4xf32, #tpu.memory_space<vmem>>, vector<18x1x4xf32>,
    %c0_20 = arith.constant 0 : index
    %c15_21 = arith.constant 15 : index
    %c0_22 = arith.constant 0 : index
    %9 = vector.load %arg6[%c0_20, %c15_21, %c0_22] : memref<18x18x4xf32, #tpu.memory_space<vmem>>, vector<18x1x4xf32>
    %c0_23 = arith.constant 0 : index
    %c17_24 = arith.constant 17 : index
    %c0_25 = arith.constant 0 : index
    %10 = vector.load %arg6[%c0_23, %c17_24, %c0_25] : memref<18x18x4xf32, #tpu.memory_space<vmem>>, vector<18x1x4xf32>
    tpu.vector_store %arg6[%c0_23, %c17_24, %c0_25], %9 {strides = array<i32>} : memref<18x18x4xf32, #tpu.memory_space<vmem>>, vector<18x1x4xf32>,
    %c0_26 = arith.constant 0 : index
    %c0_27 = arith.constant 0 : index
    %c0_28 = arith.constant 0 : index
    %11 = vector.load %arg6[%c0_26, %c0_27, %c0_28] : memref<18x18x4xf32, #tpu.memory_space<vmem>>, vector<18x18x4xf32>
    %12 = arith.truncf %11 : vector<18x18x4xf32> to vector<18x18x4xbf16>
    %c0_29 = arith.constant 0 : index
    %c0_30 = arith.constant 0 : index
    %c0_31 = arith.constant 0 : index
    %13 = vector.load %arg7[%c0_29, %c0_30, %c0_31] : memref<18x18x4xbf16, #tpu.memory_space<vmem>>, vector<18x18x4xbf16>
    tpu.vector_store %arg7[%c0_29, %c0_30, %c0_31], %12 {strides = array<i32>} : memref<18x18x4xbf16, #tpu.memory_space<vmem>>, vector<18x18x4xbf16>,
    %cst = arith.constant 0.000000e+00 : f32
    %14 = vector.broadcast %cst : f32 to vector<256x4xf32>
    %c0_32 = arith.constant 0 : index
    %c0_33 = arith.constant 0 : index
    %c0_34 = arith.constant 0 : index
    %15 = vector.load %arg7[%c0_32, %c0_33, %c0_34] : memref<18x18x4xbf16, #tpu.memory_space<vmem>>, vector<16x16x4xbf16>
    %16 = vector.shape_cast %15 : vector<16x16x4xbf16> to vector<256x4xbf16>
    %c0_35 = arith.constant 0 : index
    %c0_36 = arith.constant 0 : index
    %c0_37 = arith.constant 0 : index
    %17 = vector.load %arg2[%c0_35, %c0_36, %c0_37] : memref<9x4x4xbf16, #tpu.memory_space<vmem>>, vector<1x4x4xbf16>
    %18 = vector.shape_cast %17 : vector<1x4x4xbf16> to vector<4x4xbf16>
    %cst_38 = arith.constant dense<0.000000e+00> : vector<256x4xf32>
    %19 = tpu.matmul %16, %18, %cst_38 {dimension_numbers = #tpu.dot_dimension_numbers<[1], [0], [0], [1], [0, 0, 1, 1], [], []>} : vector<256x4xbf16>, vector<4x4xbf16>, vector<256x4xf32> -> vector<256x4xf32>
    %20 = arith.addf %14, %19 : vector<256x4xf32>
    %c0_39 = arith.constant 0 : index
    %c1_40 = arith.constant 1 : index
    %c0_41 = arith.constant 0 : index
    %21 = vector.load %arg7[%c0_39, %c1_40, %c0_41] : memref<18x18x4xbf16, #tpu.memory_space<vmem>>, vector<16x16x4xbf16>
    %22 = vector.shape_cast %21 : vector<16x16x4xbf16> to vector<256x4xbf16>
    %c1_42 = arith.constant 1 : index
    %c0_43 = arith.constant 0 : index
    %c0_44 = arith.constant 0 : index
    %23 = vector.load %arg2[%c1_42, %c0_43, %c0_44] : memref<9x4x4xbf16, #tpu.memory_space<vmem>>, vector<1x4x4xbf16>
    %24 = vector.shape_cast %23 : vector<1x4x4xbf16> to vector<4x4xbf16>
    %cst_45 = arith.constant dense<0.000000e+00> : vector<256x4xf32>
    %25 = tpu.matmul %22, %24, %cst_45 {dimension_numbers = #tpu.dot_dimension_numbers<[1], [0], [0], [1], [0, 0, 1, 1], [], []>} : vector<256x4xbf16>, vector<4x4xbf16>, vector<256x4xf32> -> vector<256x4xf32>
    %26 = arith.addf %20, %25 : vector<256x4xf32>
    %c0_46 = arith.constant 0 : index
    %c2_47 = arith.constant 2 : index
    %c0_48 = arith.constant 0 : index
    %27 = vector.load %arg7[%c0_46, %c2_47, %c0_48] : memref<18x18x4xbf16, #tpu.memory_space<vmem>>, vector<16x16x4xbf16>
    %28 = vector.shape_cast %27 : vector<16x16x4xbf16> to vector<256x4xbf16>
    %c2_49 = arith.constant 2 : index
    %c0_50 = arith.constant 0 : index
    %c0_51 = arith.constant 0 : index
    %29 = vector.load %arg2[%c2_49, %c0_50, %c0_51] : memref<9x4x4xbf16, #tpu.memory_space<vmem>>, vector<1x4x4xbf16>
    %30 = vector.shape_cast %29 : vector<1x4x4xbf16> to vector<4x4xbf16>
    %cst_52 = arith.constant dense<0.000000e+00> : vector<256x4xf32>
    %31 = tpu.matmul %28, %30, %cst_52 {dimension_numbers = #tpu.dot_dimension_numbers<[1], [0], [0], [1], [0, 0, 1, 1], [], []>} : vector<256x4xbf16>, vector<4x4xbf16>, vector<256x4xf32> -> vector<256x4xf32>
    %32 = arith.addf %26, %31 : vector<256x4xf32>
    %c1_53 = arith.constant 1 : index
    %c0_54 = arith.constant 0 : index
    %c0_55 = arith.constant 0 : index
    %33 = vector.load %arg7[%c1_53, %c0_54, %c0_55] : memref<18x18x4xbf16, #tpu.memory_space<vmem>>, vector<16x16x4xbf16>
    %34 = vector.shape_cast %33 : vector<16x16x4xbf16> to vector<256x4xbf16>
    %c3 = arith.constant 3 : index
    %c0_56 = arith.constant 0 : index
    %c0_57 = arith.constant 0 : index
    %35 = vector.load %arg2[%c3, %c0_56, %c0_57] : memref<9x4x4xbf16, #tpu.memory_space<vmem>>, vector<1x4x4xbf16>
    %36 = vector.shape_cast %35 : vector<1x4x4xbf16> to vector<4x4xbf16>
    %cst_58 = arith.constant dense<0.000000e+00> : vector<256x4xf32>
    %37 = tpu.matmul %34, %36, %cst_58 {dimension_numbers = #tpu.dot_dimension_numbers<[1], [0], [0], [1], [0, 0, 1, 1], [], []>} : vector<256x4xbf16>, vector<4x4xbf16>, vector<256x4xf32> -> vector<256x4xf32>
    %38 = arith.addf %32, %37 : vector<256x4xf32>
    %c1_59 = arith.constant 1 : index
    %c1_60 = arith.constant 1 : index
    %c0_61 = arith.constant 0 : index
    %39 = vector.load %arg7[%c1_59, %c1_60, %c0_61] : memref<18x18x4xbf16, #tpu.memory_space<vmem>>, vector<16x16x4xbf16>
    %40 = vector.shape_cast %39 : vector<16x16x4xbf16> to vector<256x4xbf16>
    %c4 = arith.constant 4 : index
    %c0_62 = arith.constant 0 : index
    %c0_63 = arith.constant 0 : index
    %41 = vector.load %arg2[%c4, %c0_62, %c0_63] : memref<9x4x4xbf16, #tpu.memory_space<vmem>>, vector<1x4x4xbf16>
    %42 = vector.shape_cast %41 : vector<1x4x4xbf16> to vector<4x4xbf16>
    %cst_64 = arith.constant dense<0.000000e+00> : vector<256x4xf32>
    %43 = tpu.matmul %40, %42, %cst_64 {dimension_numbers = #tpu.dot_dimension_numbers<[1], [0], [0], [1], [0, 0, 1, 1], [], []>} : vector<256x4xbf16>, vector<4x4xbf16>, vector<256x4xf32> -> vector<256x4xf32>
    %44 = arith.addf %38, %43 : vector<256x4xf32>
    %c1_65 = arith.constant 1 : index
    %c2_66 = arith.constant 2 : index
    %c0_67 = arith.constant 0 : index
    %45 = vector.load %arg7[%c1_65, %c2_66, %c0_67] : memref<18x18x4xbf16, #tpu.memory_space<vmem>>, vector<16x16x4xbf16>
    %46 = vector.shape_cast %45 : vector<16x16x4xbf16> to vector<256x4xbf16>
    %c5 = arith.constant 5 : index
    %c0_68 = arith.constant 0 : index
    %c0_69 = arith.constant 0 : index
    %47 = vector.load %arg2[%c5, %c0_68, %c0_69] : memref<9x4x4xbf16, #tpu.memory_space<vmem>>, vector<1x4x4xbf16>
    %48 = vector.shape_cast %47 : vector<1x4x4xbf16> to vector<4x4xbf16>
    %cst_70 = arith.constant dense<0.000000e+00> : vector<256x4xf32>
    %49 = tpu.matmul %46, %48, %cst_70 {dimension_numbers = #tpu.dot_dimension_numbers<[1], [0], [0], [1], [0, 0, 1, 1], [], []>} : vector<256x4xbf16>, vector<4x4xbf16>, vector<256x4xf32> -> vector<256x4xf32>
    %50 = arith.addf %44, %49 : vector<256x4xf32>
    %c2_71 = arith.constant 2 : index
    %c0_72 = arith.constant 0 : index
    %c0_73 = arith.constant 0 : index
    %51 = vector.load %arg7[%c2_71, %c0_72, %c0_73] : memref<18x18x4xbf16, #tpu.memory_space<vmem>>, vector<16x16x4xbf16>
    %52 = vector.shape_cast %51 : vector<16x16x4xbf16> to vector<256x4xbf16>
    %c6 = arith.constant 6 : index
    %c0_74 = arith.constant 0 : index
    %c0_75 = arith.constant 0 : index
    %53 = vector.load %arg2[%c6, %c0_74, %c0_75] : memref<9x4x4xbf16, #tpu.memory_space<vmem>>, vector<1x4x4xbf16>
    %54 = vector.shape_cast %53 : vector<1x4x4xbf16> to vector<4x4xbf16>
    %cst_76 = arith.constant dense<0.000000e+00> : vector<256x4xf32>
    %55 = tpu.matmul %52, %54, %cst_76 {dimension_numbers = #tpu.dot_dimension_numbers<[1], [0], [0], [1], [0, 0, 1, 1], [], []>} : vector<256x4xbf16>, vector<4x4xbf16>, vector<256x4xf32> -> vector<256x4xf32>
    %56 = arith.addf %50, %55 : vector<256x4xf32>
    %c2_77 = arith.constant 2 : index
    %c1_78 = arith.constant 1 : index
    %c0_79 = arith.constant 0 : index
    %57 = vector.load %arg7[%c2_77, %c1_78, %c0_79] : memref<18x18x4xbf16, #tpu.memory_space<vmem>>, vector<16x16x4xbf16>
    %58 = vector.shape_cast %57 : vector<16x16x4xbf16> to vector<256x4xbf16>
    %c7 = arith.constant 7 : index
    %c0_80 = arith.constant 0 : index
    %c0_81 = arith.constant 0 : index
    %59 = vector.load %arg2[%c7, %c0_80, %c0_81] : memref<9x4x4xbf16, #tpu.memory_space<vmem>>, vector<1x4x4xbf16>
    %60 = vector.shape_cast %59 : vector<1x4x4xbf16> to vector<4x4xbf16>
    %cst_82 = arith.constant dense<0.000000e+00> : vector<256x4xf32>
    %61 = tpu.matmul %58, %60, %cst_82 {dimension_numbers = #tpu.dot_dimension_numbers<[1], [0], [0], [1], [0, 0, 1, 1], [], []>} : vector<256x4xbf16>, vector<4x4xbf16>, vector<256x4xf32> -> vector<256x4xf32>
    %62 = arith.addf %56, %61 : vector<256x4xf32>
    %c2_83 = arith.constant 2 : index
    %c2_84 = arith.constant 2 : index
    %c0_85 = arith.constant 0 : index
    %63 = vector.load %arg7[%c2_83, %c2_84, %c0_85] : memref<18x18x4xbf16, #tpu.memory_space<vmem>>, vector<16x16x4xbf16>
    %64 = vector.shape_cast %63 : vector<16x16x4xbf16> to vector<256x4xbf16>
    %c8 = arith.constant 8 : index
    %c0_86 = arith.constant 0 : index
    %c0_87 = arith.constant 0 : index
    %65 = vector.load %arg2[%c8, %c0_86, %c0_87] : memref<9x4x4xbf16, #tpu.memory_space<vmem>>, vector<1x4x4xbf16>
    %66 = vector.shape_cast %65 : vector<1x4x4xbf16> to vector<4x4xbf16>
    %cst_88 = arith.constant dense<0.000000e+00> : vector<256x4xf32>
    %67 = tpu.matmul %64, %66, %cst_88 {dimension_numbers = #tpu.dot_dimension_numbers<[1], [0], [0], [1], [0, 0, 1, 1], [], []>} : vector<256x4xbf16>, vector<4x4xbf16>, vector<256x4xf32> -> vector<256x4xf32>
    %68 = arith.addf %62, %67 : vector<256x4xf32>
    %c0_89 = arith.constant 0 : index
    %c0_90 = arith.constant 0 : index
    %69 = vector.load %arg4[%c0_89, %c0_90] : memref<4x4xf32, #tpu.memory_space<vmem>>, vector<1x4xf32>
    %c1_91 = arith.constant 1 : index
    %c0_92 = arith.constant 0 : index
    %70 = vector.load %arg4[%c1_91, %c0_92] : memref<4x4xf32, #tpu.memory_space<vmem>>, vector<1x4xf32>
    %cst_93 = arith.constant dense<0.000000e+00> : vector<4xf32>
    %71 = vector.multi_reduction <add>, %68, %cst_93 [0] : vector<256x4xf32> to vector<4xf32>
    %72 = vector.shape_cast %71 : vector<4xf32> to vector<1x4xf32>
    %cst_94 = arith.constant 3.906250e-03 : f32
    %73 = vector.broadcast %cst_94 : f32 to vector<1x4xf32>
    %74 = arith.mulf %72, %73 : vector<1x4xf32>
    %75 = arith.mulf %68, %68 : vector<256x4xf32>
    %cst_95 = arith.constant dense<0.000000e+00> : vector<4xf32>
    %76 = vector.multi_reduction <add>, %75, %cst_95 [0] : vector<256x4xf32> to vector<4xf32>
    %77 = vector.shape_cast %76 : vector<4xf32> to vector<1x4xf32>
    %cst_96 = arith.constant 3.906250e-03 : f32
    %78 = vector.broadcast %cst_96 : f32 to vector<1x4xf32>
    %79 = arith.mulf %77, %78 : vector<1x4xf32>
    %80 = arith.mulf %74, %74 : vector<1x4xf32>
    %81 = arith.subf %79, %80 : vector<1x4xf32>
    %cst_97 = arith.constant 0.000000e+00 : f32
    %82 = vector.broadcast %cst_97 : f32 to vector<1x4xf32>
    %83 = arith.maximumf %81, %82 : vector<1x4xf32>
    %cst_98 = arith.constant 9.99999974E-6 : f32
    %84 = vector.broadcast %cst_98 : f32 to vector<1x4xf32>
    %85 = arith.addf %83, %84 : vector<1x4xf32>
    %86 = math.rsqrt %85 : vector<1x4xf32>
    %87 = arith.mulf %69, %86 : vector<1x4xf32>
    %88 = arith.mulf %74, %87 : vector<1x4xf32>
    %89 = arith.subf %70, %88 : vector<1x4xf32>
    %90 = vector.broadcast %87 : vector<1x4xf32> to vector<256x4xf32>
    %91 = arith.mulf %68, %90 : vector<256x4xf32>
    %92 = vector.broadcast %89 : vector<1x4xf32> to vector<256x4xf32>
    %93 = arith.addf %91, %92 : vector<256x4xf32>
    %cst_99 = arith.constant 0.000000e+00 : f32
    %94 = vector.broadcast %cst_99 : f32 to vector<256x4xf32>
    %95 = arith.maximumf %93, %94 : vector<256x4xf32>
    %96 = vector.shape_cast %95 : vector<256x4xf32> to vector<16x16x4xf32>
    %c1_100 = arith.constant 1 : index
    %c1_101 = arith.constant 1 : index
    %c0_102 = arith.constant 0 : index
    %97 = vector.load %arg6[%c1_100, %c1_101, %c0_102] : memref<18x18x4xf32, #tpu.memory_space<vmem>>, vector<16x16x4xf32>
    tpu.vector_store %arg6[%c1_100, %c1_101, %c0_102], %96 {strides = array<i32>} : memref<18x18x4xf32, #tpu.memory_space<vmem>>, vector<16x16x4xf32>,
    %c2_103 = arith.constant 2 : index
    %c0_104 = arith.constant 0 : index
    %c0_105 = arith.constant 0 : index
    %98 = vector.load %arg6[%c2_103, %c0_104, %c0_105] : memref<18x18x4xf32, #tpu.memory_space<vmem>>, vector<1x18x4xf32>
    %c0_106 = arith.constant 0 : index
    %c0_107 = arith.constant 0 : index
    %c0_108 = arith.constant 0 : index
    %99 = vector.load %arg6[%c0_106, %c0_107, %c0_108] : memref<18x18x4xf32, #tpu.memory_space<vmem>>, vector<1x18x4xf32>
    tpu.vector_store %arg6[%c0_106, %c0_107, %c0_108], %98 {strides = array<i32>} : memref<18x18x4xf32, #tpu.memory_space<vmem>>, vector<1x18x4xf32>,
    %c15_109 = arith.constant 15 : index
    %c0_110 = arith.constant 0 : index
    %c0_111 = arith.constant 0 : index
    %100 = vector.load %arg6[%c15_109, %c0_110, %c0_111] : memref<18x18x4xf32, #tpu.memory_space<vmem>>, vector<1x18x4xf32>
    %c17_112 = arith.constant 17 : index
    %c0_113 = arith.constant 0 : index
    %c0_114 = arith.constant 0 : index
    %101 = vector.load %arg6[%c17_112, %c0_113, %c0_114] : memref<18x18x4xf32, #tpu.memory_space<vmem>>, vector<1x18x4xf32>
    tpu.vector_store %arg6[%c17_112, %c0_113, %c0_114], %100 {strides = array<i32>} : memref<18x18x4xf32, #tpu.memory_space<vmem>>, vector<1x18x4xf32>,
    %c0_115 = arith.constant 0 : index
    %c2_116 = arith.constant 2 : index
    %c0_117 = arith.constant 0 : index
    %102 = vector.load %arg6[%c0_115, %c2_116, %c0_117] : memref<18x18x4xf32, #tpu.memory_space<vmem>>, vector<18x1x4xf32>
    %c0_118 = arith.constant 0 : index
    %c0_119 = arith.constant 0 : index
    %c0_120 = arith.constant 0 : index
    %103 = vector.load %arg6[%c0_118, %c0_119, %c0_120] : memref<18x18x4xf32, #tpu.memory_space<vmem>>, vector<18x1x4xf32>
    tpu.vector_store %arg6[%c0_118, %c0_119, %c0_120], %102 {strides = array<i32>} : memref<18x18x4xf32, #tpu.memory_space<vmem>>, vector<18x1x4xf32>,
    %c0_121 = arith.constant 0 : index
    %c15_122 = arith.constant 15 : index
    %c0_123 = arith.constant 0 : index
    %104 = vector.load %arg6[%c0_121, %c15_122, %c0_123] : memref<18x18x4xf32, #tpu.memory_space<vmem>>, vector<18x1x4xf32>
    %c0_124 = arith.constant 0 : index
    %c17_125 = arith.constant 17 : index
    %c0_126 = arith.constant 0 : index
    %105 = vector.load %arg6[%c0_124, %c17_125, %c0_126] : memref<18x18x4xf32, #tpu.memory_space<vmem>>, vector<18x1x4xf32>
    tpu.vector_store %arg6[%c0_124, %c17_125, %c0_126], %104 {strides = array<i32>} : memref<18x18x4xf32, #tpu.memory_space<vmem>>, vector<18x1x4xf32>,
    %c0_127 = arith.constant 0 : index
    %c0_128 = arith.constant 0 : index
    %c0_129 = arith.constant 0 : index
    %106 = vector.load %arg6[%c0_127, %c0_128, %c0_129] : memref<18x18x4xf32, #tpu.memory_space<vmem>>, vector<18x18x4xf32>
    %107 = arith.truncf %106 : vector<18x18x4xf32> to vector<18x18x4xbf16>
    %c0_130 = arith.constant 0 : index
    %c0_131 = arith.constant 0 : index
    %c0_132 = arith.constant 0 : index
    %108 = vector.load %arg7[%c0_130, %c0_131, %c0_132] : memref<18x18x4xbf16, #tpu.memory_space<vmem>>, vector<18x18x4xbf16>
    tpu.vector_store %arg7[%c0_130, %c0_131, %c0_132], %107 {strides = array<i32>} : memref<18x18x4xbf16, #tpu.memory_space<vmem>>, vector<18x18x4xbf16>,
    %cst_133 = arith.constant 0.000000e+00 : f32
    %109 = vector.broadcast %cst_133 : f32 to vector<256x4xf32>
    %c0_134 = arith.constant 0 : index
    %c0_135 = arith.constant 0 : index
    %c0_136 = arith.constant 0 : index
    %110 = vector.load %arg7[%c0_134, %c0_135, %c0_136] : memref<18x18x4xbf16, #tpu.memory_space<vmem>>, vector<16x16x4xbf16>
    %111 = vector.shape_cast %110 : vector<16x16x4xbf16> to vector<256x4xbf16>
    %c0_137 = arith.constant 0 : index
    %c0_138 = arith.constant 0 : index
    %c0_139 = arith.constant 0 : index
    %112 = vector.load %arg3[%c0_137, %c0_138, %c0_139] : memref<9x4x4xbf16, #tpu.memory_space<vmem>>, vector<1x4x4xbf16>
    %113 = vector.shape_cast %112 : vector<1x4x4xbf16> to vector<4x4xbf16>
    %cst_140 = arith.constant dense<0.000000e+00> : vector<256x4xf32>
    %114 = tpu.matmul %111, %113, %cst_140 {dimension_numbers = #tpu.dot_dimension_numbers<[1], [0], [0], [1], [0, 0, 1, 1], [], []>} : vector<256x4xbf16>, vector<4x4xbf16>, vector<256x4xf32> -> vector<256x4xf32>
    %115 = arith.addf %109, %114 : vector<256x4xf32>
    %c0_141 = arith.constant 0 : index
    %c1_142 = arith.constant 1 : index
    %c0_143 = arith.constant 0 : index
    %116 = vector.load %arg7[%c0_141, %c1_142, %c0_143] : memref<18x18x4xbf16, #tpu.memory_space<vmem>>, vector<16x16x4xbf16>
    %117 = vector.shape_cast %116 : vector<16x16x4xbf16> to vector<256x4xbf16>
    %c1_144 = arith.constant 1 : index
    %c0_145 = arith.constant 0 : index
    %c0_146 = arith.constant 0 : index
    %118 = vector.load %arg3[%c1_144, %c0_145, %c0_146] : memref<9x4x4xbf16, #tpu.memory_space<vmem>>, vector<1x4x4xbf16>
    %119 = vector.shape_cast %118 : vector<1x4x4xbf16> to vector<4x4xbf16>
    %cst_147 = arith.constant dense<0.000000e+00> : vector<256x4xf32>
    %120 = tpu.matmul %117, %119, %cst_147 {dimension_numbers = #tpu.dot_dimension_numbers<[1], [0], [0], [1], [0, 0, 1, 1], [], []>} : vector<256x4xbf16>, vector<4x4xbf16>, vector<256x4xf32> -> vector<256x4xf32>
    %121 = arith.addf %115, %120 : vector<256x4xf32>
    %c0_148 = arith.constant 0 : index
    %c2_149 = arith.constant 2 : index
    %c0_150 = arith.constant 0 : index
    %122 = vector.load %arg7[%c0_148, %c2_149, %c0_150] : memref<18x18x4xbf16, #tpu.memory_space<vmem>>, vector<16x16x4xbf16>
    %123 = vector.shape_cast %122 : vector<16x16x4xbf16> to vector<256x4xbf16>
    %c2_151 = arith.constant 2 : index
    %c0_152 = arith.constant 0 : index
    %c0_153 = arith.constant 0 : index
    %124 = vector.load %arg3[%c2_151, %c0_152, %c0_153] : memref<9x4x4xbf16, #tpu.memory_space<vmem>>, vector<1x4x4xbf16>
    %125 = vector.shape_cast %124 : vector<1x4x4xbf16> to vector<4x4xbf16>
    %cst_154 = arith.constant dense<0.000000e+00> : vector<256x4xf32>
    %126 = tpu.matmul %123, %125, %cst_154 {dimension_numbers = #tpu.dot_dimension_numbers<[1], [0], [0], [1], [0, 0, 1, 1], [], []>} : vector<256x4xbf16>, vector<4x4xbf16>, vector<256x4xf32> -> vector<256x4xf32>
    %127 = arith.addf %121, %126 : vector<256x4xf32>
    %c1_155 = arith.constant 1 : index
    %c0_156 = arith.constant 0 : index
    %c0_157 = arith.constant 0 : index
    %128 = vector.load %arg7[%c1_155, %c0_156, %c0_157] : memref<18x18x4xbf16, #tpu.memory_space<vmem>>, vector<16x16x4xbf16>
    %129 = vector.shape_cast %128 : vector<16x16x4xbf16> to vector<256x4xbf16>
    %c3_158 = arith.constant 3 : index
    %c0_159 = arith.constant 0 : index
    %c0_160 = arith.constant 0 : index
    %130 = vector.load %arg3[%c3_158, %c0_159, %c0_160] : memref<9x4x4xbf16, #tpu.memory_space<vmem>>, vector<1x4x4xbf16>
    %131 = vector.shape_cast %130 : vector<1x4x4xbf16> to vector<4x4xbf16>
    %cst_161 = arith.constant dense<0.000000e+00> : vector<256x4xf32>
    %132 = tpu.matmul %129, %131, %cst_161 {dimension_numbers = #tpu.dot_dimension_numbers<[1], [0], [0], [1], [0, 0, 1, 1], [], []>} : vector<256x4xbf16>, vector<4x4xbf16>, vector<256x4xf32> -> vector<256x4xf32>
    %133 = arith.addf %127, %132 : vector<256x4xf32>
    %c1_162 = arith.constant 1 : index
    %c1_163 = arith.constant 1 : index
    %c0_164 = arith.constant 0 : index
    %134 = vector.load %arg7[%c1_162, %c1_163, %c0_164] : memref<18x18x4xbf16, #tpu.memory_space<vmem>>, vector<16x16x4xbf16>
    %135 = vector.shape_cast %134 : vector<16x16x4xbf16> to vector<256x4xbf16>
    %c4_165 = arith.constant 4 : index
    %c0_166 = arith.constant 0 : index
    %c0_167 = arith.constant 0 : index
    %136 = vector.load %arg3[%c4_165, %c0_166, %c0_167] : memref<9x4x4xbf16, #tpu.memory_space<vmem>>, vector<1x4x4xbf16>
    %137 = vector.shape_cast %136 : vector<1x4x4xbf16> to vector<4x4xbf16>
    %cst_168 = arith.constant dense<0.000000e+00> : vector<256x4xf32>
    %138 = tpu.matmul %135, %137, %cst_168 {dimension_numbers = #tpu.dot_dimension_numbers<[1], [0], [0], [1], [0, 0, 1, 1], [], []>} : vector<256x4xbf16>, vector<4x4xbf16>, vector<256x4xf32> -> vector<256x4xf32>
    %139 = arith.addf %133, %138 : vector<256x4xf32>
    %c1_169 = arith.constant 1 : index
    %c2_170 = arith.constant 2 : index
    %c0_171 = arith.constant 0 : index
    %140 = vector.load %arg7[%c1_169, %c2_170, %c0_171] : memref<18x18x4xbf16, #tpu.memory_space<vmem>>, vector<16x16x4xbf16>
    %141 = vector.shape_cast %140 : vector<16x16x4xbf16> to vector<256x4xbf16>
    %c5_172 = arith.constant 5 : index
    %c0_173 = arith.constant 0 : index
    %c0_174 = arith.constant 0 : index
    %142 = vector.load %arg3[%c5_172, %c0_173, %c0_174] : memref<9x4x4xbf16, #tpu.memory_space<vmem>>, vector<1x4x4xbf16>
    %143 = vector.shape_cast %142 : vector<1x4x4xbf16> to vector<4x4xbf16>
    %cst_175 = arith.constant dense<0.000000e+00> : vector<256x4xf32>
    %144 = tpu.matmul %141, %143, %cst_175 {dimension_numbers = #tpu.dot_dimension_numbers<[1], [0], [0], [1], [0, 0, 1, 1], [], []>} : vector<256x4xbf16>, vector<4x4xbf16>, vector<256x4xf32> -> vector<256x4xf32>
    %145 = arith.addf %139, %144 : vector<256x4xf32>
    %c2_176 = arith.constant 2 : index
    %c0_177 = arith.constant 0 : index
    %c0_178 = arith.constant 0 : index
    %146 = vector.load %arg7[%c2_176, %c0_177, %c0_178] : memref<18x18x4xbf16, #tpu.memory_space<vmem>>, vector<16x16x4xbf16>
    %147 = vector.shape_cast %146 : vector<16x16x4xbf16> to vector<256x4xbf16>
    %c6_179 = arith.constant 6 : index
    %c0_180 = arith.constant 0 : index
    %c0_181 = arith.constant 0 : index
    %148 = vector.load %arg3[%c6_179, %c0_180, %c0_181] : memref<9x4x4xbf16, #tpu.memory_space<vmem>>, vector<1x4x4xbf16>
    %149 = vector.shape_cast %148 : vector<1x4x4xbf16> to vector<4x4xbf16>
    %cst_182 = arith.constant dense<0.000000e+00> : vector<256x4xf32>
    %150 = tpu.matmul %147, %149, %cst_182 {dimension_numbers = #tpu.dot_dimension_numbers<[1], [0], [0], [1], [0, 0, 1, 1], [], []>} : vector<256x4xbf16>, vector<4x4xbf16>, vector<256x4xf32> -> vector<256x4xf32>
    %151 = arith.addf %145, %150 : vector<256x4xf32>
    %c2_183 = arith.constant 2 : index
    %c1_184 = arith.constant 1 : index
    %c0_185 = arith.constant 0 : index
    %152 = vector.load %arg7[%c2_183, %c1_184, %c0_185] : memref<18x18x4xbf16, #tpu.memory_space<vmem>>, vector<16x16x4xbf16>
    %153 = vector.shape_cast %152 : vector<16x16x4xbf16> to vector<256x4xbf16>
    %c7_186 = arith.constant 7 : index
    %c0_187 = arith.constant 0 : index
    %c0_188 = arith.constant 0 : index
    %154 = vector.load %arg3[%c7_186, %c0_187, %c0_188] : memref<9x4x4xbf16, #tpu.memory_space<vmem>>, vector<1x4x4xbf16>
    %155 = vector.shape_cast %154 : vector<1x4x4xbf16> to vector<4x4xbf16>
    %cst_189 = arith.constant dense<0.000000e+00> : vector<256x4xf32>
    %156 = tpu.matmul %153, %155, %cst_189 {dimension_numbers = #tpu.dot_dimension_numbers<[1], [0], [0], [1], [0, 0, 1, 1], [], []>} : vector<256x4xbf16>, vector<4x4xbf16>, vector<256x4xf32> -> vector<256x4xf32>
    %157 = arith.addf %151, %156 : vector<256x4xf32>
    %c2_190 = arith.constant 2 : index
    %c2_191 = arith.constant 2 : index
    %c0_192 = arith.constant 0 : index
    %158 = vector.load %arg7[%c2_190, %c2_191, %c0_192] : memref<18x18x4xbf16, #tpu.memory_space<vmem>>, vector<16x16x4xbf16>
    %159 = vector.shape_cast %158 : vector<16x16x4xbf16> to vector<256x4xbf16>
    %c8_193 = arith.constant 8 : index
    %c0_194 = arith.constant 0 : index
    %c0_195 = arith.constant 0 : index
    %160 = vector.load %arg3[%c8_193, %c0_194, %c0_195] : memref<9x4x4xbf16, #tpu.memory_space<vmem>>, vector<1x4x4xbf16>
    %161 = vector.shape_cast %160 : vector<1x4x4xbf16> to vector<4x4xbf16>
    %cst_196 = arith.constant dense<0.000000e+00> : vector<256x4xf32>
    %162 = tpu.matmul %159, %161, %cst_196 {dimension_numbers = #tpu.dot_dimension_numbers<[1], [0], [0], [1], [0, 0, 1, 1], [], []>} : vector<256x4xbf16>, vector<4x4xbf16>, vector<256x4xf32> -> vector<256x4xf32>
    %163 = arith.addf %157, %162 : vector<256x4xf32>
    %c2_197 = arith.constant 2 : index
    %c0_198 = arith.constant 0 : index
    %164 = vector.load %arg4[%c2_197, %c0_198] : memref<4x4xf32, #tpu.memory_space<vmem>>, vector<1x4xf32>
    %c3_199 = arith.constant 3 : index
    %c0_200 = arith.constant 0 : index
    %165 = vector.load %arg4[%c3_199, %c0_200] : memref<4x4xf32, #tpu.memory_space<vmem>>, vector<1x4xf32>
    %cst_201 = arith.constant dense<0.000000e+00> : vector<4xf32>
    %166 = vector.multi_reduction <add>, %163, %cst_201 [0] : vector<256x4xf32> to vector<4xf32>
    %167 = vector.shape_cast %166 : vector<4xf32> to vector<1x4xf32>
    %cst_202 = arith.constant 3.906250e-03 : f32
    %168 = vector.broadcast %cst_202 : f32 to vector<1x4xf32>
    %169 = arith.mulf %167, %168 : vector<1x4xf32>
    %170 = arith.mulf %163, %163 : vector<256x4xf32>
    %cst_203 = arith.constant dense<0.000000e+00> : vector<4xf32>
    %171 = vector.multi_reduction <add>, %170, %cst_203 [0] : vector<256x4xf32> to vector<4xf32>
    %172 = vector.shape_cast %171 : vector<4xf32> to vector<1x4xf32>
    %cst_204 = arith.constant 3.906250e-03 : f32
    %173 = vector.broadcast %cst_204 : f32 to vector<1x4xf32>
    %174 = arith.mulf %172, %173 : vector<1x4xf32>
    %175 = arith.mulf %169, %169 : vector<1x4xf32>
    %176 = arith.subf %174, %175 : vector<1x4xf32>
    %cst_205 = arith.constant 0.000000e+00 : f32
    %177 = vector.broadcast %cst_205 : f32 to vector<1x4xf32>
    %178 = arith.maximumf %176, %177 : vector<1x4xf32>
    %cst_206 = arith.constant 9.99999974E-6 : f32
    %179 = vector.broadcast %cst_206 : f32 to vector<1x4xf32>
    %180 = arith.addf %178, %179 : vector<1x4xf32>
    %181 = math.rsqrt %180 : vector<1x4xf32>
    %182 = arith.mulf %164, %181 : vector<1x4xf32>
    %183 = arith.mulf %169, %182 : vector<1x4xf32>
    %184 = arith.subf %165, %183 : vector<1x4xf32>
    %185 = vector.broadcast %182 : vector<1x4xf32> to vector<256x4xf32>
    %186 = arith.mulf %163, %185 : vector<256x4xf32>
    %187 = vector.broadcast %184 : vector<1x4xf32> to vector<256x4xf32>
    %188 = arith.addf %186, %187 : vector<256x4xf32>
    %189 = vector.shape_cast %188 : vector<256x4xf32> to vector<16x16x4xf32>
    %c0_207 = arith.constant 0 : index
    %c0_208 = arith.constant 0 : index
    %c0_209 = arith.constant 0 : index
    %c0_210 = arith.constant 0 : index
    %190 = vector.load %arg1[%c0_207, %c0_208, %c0_209, %c0_210] : memref<1x16x16x4xf32, #tpu.memory_space<vmem>>, vector<1x16x16x4xf32>
    %191 = vector.shape_cast %190 : vector<1x16x16x4xf32> to vector<16x16x4xf32>
    %192 = arith.addf %189, %191 : vector<16x16x4xf32>
    %c0_211 = arith.constant 0 : index
    %c0_212 = arith.constant 0 : index
    %c0_213 = arith.constant 0 : index
    %c0_214 = arith.constant 0 : index
    %193 = vector.load %arg5[%c0_211, %c0_212, %c0_213, %c0_214] : memref<1x16x16x4xf32, #tpu.memory_space<vmem>>, vector<1x16x16x4xf32>
    %194 = vector.shape_cast %193 : vector<1x16x16x4xf32> to vector<16x16x4xf32>
    %195 = vector.shape_cast %192 : vector<16x16x4xf32> to vector<1x16x16x4xf32>
    tpu.vector_store %arg5[%c0_211, %c0_212, %c0_213, %c0_214], %195 {strides = array<i32>} : memref<1x16x16x4xf32, #tpu.memory_space<vmem>>, vector<1x16x16x4xf32>,
    return
  }
  func.func @transform_0(%arg0: i32) -> (i32, i32, i32, i32) {
    %c0_i32 = arith.constant 0 : i32
    %c0_i32_0 = arith.constant 0 : i32
    %c0_i32_1 = arith.constant 0 : i32
    %c0_i32_2 = arith.constant 0 : i32
    return %arg0, %c0_i32, %c0_i32_0, %c0_i32_1 : i32, i32, i32, i32
  }
  func.func @transform_1(%arg0: i32) -> (i32, i32, i32) {
    %c0_i32 = arith.constant 0 : i32
    %c0_i32_0 = arith.constant 0 : i32
    %c0_i32_1 = arith.constant 0 : i32
    %c0_i32_2 = arith.constant 0 : i32
    return %c0_i32, %c0_i32_0, %c0_i32_1 : i32, i32, i32
  }
  func.func @transform_2(%arg0: i32) -> (i32, i32, i32) {
    %c0_i32 = arith.constant 0 : i32
    %c0_i32_0 = arith.constant 0 : i32
    %c0_i32_1 = arith.constant 0 : i32
    %c0_i32_2 = arith.constant 0 : i32
    return %c0_i32, %c0_i32_0, %c0_i32_1 : i32, i32, i32
  }
  func.func @transform_3(%arg0: i32) -> (i32, i32) {
    %c0_i32 = arith.constant 0 : i32
    %c0_i32_0 = arith.constant 0 : i32
    %c0_i32_1 = arith.constant 0 : i32
    return %c0_i32, %c0_i32_0 : i32, i32
  }
  func.func @transform_4(%arg0: i32) -> (i32, i32, i32, i32) {
    %c0_i32 = arith.constant 0 : i32
    %c0_i32_0 = arith.constant 0 : i32
    %c0_i32_1 = arith.constant 0 : i32
    %c0_i32_2 = arith.constant 0 : i32
    return %arg0, %c0_i32, %c0_i32_0, %c0_i32_1 : i32, i32, i32, i32
  }
}

</mosaic_0001>

<llo_original>
// kernel: res_layer_forward.1
$region0: #{res_layer_forward.1}
  #allocation0 [shape = 'u32[]', space=smem, size = 0x4, offset = 0x4, fixed_abs, tag = 'smem constant byte address 0x4 - core index']
  #allocation1 [shape = 'u32[144,128]{1,0:T(1,128)}', space=vmem, size = 0x12000, scoped, tag = 'internal scratch']
  #allocation2 [shape = 'f32[18,18,4]{2,1,0:T(8,128)}', space=vmem, size = 0x36000, scoped, tag = 'scratch operand']
  #allocation3 [shape = 'bf16[18,18,4]{2,1,0:T(8,128)(2,1)}', space=vmem, size = 0x1b000, scoped, tag = 'scratch operand']
  %s0 = inlined_call_operand.vmem [shape: f32[2,16,16,4], index: 0, kind: input, shape index: {}]
  %s1 = inlined_call_operand.vmem [shape: bf16[9,4,4], index: 1, kind: input, shape index: {}]
  %s2 = inlined_call_operand.vmem [shape: bf16[9,4,4], index: 2, kind: input, shape index: {}]
  %s3 = inlined_call_operand.vmem [shape: f32[4,4], index: 3, kind: input, shape index: {}]
  %s4 = inlined_call_operand.vmem [shape: f32[2,16,16,4], index: 4, kind: output, shape index: {}]
  %s5 = sld [smem:[#allocation0]]
  $region49: #{res_layer_forward.1} parent=0
    _
  %s7 = ssub.s32 1, %s5
  %s8 = scalar_select 0, %s7, %s5
  loop: start=0, step=1, limit=4
  $region2: #{res_layer_forward.1} parent=0 // loop_pre_header
    _
  $region3: #{res_layer_forward.1} parent=0 // loop_header
    %s10 = sphi 0, %s14
    %p11 = scmp.ge.s32.totalorder %s10, 4
    %s20 = sphi 0, %s22
    %s23 = sphi 0, %s20
    %s24 = sphi 0, %s23
    %s40 = sphi 0, %s24
    %s44 = sphi 0, %s44
    %s46 = sphi 0, %s44
    %s47 = sphi 0, %s46
    %s61 = sphi 0, %s47
    %s65 = sphi 0, %s65
    %s67 = sphi 0, %s65
    %s68 = sphi 0, %s67
    %s82 = sphi 0, %s68
    %s86 = sphi 0, %s86
    %s88 = sphi 0, %s86
    %s89 = sphi 0, %s88
    %s103 = sphi 0, %s89
    %s109 = sphi 0, %s111
    %s112 = sphi 0, %s109
    %s113 = sphi 0, %s112
    %s129 = sphi 0, %s113
  $region4: #{res_layer_forward.1} parent=0 // loop_header_branch
    %13 = sbr.rel (%p11) target = $region8
  $region5: #{res_layer_forward.1} parent=0 // loop_body
    %s15 = ssub.s32 %s10, 1
    %s16 = ssub.s32 %s10, 2
    %s17 = sadd.s32 %s10, 1
    %s18 = ssub.s32 %s10, %s17
    %p19 = scmp.eq.s32.totalorder %s18, 0
    %s21 = sadd.s32 %s20, 1
    %s22 = scalar_select %p19, %s20, %s21
    %p25 = pneg %p19
    %p26 = scmp.eq.s32.totalorder %s10, 1
    %p27 = por %p25, %p26
    %p28 = scmp.ne.s32.totalorder %s20, %s23
    %p29 = scmp.eq.s32.totalorder %s10, 0
    %p30 = por %p28, %p29
    %p31 = scmp.ne.s32.totalorder %s20, %s23
    %p32 = scmp.eq.s32.totalorder %s15, 1
    %p33 = por %p31, %p32
    %p34 = scmp.ne.s32.totalorder %s23, %s24
    %p35 = scmp.eq.s32.totalorder %s15, 0
    %p36 = por %p34, %p35
    %p37 = scmp.ne.s32.totalorder %s23, %s24
    %p38 = scmp.eq.s32.totalorder %s16, 1
    %p39 = por %p37, %p38
    %p41 = scmp.ne.s32.totalorder %s24, %s40
    %p42 = scmp.eq.s32.totalorder %s16, 0
    %p43 = por %p41, %p42
    %s45 = sadd.s32 %s44, 1
    %p48 = scmp.eq.s32.totalorder %s10, 1
    %p49 = scmp.ne.s32.totalorder %s44, %s46
    %p50 = scmp.eq.s32.totalorder %s10, 0
    %p51 = por %p49, %p50
    %p52 = scmp.ne.s32.totalorder %s44, %s46
    %p53 = scmp.eq.s32.totalorder %s15, 1
    %p54 = por %p52, %p53
    %p55 = scmp.ne.s32.totalorder %s46, %s47
    %p56 = scmp.eq.s32.totalorder %s15, 0
    %p57 = por %p55, %p56
    %p58 = scmp.ne.s32.totalorder %s46, %s47
    %p59 = scmp.eq.s32.totalorder %s16, 1
    %p60 = por %p58, %p59
    %p62 = scmp.ne.s32.totalorder %s47, %s61
    %p63 = scmp.eq.s32.totalorder %s16, 0
    %p64 = por %p62, %p63
    %s66 = sadd.s32 %s65, 1
    %p69 = scmp.eq.s32.totalorder %s10, 1
    %p70 = scmp.ne.s32.totalorder %s65, %s67
    %p71 = scmp.eq.s32.totalorder %s10, 0
    %p72 = por %p70, %p71
    %p73 = scmp.ne.s32.totalorder %s65, %s67
    %p74 = scmp.eq.s32.totalorder %s15, 1
    %p75 = por %p73, %p74
    %p76 = scmp.ne.s32.totalorder %s67, %s68
    %p77 = scmp.eq.s32.totalorder %s15, 0
    %p78 = por %p76, %p77
    %p79 = scmp.ne.s32.totalorder %s67, %s68
    %p80 = scmp.eq.s32.totalorder %s16, 1
    %p81 = por %p79, %p80
    %p83 = scmp.ne.s32.totalorder %s68, %s82
    %p84 = scmp.eq.s32.totalorder %s16, 0
    %p85 = por %p83, %p84
    %s87 = sadd.s32 %s86, 1
    %p90 = scmp.eq.s32.totalorder %s10, 1
    %p91 = scmp.ne.s32.totalorder %s86, %s88
    %p92 = scmp.eq.s32.totalorder %s10, 0
    %p93 = por %p91, %p92
    %p94 = scmp.ne.s32.totalorder %s86, %s88
    %p95 = scmp.eq.s32.totalorder %s15, 1
    %p96 = por %p94, %p95
    %p97 = scmp.ne.s32.totalorder %s88, %s89
    %p98 = scmp.eq.s32.totalorder %s15, 0
    %p99 = por %p97, %p98
    %p100 = scmp.ne.s32.totalorder %s88, %s89
    %p101 = scmp.eq.s32.totalorder %s16, 1
    %p102 = por %p100, %p101
    %p104 = scmp.ne.s32.totalorder %s89, %s103
    %p105 = scmp.eq.s32.totalorder %s16, 0
    %p106 = por %p104, %p105
    %s107 = ssub.s32 %s10, %s17
    %p108 = scmp.eq.s32.totalorder %s107, 0
    %s110 = sadd.s32 %s109, 1
    %s111 = scalar_select %p108, %s109, %s110
    %p114 = pneg %p108
    %p115 = scmp.eq.s32.totalorder %s10, 1
    %p116 = por %p114, %p115
    %p117 = scmp.ne.s32.totalorder %s109, %s112
    %p118 = scmp.eq.s32.totalorder %s10, 0
    %p119 = por %p117, %p118
    %p120 = scmp.ne.s32.totalorder %s109, %s112
    %p121 = scmp.eq.s32.totalorder %s15, 1
    %p122 = por %p120, %p121
    %p123 = scmp.ne.s32.totalorder %s112, %s113
    %p124 = scmp.eq.s32.totalorder %s15, 0
    %p125 = por %p123, %p124
    %p126 = scmp.ne.s32.totalorder %s112, %s113
    %p127 = scmp.eq.s32.totalorder %s16, 1
    %p128 = por %p126, %p127
    %p130 = scmp.ne.s32.totalorder %s113, %s129
    %p131 = scmp.eq.s32.totalorder %s16, 0
    %p132 = por %p130, %p131
    %p133 = scmp.le.s32.totalorder 1, %s10
    %p134 = scmp.lt.s32.totalorder %s10, 3
    %p135 = pnand %p133, %p134
    %p136 = pneg %p135
    // Predicated region
    $region9: #{res_layer_forward.1} parent=5 // pred_check
      _
    $region10: #{res_layer_forward.1} parent=5 // pred_check_branch
      %138 = sbr.rel (%p135) target = $region12
    $region11: #{res_layer_forward.1} parent=5 // pred_region
      %s139 = ssub.s32 %s10, 1
      // Predicated region
      $region13: #{res_layer_forward.1} parent=11 // pred_check
        %p140 = pneg %p57
      $region14: #{res_layer_forward.1} parent=11 // pred_check_branch
        %142 = sbr.rel (%p140) target = $region16
      $region15: #{res_layer_forward.1} parent=11 // pred_region
        _
      $region16: #{res_layer_forward.1} parent=11 // pred_fallthru
        _
      // Predicated region
      $region17: #{res_layer_forward.1} parent=11 // pred_check
        %p143 = pneg %p78
      $region18: #{res_layer_forward.1} parent=11 // pred_check_branch
        %145 = sbr.rel (%p143) target = $region20
      $region19: #{res_layer_forward.1} parent=11 // pred_region
        _
      $region20: #{res_layer_forward.1} parent=11 // pred_fallthru
        _
      // Predicated region
      $region21: #{res_layer_forward.1} parent=11 // pred_check
        %p146 = pneg %p99
      $region22: #{res_layer_forward.1} parent=11 // pred_check_branch
        %148 = sbr.rel (%p146) target = $region24
      $region23: #{res_layer_forward.1} parent=11 // pred_region
        _
      $region24: #{res_layer_forward.1} parent=11 // pred_fallthru
        _
    $region12: #{res_layer_forward.1} parent=5 // pred_fallthru
      _
    %p149 = scmp.lt.s32.totalorder %s10, 2
    // Predicated region
    $region25: #{res_layer_forward.1} parent=5 // pred_check
      %p150 = pneg %p149
    $region26: #{res_layer_forward.1} parent=5 // pred_check_branch
      %152 = sbr.rel (%p150) target = $region28
    $region27: #{res_layer_forward.1} parent=5 // pred_region
      // Predicated region
      $region29: #{res_layer_forward.1} parent=27 // pred_check
        %p153 = pneg %p30
      $region30: #{res_layer_forward.1} parent=27 // pred_check_branch
        %155 = sbr.rel (%p153) target = $region32
      $region31: #{res_layer_forward.1} parent=27 // pred_region
        %p156 = scmp.lt.s32.totalorder %s10, 1
        %s157 = scalar_select %p156, %s10, 1
        %s158 = smul.addr %s157, 32
        %s159 = smul.addr %s158, 8
        %s160 = scalar_lea.vmem %s0, %s159
      $region32: #{res_layer_forward.1} parent=27 // pred_fallthru
        _
    $region28: #{res_layer_forward.1} parent=5 // pred_fallthru
      _
    %p161 = scmp.le.s32.totalorder 1, %s10
    %p162 = scmp.lt.s32.totalorder %s10, 3
    %p163 = pnand %p161, %p162
    %p164 = pneg %p163
    // Predicated region
    $region33: #{res_layer_forward.1} parent=5 // pred_check
      _
    $region34: #{res_layer_forward.1} parent=5 // pred_check_branch
      %166 = sbr.rel (%p163) target = $region36
    $region35: #{res_layer_forward.1} parent=5 // pred_region
      %s167 = ssub.s32 %s10, 1
      %p168 = scmp.lt.s32.totalorder %s15, 1
      %s169 = scalar_select %p168, %s15, 1
      %s170 = smul.addr %s169, 32
      %s171 = smul.addr %s170, 8
      %s172 = scalar_lea.vmem %s0, %s171
      %p173 = pneg %p36
      %p174 = pneg %p33
      %p175 = pneg %p57
      %p176 = pneg %p54
      %p177 = pneg %p78
      %p178 = pneg %p75
      %p179 = pneg %p99
      %p180 = pneg %p96
      %p181 = pneg %p125
      %p182 = pneg %p122
      %p183 = scmp.lt.s32.totalorder %s15, 1
      %s184 = scalar_select %p183, %s15, 1
      %s185 = smul.addr %s184, 32
      %s186 = smul.addr %s185, 8
      %s187 = scalar_lea.vmem %s4, %s186
      %p188 = scmp.lt.s32.totalorder %s15, 1
      %s189 = scalar_select %p188, %s15, 1
      %s190 = smul.addr %s189, 32
      %s191 = smul.addr %s190, 8
      %s192 = scalar_lea.vmem %s0, %s191
      %p193 = scmp.lt.s32.totalorder %s15, 1
      %s194 = scalar_select %p193, %s15, 1
      %s195 = smul.addr %s194, 32
      %s196 = smul.addr %s195, 8
      %s197 = scalar_lea.vmem %s4, %s196
      %v199 = vld [vmem:[%s192] sm:$0xff]
      %v200 = vld [vmem:[%s192 + $0x8] sm:$0xff]
      %v201 = vld [vmem:[%s192 + $0x10] sm:$0xff]
      %v202 = vld [vmem:[%s192 + $0x18] sm:$0xff]
      %v203 = vld [vmem:[%s192 + $0x20] sm:$0xff]
      %v204 = vld [vmem:[%s192 + $0x28] sm:$0xff]
      %v205 = vld [vmem:[%s192 + $0x30] sm:$0xff]
      %v206 = vld [vmem:[%s192 + $0x38] sm:$0xff]
      %v207 = vld [vmem:[%s192 + $0x40] sm:$0xff]
      %v208 = vld [vmem:[%s192 + $0x48] sm:$0xff]
      %v209 = vld [vmem:[%s192 + $0x50] sm:$0xff]
      %v210 = vld [vmem:[%s192 + $0x58] sm:$0xff]
      %v211 = vld [vmem:[%s192 + $0x60] sm:$0xff]
      %v212 = vld [vmem:[%s192 + $0x68] sm:$0xff]
      %v213 = vld [vmem:[%s192 + $0x70] sm:$0xff]
      %v214 = vld [vmem:[%s192 + $0x78] sm:$0xff]
      %v215 = vld [vmem:[%s192 + $0x80] sm:$0xff]
      %v216 = vld [vmem:[%s192 + $0x88] sm:$0xff]
      %v217 = vld [vmem:[%s192 + $0x90] sm:$0xff]
      %v218 = vld [vmem:[%s192 + $0x98] sm:$0xff]
      %v219 = vld [vmem:[%s192 + $0xa0] sm:$0xff]
      %v220 = vld [vmem:[%s192 + $0xa8] sm:$0xff]
      %v221 = vld [vmem:[%s192 + $0xb0] sm:$0xff]
      %v222 = vld [vmem:[%s192 + $0xb8] sm:$0xff]
      %v223 = vld [vmem:[%s192 + $0xc0] sm:$0xff]
      %v224 = vld [vmem:[%s192 + $0xc8] sm:$0xff]
      %v225 = vld [vmem:[%s192 + $0xd0] sm:$0xff]
      %v226 = vld [vmem:[%s192 + $0xd8] sm:$0xff]
      %v227 = vld [vmem:[%s192 + $0xe0] sm:$0xff]
      %v228 = vld [vmem:[%s192 + $0xe8] sm:$0xff]
      %v229 = vld [vmem:[%s192 + $0xf0] sm:$0xff]
      %v230 = vld [vmem:[%s192 + $0xf8] sm:$0xff]
      %s231 = scalar_lea.vmem [#allocation2], 24
      %vm232 = vcmask 31744
      %233 = vst.msk [vmem:[%s231 + $0x1] sm:$0xff] %vm232, %v199
      %234 = vst.msk [vmem:[%s231 + $0x9] sm:$0xff] %vm232, %v200
      %235 = vst.msk [vmem:[%s231 + $0x19] sm:$0xff] %vm232, %v201
      %236 = vst.msk [vmem:[%s231 + $0x21] sm:$0xff] %vm232, %v202
      %237 = vst.msk [vmem:[%s231 + $0x31] sm:$0xff] %vm232, %v203
      %238 = vst.msk [vmem:[%s231 + $0x39] sm:$0xff] %vm232, %v204
      %239 = vst.msk [vmem:[%s231 + $0x49] sm:$0xff] %vm232, %v205
      %240 = vst.msk [vmem:[%s231 + $0x51] sm:$0xff] %vm232, %v206
      %241 = vst.msk [vmem:[%s231 + $0x61] sm:$0xff] %vm232, %v207
      %242 = vst.msk [vmem:[%s231 + $0x69] sm:$0xff] %vm232, %v208
      %243 = vst.msk [vmem:[%s231 + $0x79] sm:$0xff] %vm232, %v209
      %244 = vst.msk [vmem:[%s231 + $0x81] sm:$0xff] %vm232, %v210
      %245 = vst.msk [vmem:[%s231 + $0x91] sm:$0xff] %vm232, %v211
      %246 = vst.msk [vmem:[%s231 + $0x99] sm:$0xff] %vm232, %v212
      %247 = vst.msk [vmem:[%s231 + $0xa9] sm:$0xff] %vm232, %v213
      %248 = vst.msk [vmem:[%s231 + $0xb1] sm:$0xff] %vm232, %v214
      %249 = vst.msk [vmem:[%s231 + $0xc1] sm:$0xff] %vm232, %v215
      %250 = vst.msk [vmem:[%s231 + $0xc9] sm:$0xff] %vm232, %v216
      %251 = vst.msk [vmem:[%s231 + $0xd9] sm:$0xff] %vm232, %v217
      %252 = vst.msk [vmem:[%s231 + $0xe1] sm:$0xff] %vm232, %v218
      %253 = vst.msk [vmem:[%s231 + $0xf1] sm:$0xff] %vm232, %v219
      %254 = vst.msk [vmem:[%s231 + $0xf9] sm:$0xff] %vm232, %v220
      %255 = vst.msk [vmem:[%s231 + $0x109] sm:$0xff] %vm232, %v221
      %256 = vst.msk [vmem:[%s231 + $0x111] sm:$0xff] %vm232, %v222
      %257 = vst.msk [vmem:[%s231 + $0x121] sm:$0xff] %vm232, %v223
      %258 = vst.msk [vmem:[%s231 + $0x129] sm:$0xff] %vm232, %v224
      %259 = vst.msk [vmem:[%s231 + $0x139] sm:$0xff] %vm232, %v225
      %260 = vst.msk [vmem:[%s231 + $0x141] sm:$0xff] %vm232, %v226
      %261 = vst.msk [vmem:[%s231 + $0x151] sm:$0xff] %vm232, %v227
      %262 = vst.msk [vmem:[%s231 + $0x159] sm:$0xff] %vm232, %v228
      %263 = vst.msk [vmem:[%s231 + $0x169] sm:$0xff] %vm232, %v229
      %264 = vst.msk [vmem:[%s231 + $0x171] sm:$0xff] %vm232, %v230
      %s265 = scalar_lea.vmem [#allocation2], 48
      %v266 = vld [vmem:[%s265] sm:$0xff]
      %v267 = vld [vmem:[%s265 + $0x8] sm:$0xff]
      %v268 = vld [vmem:[%s265 + $0x10] sm:$0x3]
      %269 = vst.msk [vmem:[#allocation2] sm:$0xff] %vm232, %v266
      %270 = vst.msk [vmem:[#allocation2 + $0x8] sm:$0xff] %vm232, %v267
      %vm271 = vcmask 25600
      %272 = vst.msk [vmem:[#allocation2 + $0x10] sm:$0x3] %vm271, %v268
      %s273 = scalar_lea.vmem [#allocation2], 360
      %v274 = vld [vmem:[%s273] sm:$0xff]
      %v275 = vld [vmem:[%s273 + $0x8] sm:$0xff]
      %v276 = vld [vmem:[%s273 + $0x10] sm:$0x3]
      %s277 = scalar_lea.vmem [#allocation2], 408
      %278 = vst.msk [vmem:[%s277] sm:$0xff] %vm232, %v274
      %279 = vst.msk [vmem:[%s277 + $0x8] sm:$0xff] %vm232, %v275
      %280 = vst.msk [vmem:[%s277 + $0x10] sm:$0x3] %vm271, %v276
      %v281 = vld [vmem:[#allocation2 + $0x2] sm:$0x1]
      %v282 = vld [vmem:[#allocation2 + $0x1a] sm:$0x1]
      %v283 = vld [vmem:[#allocation2 + $0x32] sm:$0x1]
      %v284 = vld [vmem:[#allocation2 + $0x4a] sm:$0x1]
      %v285 = vld [vmem:[#allocation2 + $0x62] sm:$0x1]
      %v286 = vld [vmem:[#allocation2 + $0x7a] sm:$0x1]
      %v287 = vld [vmem:[#allocation2 + $0x92] sm:$0x1]
      %v288 = vld [vmem:[#allocation2 + $0xaa] sm:$0x1]
      %v289 = vld [vmem:[#allocation2 + $0xc2] sm:$0x1]
      %v290 = vld [vmem:[#allocation2 + $0xda] sm:$0x1]
      %v291 = vld [vmem:[#allocation2 + $0xf2] sm:$0x1]
      %v292 = vld [vmem:[#allocation2 + $0x10a] sm:$0x1]
      %v293 = vld [vmem:[#allocation2 + $0x122] sm:$0x1]
      %v294 = vld [vmem:[#allocation2 + $0x13a] sm:$0x1]
      %v295 = vld [vmem:[#allocation2 + $0x152] sm:$0x1]
      %v296 = vld [vmem:[#allocation2 + $0x16a] sm:$0x1]
      %v297 = vld [vmem:[#allocation2 + $0x182] sm:$0x1]
      %v298 = vld [vmem:[#allocation2 + $0x19a] sm:$0x1]
      %vm299 = vcmask 24576
      %300 = vst.msk [vmem:[#allocation2] sm:$0x1] %vm299, %v281
      %301 = vst.msk [vmem:[#allocation2 + $0x18] sm:$0x1] %vm299, %v282
      %302 = vst.msk [vmem:[#allocation2 + $0x30] sm:$0x1] %vm299, %v283
      %303 = vst.msk [vmem:[#allocation2 + $0x48] sm:$0x1] %vm299, %v284
      %304 = vst.msk [vmem:[#allocation2 + $0x60] sm:$0x1] %vm299, %v285
      %305 = vst.msk [vmem:[#allocation2 + $0x78] sm:$0x1] %vm299, %v286
      %306 = vst.msk [vmem:[#allocation2 + $0x90] sm:$0x1] %vm299, %v287
      %307 = vst.msk [vmem:[#allocation2 + $0xa8] sm:$0x1] %vm299, %v288
      %308 = vst.msk [vmem:[#allocation2 + $0xc0] sm:$0x1] %vm299, %v289
      %309 = vst.msk [vmem:[#allocation2 + $0xd8] sm:$0x1] %vm299, %v290
      %310 = vst.msk [vmem:[#allocation2 + $0xf0] sm:$0x1] %vm299, %v291
      %311 = vst.msk [vmem:[#allocation2 + $0x108] sm:$0x1] %vm299, %v292
      %312 = vst.msk [vmem:[#allocation2 + $0x120] sm:$0x1] %vm299, %v293
      %313 = vst.msk [vmem:[#allocation2 + $0x138] sm:$0x1] %vm299, %v294
      %314 = vst.msk [vmem:[#allocation2 + $0x150] sm:$0x1] %vm299, %v295
      %315 = vst.msk [vmem:[#allocation2 + $0x168] sm:$0x1] %vm299, %v296
      %316 = vst.msk [vmem:[#allocation2 + $0x180] sm:$0x1] %vm299, %v297
      %317 = vst.msk [vmem:[#allocation2 + $0x198] sm:$0x1] %vm299, %v298
      %v318 = vld [vmem:[#allocation2 + $0xf] sm:$0x1]
      %v319 = vld [vmem:[#allocation2 + $0x27] sm:$0x1]
      %v320 = vld [vmem:[#allocation2 + $0x3f] sm:$0x1]
      %v321 = vld [vmem:[#allocation2 + $0x57] sm:$0x1]
      %v322 = vld [vmem:[#allocation2 + $0x6f] sm:$0x1]
      %v323 = vld [vmem:[#allocation2 + $0x87] sm:$0x1]
      %v324 = vld [vmem:[#allocation2 + $0x9f] sm:$0x1]
      %v325 = vld [vmem:[#allocation2 + $0xb7] sm:$0x1]
      %v326 = vld [vmem:[#allocation2 + $0xcf] sm:$0x1]
      %v327 = vld [vmem:[#allocation2 + $0xe7] sm:$0x1]
      %v328 = vld [vmem:[#allocation2 + $0xff] sm:$0x1]
      %v329 = vld [vmem:[#allocation2 + $0x117] sm:$0x1]
      %v330 = vld [vmem:[#allocation2 + $0x12f] sm:$0x1]
      %v331 = vld [vmem:[#allocation2 + $0x147] sm:$0x1]
      %v332 = vld [vmem:[#allocation2 + $0x15f] sm:$0x1]
      %v333 = vld [vmem:[#allocation2 + $0x177] sm:$0x1]
      %v334 = vld [vmem:[#allocation2 + $0x18f] sm:$0x1]
      %v335 = vld [vmem:[#allocation2 + $0x1a7] sm:$0x1]
      %336 = vst.msk [vmem:[#allocation2 + $0x11] sm:$0x1] %vm299, %v318
      %337 = vst.msk [vmem:[#allocation2 + $0x29] sm:$0x1] %vm299, %v319
      %338 = vst.msk [vmem:[#allocation2 + $0x41] sm:$0x1] %vm299, %v320
      %339 = vst.msk [vmem:[#allocation2 + $0x59] sm:$0x1] %vm299, %v321
      %340 = vst.msk [vmem:[#allocation2 + $0x71] sm:$0x1] %vm299, %v322
      %341 = vst.msk [vmem:[#allocation2 + $0x89] sm:$0x1] %vm299, %v323
      %342 = vst.msk [vmem:[#allocation2 + $0xa1] sm:$0x1] %vm299, %v324
      %343 = vst.msk [vmem:[#allocation2 + $0xb9] sm:$0x1] %vm299, %v325
      %344 = vst.msk [vmem:[#allocation2 + $0xd1] sm:$0x1] %vm299, %v326
      %345 = vst.msk [vmem:[#allocation2 + $0xe9] sm:$0x1] %vm299, %v327
      %346 = vst.msk [vmem:[#allocation2 + $0x101] sm:$0x1] %vm299, %v328
      %347 = vst.msk [vmem:[#allocation2 + $0x119] sm:$0x1] %vm299, %v329
      %348 = vst.msk [vmem:[#allocation2 + $0x131] sm:$0x1] %vm299, %v330
      %349 = vst.msk [vmem:[#allocation2 + $0x149] sm:$0x1] %vm299, %v331
      %350 = vst.msk [vmem:[#allocation2 + $0x161] sm:$0x1] %vm299, %v332
      %351 = vst.msk [vmem:[#allocation2 + $0x179] sm:$0x1] %vm299, %v333
      %352 = vst.msk [vmem:[#allocation2 + $0x191] sm:$0x1] %vm299, %v334
      %353 = vst.msk [vmem:[#allocation2 + $0x1a9] sm:$0x1] %vm299, %v335
      %v354 = vld [vmem:[#allocation2] sm:$0xff]
      %v355 = vld [vmem:[#allocation2 + $0x8] sm:$0xff]
      %v356 = vld [vmem:[#allocation2 + $0x10] sm:$0x3]
      %v357 = vld [vmem:[#allocation2 + $0x18] sm:$0xff]
      %v358 = vld [vmem:[#allocation2 + $0x20] sm:$0xff]
      %v359 = vld [vmem:[#allocation2 + $0x28] sm:$0x3]
      %v360 = vld [vmem:[#allocation2 + $0x30] sm:$0xff]
      %v361 = vld [vmem:[#allocation2 + $0x38] sm:$0xff]
      %v362 = vld [vmem:[#allocation2 + $0x40] sm:$0x3]
      %v363 = vld [vmem:[#allocation2 + $0x48] sm:$0xff]
      %v364 = vld [vmem:[#allocation2 + $0x50] sm:$0xff]
      %v365 = vld [vmem:[#allocation2 + $0x58] sm:$0x3]
      %v366 = vld [vmem:[#allocation2 + $0x60] sm:$0xff]
      %v367 = vld [vmem:[#allocation2 + $0x68] sm:$0xff]
      %v368 = vld [vmem:[#allocation2 + $0x70] sm:$0x3]
      %v369 = vld [vmem:[#allocation2 + $0x78] sm:$0xff]
      %v370 = vld [vmem:[#allocation2 + $0x80] sm:$0xff]
      %v371 = vld [vmem:[#allocation2 + $0x88] sm:$0x3]
      %v372 = vld [vmem:[#allocation2 + $0x90] sm:$0xff]
      %v373 = vld [vmem:[#allocation2 + $0x98] sm:$0xff]
      %v374 = vld [vmem:[#allocation2 + $0xa0] sm:$0x3]
      %v375 = vld [vmem:[#allocation2 + $0xa8] sm:$0xff]
      %v376 = vld [vmem:[#allocation2 + $0xb0] sm:$0xff]
      %v377 = vld [vmem:[#allocation2 + $0xb8] sm:$0x3]
      %v378 = vld [vmem:[#allocation2 + $0xc0] sm:$0xff]
      %v379 = vld [vmem:[#allocation2 + $0xc8] sm:$0xff]
      %v380 = vld [vmem:[#allocation2 + $0xd0] sm:$0x3]
      %v381 = vld [vmem:[#allocation2 + $0xd8] sm:$0xff]
      %v382 = vld [vmem:[#allocation2 + $0xe0] sm:$0xff]
      %v383 = vld [vmem:[#allocation2 + $0xe8] sm:$0x3]
      %v384 = vld [vmem:[#allocation2 + $0xf0] sm:$0xff]
      %v385 = vld [vmem:[#allocation2 + $0xf8] sm:$0xff]
      %v386 = vld [vmem:[#allocation2 + $0x100] sm:$0x3]
      %v387 = vld [vmem:[#allocation2 + $0x108] sm:$0xff]
      %v388 = vld [vmem:[#allocation2 + $0x110] sm:$0xff]
      %v389 = vld [vmem:[#allocation2 + $0x118] sm:$0x3]
      %v390 = vld [vmem:[#allocation2 + $0x120] sm:$0xff]
      %v391 = vld [vmem:[#allocation2 + $0x128] sm:$0xff]
      %v392 = vld [vmem:[#allocation2 + $0x130] sm:$0x3]
      %v393 = vld [vmem:[#allocation2 + $0x138] sm:$0xff]
      %v394 = vld [vmem:[#allocation2 + $0x140] sm:$0xff]
      %v395 = vld [vmem:[#allocation2 + $0x148] sm:$0x3]
      %v396 = vld [vmem:[#allocation2 + $0x150] sm:$0xff]
      %v397 = vld [vmem:[#allocation2 + $0x158] sm:$0xff]
      %v398 = vld [vmem:[#allocation2 + $0x160] sm:$0x3]
      %v399 = vld [vmem:[#allocation2 + $0x168] sm:$0xff]
      %v400 = vld [vmem:[#allocation2 + $0x170] sm:$0xff]
      %v401 = vld [vmem:[#allocation2 + $0x178] sm:$0x3]
      %v402 = vld [vmem:[#allocation2 + $0x180] sm:$0xff]
      %v403 = vld [vmem:[#allocation2 + $0x188] sm:$0xff]
      %v404 = vld [vmem:[#allocation2 + $0x190] sm:$0x3]
      %v405 = vld [vmem:[#allocation2 + $0x198] sm:$0xff]
      %v406 = vld [vmem:[#allocation2 + $0x1a0] sm:$0xff]
      %v407 = vld [vmem:[#allocation2 + $0x1a8] sm:$0x3]
      %v408 = vpack.c.bf16 %v355, %v354
      %v409 = vpack.c.bf16 %v356, %v356
      %v410 = vpack.c.bf16 %v358, %v357
      %v411 = vpack.c.bf16 %v359, %v359
      %v412 = vpack.c.bf16 %v361, %v360
      %v413 = vpack.c.bf16 %v362, %v362
      %v414 = vpack.c.bf16 %v364, %v363
      %v415 = vpack.c.bf16 %v365, %v365
      %v416 = vpack.c.bf16 %v367, %v366
      %v417 = vpack.c.bf16 %v368, %v368
      %v418 = vpack.c.bf16 %v370, %v369
      %v419 = vpack.c.bf16 %v371, %v371
      %v420 = vpack.c.bf16 %v373, %v372
      %v421 = vpack.c.bf16 %v374, %v374
      %v422 = vpack.c.bf16 %v376, %v375
      %v423 = vpack.c.bf16 %v377, %v377
      %v424 = vpack.c.bf16 %v379, %v378
      %v425 = vpack.c.bf16 %v380, %v380
      %v426 = vpack.c.bf16 %v382, %v381
      %v427 = vpack.c.bf16 %v383, %v383
      %v428 = vpack.c.bf16 %v385, %v384
      %v429 = vpack.c.bf16 %v386, %v386
      %v430 = vpack.c.bf16 %v388, %v387
      %v431 = vpack.c.bf16 %v389, %v389
      %v432 = vpack.c.bf16 %v391, %v390
      %v433 = vpack.c.bf16 %v392, %v392
      %v434 = vpack.c.bf16 %v394, %v393
      %v435 = vpack.c.bf16 %v395, %v395
      %v436 = vpack.c.bf16 %v397, %v396
      %v437 = vpack.c.bf16 %v398, %v398
      %v438 = vpack.c.bf16 %v400, %v399
      %v439 = vpack.c.bf16 %v401, %v401
      %v440 = vpack.c.bf16 %v403, %v402
      %v441 = vpack.c.bf16 %v404, %v404
      %v442 = vpack.c.bf16 %v406, %v405
      %v443 = vpack.c.bf16 %v407, %v407
      %v480 = vunpack.c.l.b16 %v408
      %v481 = vunpack.c.h.b16 %v408
      %v482 = vunpack.c.l.b16 %v409
      %v483 = vunpack.c.l.b16 %v410
      %v484 = vunpack.c.h.b16 %v410
      %v485 = vunpack.c.l.b16 %v411
      %v486 = vunpack.c.l.b16 %v412
      %v487 = vunpack.c.h.b16 %v412
      %v488 = vunpack.c.l.b16 %v413
      %v489 = vunpack.c.l.b16 %v414
      %v490 = vunpack.c.h.b16 %v414
      %v491 = vunpack.c.l.b16 %v415
      %v492 = vunpack.c.l.b16 %v416
      %v493 = vunpack.c.h.b16 %v416
      %v494 = vunpack.c.l.b16 %v417
      %v495 = vunpack.c.l.b16 %v418
      %v496 = vunpack.c.h.b16 %v418
      %v497 = vunpack.c.l.b16 %v419
      %v498 = vunpack.c.l.b16 %v420
      %v499 = vunpack.c.h.b16 %v420
      %v500 = vunpack.c.l.b16 %v421
      %v501 = vunpack.c.l.b16 %v422
      %v502 = vunpack.c.h.b16 %v422
      %v503 = vunpack.c.l.b16 %v423
      %v504 = vunpack.c.l.b16 %v424
      %v505 = vunpack.c.h.b16 %v424
      %v506 = vunpack.c.l.b16 %v425
      %v507 = vunpack.c.l.b16 %v426
      %v508 = vunpack.c.h.b16 %v426
      %v509 = vunpack.c.l.b16 %v427
      %v510 = vunpack.c.l.b16 %v428
      %v511 = vunpack.c.h.b16 %v428
      %v512 = vunpack.c.l.b16 %v429
      %v513 = vunpack.c.l.b16 %v430
      %v514 = vunpack.c.h.b16 %v430
      %v515 = vunpack.c.l.b16 %v431
      %v516 = vunpack.c.l.b16 %v432
      %v517 = vunpack.c.h.b16 %v432
      %v518 = vunpack.c.l.b16 %v433
      %v519 = vunpack.c.l.b16 %v434
      %v520 = vunpack.c.h.b16 %v434
      %v521 = vunpack.c.l.b16 %v435
      %v522 = vunpack.c.l.b16 %v436
      %v523 = vunpack.c.h.b16 %v436
      %v524 = vunpack.c.l.b16 %v437
      %v525 = vunpack.c.l.b16 %v438
      %v526 = vunpack.c.h.b16 %v438
      %v527 = vunpack.c.l.b16 %v439
      %v528 = vunpack.c.l.b16 %v440
      %v529 = vunpack.c.h.b16 %v440
      %v530 = vunpack.c.l.b16 %v441
      %v531 = vunpack.c.l.b16 %v442
      %v532 = vunpack.c.h.b16 %v442
      %v533 = vunpack.c.l.b16 %v443
      %v534 = vpack.c.b16 %v480, %v480
      %v535 = vpack.c.b16 %v481, %v481
      %v536 = vpack.c.b16 %v482, %v482
      %v537 = vpack.c.b16 %v483, %v483
      %v538 = vpack.c.b16 %v484, %v484
      %v539 = vpack.c.b16 %v485, %v485
      %v540 = vpack.c.b16 %v486, %v486
      %v541 = vpack.c.b16 %v487, %v487
      %v542 = vpack.c.b16 %v488, %v488
      %v543 = vpack.c.b16 %v489, %v489
      %v544 = vpack.c.b16 %v490, %v490
      %v545 = vpack.c.b16 %v491, %v491
      %v546 = vpack.c.b16 %v492, %v492
      %v547 = vpack.c.b16 %v493, %v493
      %v548 = vpack.c.b16 %v494, %v494
      %v549 = vpack.c.b16 %v495, %v495
      %v550 = vpack.c.b16 %v496, %v496
      %v551 = vpack.c.b16 %v497, %v497
      %v552 = vpack.c.b16 %v498, %v498
      %v553 = vpack.c.b16 %v499, %v499
      %v554 = vpack.c.b16 %v500, %v500
      %v555 = vpack.c.b16 %v501, %v501
      %v556 = vpack.c.b16 %v502, %v502
      %v557 = vpack.c.b16 %v503, %v503
      %v558 = vpack.c.b16 %v504, %v504
      %v559 = vpack.c.b16 %v505, %v505
      %v560 = vpack.c.b16 %v506, %v506
      %v561 = vpack.c.b16 %v507, %v507
      %v562 = vpack.c.b16 %v508, %v508
      %v563 = vpack.c.b16 %v509, %v509
      %v564 = vpack.c.b16 %v510, %v510
      %v565 = vpack.c.b16 %v511, %v511
      %v566 = vpack.c.b16 %v512, %v512
      %v567 = vpack.c.b16 %v513, %v513
      %v568 = vpack.c.b16 %v514, %v514
      %v569 = vpack.c.b16 %v515, %v515
      %v570 = vpack.c.b16 %v516, %v516
      %v571 = vpack.c.b16 %v517, %v517
      %v572 = vpack.c.b16 %v518, %v518
      %v573 = vpack.c.b16 %v519, %v519
      %v574 = vpack.c.b16 %v520, %v520
      %v575 = vpack.c.b16 %v521, %v521
      %v576 = vpack.c.b16 %v522, %v522
      %v577 = vpack.c.b16 %v523, %v523
      %v578 = vpack.c.b16 %v524, %v524
      %v579 = vpack.c.b16 %v525, %v525
      %v580 = vpack.c.b16 %v526, %v526
      %v581 = vpack.c.b16 %v527, %v527
      %v582 = vpack.c.b16 %v528, %v528
      %v583 = vpack.c.b16 %v529, %v529
      %v584 = vpack.c.b16 %v530, %v530
      %v585 = vpack.c.b16 %v531, %v531
      %v586 = vpack.c.b16 %v532, %v532
      %v587 = vpack.c.b16 %v533, %v533
      %vm642 = vcmask 27648
      %643 = vst.msk [vmem:[#allocation3] sm:$0xf] %vm642, %v534
      %644 = vst.msk [vmem:[#allocation3 + $0x4] sm:$0xf] %vm642, %v535
      %645 = vst.msk [vmem:[#allocation3 + $0x8] sm:$0x1] %vm299, %v536
      %646 = vst.msk [vmem:[#allocation3 + $0xc] sm:$0xf] %vm642, %v537
      %647 = vst.msk [vmem:[#allocation3 + $0x10] sm:$0xf] %vm642, %v538
      %648 = vst.msk [vmem:[#allocation3 + $0x14] sm:$0x1] %vm299, %v539
      %649 = vst.msk [vmem:[#allocation3 + $0x18] sm:$0xf] %vm642, %v540
      %650 = vst.msk [vmem:[#allocation3 + $0x1c] sm:$0xf] %vm642, %v541
      %651 = vst.msk [vmem:[#allocation3 + $0x20] sm:$0x1] %vm299, %v542
      %652 = vst.msk [vmem:[#allocation3 + $0x24] sm:$0xf] %vm642, %v543
      %653 = vst.msk [vmem:[#allocation3 + $0x28] sm:$0xf] %vm642, %v544
      %654 = vst.msk [vmem:[#allocation3 + $0x2c] sm:$0x1] %vm299, %v545
      %655 = vst.msk [vmem:[#allocation3 + $0x30] sm:$0xf] %vm642, %v546
      %656 = vst.msk [vmem:[#allocation3 + $0x34] sm:$0xf] %vm642, %v547
      %657 = vst.msk [vmem:[#allocation3 + $0x38] sm:$0x1] %vm299, %v548
      %658 = vst.msk [vmem:[#allocation3 + $0x3c] sm:$0xf] %vm642, %v549
      %659 = vst.msk [vmem:[#allocation3 + $0x40] sm:$0xf] %vm642, %v550
      %660 = vst.msk [vmem:[#allocation3 + $0x44] sm:$0x1] %vm299, %v551
      %661 = vst.msk [vmem:[#allocation3 + $0x48] sm:$0xf] %vm642, %v552
      %662 = vst.msk [vmem:[#allocation3 + $0x4c] sm:$0xf] %vm642, %v553
      %663 = vst.msk [vmem:[#allocation3 + $0x50] sm:$0x1] %vm299, %v554
      %664 = vst.msk [vmem:[#allocation3 + $0x54] sm:$0xf] %vm642, %v555
      %665 = vst.msk [vmem:[#allocation3 + $0x58] sm:$0xf] %vm642, %v556
      %666 = vst.msk [vmem:[#allocation3 + $0x5c] sm:$0x1] %vm299, %v557
      %667 = vst.msk [vmem:[#allocation3 + $0x60] sm:$0xf] %vm642, %v558
      %668 = vst.msk [vmem:[#allocation3 + $0x64] sm:$0xf] %vm642, %v559
      %669 = vst.msk [vmem:[#allocation3 + $0x68] sm:$0x1] %vm299, %v560
      %670 = vst.msk [vmem:[#allocation3 + $0x6c] sm:$0xf] %vm642, %v561
      %671 = vst.msk [vmem:[#allocation3 + $0x70] sm:$0xf] %vm642, %v562
      %672 = vst.msk [vmem:[#allocation3 + $0x74] sm:$0x1] %vm299, %v563
      %673 = vst.msk [vmem:[#allocation3 + $0x78] sm:$0xf] %vm642, %v564
      %674 = vst.msk [vmem:[#allocation3 + $0x7c] sm:$0xf] %vm642, %v565
      %675 = vst.msk [vmem:[#allocation3 + $0x80] sm:$0x1] %vm299, %v566
      %676 = vst.msk [vmem:[#allocation3 + $0x84] sm:$0xf] %vm642, %v567
      %677 = vst.msk [vmem:[#allocation3 + $0x88] sm:$0xf] %vm642, %v568
      %678 = vst.msk [vmem:[#allocation3 + $0x8c] sm:$0x1] %vm299, %v569
      %679 = vst.msk [vmem:[#allocation3 + $0x90] sm:$0xf] %vm642, %v570
      %680 = vst.msk [vmem:[#allocation3 + $0x94] sm:$0xf] %vm642, %v571
      %681 = vst.msk [vmem:[#allocation3 + $0x98] sm:$0x1] %vm299, %v572
      %682 = vst.msk [vmem:[#allocation3 + $0x9c] sm:$0xf] %vm642, %v573
      %683 = vst.msk [vmem:[#allocation3 + $0xa0] sm:$0xf] %vm642, %v574
      %684 = vst.msk [vmem:[#allocation3 + $0xa4] sm:$0x1] %vm299, %v575
      %685 = vst.msk [vmem:[#allocation3 + $0xa8] sm:$0xf] %vm642, %v576
      %686 = vst.msk [vmem:[#allocation3 + $0xac] sm:$0xf] %vm642, %v577
      %687 = vst.msk [vmem:[#allocation3 + $0xb0] sm:$0x1] %vm299, %v578
      %688 = vst.msk [vmem:[#allocation3 + $0xb4] sm:$0xf] %vm642, %v579
      %689 = vst.msk [vmem:[#allocation3 + $0xb8] sm:$0xf] %vm642, %v580
      %690 = vst.msk [vmem:[#allocation3 + $0xbc] sm:$0x1] %vm299, %v581
      %691 = vst.msk [vmem:[#allocation3 + $0xc0] sm:$0xf] %vm642, %v582
      %692 = vst.msk [vmem:[#allocation3 + $0xc4] sm:$0xf] %vm642, %v583
      %693 = vst.msk [vmem:[#allocation3 + $0xc8] sm:$0x1] %vm299, %v584
      %694 = vst.msk [vmem:[#allocation3 + $0xcc] sm:$0xf] %vm642, %v585
      %695 = vst.msk [vmem:[#allocation3 + $0xd0] sm:$0xf] %vm642, %v586
      %696 = vst.msk [vmem:[#allocation3 + $0xd4] sm:$0x1] %vm299, %v587
      %v697 = vld [vmem:[#allocation3] sm:$0xf]
      %v698 = vld [vmem:[#allocation3 + $0x4] sm:$0xf]
      %v699 = vld [vmem:[#allocation3 + $0xc] sm:$0xf]
      %v700 = vld [vmem:[#allocation3 + $0x10] sm:$0xf]
      %v701 = vld [vmem:[#allocation3 + $0x18] sm:$0xf]
      %v702 = vld [vmem:[#allocation3 + $0x1c] sm:$0xf]
      %v703 = vld [vmem:[#allocation3 + $0x24] sm:$0xf]
      %v704 = vld [vmem:[#allocation3 + $0x28] sm:$0xf]
      %v705 = vld [vmem:[#allocation3 + $0x30] sm:$0xf]
      %v706 = vld [vmem:[#allocation3 + $0x34] sm:$0xf]
      %v707 = vld [vmem:[#allocation3 + $0x3c] sm:$0xf]
      %v708 = vld [vmem:[#allocation3 + $0x40] sm:$0xf]
      %v709 = vld [vmem:[#allocation3 + $0x48] sm:$0xf]
      %v710 = vld [vmem:[#allocation3 + $0x4c] sm:$0xf]
      %v711 = vld [vmem:[#allocation3 + $0x54] sm:$0xf]
      %v712 = vld [vmem:[#allocation3 + $0x58] sm:$0xf]
      %v713 = vld [vmem:[#allocation3 + $0x60] sm:$0xf]
      %v714 = vld [vmem:[#allocation3 + $0x64] sm:$0xf]
      %v715 = vld [vmem:[#allocation3 + $0x6c] sm:$0xf]
      %v716 = vld [vmem:[#allocation3 + $0x70] sm:$0xf]
      %v717 = vld [vmem:[#allocation3 + $0x78] sm:$0xf]
      %v718 = vld [vmem:[#allocation3 + $0x7c] sm:$0xf]
      %v719 = vld [vmem:[#allocation3 + $0x84] sm:$0xf]
      %v720 = vld [vmem:[#allocation3 + $0x88] sm:$0xf]
      %v721 = vld [vmem:[#allocation3 + $0x90] sm:$0xf]
      %v722 = vld [vmem:[#allocation3 + $0x94] sm:$0xf]
      %v723 = vld [vmem:[#allocation3 + $0x9c] sm:$0xf]
      %v724 = vld [vmem:[#allocation3 + $0xa0] sm:$0xf]
      %v725 = vld [vmem:[#allocation3 + $0xa8] sm:$0xf]
      %v726 = vld [vmem:[#allocation3 + $0xac] sm:$0xf]
      %v727 = vld [vmem:[#allocation3 + $0xb4] sm:$0xf]
      %v728 = vld [vmem:[#allocation3 + $0xb8] sm:$0xf]
      %v729 = vld [vmem:[%s1] sm:$0x3]
      %v730 = vld [vmem:[#allocation3 + $0x8] sm:$0x1]
      %v731 = vld [vmem:[#allocation3 + $0x14] sm:$0x1]
      %v732 = vld [vmem:[#allocation3 + $0x20] sm:$0x1]
      %v733 = vld [vmem:[#allocation3 + $0x2c] sm:$0x1]
      %v734 = vld [vmem:[#allocation3 + $0x38] sm:$0x1]
      %v735 = vld [vmem:[#allocation3 + $0x44] sm:$0x1]
      %v736 = vld [vmem:[#allocation3 + $0x50] sm:$0x1]
      %v737 = vld [vmem:[#allocation3 + $0x5c] sm:$0x1]
      %v738 = vld [vmem:[#allocation3 + $0x68] sm:$0x1]
      %v739 = vld [vmem:[#allocation3 + $0x74] sm:$0x1]
      %v740 = vld [vmem:[#allocation3 + $0x80] sm:$0x1]
      %v741 = vld [vmem:[#allocation3 + $0x8c] sm:$0x1]
      %v742 = vld [vmem:[#allocation3 + $0x98] sm:$0x1]
      %v743 = vld [vmem:[#allocation3 + $0xa4] sm:$0x1]
      %v744 = vld [vmem:[#allocation3 + $0xb0] sm:$0x1]
      %v745 = vld [vmem:[#allocation3 + $0xbc] sm:$0x1]
      %vm746 = vsmask.f32 3328
      %vm747 = vsmask.f32 7440
      %vm748 = vmor %vm746, %vm747
      %v750 = vshrl.u32 %v697, 16
      %v752 = vrot.slane %v750, 4
      %v753 = vshll.u32 %v697, 16
      %v755 = vrot.slane %v753, 5
      %v756 = vor.u32 %v752, %v755
      %v757 = vrot.slane %v756, 4
      %v759 = vshll.u32 %v698, 16
      %v761 = vrot.slane %v759, 5
      %v762 = vsel %vm748, %v757, %v761
      %v763 = vshrl.u32 %v698, 16
      %v765 = vrot.slane %v763, 4
      %v766 = vor.u32 %v765, %v761
      %v767 = vrot.slane %v766, 4
      %v769 = vshll.u32 %v730, 16
      %v771 = vrot.slane %v769, 5
      %v772 = vsel %vm748, %v767, %v771
      %v774 = vshrl.u32 %v699, 16
      %v776 = vrot.slane %v774, 4
      %v777 = vshll.u32 %v699, 16
      %v779 = vrot.slane %v777, 5
      %v780 = vor.u32 %v776, %v779
      %v781 = vrot.slane %v780, 4
      %v783 = vshll.u32 %v700, 16
      %v785 = vrot.slane %v783, 5
      %v786 = vsel %vm748, %v781, %v785
      %v787 = vshrl.u32 %v700, 16
      %v789 = vrot.slane %v787, 4
      %v790 = vor.u32 %v789, %v785
      %v791 = vrot.slane %v790, 4
      %v793 = vshll.u32 %v731, 16
      %v795 = vrot.slane %v793, 5
      %v796 = vsel %vm748, %v791, %v795
      %v798 = vshrl.u32 %v701, 16
      %v800 = vrot.slane %v798, 4
      %v801 = vshll.u32 %v701, 16
      %v803 = vrot.slane %v801, 5
      %v804 = vor.u32 %v800, %v803
      %v805 = vrot.slane %v804, 4
      %v807 = vshll.u32 %v702, 16
      %v809 = vrot.slane %v807, 5
      %v810 = vsel %vm748, %v805, %v809
      %v811 = vshrl.u32 %v702, 16
      %v813 = vrot.slane %v811, 4
      %v814 = vor.u32 %v813, %v809
      %v815 = vrot.slane %v814, 4
      %v817 = vshll.u32 %v732, 16
      %v819 = vrot.slane %v817, 5
      %v820 = vsel %vm748, %v815, %v819
      %v822 = vshrl.u32 %v703, 16
      %v824 = vrot.slane %v822, 4
      %v825 = vshll.u32 %v703, 16
      %v827 = vrot.slane %v825, 5
      %v828 = vor.u32 %v824, %v827
      %v829 = vrot.slane %v828, 4
      %v831 = vshll.u32 %v704, 16
      %v833 = vrot.slane %v831, 5
      %v834 = vsel %vm748, %v829, %v833
      %v835 = vshrl.u32 %v704, 16
      %v837 = vrot.slane %v835, 4
      %v838 = vor.u32 %v837, %v833
      %v839 = vrot.slane %v838, 4
      %v841 = vshll.u32 %v733, 16
      %v843 = vrot.slane %v841, 5
      %v844 = vsel %vm748, %v839, %v843
      %v846 = vshrl.u32 %v705, 16
      %v848 = vrot.slane %v846, 4
      %v849 = vshll.u32 %v705, 16
      %v851 = vrot.slane %v849, 5
      %v852 = vor.u32 %v848, %v851
      %v853 = vrot.slane %v852, 4
      %v855 = vshll.u32 %v706, 16
      %v857 = vrot.slane %v855, 5
      %v858 = vsel %vm748, %v853, %v857
      %v859 = vshrl.u32 %v706, 16
      %v861 = vrot.slane %v859, 4
      %v862 = vor.u32 %v861, %v857
      %v863 = vrot.slane %v862, 4
      %v865 = vshll.u32 %v734, 16
      %v867 = vrot.slane %v865, 5
      %v868 = vsel %vm748, %v863, %v867
      %v870 = vshrl.u32 %v707, 16
      %v872 = vrot.slane %v870, 4
      %v873 = vshll.u32 %v707, 16
      %v875 = vrot.slane %v873, 5
      %v876 = vor.u32 %v872, %v875
      %v877 = vrot.slane %v876, 4
      %v879 = vshll.u32 %v708, 16
      %v881 = vrot.slane %v879, 5
      %v882 = vsel %vm748, %v877, %v881
      %v883 = vshrl.u32 %v708, 16
      %v885 = vrot.slane %v883, 4
      %v886 = vor.u32 %v885, %v881
      %v887 = vrot.slane %v886, 4
      %v889 = vshll.u32 %v735, 16
      %v891 = vrot.slane %v889, 5
      %v892 = vsel %vm748, %v887, %v891
      %v894 = vshrl.u32 %v709, 16
      %v896 = vrot.slane %v894, 4
      %v897 = vshll.u32 %v709, 16
      %v899 = vrot.slane %v897, 5
      %v900 = vor.u32 %v896, %v899
      %v901 = vrot.slane %v900, 4
      %v903 = vshll.u32 %v710, 16
      %v905 = vrot.slane %v903, 5
      %v906 = vsel %vm748, %v901, %v905
      %v907 = vshrl.u32 %v710, 16
      %v909 = vrot.slane %v907, 4
      %v910 = vor.u32 %v909, %v905
      %v911 = vrot.slane %v910, 4
      %v913 = vshll.u32 %v736, 16
      %v915 = vrot.slane %v913, 5
      %v916 = vsel %vm748, %v911, %v915
      %v918 = vshrl.u32 %v711, 16
      %v920 = vrot.slane %v918, 4
      %v921 = vshll.u32 %v711, 16
      %v923 = vrot.slane %v921, 5
      %v924 = vor.u32 %v920, %v923
      %v925 = vrot.slane %v924, 4
      %v927 = vshll.u32 %v712, 16
      %v929 = vrot.slane %v927, 5
      %v930 = vsel %vm748, %v925, %v929
      %v931 = vshrl.u32 %v712, 16
      %v933 = vrot.slane %v931, 4
      %v934 = vor.u32 %v933, %v929
      %v935 = vrot.slane %v934, 4
      %v937 = vshll.u32 %v737, 16
      %v939 = vrot.slane %v937, 5
      %v940 = vsel %vm748, %v935, %v939
      %v942 = vshrl.u32 %v713, 16
      %v944 = vrot.slane %v942, 4
      %v945 = vshll.u32 %v713, 16
      %v947 = vrot.slane %v945, 5
      %v948 = vor.u32 %v944, %v947
      %v949 = vrot.slane %v948, 4
      %v951 = vshll.u32 %v714, 16
      %v953 = vrot.slane %v951, 5
      %v954 = vsel %vm748, %v949, %v953
      %v955 = vshrl.u32 %v714, 16
      %v957 = vrot.slane %v955, 4
      %v958 = vor.u32 %v957, %v953
      %v959 = vrot.slane %v958, 4
      %v961 = vshll.u32 %v738, 16
      %v963 = vrot.slane %v961, 5
      %v964 = vsel %vm748, %v959, %v963
      %v966 = vshrl.u32 %v715, 16
      %v968 = vrot.slane %v966, 4
      %v969 = vshll.u32 %v715, 16
      %v971 = vrot.slane %v969, 5
      %v972 = vor.u32 %v968, %v971
      %v973 = vrot.slane %v972, 4
      %v975 = vshll.u32 %v716, 16
      %v977 = vrot.slane %v975, 5
      %v978 = vsel %vm748, %v973, %v977
      %v979 = vshrl.u32 %v716, 16
      %v981 = vrot.slane %v979, 4
      %v982 = vor.u32 %v981, %v977
      %v983 = vrot.slane %v982, 4
      %v985 = vshll.u32 %v739, 16
      %v987 = vrot.slane %v985, 5
      %v988 = vsel %vm748, %v983, %v987
      %v990 = vshrl.u32 %v717, 16
      %v992 = vrot.slane %v990, 4
      %v993 = vshll.u32 %v717, 16
      %v995 = vrot.slane %v993, 5
      %v996 = vor.u32 %v992, %v995
      %v997 = vrot.slane %v996, 4
      %v999 = vshll.u32 %v718, 16
      %v1001 = vrot.slane %v999, 5
      %v1002 = vsel %vm748, %v997, %v1001
      %v1003 = vshrl.u32 %v718, 16
      %v1005 = vrot.slane %v1003, 4
      %v1006 = vor.u32 %v1005, %v1001
      %v1007 = vrot.slane %v1006, 4
      %v1009 = vshll.u32 %v740, 16
      %v1011 = vrot.slane %v1009, 5
      %v1012 = vsel %vm748, %v1007, %v1011
      %v1014 = vshrl.u32 %v719, 16
      %v1016 = vrot.slane %v1014, 4
      %v1017 = vshll.u32 %v719, 16
      %v1019 = vrot.slane %v1017, 5
      %v1020 = vor.u32 %v1016, %v1019
      %v1021 = vrot.slane %v1020, 4
      %v1023 = vshll.u32 %v720, 16
      %v1025 = vrot.slane %v1023, 5
      %v1026 = vsel %vm748, %v1021, %v1025
      %v1027 = vshrl.u32 %v720, 16
      %v1029 = vrot.slane %v1027, 4
      %v1030 = vor.u32 %v1029, %v1025
      %v1031 = vrot.slane %v1030, 4
      %v1033 = vshll.u32 %v741, 16
      %v1035 = vrot.slane %v1033, 5
      %v1036 = vsel %vm748, %v1031, %v1035
      %v1038 = vshrl.u32 %v721, 16
      %v1040 = vrot.slane %v1038, 4
      %v1041 = vshll.u32 %v721, 16
      %v1043 = vrot.slane %v1041, 5
      %v1044 = vor.u32 %v1040, %v1043
      %v1045 = vrot.slane %v1044, 4
      %v1047 = vshll.u32 %v722, 16
      %v1049 = vrot.slane %v1047, 5
      %v1050 = vsel %vm748, %v1045, %v1049
      %v1051 = vshrl.u32 %v722, 16
      %v1053 = vrot.slane %v1051, 4
      %v1054 = vor.u32 %v1053, %v1049
      %v1055 = vrot.slane %v1054, 4
      %v1057 = vshll.u32 %v742, 16
      %v1059 = vrot.slane %v1057, 5
      %v1060 = vsel %vm748, %v1055, %v1059
      %v1062 = vshrl.u32 %v723, 16
      %v1064 = vrot.slane %v1062, 4
      %v1065 = vshll.u32 %v723, 16
      %v1067 = vrot.slane %v1065, 5
      %v1068 = vor.u32 %v1064, %v1067
      %v1069 = vrot.slane %v1068, 4
      %v1071 = vshll.u32 %v724, 16
      %v1073 = vrot.slane %v1071, 5
      %v1074 = vsel %vm748, %v1069, %v1073
      %v1075 = vshrl.u32 %v724, 16
      %v1077 = vrot.slane %v1075, 4
      %v1078 = vor.u32 %v1077, %v1073
      %v1079 = vrot.slane %v1078, 4
      %v1081 = vshll.u32 %v743, 16
      %v1083 = vrot.slane %v1081, 5
      %v1084 = vsel %vm748, %v1079, %v1083
      %v1086 = vshrl.u32 %v725, 16
      %v1088 = vrot.slane %v1086, 4
      %v1089 = vshll.u32 %v725, 16
      %v1091 = vrot.slane %v1089, 5
      %v1092 = vor.u32 %v1088, %v1091
      %v1093 = vrot.slane %v1092, 4
      %v1095 = vshll.u32 %v726, 16
      %v1097 = vrot.slane %v1095, 5
      %v1098 = vsel %vm748, %v1093, %v1097
      %v1099 = vshrl.u32 %v726, 16
      %v1101 = vrot.slane %v1099, 4
      %v1102 = vor.u32 %v1101, %v1097
      %v1103 = vrot.slane %v1102, 4
      %v1105 = vshll.u32 %v744, 16
      %v1107 = vrot.slane %v1105, 5
      %v1108 = vsel %vm748, %v1103, %v1107
      %v1110 = vshrl.u32 %v727, 16
      %v1112 = vrot.slane %v1110, 4
      %v1113 = vshll.u32 %v727, 16
      %v1115 = vrot.slane %v1113, 5
      %v1116 = vor.u32 %v1112, %v1115
      %v1117 = vrot.slane %v1116, 4
      %v1119 = vshll.u32 %v728, 16
      %v1121 = vrot.slane %v1119, 5
      %v1122 = vsel %vm748, %v1117, %v1121
      %v1123 = vshrl.u32 %v728, 16
      %v1125 = vrot.slane %v1123, 4
      %v1126 = vor.u32 %v1125, %v1121
      %v1127 = vrot.slane %v1126, 4
      %v1129 = vshll.u32 %v745, 16
      %v1131 = vrot.slane %v1129, 5
      %v1132 = vsel %vm748, %v1127, %v1131
      %s1133 = scalar_lea.vmem %s1, 2
      %v1134 = vld [vmem:[%s1133] sm:$0x3]
      %v1135 = vunpack.c.l.b16 %v762
      %v1136 = vunpack.c.l.b16 %v772
      %v1137 = vunpack.c.l.b16 %v786
      %v1138 = vunpack.c.l.b16 %v796
      %v1139 = vunpack.c.l.b16 %v810
      %v1140 = vunpack.c.l.b16 %v820
      %v1141 = vunpack.c.l.b16 %v834
      %v1142 = vunpack.c.l.b16 %v844
      %v1143 = vunpack.c.l.b16 %v858
      %v1144 = vunpack.c.l.b16 %v868
      %v1145 = vunpack.c.l.b16 %v882
      %v1146 = vunpack.c.l.b16 %v892
      %v1147 = vunpack.c.l.b16 %v906
      %v1148 = vunpack.c.l.b16 %v916
      %v1149 = vunpack.c.l.b16 %v930
      %v1150 = vunpack.c.l.b16 %v940
      %v1151 = vunpack.c.l.b16 %v954
      %v1152 = vunpack.c.l.b16 %v964
      %v1153 = vunpack.c.l.b16 %v978
      %v1154 = vunpack.c.l.b16 %v988
      %v1155 = vunpack.c.l.b16 %v1002
      %v1156 = vunpack.c.l.b16 %v1012
      %v1157 = vunpack.c.l.b16 %v1026
      %v1158 = vunpack.c.l.b16 %v1036
      %v1159 = vunpack.c.l.b16 %v1050
      %v1160 = vunpack.c.l.b16 %v1060
      %v1161 = vunpack.c.l.b16 %v1074
      %v1162 = vunpack.c.l.b16 %v1084
      %v1163 = vunpack.c.l.b16 %v1098
      %v1164 = vunpack.c.l.b16 %v1108
      %v1165 = vunpack.c.l.b16 %v1122
      %v1166 = vunpack.c.l.b16 %v1132
      %v1167 = vpack.c.b16 %v1136, %v1135
      %v1168 = vpack.c.b16 %v1138, %v1137
      %v1169 = vpack.c.b16 %v1140, %v1139
      %v1170 = vpack.c.b16 %v1142, %v1141
      %v1171 = vpack.c.b16 %v1144, %v1143
      %v1172 = vpack.c.b16 %v1146, %v1145
      %v1173 = vpack.c.b16 %v1148, %v1147
      %v1174 = vpack.c.b16 %v1150, %v1149
      %v1175 = vpack.c.b16 %v1152, %v1151
      %v1176 = vpack.c.b16 %v1154, %v1153
      %v1177 = vpack.c.b16 %v1156, %v1155
      %v1178 = vpack.c.b16 %v1158, %v1157
      %v1179 = vpack.c.b16 %v1160, %v1159
      %v1180 = vpack.c.b16 %v1162, %v1161
      %v1181 = vpack.c.b16 %v1164, %v1163
      %v1182 = vpack.c.b16 %v1166, %v1165
      %v1184 = vsel %vm232, %v1167, 0
      %v1187 = vsel %vm232, %v1168, 0
      %v1190 = vsel %vm232, %v1169, 0
      %v1193 = vsel %vm232, %v1170, 0
      %v1196 = vsel %vm232, %v1171, 0
      %v1199 = vsel %vm232, %v1172, 0
      %v1202 = vsel %vm232, %v1173, 0
      %v1205 = vsel %vm232, %v1174, 0
      %v1208 = vsel %vm232, %v1175, 0
      %v1211 = vsel %vm232, %v1176, 0
      %v1214 = vsel %vm232, %v1177, 0
      %v1217 = vsel %vm232, %v1178, 0
      %v1220 = vsel %vm232, %v1179, 0
      %v1223 = vsel %vm232, %v1180, 0
      %v1226 = vsel %vm232, %v1181, 0
      %v1229 = vsel %vm232, %v1182, 0
      %vm1231 = vcmask 1041408
      %v1233 = vsel %vm1231, %v1134, 0
      %1235 = vmatprep.subr.bf16.mxu0 0
      %1236 = vmatpush1.bf16.msra.mxu0 0
      %1237 = vmatprep.subr.bf16.mxu0 0
      %1238 = vmatpush1.bf16.msra.mxu0 0
      %1239 = vmatprep.subr.bf16.mxu0 0
      %1240 = vmatpush1.bf16.msra.mxu0 0
      %1241 = vmatprep.subr.bf16.mxu0 0
      %1242 = vmatpush1.bf16.msra.mxu0 0
      %1243 = vmatprep.subr.bf16.mxu0 0
      %1244 = vmatpush1.bf16.msra.mxu0 0
      %1245 = vmatprep.subr.bf16.mxu0 0
      %1246 = vmatpush1.bf16.msra.mxu0 0
      %1247 = vmatprep.subr.bf16.mxu0 0
      %1248 = vmatpush1.bf16.msra.mxu0 0
      %1249 = vmatprep.subr.bf16.mxu0 0
      %1250 = vmatpush1.bf16.msra.mxu0 %v1233
      %1251 = vmatprep.subr.bf16.mxu0 0
      %1252 = vmatpush2.bf16.msra.mxu0 0
      %1253 = vmatprep.subr.bf16.mxu0 0
      %1254 = vmatpush2.bf16.msra.mxu0 0
      %1255 = vmatprep.subr.bf16.mxu0 0
      %1256 = vmatpush2.bf16.msra.mxu0 0
      %1257 = vmatprep.subr.bf16.mxu0 0
      %1258 = vmatpush2.bf16.msra.mxu0 0
      %1259 = vmatprep.subr.bf16.mxu0 0
      %1260 = vmatpush2.bf16.msra.mxu0 0
      %1261 = vmatprep.subr.bf16.mxu0 0
      %1262 = vmatpush2.bf16.msra.mxu0 0
      %1263 = vmatprep.subr.bf16.mxu0 0
      %1264 = vmatpush2.bf16.msra.mxu0 0
      %1265 = vmatprep.subr.bf16.mxu0 0
      %1266 = vmatpush2.bf16.msra.mxu0 0
      %1267 = vmatprep.mubr.bf16.mxu0 0
      %1268 = vmatmul.mubr.bf16.gmra.mxu0 %v1184
      %v1269 = vpop.f32.mrf.mxu0
      %v1270 = vadd.f32 0.0, %v1269
      %v1271 = vpop.f32.mrf.mxu0
      %v1272 = vpop.f32.mrf.mxu0
      %v1273 = vadd.f32 0.0, %v1272
      %v1274 = vpop.f32.mrf.mxu0
      %1275 = vmatprep.mubr.bf16.mxu0 0
      %1276 = vmatmul.mubr.bf16.gmra.mxu0 %v1187
      %v1277 = vpop.f32.mrf.mxu0
      %v1278 = vadd.f32 0.0, %v1277
      %v1279 = vpop.f32.mrf.mxu0
      %v1280 = vpop.f32.mrf.mxu0
      %v1281 = vadd.f32 0.0, %v1280
      %v1282 = vpop.f32.mrf.mxu0
      %1283 = vmatprep.mubr.bf16.mxu0 0
      %1284 = vmatmul.mubr.bf16.gmra.mxu0 %v1190
      %v1285 = vpop.f32.mrf.mxu0
      %v1286 = vadd.f32 0.0, %v1285
      %v1287 = vpop.f32.mrf.mxu0
      %v1288 = vpop.f32.mrf.mxu0
      %v1289 = vadd.f32 0.0, %v1288
      %v1290 = vpop.f32.mrf.mxu0
      %1291 = vmatprep.mubr.bf16.mxu0 0
      %1292 = vmatmul.mubr.bf16.gmra.mxu0 %v1193
      %v1293 = vpop.f32.mrf.mxu0
      %v1294 = vadd.f32 0.0, %v1293
      %v1295 = vpop.f32.mrf.mxu0
      %v1296 = vpop.f32.mrf.mxu0
      %v1297 = vadd.f32 0.0, %v1296
      %v1298 = vpop.f32.mrf.mxu0
      %1299 = vmatprep.mubr.bf16.mxu0 0
      %1300 = vmatmul.mubr.bf16.gmra.mxu0 %v1196
      %v1301 = vpop.f32.mrf.mxu0
      %v1302 = vadd.f32 0.0, %v1301
      %v1303 = vpop.f32.mrf.mxu0
      %v1304 = vpop.f32.mrf.mxu0
      %v1305 = vadd.f32 0.0, %v1304
      %v1306 = vpop.f32.mrf.mxu0
      %1307 = vmatprep.mubr.bf16.mxu0 0
      %1308 = vmatmul.mubr.bf16.gmra.mxu0 %v1199
      %v1309 = vpop.f32.mrf.mxu0
      %v1310 = vadd.f32 0.0, %v1309
      %v1311 = vpop.f32.mrf.mxu0
      %v1312 = vpop.f32.mrf.mxu0
      %v1313 = vadd.f32 0.0, %v1312
      %v1314 = vpop.f32.mrf.mxu0
      %1315 = vmatprep.mubr.bf16.mxu0 0
      %1316 = vmatmul.mubr.bf16.gmra.mxu0 %v1202
      %v1317 = vpop.f32.mrf.mxu0
      %v1318 = vadd.f32 0.0, %v1317
      %v1319 = vpop.f32.mrf.mxu0
      %v1320 = vpop.f32.mrf.mxu0
      %v1321 = vadd.f32 0.0, %v1320
      %v1322 = vpop.f32.mrf.mxu0
      %1323 = vmatprep.mubr.bf16.mxu0 0
      %1324 = vmatmul.mubr.bf16.gmra.mxu0 %v1205
      %v1325 = vpop.f32.mrf.mxu0
      %v1326 = vadd.f32 0.0, %v1325
      %v1327 = vpop.f32.mrf.mxu0
      %v1328 = vpop.f32.mrf.mxu0
      %v1329 = vadd.f32 0.0, %v1328
      %v1330 = vpop.f32.mrf.mxu0
      %1331 = vmatprep.mubr.bf16.mxu0 0
      %1332 = vmatmul.mubr.bf16.gmra.mxu0 %v1208
      %v1333 = vpop.f32.mrf.mxu0
      %v1334 = vadd.f32 0.0, %v1333
      %v1335 = vpop.f32.mrf.mxu0
      %v1336 = vpop.f32.mrf.mxu0
      %v1337 = vadd.f32 0.0, %v1336
      %v1338 = vpop.f32.mrf.mxu0
      %1339 = vmatprep.mubr.bf16.mxu0 0
      %1340 = vmatmul.mubr.bf16.gmra.mxu0 %v1211
      %v1341 = vpop.f32.mrf.mxu0
      %v1342 = vadd.f32 0.0, %v1341
      %v1343 = vpop.f32.mrf.mxu0
      %v1344 = vpop.f32.mrf.mxu0
      %v1345 = vadd.f32 0.0, %v1344
      %v1346 = vpop.f32.mrf.mxu0
      %1347 = vmatprep.mubr.bf16.mxu0 0
      %1348 = vmatmul.mubr.bf16.gmra.mxu0 %v1214
      %v1349 = vpop.f32.mrf.mxu0
      %v1350 = vadd.f32 0.0, %v1349
      %v1351 = vpop.f32.mrf.mxu0
      %v1352 = vpop.f32.mrf.mxu0
      %v1353 = vadd.f32 0.0, %v1352
      %v1354 = vpop.f32.mrf.mxu0
      %1355 = vmatprep.mubr.bf16.mxu0 0
      %1356 = vmatmul.mubr.bf16.gmra.mxu0 %v1217
      %v1357 = vpop.f32.mrf.mxu0
      %v1358 = vadd.f32 0.0, %v1357
      %v1359 = vpop.f32.mrf.mxu0
      %v1360 = vpop.f32.mrf.mxu0
      %v1361 = vadd.f32 0.0, %v1360
      %v1362 = vpop.f32.mrf.mxu0
      %1363 = vmatprep.mubr.bf16.mxu0 0
      %1364 = vmatmul.mubr.bf16.gmra.mxu0 %v1220
      %v1365 = vpop.f32.mrf.mxu0
      %v1366 = vadd.f32 0.0, %v1365
      %v1367 = vpop.f32.mrf.mxu0
      %v1368 = vpop.f32.mrf.mxu0
      %v1369 = vadd.f32 0.0, %v1368
      %v1370 = vpop.f32.mrf.mxu0
      %1371 = vmatprep.mubr.bf16.mxu0 0
      %1372 = vmatmul.mubr.bf16.gmra.mxu0 %v1223
      %v1373 = vpop.f32.mrf.mxu0
      %v1374 = vadd.f32 0.0, %v1373
      %v1375 = vpop.f32.mrf.mxu0
      %v1376 = vpop.f32.mrf.mxu0
      %v1377 = vadd.f32 0.0, %v1376
      %v1378 = vpop.f32.mrf.mxu0
      %1379 = vmatprep.mubr.bf16.mxu0 0
      %1380 = vmatmul.mubr.bf16.gmra.mxu0 %v1226
      %v1381 = vpop.f32.mrf.mxu0
      %v1382 = vadd.f32 0.0, %v1381
      %v1383 = vpop.f32.mrf.mxu0
      %v1384 = vpop.f32.mrf.mxu0
      %v1385 = vadd.f32 0.0, %v1384
      %v1386 = vpop.f32.mrf.mxu0
      %1387 = vmatprep.mubr.bf16.mxu0 0
      %1388 = vmatmul.mubr.bf16.gmra.mxu0 %v1229
      %v1389 = vpop.f32.mrf.mxu0
      %v1390 = vadd.f32 0.0, %v1389
      %v1391 = vpop.f32.mrf.mxu0
      %v1392 = vpop.f32.mrf.mxu0
      %v1393 = vadd.f32 0.0, %v1392
      %v1394 = vpop.f32.mrf.mxu0
      %1395 = vdwg.mxu0
      %v1428 = vunpack.c.l.b16 %v697
      %v1429 = vunpack.c.l.b16 %v698
      %v1430 = vunpack.c.l.b16 %v699
      %v1431 = vunpack.c.l.b16 %v700
      %v1432 = vunpack.c.l.b16 %v701
      %v1433 = vunpack.c.l.b16 %v702
      %v1434 = vunpack.c.l.b16 %v703
      %v1435 = vunpack.c.l.b16 %v704
      %v1436 = vunpack.c.l.b16 %v705
      %v1437 = vunpack.c.l.b16 %v706
      %v1438 = vunpack.c.l.b16 %v707
      %v1439 = vunpack.c.l.b16 %v708
      %v1440 = vunpack.c.l.b16 %v709
      %v1441 = vunpack.c.l.b16 %v710
      %v1442 = vunpack.c.l.b16 %v711
      %v1443 = vunpack.c.l.b16 %v712
      %v1444 = vunpack.c.l.b16 %v713
      %v1445 = vunpack.c.l.b16 %v714
      %v1446 = vunpack.c.l.b16 %v715
      %v1447 = vunpack.c.l.b16 %v716
      %v1448 = vunpack.c.l.b16 %v717
      %v1449 = vunpack.c.l.b16 %v718
      %v1450 = vunpack.c.l.b16 %v719
      %v1451 = vunpack.c.l.b16 %v720
      %v1452 = vunpack.c.l.b16 %v721
      %v1453 = vunpack.c.l.b16 %v722
      %v1454 = vunpack.c.l.b16 %v723
      %v1455 = vunpack.c.l.b16 %v724
      %v1456 = vunpack.c.l.b16 %v725
      %v1457 = vunpack.c.l.b16 %v726
      %v1458 = vunpack.c.l.b16 %v727
      %v1459 = vunpack.c.l.b16 %v728
      %v1460 = vpack.c.b16 %v1429, %v1428
      %v1461 = vpack.c.b16 %v1431, %v1430
      %v1462 = vpack.c.b16 %v1433, %v1432
      %v1463 = vpack.c.b16 %v1435, %v1434
      %v1464 = vpack.c.b16 %v1437, %v1436
      %v1465 = vpack.c.b16 %v1439, %v1438
      %v1466 = vpack.c.b16 %v1441, %v1440
      %v1467 = vpack.c.b16 %v1443, %v1442
      %v1468 = vpack.c.b16 %v1445, %v1444
      %v1469 = vpack.c.b16 %v1447, %v1446
      %v1470 = vpack.c.b16 %v1449, %v1448
      %v1471 = vpack.c.b16 %v1451, %v1450
      %v1472 = vpack.c.b16 %v1453, %v1452
      %v1473 = vpack.c.b16 %v1455, %v1454
      %v1474 = vpack.c.b16 %v1457, %v1456
      %v1475 = vpack.c.b16 %v1459, %v1458
      %v1477 = vsel %vm232, %v1460, 0
      %v1480 = vsel %vm232, %v1461, 0
      %v1483 = vsel %vm232, %v1462, 0
      %v1486 = vsel %vm232, %v1463, 0
      %v1489 = vsel %vm232, %v1464, 0
      %v1492 = vsel %vm232, %v1465, 0
      %v1495 = vsel %vm232, %v1466, 0
      %v1498 = vsel %vm232, %v1467, 0
      %v1501 = vsel %vm232, %v1468, 0
      %v1504 = vsel %vm232, %v1469, 0
      %v1507 = vsel %vm232, %v1470, 0
      %v1510 = vsel %vm232, %v1471, 0
      %v1513 = vsel %vm232, %v1472, 0
      %v1516 = vsel %vm232, %v1473, 0
      %v1519 = vsel %vm232, %v1474, 0
      %v1522 = vsel %vm232, %v1475, 0
      %v1525 = vsel %vm1231, %v729, 0
      %1527 = vmatprep.subr.bf16.mxu0 0
      %1528 = vmatpush1.bf16.msra.mxu0 0
      %1529 = vmatprep.subr.bf16.mxu0 0
      %1530 = vmatpush1.bf16.msra.mxu0 0
      %1531 = vmatprep.subr.bf16.mxu0 0
      %1532 = vmatpush1.bf16.msra.mxu0 0
      %1533 = vmatprep.subr.bf16.mxu0 0
      %1534 = vmatpush1.bf16.msra.mxu0 0
      %1535 = vmatprep.subr.bf16.mxu0 0
      %1536 = vmatpush1.bf16.msra.mxu0 0
      %1537 = vmatprep.subr.bf16.mxu0 0
      %1538 = vmatpush1.bf16.msra.mxu0 0
      %1539 = vmatprep.subr.bf16.mxu0 0
      %1540 = vmatpush1.bf16.msra.mxu0 0
      %1541 = vmatprep.subr.bf16.mxu0 0
      %1542 = vmatpush1.bf16.msra.mxu0 %v1525
      %1543 = vmatprep.subr.bf16.mxu0 0
      %1544 = vmatpush2.bf16.msra.mxu0 0
      %1545 = vmatprep.subr.bf16.mxu0 0
      %1546 = vmatpush2.bf16.msra.mxu0 0
      %1547 = vmatprep.subr.bf16.mxu0 0
      %1548 = vmatpush2.bf16.msra.mxu0 0
      %1549 = vmatprep.subr.bf16.mxu0 0
      %1550 = vmatpush2.bf16.msra.mxu0 0
      %1551 = vmatprep.subr.bf16.mxu0 0
      %1552 = vmatpush2.bf16.msra.mxu0 0
      %1553 = vmatprep.subr.bf16.mxu0 0
      %1554 = vmatpush2.bf16.msra.mxu0 0
      %1555 = vmatprep.subr.bf16.mxu0 0
      %1556 = vmatpush2.bf16.msra.mxu0 0
      %1557 = vmatprep.subr.bf16.mxu0 0
      %1558 = vmatpush2.bf16.msra.mxu0 0
      %1559 = vmatprep.mubr.bf16.mxu0 0
      %1560 = vmatmul.mubr.bf16.gmra.mxu0 %v1477
      %v1561 = vpop.f32.mrf.mxu0
      %v1562 = vadd.f32 %v1270, %v1561
      %v1563 = vpop.f32.mrf.mxu0
      %v1564 = vpop.f32.mrf.mxu0
      %v1565 = vadd.f32 %v1273, %v1564
      %v1566 = vpop.f32.mrf.mxu0
      %1567 = vmatprep.mubr.bf16.mxu0 0
      %1568 = vmatmul.mubr.bf16.gmra.mxu0 %v1480
      %v1569 = vpop.f32.mrf.mxu0
      %v1570 = vadd.f32 %v1278, %v1569
      %v1571 = vpop.f32.mrf.mxu0
      %v1572 = vpop.f32.mrf.mxu0
      %v1573 = vadd.f32 %v1281, %v1572
      %v1574 = vpop.f32.mrf.mxu0
      %1575 = vmatprep.mubr.bf16.mxu0 0
      %1576 = vmatmul.mubr.bf16.gmra.mxu0 %v1483
      %v1577 = vpop.f32.mrf.mxu0
      %v1578 = vadd.f32 %v1286, %v1577
      %v1579 = vpop.f32.mrf.mxu0
      %v1580 = vpop.f32.mrf.mxu0
      %v1581 = vadd.f32 %v1289, %v1580
      %v1582 = vpop.f32.mrf.mxu0
      %1583 = vmatprep.mubr.bf16.mxu0 0
      %1584 = vmatmul.mubr.bf16.gmra.mxu0 %v1486
      %v1585 = vpop.f32.mrf.mxu0
      %v1586 = vadd.f32 %v1294, %v1585
      %v1587 = vpop.f32.mrf.mxu0
      %v1588 = vpop.f32.mrf.mxu0
      %v1589 = vadd.f32 %v1297, %v1588
      %v1590 = vpop.f32.mrf.mxu0
      %1591 = vmatprep.mubr.bf16.mxu0 0
      %1592 = vmatmul.mubr.bf16.gmra.mxu0 %v1489
      %v1593 = vpop.f32.mrf.mxu0
      %v1594 = vadd.f32 %v1302, %v1593
      %v1595 = vpop.f32.mrf.mxu0
      %v1596 = vpop.f32.mrf.mxu0
      %v1597 = vadd.f32 %v1305, %v1596
      %v1598 = vpop.f32.mrf.mxu0
      %1599 = vmatprep.mubr.bf16.mxu0 0
      %1600 = vmatmul.mubr.bf16.gmra.mxu0 %v1492
      %v1601 = vpop.f32.mrf.mxu0
      %v1602 = vadd.f32 %v1310, %v1601
      %v1603 = vpop.f32.mrf.mxu0
      %v1604 = vpop.f32.mrf.mxu0
      %v1605 = vadd.f32 %v1313, %v1604
      %v1606 = vpop.f32.mrf.mxu0
      %1607 = vmatprep.mubr.bf16.mxu0 0
      %1608 = vmatmul.mubr.bf16.gmra.mxu0 %v1495
      %v1609 = vpop.f32.mrf.mxu0
      %v1610 = vadd.f32 %v1318, %v1609
      %v1611 = vpop.f32.mrf.mxu0
      %v1612 = vpop.f32.mrf.mxu0
      %v1613 = vadd.f32 %v1321, %v1612
      %v1614 = vpop.f32.mrf.mxu0
      %1615 = vmatprep.mubr.bf16.mxu0 0
      %1616 = vmatmul.mubr.bf16.gmra.mxu0 %v1498
      %v1617 = vpop.f32.mrf.mxu0
      %v1618 = vadd.f32 %v1326, %v1617
      %v1619 = vpop.f32.mrf.mxu0
      %v1620 = vpop.f32.mrf.mxu0
      %v1621 = vadd.f32 %v1329, %v1620
      %v1622 = vpop.f32.mrf.mxu0
      %1623 = vmatprep.mubr.bf16.mxu0 0
      %1624 = vmatmul.mubr.bf16.gmra.mxu0 %v1501
      %v1625 = vpop.f32.mrf.mxu0
      %v1626 = vadd.f32 %v1334, %v1625
      %v1627 = vpop.f32.mrf.mxu0
      %v1628 = vpop.f32.mrf.mxu0
      %v1629 = vadd.f32 %v1337, %v1628
      %v1630 = vpop.f32.mrf.mxu0
      %1631 = vmatprep.mubr.bf16.mxu0 0
      %1632 = vmatmul.mubr.bf16.gmra.mxu0 %v1504
      %v1633 = vpop.f32.mrf.mxu0
      %v1634 = vadd.f32 %v1342, %v1633
      %v1635 = vpop.f32.mrf.mxu0
      %v1636 = vpop.f32.mrf.mxu0
      %v1637 = vadd.f32 %v1345, %v1636
      %v1638 = vpop.f32.mrf.mxu0
      %1639 = vmatprep.mubr.bf16.mxu0 0
      %1640 = vmatmul.mubr.bf16.gmra.mxu0 %v1507
      %v1641 = vpop.f32.mrf.mxu0
      %v1642 = vadd.f32 %v1350, %v1641
      %v1643 = vpop.f32.mrf.mxu0
      %v1644 = vpop.f32.mrf.mxu0
      %v1645 = vadd.f32 %v1353, %v1644
      %v1646 = vpop.f32.mrf.mxu0
      %1647 = vmatprep.mubr.bf16.mxu0 0
      %1648 = vmatmul.mubr.bf16.gmra.mxu0 %v1510
      %v1649 = vpop.f32.mrf.mxu0
      %v1650 = vadd.f32 %v1358, %v1649
      %v1651 = vpop.f32.mrf.mxu0
      %v1652 = vpop.f32.mrf.mxu0
      %v1653 = vadd.f32 %v1361, %v1652
      %v1654 = vpop.f32.mrf.mxu0
      %1655 = vmatprep.mubr.bf16.mxu0 0
      %1656 = vmatmul.mubr.bf16.gmra.mxu0 %v1513
      %v1657 = vpop.f32.mrf.mxu0
      %v1658 = vadd.f32 %v1366, %v1657
      %v1659 = vpop.f32.mrf.mxu0
      %v1660 = vpop.f32.mrf.mxu0
      %v1661 = vadd.f32 %v1369, %v1660
      %v1662 = vpop.f32.mrf.mxu0
      %1663 = vmatprep.mubr.bf16.mxu0 0
      %1664 = vmatmul.mubr.bf16.gmra.mxu0 %v1516
      %v1665 = vpop.f32.mrf.mxu0
      %v1666 = vadd.f32 %v1374, %v1665
      %v1667 = vpop.f32.mrf.mxu0
      %v1668 = vpop.f32.mrf.mxu0
      %v1669 = vadd.f32 %v1377, %v1668
      %v1670 = vpop.f32.mrf.mxu0
      %1671 = vmatprep.mubr.bf16.mxu0 0
      %1672 = vmatmul.mubr.bf16.gmra.mxu0 %v1519
      %v1673 = vpop.f32.mrf.mxu0
      %v1674 = vadd.f32 %v1382, %v1673
      %v1675 = vpop.f32.mrf.mxu0
      %v1676 = vpop.f32.mrf.mxu0
      %v1677 = vadd.f32 %v1385, %v1676
      %v1678 = vpop.f32.mrf.mxu0
      %1679 = vmatprep.mubr.bf16.mxu0 0
      %1680 = vmatmul.mubr.bf16.gmra.mxu0 %v1522
      %v1681 = vpop.f32.mrf.mxu0
      %v1682 = vadd.f32 %v1390, %v1681
      %v1683 = vpop.f32.mrf.mxu0
      %v1684 = vpop.f32.mrf.mxu0
      %v1685 = vadd.f32 %v1393, %v1684
      %v1686 = vpop.f32.mrf.mxu0
      %1687 = vdwg.mxu0
      %v1688 = vld [vmem:[#allocation3] sm:$0xe]
      %v1689 = vld [vmem:[#allocation3 + $0xc] sm:$0xe]
      %v1690 = vld [vmem:[#allocation3 + $0x18] sm:$0xe]
      %v1691 = vld [vmem:[#allocation3 + $0x24] sm:$0xe]
      %v1692 = vld [vmem:[#allocation3 + $0x30] sm:$0xe]
      %v1693 = vld [vmem:[#allocation3 + $0x3c] sm:$0xe]
      %v1694 = vld [vmem:[#allocation3 + $0x48] sm:$0xe]
      %v1695 = vld [vmem:[#allocation3 + $0x54] sm:$0xe]
      %v1696 = vld [vmem:[#allocation3 + $0x60] sm:$0xe]
      %v1697 = vld [vmem:[#allocation3 + $0x6c] sm:$0xe]
      %v1698 = vld [vmem:[#allocation3 + $0x78] sm:$0xe]
      %v1699 = vld [vmem:[#allocation3 + $0x84] sm:$0xe]
      %v1700 = vld [vmem:[#allocation3 + $0x90] sm:$0xe]
      %v1701 = vld [vmem:[#allocation3 + $0x9c] sm:$0xe]
      %v1702 = vld [vmem:[#allocation3 + $0xa8] sm:$0xe]
      %v1703 = vld [vmem:[#allocation3 + $0xb4] sm:$0xe]
      %vm1736 = vcmask 1042432
      %vm1737 = vcmask 1046532
      %vm1738 = vmor %vm1736, %vm1737
      %v1739 = vrot.slane %v1688, 5
      %v1740 = vrot.slane %v1739, 4
      %v1741 = vrot.slane %v698, 5
      %v1742 = vsel %vm1738, %v1740, %v1741
      %v1743 = vrot.slane %v1741, 4
      %v1744 = vrot.slane %v730, 5
      %v1745 = vsel %vm1738, %v1743, %v1744
      %v1746 = vrot.slane %v1689, 5
      %v1747 = vrot.slane %v1746, 4
      %v1748 = vrot.slane %v700, 5
      %v1749 = vsel %vm1738, %v1747, %v1748
      %v1750 = vrot.slane %v1748, 4
      %v1751 = vrot.slane %v731, 5
      %v1752 = vsel %vm1738, %v1750, %v1751
      %v1753 = vrot.slane %v1690, 5
      %v1754 = vrot.slane %v1753, 4
      %v1755 = vrot.slane %v702, 5
      %v1756 = vsel %vm1738, %v1754, %v1755
      %v1757 = vrot.slane %v1755, 4
      %v1758 = vrot.slane %v732, 5
      %v1759 = vsel %vm1738, %v1757, %v1758
      %v1760 = vrot.slane %v1691, 5
      %v1761 = vrot.slane %v1760, 4
      %v1762 = vrot.slane %v704, 5
      %v1763 = vsel %vm1738, %v1761, %v1762
      %v1764 = vrot.slane %v1762, 4
      %v1765 = vrot.slane %v733, 5
      %v1766 = vsel %vm1738, %v1764, %v1765
      %v1767 = vrot.slane %v1692, 5
      %v1768 = vrot.slane %v1767, 4
      %v1769 = vrot.slane %v706, 5
      %v1770 = vsel %vm1738, %v1768, %v1769
      %v1771 = vrot.slane %v1769, 4
      %v1772 = vrot.slane %v734, 5
      %v1773 = vsel %vm1738, %v1771, %v1772
      %v1774 = vrot.slane %v1693, 5
      %v1775 = vrot.slane %v1774, 4
      %v1776 = vrot.slane %v708, 5
      %v1777 = vsel %vm1738, %v1775, %v1776
      %v1778 = vrot.slane %v1776, 4
      %v1779 = vrot.slane %v735, 5
      %v1780 = vsel %vm1738, %v1778, %v1779
      %v1781 = vrot.slane %v1694, 5
      %v1782 = vrot.slane %v1781, 4
      %v1783 = vrot.slane %v710, 5
      %v1784 = vsel %vm1738, %v1782, %v1783
      %v1785 = vrot.slane %v1783, 4
      %v1786 = vrot.slane %v736, 5
      %v1787 = vsel %vm1738, %v1785, %v1786
      %v1788 = vrot.slane %v1695, 5
      %v1789 = vrot.slane %v1788, 4
      %v1790 = vrot.slane %v712, 5
      %v1791 = vsel %vm1738, %v1789, %v1790
      %v1792 = vrot.slane %v1790, 4
      %v1793 = vrot.slane %v737, 5
      %v1794 = vsel %vm1738, %v1792, %v1793
      %v1795 = vrot.slane %v1696, 5
      %v1796 = vrot.slane %v1795, 4
      %v1797 = vrot.slane %v714, 5
      %v1798 = vsel %vm1738, %v1796, %v1797
      %v1799 = vrot.slane %v1797, 4
      %v1800 = vrot.slane %v738, 5
      %v1801 = vsel %vm1738, %v1799, %v1800
      %v1802 = vrot.slane %v1697, 5
      %v1803 = vrot.slane %v1802, 4
      %v1804 = vrot.slane %v716, 5
      %v1805 = vsel %vm1738, %v1803, %v1804
      %v1806 = vrot.slane %v1804, 4
      %v1807 = vrot.slane %v739, 5
      %v1808 = vsel %vm1738, %v1806, %v1807
      %v1809 = vrot.slane %v1698, 5
      %v1810 = vrot.slane %v1809, 4
      %v1811 = vrot.slane %v718, 5
      %v1812 = vsel %vm1738, %v1810, %v1811
      %v1813 = vrot.slane %v1811, 4
      %v1814 = vrot.slane %v740, 5
      %v1815 = vsel %vm1738, %v1813, %v1814
      %v1816 = vrot.slane %v1699, 5
      %v1817 = vrot.slane %v1816, 4
      %v1818 = vrot.slane %v720, 5
      %v1819 = vsel %vm1738, %v1817, %v1818
      %v1820 = vrot.slane %v1818, 4
      %v1821 = vrot.slane %v741, 5
      %v1822 = vsel %vm1738, %v1820, %v1821
      %v1823 = vrot.slane %v1700, 5
      %v1824 = vrot.slane %v1823, 4
      %v1825 = vrot.slane %v722, 5
      %v1826 = vsel %vm1738, %v1824, %v1825
      %v1827 = vrot.slane %v1825, 4
      %v1828 = vrot.slane %v742, 5
      %v1829 = vsel %vm1738, %v1827, %v1828
      %v1830 = vrot.slane %v1701, 5
      %v1831 = vrot.slane %v1830, 4
      %v1832 = vrot.slane %v724, 5
      %v1833 = vsel %vm1738, %v1831, %v1832
      %v1834 = vrot.slane %v1832, 4
      %v1835 = vrot.slane %v743, 5
      %v1836 = vsel %vm1738, %v1834, %v1835
      %v1837 = vrot.slane %v1702, 5
      %v1838 = vrot.slane %v1837, 4
      %v1839 = vrot.slane %v726, 5
      %v1840 = vsel %vm1738, %v1838, %v1839
      %v1841 = vrot.slane %v1839, 4
      %v1842 = vrot.slane %v744, 5
      %v1843 = vsel %vm1738, %v1841, %v1842
      %v1844 = vrot.slane %v1703, 5
      %v1845 = vrot.slane %v1844, 4
      %v1846 = vrot.slane %v728, 5
      %v1847 = vsel %vm1738, %v1845, %v1846
      %v1848 = vrot.slane %v1846, 4
      %v1849 = vrot.slane %v745, 5
      %v1850 = vsel %vm1738, %v1848, %v1849
      %s1851 = scalar_lea.vmem %s1, 4
      %v1852 = vld [vmem:[%s1851] sm:$0x3]
      %v1853 = vunpack.c.l.b16 %v1742
      %v1854 = vunpack.c.l.b16 %v1745
      %v1855 = vunpack.c.l.b16 %v1749
      %v1856 = vunpack.c.l.b16 %v1752
      %v1857 = vunpack.c.l.b16 %v1756
      %v1858 = vunpack.c.l.b16 %v1759
      %v1859 = vunpack.c.l.b16 %v1763
      %v1860 = vunpack.c.l.b16 %v1766
      %v1861 = vunpack.c.l.b16 %v1770
      %v1862 = vunpack.c.l.b16 %v1773
      %v1863 = vunpack.c.l.b16 %v1777
      %v1864 = vunpack.c.l.b16 %v1780
      %v1865 = vunpack.c.l.b16 %v1784
      %v1866 = vunpack.c.l.b16 %v1787
      %v1867 = vunpack.c.l.b16 %v1791
      %v1868 = vunpack.c.l.b16 %v1794
      %v1869 = vunpack.c.l.b16 %v1798
      %v1870 = vunpack.c.l.b16 %v1801
      %v1871 = vunpack.c.l.b16 %v1805
      %v1872 = vunpack.c.l.b16 %v1808
      %v1873 = vunpack.c.l.b16 %v1812
      %v1874 = vunpack.c.l.b16 %v1815
      %v1875 = vunpack.c.l.b16 %v1819
      %v1876 = vunpack.c.l.b16 %v1822
      %v1877 = vunpack.c.l.b16 %v1826
      %v1878 = vunpack.c.l.b16 %v1829
      %v1879 = vunpack.c.l.b16 %v1833
      %v1880 = vunpack.c.l.b16 %v1836
      %v1881 = vunpack.c.l.b16 %v1840
      %v1882 = vunpack.c.l.b16 %v1843
      %v1883 = vunpack.c.l.b16 %v1847
      %v1884 = vunpack.c.l.b16 %v1850
      %v1885 = vpack.c.b16 %v1854, %v1853
      %v1886 = vpack.c.b16 %v1856, %v1855
      %v1887 = vpack.c.b16 %v1858, %v1857
      %v1888 = vpack.c.b16 %v1860, %v1859
      %v1889 = vpack.c.b16 %v1862, %v1861
      %v1890 = vpack.c.b16 %v1864, %v1863
      %v1891 = vpack.c.b16 %v1866, %v1865
      %v1892 = vpack.c.b16 %v1868, %v1867
      %v1893 = vpack.c.b16 %v1870, %v1869
      %v1894 = vpack.c.b16 %v1872, %v1871
      %v1895 = vpack.c.b16 %v1874, %v1873
      %v1896 = vpack.c.b16 %v1876, %v1875
      %v1897 = vpack.c.b16 %v1878, %v1877
      %v1898 = vpack.c.b16 %v1880, %v1879
      %v1899 = vpack.c.b16 %v1882, %v1881
      %v1900 = vpack.c.b16 %v1884, %v1883
      %v1902 = vsel %vm232, %v1885, 0
      %v1905 = vsel %vm232, %v1886, 0
      %v1908 = vsel %vm232, %v1887, 0
      %v1911 = vsel %vm232, %v1888, 0
      %v1914 = vsel %vm232, %v1889, 0
      %v1917 = vsel %vm232, %v1890, 0
      %v1920 = vsel %vm232, %v1891, 0
      %v1923 = vsel %vm232, %v1892, 0
      %v1926 = vsel %vm232, %v1893, 0
      %v1929 = vsel %vm232, %v1894, 0
      %v1932 = vsel %vm232, %v1895, 0
      %v1935 = vsel %vm232, %v1896, 0
      %v1938 = vsel %vm232, %v1897, 0
      %v1941 = vsel %vm232, %v1898, 0
      %v1944 = vsel %vm232, %v1899, 0
      %v1947 = vsel %vm232, %v1900, 0
      %v1950 = vsel %vm1231, %v1852, 0
      %1952 = vmatprep.subr.bf16.mxu0 0
      %1953 = vmatpush1.bf16.msra.mxu0 0
      %1954 = vmatprep.subr.bf16.mxu0 0
      %1955 = vmatpush1.bf16.msra.mxu0 0
      %1956 = vmatprep.subr.bf16.mxu0 0
      %1957 = vmatpush1.bf16.msra.mxu0 0
      %1958 = vmatprep.subr.bf16.mxu0 0
      %1959 = vmatpush1.bf16.msra.mxu0 0
      %1960 = vmatprep.subr.bf16.mxu0 0
      %1961 = vmatpush1.bf16.msra.mxu0 0
      %1962 = vmatprep.subr.bf16.mxu0 0
      %1963 = vmatpush1.bf16.msra.mxu0 0
      %1964 = vmatprep.subr.bf16.mxu0 0
      %1965 = vmatpush1.bf16.msra.mxu0 0
      %1966 = vmatprep.subr.bf16.mxu0 0
      %1967 = vmatpush1.bf16.msra.mxu0 %v1950
      %1968 = vmatprep.subr.bf16.mxu0 0
      %1969 = vmatpush2.bf16.msra.mxu0 0
      %1970 = vmatprep.subr.bf16.mxu0 0
      %1971 = vmatpush2.bf16.msra.mxu0 0
      %1972 = vmatprep.subr.bf16.mxu0 0
      %1973 = vmatpush2.bf16.msra.mxu0 0
      %1974 = vmatprep.subr.bf16.mxu0 0
      %1975 = vmatpush2.bf16.msra.mxu0 0
      %1976 = vmatprep.subr.bf16.mxu0 0
      %1977 = vmatpush2.bf16.msra.mxu0 0
      %1978 = vmatprep.subr.bf16.mxu0 0
      %1979 = vmatpush2.bf16.msra.mxu0 0
      %1980 = vmatprep.subr.bf16.mxu0 0
      %1981 = vmatpush2.bf16.msra.mxu0 0
      %1982 = vmatprep.subr.bf16.mxu0 0
      %1983 = vmatpush2.bf16.msra.mxu0 0
      %1984 = vmatprep.mubr.bf16.mxu0 0
      %1985 = vmatmul.mubr.bf16.gmra.mxu0 %v1902
      %v1986 = vpop.f32.mrf.mxu0
      %v1987 = vadd.f32 0.0, %v1986
      %v1988 = vpop.f32.mrf.mxu0
      %v1989 = vpop.f32.mrf.mxu0
      %v1990 = vadd.f32 0.0, %v1989
      %v1991 = vpop.f32.mrf.mxu0
      %1992 = vmatprep.mubr.bf16.mxu0 0
      %1993 = vmatmul.mubr.bf16.gmra.mxu0 %v1905
      %v1994 = vpop.f32.mrf.mxu0
      %v1995 = vadd.f32 0.0, %v1994
      %v1996 = vpop.f32.mrf.mxu0
      %v1997 = vpop.f32.mrf.mxu0
      %v1998 = vadd.f32 0.0, %v1997
      %v1999 = vpop.f32.mrf.mxu0
      %2000 = vmatprep.mubr.bf16.mxu0 0
      %2001 = vmatmul.mubr.bf16.gmra.mxu0 %v1908
      %v2002 = vpop.f32.mrf.mxu0
      %v2003 = vadd.f32 0.0, %v2002
      %v2004 = vpop.f32.mrf.mxu0
      %v2005 = vpop.f32.mrf.mxu0
      %v2006 = vadd.f32 0.0, %v2005
      %v2007 = vpop.f32.mrf.mxu0
      %2008 = vmatprep.mubr.bf16.mxu0 0
      %2009 = vmatmul.mubr.bf16.gmra.mxu0 %v1911
      %v2010 = vpop.f32.mrf.mxu0
      %v2011 = vadd.f32 0.0, %v2010
      %v2012 = vpop.f32.mrf.mxu0
      %v2013 = vpop.f32.mrf.mxu0
      %v2014 = vadd.f32 0.0, %v2013
      %v2015 = vpop.f32.mrf.mxu0
      %2016 = vmatprep.mubr.bf16.mxu0 0
      %2017 = vmatmul.mubr.bf16.gmra.mxu0 %v1914
      %v2018 = vpop.f32.mrf.mxu0
      %v2019 = vadd.f32 0.0, %v2018
      %v2020 = vpop.f32.mrf.mxu0
      %v2021 = vpop.f32.mrf.mxu0
      %v2022 = vadd.f32 0.0, %v2021
      %v2023 = vpop.f32.mrf.mxu0
      %2024 = vmatprep.mubr.bf16.mxu0 0
      %2025 = vmatmul.mubr.bf16.gmra.mxu0 %v1917
      %v2026 = vpop.f32.mrf.mxu0
      %v2027 = vadd.f32 0.0, %v2026
      %v2028 = vpop.f32.mrf.mxu0
      %v2029 = vpop.f32.mrf.mxu0
      %v2030 = vadd.f32 0.0, %v2029
      %v2031 = vpop.f32.mrf.mxu0
      %2032 = vmatprep.mubr.bf16.mxu0 0
      %2033 = vmatmul.mubr.bf16.gmra.mxu0 %v1920
      %v2034 = vpop.f32.mrf.mxu0
      %v2035 = vadd.f32 0.0, %v2034
      %v2036 = vpop.f32.mrf.mxu0
      %v2037 = vpop.f32.mrf.mxu0
      %v2038 = vadd.f32 0.0, %v2037
      %v2039 = vpop.f32.mrf.mxu0
      %2040 = vmatprep.mubr.bf16.mxu0 0
      %2041 = vmatmul.mubr.bf16.gmra.mxu0 %v1923
      %v2042 = vpop.f32.mrf.mxu0
      %v2043 = vadd.f32 0.0, %v2042
      %v2044 = vpop.f32.mrf.mxu0
      %v2045 = vpop.f32.mrf.mxu0
      %v2046 = vadd.f32 0.0, %v2045
      %v2047 = vpop.f32.mrf.mxu0
      %2048 = vmatprep.mubr.bf16.mxu0 0
      %2049 = vmatmul.mubr.bf16.gmra.mxu0 %v1926
      %v2050 = vpop.f32.mrf.mxu0
      %v2051 = vadd.f32 0.0, %v2050
      %v2052 = vpop.f32.mrf.mxu0
      %v2053 = vpop.f32.mrf.mxu0
      %v2054 = vadd.f32 0.0, %v2053
      %v2055 = vpop.f32.mrf.mxu0
      %2056 = vmatprep.mubr.bf16.mxu0 0
      %2057 = vmatmul.mubr.bf16.gmra.mxu0 %v1929
      %v2058 = vpop.f32.mrf.mxu0
      %v2059 = vadd.f32 0.0, %v2058
      %v2060 = vpop.f32.mrf.mxu0
      %v2061 = vpop.f32.mrf.mxu0
      %v2062 = vadd.f32 0.0, %v2061
      %v2063 = vpop.f32.mrf.mxu0
      %2064 = vmatprep.mubr.bf16.mxu0 0
      %2065 = vmatmul.mubr.bf16.gmra.mxu0 %v1932
      %v2066 = vpop.f32.mrf.mxu0
      %v2067 = vadd.f32 0.0, %v2066
      %v2068 = vpop.f32.mrf.mxu0
      %v2069 = vpop.f32.mrf.mxu0
      %v2070 = vadd.f32 0.0, %v2069
      %v2071 = vpop.f32.mrf.mxu0
      %2072 = vmatprep.mubr.bf16.mxu0 0
      %2073 = vmatmul.mubr.bf16.gmra.mxu0 %v1935
      %v2074 = vpop.f32.mrf.mxu0
      %v2075 = vadd.f32 0.0, %v2074
      %v2076 = vpop.f32.mrf.mxu0
      %v2077 = vpop.f32.mrf.mxu0
      %v2078 = vadd.f32 0.0, %v2077
      %v2079 = vpop.f32.mrf.mxu0
      %2080 = vmatprep.mubr.bf16.mxu0 0
      %2081 = vmatmul.mubr.bf16.gmra.mxu0 %v1938
      %v2082 = vpop.f32.mrf.mxu0
      %v2083 = vadd.f32 0.0, %v2082
      %v2084 = vpop.f32.mrf.mxu0
      %v2085 = vpop.f32.mrf.mxu0
      %v2086 = vadd.f32 0.0, %v2085
      %v2087 = vpop.f32.mrf.mxu0
      %2088 = vmatprep.mubr.bf16.mxu0 0
      %2089 = vmatmul.mubr.bf16.gmra.mxu0 %v1941
      %v2090 = vpop.f32.mrf.mxu0
      %v2091 = vadd.f32 0.0, %v2090
      %v2092 = vpop.f32.mrf.mxu0
      %v2093 = vpop.f32.mrf.mxu0
      %v2094 = vadd.f32 0.0, %v2093
      %v2095 = vpop.f32.mrf.mxu0
      %2096 = vmatprep.mubr.bf16.mxu0 0
      %2097 = vmatmul.mubr.bf16.gmra.mxu0 %v1944
      %v2098 = vpop.f32.mrf.mxu0
      %v2099 = vadd.f32 0.0, %v2098
      %v2100 = vpop.f32.mrf.mxu0
      %v2101 = vpop.f32.mrf.mxu0
      %v2102 = vadd.f32 0.0, %v2101
      %v2103 = vpop.f32.mrf.mxu0
      %2104 = vmatprep.mubr.bf16.mxu0 0
      %2105 = vmatmul.mubr.bf16.gmra.mxu0 %v1947
      %v2106 = vpop.f32.mrf.mxu0
      %v2107 = vadd.f32 0.0, %v2106
      %v2108 = vpop.f32.mrf.mxu0
      %v2109 = vpop.f32.mrf.mxu0
      %v2110 = vadd.f32 0.0, %v2109
      %v2111 = vpop.f32.mrf.mxu0
      %2112 = vdwg.mxu0
      %v2113 = vadd.f32 %v1562, %v1987
      %v2114 = vadd.f32 %v1565, %v1990
      %v2115 = vadd.f32 %v1570, %v1995
      %v2116 = vadd.f32 %v1573, %v1998
      %v2117 = vadd.f32 %v1578, %v2003
      %v2118 = vadd.f32 %v1581, %v2006
      %v2119 = vadd.f32 %v1586, %v2011
      %v2120 = vadd.f32 %v1589, %v2014
      %v2121 = vadd.f32 %v1594, %v2019
      %v2122 = vadd.f32 %v1597, %v2022
      %v2123 = vadd.f32 %v1602, %v2027
      %v2124 = vadd.f32 %v1605, %v2030
      %v2125 = vadd.f32 %v1610, %v2035
      %v2126 = vadd.f32 %v1613, %v2038
      %v2127 = vadd.f32 %v1618, %v2043
      %v2128 = vadd.f32 %v1621, %v2046
      %v2129 = vadd.f32 %v1626, %v2051
      %v2130 = vadd.f32 %v1629, %v2054
      %v2131 = vadd.f32 %v1634, %v2059
      %v2132 = vadd.f32 %v1637, %v2062
      %v2133 = vadd.f32 %v1642, %v2067
      %v2134 = vadd.f32 %v1645, %v2070
      %v2135 = vadd.f32 %v1650, %v2075
      %v2136 = vadd.f32 %v1653, %v2078
      %v2137 = vadd.f32 %v1658, %v2083
      %v2138 = vadd.f32 %v1661, %v2086
      %v2139 = vadd.f32 %v1666, %v2091
      %v2140 = vadd.f32 %v1669, %v2094
      %v2141 = vadd.f32 %v1674, %v2099
      %v2142 = vadd.f32 %v1677, %v2102
      %v2143 = vadd.f32 %v1682, %v2107
      %v2144 = vadd.f32 %v1685, %v2110
      %s2145 = scalar_lea.vmem [#allocation3], 12
      %v2146 = vld [vmem:[%s2145] sm:$0xf]
      %v2147 = vld [vmem:[%s2145 + $0x4] sm:$0xf]
      %v2148 = vld [vmem:[%s2145 + $0xc] sm:$0xf]
      %v2149 = vld [vmem:[%s2145 + $0x10] sm:$0xf]
      %v2150 = vld [vmem:[%s2145 + $0x18] sm:$0xf]
      %v2151 = vld [vmem:[%s2145 + $0x1c] sm:$0xf]
      %v2152 = vld [vmem:[%s2145 + $0x24] sm:$0xf]
      %v2153 = vld [vmem:[%s2145 + $0x28] sm:$0xf]
      %v2154 = vld [vmem:[%s2145 + $0x30] sm:$0xf]
      %v2155 = vld [vmem:[%s2145 + $0x34] sm:$0xf]
      %v2156 = vld [vmem:[%s2145 + $0x3c] sm:$0xf]
      %v2157 = vld [vmem:[%s2145 + $0x40] sm:$0xf]
      %v2158 = vld [vmem:[%s2145 + $0x48] sm:$0xf]
      %v2159 = vld [vmem:[%s2145 + $0x4c] sm:$0xf]
      %v2160 = vld [vmem:[%s2145 + $0x54] sm:$0xf]
      %v2161 = vld [vmem:[%s2145 + $0x58] sm:$0xf]
      %v2162 = vld [vmem:[%s2145 + $0x60] sm:$0xf]
      %v2163 = vld [vmem:[%s2145 + $0x64] sm:$0xf]
      %v2164 = vld [vmem:[%s2145 + $0x6c] sm:$0xf]
      %v2165 = vld [vmem:[%s2145 + $0x70] sm:$0xf]
      %v2166 = vld [vmem:[%s2145 + $0x78] sm:$0xf]
      %v2167 = vld [vmem:[%s2145 + $0x7c] sm:$0xf]
      %v2168 = vld [vmem:[%s2145 + $0x84] sm:$0xf]
      %v2169 = vld [vmem:[%s2145 + $0x88] sm:$0xf]
      %v2170 = vld [vmem:[%s2145 + $0x90] sm:$0xf]
      %v2171 = vld [vmem:[%s2145 + $0x94] sm:$0xf]
      %v2172 = vld [vmem:[%s2145 + $0x9c] sm:$0xf]
      %v2173 = vld [vmem:[%s2145 + $0xa0] sm:$0xf]
      %v2174 = vld [vmem:[%s2145 + $0xa8] sm:$0xf]
      %v2175 = vld [vmem:[%s2145 + $0xac] sm:$0xf]
      %v2176 = vld [vmem:[%s2145 + $0xb4] sm:$0xf]
      %v2177 = vld [vmem:[%s2145 + $0xb8] sm:$0xf]
      %s2178 = scalar_lea.vmem %s1, 6
      %v2179 = vld [vmem:[%s2178] sm:$0x3]
      %v2212 = vunpack.c.l.b16 %v2146
      %v2213 = vunpack.c.l.b16 %v2147
      %v2214 = vunpack.c.l.b16 %v2148
      %v2215 = vunpack.c.l.b16 %v2149
      %v2216 = vunpack.c.l.b16 %v2150
      %v2217 = vunpack.c.l.b16 %v2151
      %v2218 = vunpack.c.l.b16 %v2152
      %v2219 = vunpack.c.l.b16 %v2153
      %v2220 = vunpack.c.l.b16 %v2154
      %v2221 = vunpack.c.l.b16 %v2155
      %v2222 = vunpack.c.l.b16 %v2156
      %v2223 = vunpack.c.l.b16 %v2157
      %v2224 = vunpack.c.l.b16 %v2158
      %v2225 = vunpack.c.l.b16 %v2159
      %v2226 = vunpack.c.l.b16 %v2160
      %v2227 = vunpack.c.l.b16 %v2161
      %v2228 = vunpack.c.l.b16 %v2162
      %v2229 = vunpack.c.l.b16 %v2163
      %v2230 = vunpack.c.l.b16 %v2164
      %v2231 = vunpack.c.l.b16 %v2165
      %v2232 = vunpack.c.l.b16 %v2166
      %v2233 = vunpack.c.l.b16 %v2167
      %v2234 = vunpack.c.l.b16 %v2168
      %v2235 = vunpack.c.l.b16 %v2169
      %v2236 = vunpack.c.l.b16 %v2170
      %v2237 = vunpack.c.l.b16 %v2171
      %v2238 = vunpack.c.l.b16 %v2172
      %v2239 = vunpack.c.l.b16 %v2173
      %v2240 = vunpack.c.l.b16 %v2174
      %v2241 = vunpack.c.l.b16 %v2175
      %v2242 = vunpack.c.l.b16 %v2176
      %v2243 = vunpack.c.l.b16 %v2177
      %v2244 = vpack.c.b16 %v2213, %v2212
      %v2245 = vpack.c.b16 %v2215, %v2214
      %v2246 = vpack.c.b16 %v2217, %v2216
      %v2247 = vpack.c.b16 %v2219, %v2218
      %v2248 = vpack.c.b16 %v2221, %v2220
      %v2249 = vpack.c.b16 %v2223, %v2222
      %v2250 = vpack.c.b16 %v2225, %v2224
      %v2251 = vpack.c.b16 %v2227, %v2226
      %v2252 = vpack.c.b16 %v2229, %v2228
      %v2253 = vpack.c.b16 %v2231, %v2230
      %v2254 = vpack.c.b16 %v2233, %v2232
      %v2255 = vpack.c.b16 %v2235, %v2234
      %v2256 = vpack.c.b16 %v2237, %v2236
      %v2257 = vpack.c.b16 %v2239, %v2238
      %v2258 = vpack.c.b16 %v2241, %v2240
      %v2259 = vpack.c.b16 %v2243, %v2242
      %v2261 = vsel %vm232, %v2244, 0
      %v2264 = vsel %vm232, %v2245, 0
      %v2267 = vsel %vm232, %v2246, 0
      %v2270 = vsel %vm232, %v2247, 0
      %v2273 = vsel %vm232, %v2248, 0
      %v2276 = vsel %vm232, %v2249, 0
      %v2279 = vsel %vm232, %v2250, 0
      %v2282 = vsel %vm232, %v2251, 0
      %v2285 = vsel %vm232, %v2252, 0
      %v2288 = vsel %vm232, %v2253, 0
      %v2291 = vsel %vm232, %v2254, 0
      %v2294 = vsel %vm232, %v2255, 0
      %v2297 = vsel %vm232, %v2256, 0
      %v2300 = vsel %vm232, %v2257, 0
      %v2303 = vsel %vm232, %v2258, 0
      %v2306 = vsel %vm232, %v2259, 0
      %v2309 = vsel %vm1231, %v2179, 0
      %2311 = vmatprep.subr.bf16.mxu0 0
      %2312 = vmatpush1.bf16.msra.mxu0 0
      %2313 = vmatprep.subr.bf16.mxu0 0
      %2314 = vmatpush1.bf16.msra.mxu0 0
      %2315 = vmatprep.subr.bf16.mxu0 0
      %2316 = vmatpush1.bf16.msra.mxu0 0
      %2317 = vmatprep.subr.bf16.mxu0 0
      %2318 = vmatpush1.bf16.msra.mxu0 0
      %2319 = vmatprep.subr.bf16.mxu0 0
      %2320 = vmatpush1.bf16.msra.mxu0 0
      %2321 = vmatprep.subr.bf16.mxu0 0
      %2322 = vmatpush1.bf16.msra.mxu0 0
      %2323 = vmatprep.subr.bf16.mxu0 0
      %2324 = vmatpush1.bf16.msra.mxu0 0
      %2325 = vmatprep.subr.bf16.mxu0 0
      %2326 = vmatpush1.bf16.msra.mxu0 %v2309
      %2327 = vmatprep.subr.bf16.mxu0 0
      %2328 = vmatpush2.bf16.msra.mxu0 0
      %2329 = vmatprep.subr.bf16.mxu0 0
      %2330 = vmatpush2.bf16.msra.mxu0 0
      %2331 = vmatprep.subr.bf16.mxu0 0
      %2332 = vmatpush2.bf16.msra.mxu0 0
      %2333 = vmatprep.subr.bf16.mxu0 0
      %2334 = vmatpush2.bf16.msra.mxu0 0
      %2335 = vmatprep.subr.bf16.mxu0 0
      %2336 = vmatpush2.bf16.msra.mxu0 0
      %2337 = vmatprep.subr.bf16.mxu0 0
      %2338 = vmatpush2.bf16.msra.mxu0 0
      %2339 = vmatprep.subr.bf16.mxu0 0
      %2340 = vmatpush2.bf16.msra.mxu0 0
      %2341 = vmatprep.subr.bf16.mxu0 0
      %2342 = vmatpush2.bf16.msra.mxu0 0
      %2343 = vmatprep.mubr.bf16.mxu0 0
      %2344 = vmatmul.mubr.bf16.gmra.mxu0 %v2261
      %v2345 = vpop.f32.mrf.mxu0
      %v2346 = vadd.f32 0.0, %v2345
      %v2347 = vpop.f32.mrf.mxu0
      %v2348 = vpop.f32.mrf.mxu0
      %v2349 = vadd.f32 0.0, %v2348
      %v2350 = vpop.f32.mrf.mxu0
      %2351 = vmatprep.mubr.bf16.mxu0 0
      %2352 = vmatmul.mubr.bf16.gmra.mxu0 %v2264
      %v2353 = vpop.f32.mrf.mxu0
      %v2354 = vadd.f32 0.0, %v2353
      %v2355 = vpop.f32.mrf.mxu0
      %v2356 = vpop.f32.mrf.mxu0
      %v2357 = vadd.f32 0.0, %v2356
      %v2358 = vpop.f32.mrf.mxu0
      %2359 = vmatprep.mubr.bf16.mxu0 0
      %2360 = vmatmul.mubr.bf16.gmra.mxu0 %v2267
      %v2361 = vpop.f32.mrf.mxu0
      %v2362 = vadd.f32 0.0, %v2361
      %v2363 = vpop.f32.mrf.mxu0
      %v2364 = vpop.f32.mrf.mxu0
      %v2365 = vadd.f32 0.0, %v2364
      %v2366 = vpop.f32.mrf.mxu0
      %2367 = vmatprep.mubr.bf16.mxu0 0
      %2368 = vmatmul.mubr.bf16.gmra.mxu0 %v2270
      %v2369 = vpop.f32.mrf.mxu0
      %v2370 = vadd.f32 0.0, %v2369
      %v2371 = vpop.f32.mrf.mxu0
      %v2372 = vpop.f32.mrf.mxu0
      %v2373 = vadd.f32 0.0, %v2372
      %v2374 = vpop.f32.mrf.mxu0
      %2375 = vmatprep.mubr.bf16.mxu0 0
      %2376 = vmatmul.mubr.bf16.gmra.mxu0 %v2273
      %v2377 = vpop.f32.mrf.mxu0
      %v2378 = vadd.f32 0.0, %v2377
      %v2379 = vpop.f32.mrf.mxu0
      %v2380 = vpop.f32.mrf.mxu0
      %v2381 = vadd.f32 0.0, %v2380
      %v2382 = vpop.f32.mrf.mxu0
      %2383 = vmatprep.mubr.bf16.mxu0 0
      %2384 = vmatmul.mubr.bf16.gmra.mxu0 %v2276
      %v2385 = vpop.f32.mrf.mxu0
      %v2386 = vadd.f32 0.0, %v2385
      %v2387 = vpop.f32.mrf.mxu0
      %v2388 = vpop.f32.mrf.mxu0
      %v2389 = vadd.f32 0.0, %v2388
      %v2390 = vpop.f32.mrf.mxu0
      %2391 = vmatprep.mubr.bf16.mxu0 0
      %2392 = vmatmul.mubr.bf16.gmra.mxu0 %v2279
      %v2393 = vpop.f32.mrf.mxu0
      %v2394 = vadd.f32 0.0, %v2393
      %v2395 = vpop.f32.mrf.mxu0
      %v2396 = vpop.f32.mrf.mxu0
      %v2397 = vadd.f32 0.0, %v2396
      %v2398 = vpop.f32.mrf.mxu0
      %2399 = vmatprep.mubr.bf16.mxu0 0
      %2400 = vmatmul.mubr.bf16.gmra.mxu0 %v2282
      %v2401 = vpop.f32.mrf.mxu0
      %v2402 = vadd.f32 0.0, %v2401
      %v2403 = vpop.f32.mrf.mxu0
      %v2404 = vpop.f32.mrf.mxu0
      %v2405 = vadd.f32 0.0, %v2404
      %v2406 = vpop.f32.mrf.mxu0
      %2407 = vmatprep.mubr.bf16.mxu0 0
      %2408 = vmatmul.mubr.bf16.gmra.mxu0 %v2285
      %v2409 = vpop.f32.mrf.mxu0
      %v2410 = vadd.f32 0.0, %v2409
      %v2411 = vpop.f32.mrf.mxu0
      %v2412 = vpop.f32.mrf.mxu0
      %v2413 = vadd.f32 0.0, %v2412
      %v2414 = vpop.f32.mrf.mxu0
      %2415 = vmatprep.mubr.bf16.mxu0 0
      %2416 = vmatmul.mubr.bf16.gmra.mxu0 %v2288
      %v2417 = vpop.f32.mrf.mxu0
      %v2418 = vadd.f32 0.0, %v2417
      %v2419 = vpop.f32.mrf.mxu0
      %v2420 = vpop.f32.mrf.mxu0
      %v2421 = vadd.f32 0.0, %v2420
      %v2422 = vpop.f32.mrf.mxu0
      %2423 = vmatprep.mubr.bf16.mxu0 0
      %2424 = vmatmul.mubr.bf16.gmra.mxu0 %v2291
      %v2425 = vpop.f32.mrf.mxu0
      %v2426 = vadd.f32 0.0, %v2425
      %v2427 = vpop.f32.mrf.mxu0
      %v2428 = vpop.f32.mrf.mxu0
      %v2429 = vadd.f32 0.0, %v2428
      %v2430 = vpop.f32.mrf.mxu0
      %2431 = vmatprep.mubr.bf16.mxu0 0
      %2432 = vmatmul.mubr.bf16.gmra.mxu0 %v2294
      %v2433 = vpop.f32.mrf.mxu0
      %v2434 = vadd.f32 0.0, %v2433
      %v2435 = vpop.f32.mrf.mxu0
      %v2436 = vpop.f32.mrf.mxu0
      %v2437 = vadd.f32 0.0, %v2436
      %v2438 = vpop.f32.mrf.mxu0
      %2439 = vmatprep.mubr.bf16.mxu0 0
      %2440 = vmatmul.mubr.bf16.gmra.mxu0 %v2297
      %v2441 = vpop.f32.mrf.mxu0
      %v2442 = vadd.f32 0.0, %v2441
      %v2443 = vpop.f32.mrf.mxu0
      %v2444 = vpop.f32.mrf.mxu0
      %v2445 = vadd.f32 0.0, %v2444
      %v2446 = vpop.f32.mrf.mxu0
      %2447 = vmatprep.mubr.bf16.mxu0 0
      %2448 = vmatmul.mubr.bf16.gmra.mxu0 %v2300
      %v2449 = vpop.f32.mrf.mxu0
      %v2450 = vadd.f32 0.0, %v2449
      %v2451 = vpop.f32.mrf.mxu0
      %v2452 = vpop.f32.mrf.mxu0
      %v2453 = vadd.f32 0.0, %v2452
      %v2454 = vpop.f32.mrf.mxu0
      %2455 = vmatprep.mubr.bf16.mxu0 0
      %2456 = vmatmul.mubr.bf16.gmra.mxu0 %v2303
      %v2457 = vpop.f32.mrf.mxu0
      %v2458 = vadd.f32 0.0, %v2457
      %v2459 = vpop.f32.mrf.mxu0
      %v2460 = vpop.f32.mrf.mxu0
      %v2461 = vadd.f32 0.0, %v2460
      %v2462 = vpop.f32.mrf.mxu0
      %2463 = vmatprep.mubr.bf16.mxu0 0
      %2464 = vmatmul.mubr.bf16.gmra.mxu0 %v2306
      %v2465 = vpop.f32.mrf.mxu0
      %v2466 = vadd.f32 0.0, %v2465
      %v2467 = vpop.f32.mrf.mxu0
      %v2468 = vpop.f32.mrf.mxu0
      %v2469 = vadd.f32 0.0, %v2468
      %v2470 = vpop.f32.mrf.mxu0
      %2471 = vdwg.mxu0
      %v2472 = vadd.f32 %v2113, %v2346
      %v2473 = vadd.f32 %v2114, %v2349
      %v2474 = vadd.f32 %v2115, %v2354
      %v2475 = vadd.f32 %v2116, %v2357
      %v2476 = vadd.f32 %v2117, %v2362
      %v2477 = vadd.f32 %v2118, %v2365
      %v2478 = vadd.f32 %v2119, %v2370
      %v2479 = vadd.f32 %v2120, %v2373
      %v2480 = vadd.f32 %v2121, %v2378
      %v2481 = vadd.f32 %v2122, %v2381
      %v2482 = vadd.f32 %v2123, %v2386
      %v2483 = vadd.f32 %v2124, %v2389
      %v2484 = vadd.f32 %v2125, %v2394
      %v2485 = vadd.f32 %v2126, %v2397
      %v2486 = vadd.f32 %v2127, %v2402
      %v2487 = vadd.f32 %v2128, %v2405
      %v2488 = vadd.f32 %v2129, %v2410
      %v2489 = vadd.f32 %v2130, %v2413
      %v2490 = vadd.f32 %v2131, %v2418
      %v2491 = vadd.f32 %v2132, %v2421
      %v2492 = vadd.f32 %v2133, %v2426
      %v2493 = vadd.f32 %v2134, %v2429
      %v2494 = vadd.f32 %v2135, %v2434
      %v2495 = vadd.f32 %v2136, %v2437
      %v2496 = vadd.f32 %v2137, %v2442
      %v2497 = vadd.f32 %v2138, %v2445
      %v2498 = vadd.f32 %v2139, %v2450
      %v2499 = vadd.f32 %v2140, %v2453
      %v2500 = vadd.f32 %v2141, %v2458
      %v2501 = vadd.f32 %v2142, %v2461
      %v2502 = vadd.f32 %v2143, %v2466
      %v2503 = vadd.f32 %v2144, %v2469
      %v2504 = vld [vmem:[%s2145] sm:$0xf]
      %v2505 = vld [vmem:[%s2145 + $0x4] sm:$0xf]
      %v2506 = vld [vmem:[%s2145 + $0x8] sm:$0x1]
      %v2507 = vld [vmem:[%s2145 + $0xc] sm:$0xf]
      %v2508 = vld [vmem:[%s2145 + $0x10] sm:$0xf]
      %v2509 = vld [vmem:[%s2145 + $0x14] sm:$0x1]
      %v2510 = vld [vmem:[%s2145 + $0x18] sm:$0xf]
      %v2511 = vld [vmem:[%s2145 + $0x1c] sm:$0xf]
      %v2512 = vld [vmem:[%s2145 + $0x20] sm:$0x1]
      %v2513 = vld [vmem:[%s2145 + $0x24] sm:$0xf]
      %v2514 = vld [vmem:[%s2145 + $0x28] sm:$0xf]
      %v2515 = vld [vmem:[%s2145 + $0x2c] sm:$0x1]
      %v2516 = vld [vmem:[%s2145 + $0x30] sm:$0xf]
      %v2517 = vld [vmem:[%s2145 + $0x34] sm:$0xf]
      %v2518 = vld [vmem:[%s2145 + $0x38] sm:$0x1]
      %v2519 = vld [vmem:[%s2145 + $0x3c] sm:$0xf]
      %v2520 = vld [vmem:[%s2145 + $0x40] sm:$0xf]
      %v2521 = vld [vmem:[%s2145 + $0x44] sm:$0x1]
      %v2522 = vld [vmem:[%s2145 + $0x48] sm:$0xf]
      %v2523 = vld [vmem:[%s2145 + $0x4c] sm:$0xf]
      %v2524 = vld [vmem:[%s2145 + $0x50] sm:$0x1]
      %v2525 = vld [vmem:[%s2145 + $0x54] sm:$0xf]
      %v2526 = vld [vmem:[%s2145 + $0x58] sm:$0xf]
      %v2527 = vld [vmem:[%s2145 + $0x5c] sm:$0x1]
      %v2528 = vld [vmem:[%s2145 + $0x60] sm:$0xf]
      %v2529 = vld [vmem:[%s2145 + $0x64] sm:$0xf]
      %v2530 = vld [vmem:[%s2145 + $0x68] sm:$0x1]
      %v2531 = vld [vmem:[%s2145 + $0x6c] sm:$0xf]
      %v2532 = vld [vmem:[%s2145 + $0x70] sm:$0xf]
      %v2533 = vld [vmem:[%s2145 + $0x74] sm:$0x1]
      %v2534 = vld [vmem:[%s2145 + $0x78] sm:$0xf]
      %v2535 = vld [vmem:[%s2145 + $0x7c] sm:$0xf]
      %v2536 = vld [vmem:[%s2145 + $0x80] sm:$0x1]
      %v2537 = vld [vmem:[%s2145 + $0x84] sm:$0xf]
      %v2538 = vld [vmem:[%s2145 + $0x88] sm:$0xf]
      %v2539 = vld [vmem:[%s2145 + $0x8c] sm:$0x1]
      %v2540 = vld [vmem:[%s2145 + $0x90] sm:$0xf]
      %v2541 = vld [vmem:[%s2145 + $0x94] sm:$0xf]
      %v2542 = vld [vmem:[%s2145 + $0x98] sm:$0x1]
      %v2543 = vld [vmem:[%s2145 + $0x9c] sm:$0xf]
      %v2544 = vld [vmem:[%s2145 + $0xa0] sm:$0xf]
      %v2545 = vld [vmem:[%s2145 + $0xa4] sm:$0x1]
      %v2546 = vld [vmem:[%s2145 + $0xa8] sm:$0xf]
      %v2547 = vld [vmem:[%s2145 + $0xac] sm:$0xf]
      %v2548 = vld [vmem:[%s2145 + $0xb0] sm:$0x1]
      %v2549 = vld [vmem:[%s2145 + $0xb4] sm:$0xf]
      %v2550 = vld [vmem:[%s2145 + $0xb8] sm:$0xf]
      %v2551 = vld [vmem:[%s2145 + $0xbc] sm:$0x1]
      %v2553 = vshrl.u32 %v2504, 16
      %v2555 = vrot.slane %v2553, 4
      %v2556 = vshll.u32 %v2504, 16
      %v2558 = vrot.slane %v2556, 5
      %v2559 = vor.u32 %v2555, %v2558
      %v2560 = vrot.slane %v2559, 4
      %v2562 = vshll.u32 %v2505, 16
      %v2564 = vrot.slane %v2562, 5
      %v2565 = vsel %vm748, %v2560, %v2564
      %v2566 = vshrl.u32 %v2505, 16
      %v2568 = vrot.slane %v2566, 4
      %v2569 = vor.u32 %v2568, %v2564
      %v2570 = vrot.slane %v2569, 4
      %v2572 = vshll.u32 %v2506, 16
      %v2574 = vrot.slane %v2572, 5
      %v2575 = vsel %vm748, %v2570, %v2574
      %v2577 = vshrl.u32 %v2507, 16
      %v2579 = vrot.slane %v2577, 4
      %v2580 = vshll.u32 %v2507, 16
      %v2582 = vrot.slane %v2580, 5
      %v2583 = vor.u32 %v2579, %v2582
      %v2584 = vrot.slane %v2583, 4
      %v2586 = vshll.u32 %v2508, 16
      %v2588 = vrot.slane %v2586, 5
      %v2589 = vsel %vm748, %v2584, %v2588
      %v2590 = vshrl.u32 %v2508, 16
      %v2592 = vrot.slane %v2590, 4
      %v2593 = vor.u32 %v2592, %v2588
      %v2594 = vrot.slane %v2593, 4
      %v2596 = vshll.u32 %v2509, 16
      %v2598 = vrot.slane %v2596, 5
      %v2599 = vsel %vm748, %v2594, %v2598
      %v2601 = vshrl.u32 %v2510, 16
      %v2603 = vrot.slane %v2601, 4
      %v2604 = vshll.u32 %v2510, 16
      %v2606 = vrot.slane %v2604, 5
      %v2607 = vor.u32 %v2603, %v2606
      %v2608 = vrot.slane %v2607, 4
      %v2610 = vshll.u32 %v2511, 16
      %v2612 = vrot.slane %v2610, 5
      %v2613 = vsel %vm748, %v2608, %v2612
      %v2614 = vshrl.u32 %v2511, 16
      %v2616 = vrot.slane %v2614, 4
      %v2617 = vor.u32 %v2616, %v2612
      %v2618 = vrot.slane %v2617, 4
      %v2620 = vshll.u32 %v2512, 16
      %v2622 = vrot.slane %v2620, 5
      %v2623 = vsel %vm748, %v2618, %v2622
      %v2625 = vshrl.u32 %v2513, 16
      %v2627 = vrot.slane %v2625, 4
      %v2628 = vshll.u32 %v2513, 16
      %v2630 = vrot.slane %v2628, 5
      %v2631 = vor.u32 %v2627, %v2630
      %v2632 = vrot.slane %v2631, 4
      %v2634 = vshll.u32 %v2514, 16
      %v2636 = vrot.slane %v2634, 5
      %v2637 = vsel %vm748, %v2632, %v2636
      %v2638 = vshrl.u32 %v2514, 16
      %v2640 = vrot.slane %v2638, 4
      %v2641 = vor.u32 %v2640, %v2636
      %v2642 = vrot.slane %v2641, 4
      %v2644 = vshll.u32 %v2515, 16
      %v2646 = vrot.slane %v2644, 5
      %v2647 = vsel %vm748, %v2642, %v2646
      %v2649 = vshrl.u32 %v2516, 16
      %v2651 = vrot.slane %v2649, 4
      %v2652 = vshll.u32 %v2516, 16
      %v2654 = vrot.slane %v2652, 5
      %v2655 = vor.u32 %v2651, %v2654
      %v2656 = vrot.slane %v2655, 4
      %v2658 = vshll.u32 %v2517, 16
      %v2660 = vrot.slane %v2658, 5
      %v2661 = vsel %vm748, %v2656, %v2660
      %v2662 = vshrl.u32 %v2517, 16
      %v2664 = vrot.slane %v2662, 4
      %v2665 = vor.u32 %v2664, %v2660
      %v2666 = vrot.slane %v2665, 4
      %v2668 = vshll.u32 %v2518, 16
      %v2670 = vrot.slane %v2668, 5
      %v2671 = vsel %vm748, %v2666, %v2670
      %v2673 = vshrl.u32 %v2519, 16
      %v2675 = vrot.slane %v2673, 4
      %v2676 = vshll.u32 %v2519, 16
      %v2678 = vrot.slane %v2676, 5
      %v2679 = vor.u32 %v2675, %v2678
      %v2680 = vrot.slane %v2679, 4
      %v2682 = vshll.u32 %v2520, 16
      %v2684 = vrot.slane %v2682, 5
      %v2685 = vsel %vm748, %v2680, %v2684
      %v2686 = vshrl.u32 %v2520, 16
      %v2688 = vrot.slane %v2686, 4
      %v2689 = vor.u32 %v2688, %v2684
      %v2690 = vrot.slane %v2689, 4
      %v2692 = vshll.u32 %v2521, 16
      %v2694 = vrot.slane %v2692, 5
      %v2695 = vsel %vm748, %v2690, %v2694
      %v2697 = vshrl.u32 %v2522, 16
      %v2699 = vrot.slane %v2697, 4
      %v2700 = vshll.u32 %v2522, 16
      %v2702 = vrot.slane %v2700, 5
      %v2703 = vor.u32 %v2699, %v2702
      %v2704 = vrot.slane %v2703, 4
      %v2706 = vshll.u32 %v2523, 16
      %v2708 = vrot.slane %v2706, 5
      %v2709 = vsel %vm748, %v2704, %v2708
      %v2710 = vshrl.u32 %v2523, 16
      %v2712 = vrot.slane %v2710, 4
      %v2713 = vor.u32 %v2712, %v2708
      %v2714 = vrot.slane %v2713, 4
      %v2716 = vshll.u32 %v2524, 16
      %v2718 = vrot.slane %v2716, 5
      %v2719 = vsel %vm748, %v2714, %v2718
      %v2721 = vshrl.u32 %v2525, 16
      %v2723 = vrot.slane %v2721, 4
      %v2724 = vshll.u32 %v2525, 16
      %v2726 = vrot.slane %v2724, 5
      %v2727 = vor.u32 %v2723, %v2726
      %v2728 = vrot.slane %v2727, 4
      %v2730 = vshll.u32 %v2526, 16
      %v2732 = vrot.slane %v2730, 5
      %v2733 = vsel %vm748, %v2728, %v2732
      %v2734 = vshrl.u32 %v2526, 16
      %v2736 = vrot.slane %v2734, 4
      %v2737 = vor.u32 %v2736, %v2732
      %v2738 = vrot.slane %v2737, 4
      %v2740 = vshll.u32 %v2527, 16
      %v2742 = vrot.slane %v2740, 5
      %v2743 = vsel %vm748, %v2738, %v2742
      %v2745 = vshrl.u32 %v2528, 16
      %v2747 = vrot.slane %v2745, 4
      %v2748 = vshll.u32 %v2528, 16
      %v2750 = vrot.slane %v2748, 5
      %v2751 = vor.u32 %v2747, %v2750
      %v2752 = vrot.slane %v2751, 4
      %v2754 = vshll.u32 %v2529, 16
      %v2756 = vrot.slane %v2754, 5
      %v2757 = vsel %vm748, %v2752, %v2756
      %v2758 = vshrl.u32 %v2529, 16
      %v2760 = vrot.slane %v2758, 4
      %v2761 = vor.u32 %v2760, %v2756
      %v2762 = vrot.slane %v2761, 4
      %v2764 = vshll.u32 %v2530, 16
      %v2766 = vrot.slane %v2764, 5
      %v2767 = vsel %vm748, %v2762, %v2766
      %v2769 = vshrl.u32 %v2531, 16
      %v2771 = vrot.slane %v2769, 4
      %v2772 = vshll.u32 %v2531, 16
      %v2774 = vrot.slane %v2772, 5
      %v2775 = vor.u32 %v2771, %v2774
      %v2776 = vrot.slane %v2775, 4
      %v2778 = vshll.u32 %v2532, 16
      %v2780 = vrot.slane %v2778, 5
      %v2781 = vsel %vm748, %v2776, %v2780
      %v2782 = vshrl.u32 %v2532, 16
      %v2784 = vrot.slane %v2782, 4
      %v2785 = vor.u32 %v2784, %v2780
      %v2786 = vrot.slane %v2785, 4
      %v2788 = vshll.u32 %v2533, 16
      %v2790 = vrot.slane %v2788, 5
      %v2791 = vsel %vm748, %v2786, %v2790
      %v2793 = vshrl.u32 %v2534, 16
      %v2795 = vrot.slane %v2793, 4
      %v2796 = vshll.u32 %v2534, 16
      %v2798 = vrot.slane %v2796, 5
      %v2799 = vor.u32 %v2795, %v2798
      %v2800 = vrot.slane %v2799, 4
      %v2802 = vshll.u32 %v2535, 16
      %v2804 = vrot.slane %v2802, 5
      %v2805 = vsel %vm748, %v2800, %v2804
      %v2806 = vshrl.u32 %v2535, 16
      %v2808 = vrot.slane %v2806, 4
      %v2809 = vor.u32 %v2808, %v2804
      %v2810 = vrot.slane %v2809, 4
      %v2812 = vshll.u32 %v2536, 16
      %v2814 = vrot.slane %v2812, 5
      %v2815 = vsel %vm748, %v2810, %v2814
      %v2817 = vshrl.u32 %v2537, 16
      %v2819 = vrot.slane %v2817, 4
      %v2820 = vshll.u32 %v2537, 16
      %v2822 = vrot.slane %v2820, 5
      %v2823 = vor.u32 %v2819, %v2822
      %v2824 = vrot.slane %v2823, 4
      %v2826 = vshll.u32 %v2538, 16
      %v2828 = vrot.slane %v2826, 5
      %v2829 = vsel %vm748, %v2824, %v2828
      %v2830 = vshrl.u32 %v2538, 16
      %v2832 = vrot.slane %v2830, 4
      %v2833 = vor.u32 %v2832, %v2828
      %v2834 = vrot.slane %v2833, 4
      %v2836 = vshll.u32 %v2539, 16
      %v2838 = vrot.slane %v2836, 5
      %v2839 = vsel %vm748, %v2834, %v2838
      %v2841 = vshrl.u32 %v2540, 16
      %v2843 = vrot.slane %v2841, 4
      %v2844 = vshll.u32 %v2540, 16
      %v2846 = vrot.slane %v2844, 5
      %v2847 = vor.u32 %v2843, %v2846
      %v2848 = vrot.slane %v2847, 4
      %v2850 = vshll.u32 %v2541, 16
      %v2852 = vrot.slane %v2850, 5
      %v2853 = vsel %vm748, %v2848, %v2852
      %v2854 = vshrl.u32 %v2541, 16
      %v2856 = vrot.slane %v2854, 4
      %v2857 = vor.u32 %v2856, %v2852
      %v2858 = vrot.slane %v2857, 4
      %v2860 = vshll.u32 %v2542, 16
      %v2862 = vrot.slane %v2860, 5
      %v2863 = vsel %vm748, %v2858, %v2862
      %v2865 = vshrl.u32 %v2543, 16
      %v2867 = vrot.slane %v2865, 4
      %v2868 = vshll.u32 %v2543, 16
      %v2870 = vrot.slane %v2868, 5
      %v2871 = vor.u32 %v2867, %v2870
      %v2872 = vrot.slane %v2871, 4
      %v2874 = vshll.u32 %v2544, 16
      %v2876 = vrot.slane %v2874, 5
      %v2877 = vsel %vm748, %v2872, %v2876
      %v2878 = vshrl.u32 %v2544, 16
      %v2880 = vrot.slane %v2878, 4
      %v2881 = vor.u32 %v2880, %v2876
      %v2882 = vrot.slane %v2881, 4
      %v2884 = vshll.u32 %v2545, 16
      %v2886 = vrot.slane %v2884, 5
      %v2887 = vsel %vm748, %v2882, %v2886
      %v2889 = vshrl.u32 %v2546, 16
      %v2891 = vrot.slane %v2889, 4
      %v2892 = vshll.u32 %v2546, 16
      %v2894 = vrot.slane %v2892, 5
      %v2895 = vor.u32 %v2891, %v2894
      %v2896 = vrot.slane %v2895, 4
      %v2898 = vshll.u32 %v2547, 16
      %v2900 = vrot.slane %v2898, 5
      %v2901 = vsel %vm748, %v2896, %v2900
      %v2902 = vshrl.u32 %v2547, 16
      %v2904 = vrot.slane %v2902, 4
      %v2905 = vor.u32 %v2904, %v2900
      %v2906 = vrot.slane %v2905, 4
      %v2908 = vshll.u32 %v2548, 16
      %v2910 = vrot.slane %v2908, 5
      %v2911 = vsel %vm748, %v2906, %v2910
      %v2913 = vshrl.u32 %v2549, 16
      %v2915 = vrot.slane %v2913, 4
      %v2916 = vshll.u32 %v2549, 16
      %v2918 = vrot.slane %v2916, 5
      %v2919 = vor.u32 %v2915, %v2918
      %v2920 = vrot.slane %v2919, 4
      %v2922 = vshll.u32 %v2550, 16
      %v2924 = vrot.slane %v2922, 5
      %v2925 = vsel %vm748, %v2920, %v2924
      %v2926 = vshrl.u32 %v2550, 16
      %v2928 = vrot.slane %v2926, 4
      %v2929 = vor.u32 %v2928, %v2924
      %v2930 = vrot.slane %v2929, 4
      %v2932 = vshll.u32 %v2551, 16
      %v2934 = vrot.slane %v2932, 5
      %v2935 = vsel %vm748, %v2930, %v2934
      %s2936 = scalar_lea.vmem %s1, 8
      %v2937 = vld [vmem:[%s2936] sm:$0x3]
      %v2938 = vunpack.c.l.b16 %v2565
      %v2939 = vunpack.c.l.b16 %v2575
      %v2940 = vunpack.c.l.b16 %v2589
      %v2941 = vunpack.c.l.b16 %v2599
      %v2942 = vunpack.c.l.b16 %v2613
      %v2943 = vunpack.c.l.b16 %v2623
      %v2944 = vunpack.c.l.b16 %v2637
      %v2945 = vunpack.c.l.b16 %v2647
      %v2946 = vunpack.c.l.b16 %v2661
      %v2947 = vunpack.c.l.b16 %v2671
      %v2948 = vunpack.c.l.b16 %v2685
      %v2949 = vunpack.c.l.b16 %v2695
      %v2950 = vunpack.c.l.b16 %v2709
      %v2951 = vunpack.c.l.b16 %v2719
      %v2952 = vunpack.c.l.b16 %v2733
      %v2953 = vunpack.c.l.b16 %v2743
      %v2954 = vunpack.c.l.b16 %v2757
      %v2955 = vunpack.c.l.b16 %v2767
      %v2956 = vunpack.c.l.b16 %v2781
      %v2957 = vunpack.c.l.b16 %v2791
      %v2958 = vunpack.c.l.b16 %v2805
      %v2959 = vunpack.c.l.b16 %v2815
      %v2960 = vunpack.c.l.b16 %v2829
      %v2961 = vunpack.c.l.b16 %v2839
      %v2962 = vunpack.c.l.b16 %v2853
      %v2963 = vunpack.c.l.b16 %v2863
      %v2964 = vunpack.c.l.b16 %v2877
      %v2965 = vunpack.c.l.b16 %v2887
      %v2966 = vunpack.c.l.b16 %v2901
      %v2967 = vunpack.c.l.b16 %v2911
      %v2968 = vunpack.c.l.b16 %v2925
      %v2969 = vunpack.c.l.b16 %v2935
      %v2970 = vpack.c.b16 %v2939, %v2938
      %v2971 = vpack.c.b16 %v2941, %v2940
      %v2972 = vpack.c.b16 %v2943, %v2942
      %v2973 = vpack.c.b16 %v2945, %v2944
      %v2974 = vpack.c.b16 %v2947, %v2946
      %v2975 = vpack.c.b16 %v2949, %v2948
      %v2976 = vpack.c.b16 %v2951, %v2950
      %v2977 = vpack.c.b16 %v2953, %v2952
      %v2978 = vpack.c.b16 %v2955, %v2954
      %v2979 = vpack.c.b16 %v2957, %v2956
      %v2980 = vpack.c.b16 %v2959, %v2958
      %v2981 = vpack.c.b16 %v2961, %v2960
      %v2982 = vpack.c.b16 %v2963, %v2962
      %v2983 = vpack.c.b16 %v2965, %v2964
      %v2984 = vpack.c.b16 %v2967, %v2966
      %v2985 = vpack.c.b16 %v2969, %v2968
      %v2987 = vsel %vm232, %v2970, 0
      %v2990 = vsel %vm232, %v2971, 0
      %v2993 = vsel %vm232, %v2972, 0
      %v2996 = vsel %vm232, %v2973, 0
      %v2999 = vsel %vm232, %v2974, 0
      %v3002 = vsel %vm232, %v2975, 0
      %v3005 = vsel %vm232, %v2976, 0
      %v3008 = vsel %vm232, %v2977, 0
      %v3011 = vsel %vm232, %v2978, 0
      %v3014 = vsel %vm232, %v2979, 0
      %v3017 = vsel %vm232, %v2980, 0
      %v3020 = vsel %vm232, %v2981, 0
      %v3023 = vsel %vm232, %v2982, 0
      %v3026 = vsel %vm232, %v2983, 0
      %v3029 = vsel %vm232, %v2984, 0
      %v3032 = vsel %vm232, %v2985, 0
      %v3035 = vsel %vm1231, %v2937, 0
      %3037 = vmatprep.subr.bf16.mxu0 0
      %3038 = vmatpush1.bf16.msra.mxu0 0
      %3039 = vmatprep.subr.bf16.mxu0 0
      %3040 = vmatpush1.bf16.msra.mxu0 0
      %3041 = vmatprep.subr.bf16.mxu0 0
      %3042 = vmatpush1.bf16.msra.mxu0 0
      %3043 = vmatprep.subr.bf16.mxu0 0
      %3044 = vmatpush1.bf16.msra.mxu0 0
      %3045 = vmatprep.subr.bf16.mxu0 0
      %3046 = vmatpush1.bf16.msra.mxu0 0
      %3047 = vmatprep.subr.bf16.mxu0 0
      %3048 = vmatpush1.bf16.msra.mxu0 0
      %3049 = vmatprep.subr.bf16.mxu0 0
      %3050 = vmatpush1.bf16.msra.mxu0 0
      %3051 = vmatprep.subr.bf16.mxu0 0
      %3052 = vmatpush1.bf16.msra.mxu0 %v3035
      %3053 = vmatprep.subr.bf16.mxu0 0
      %3054 = vmatpush2.bf16.msra.mxu0 0
      %3055 = vmatprep.subr.bf16.mxu0 0
      %3056 = vmatpush2.bf16.msra.mxu0 0
      %3057 = vmatprep.subr.bf16.mxu0 0
      %3058 = vmatpush2.bf16.msra.mxu0 0
      %3059 = vmatprep.subr.bf16.mxu0 0
      %3060 = vmatpush2.bf16.msra.mxu0 0
      %3061 = vmatprep.subr.bf16.mxu0 0
      %3062 = vmatpush2.bf16.msra.mxu0 0
      %3063 = vmatprep.subr.bf16.mxu0 0
      %3064 = vmatpush2.bf16.msra.mxu0 0
      %3065 = vmatprep.subr.bf16.mxu0 0
      %3066 = vmatpush2.bf16.msra.mxu0 0
      %3067 = vmatprep.subr.bf16.mxu0 0
      %3068 = vmatpush2.bf16.msra.mxu0 0
      %3069 = vmatprep.mubr.bf16.mxu0 0
      %3070 = vmatmul.mubr.bf16.gmra.mxu0 %v2987
      %v3071 = vpop.f32.mrf.mxu0
      %v3072 = vadd.f32 0.0, %v3071
      %v3073 = vpop.f32.mrf.mxu0
      %v3074 = vpop.f32.mrf.mxu0
      %v3075 = vadd.f32 0.0, %v3074
      %v3076 = vpop.f32.mrf.mxu0
      %3077 = vmatprep.mubr.bf16.mxu0 0
      %3078 = vmatmul.mubr.bf16.gmra.mxu0 %v2990
      %v3079 = vpop.f32.mrf.mxu0
      %v3080 = vadd.f32 0.0, %v3079
      %v3081 = vpop.f32.mrf.mxu0
      %v3082 = vpop.f32.mrf.mxu0
      %v3083 = vadd.f32 0.0, %v3082
      %v3084 = vpop.f32.mrf.mxu0
      %3085 = vmatprep.mubr.bf16.mxu0 0
      %3086 = vmatmul.mubr.bf16.gmra.mxu0 %v2993
      %v3087 = vpop.f32.mrf.mxu0
      %v3088 = vadd.f32 0.0, %v3087
      %v3089 = vpop.f32.mrf.mxu0
      %v3090 = vpop.f32.mrf.mxu0
      %v3091 = vadd.f32 0.0, %v3090
      %v3092 = vpop.f32.mrf.mxu0
      %3093 = vmatprep.mubr.bf16.mxu0 0
      %3094 = vmatmul.mubr.bf16.gmra.mxu0 %v2996
      %v3095 = vpop.f32.mrf.mxu0
      %v3096 = vadd.f32 0.0, %v3095
      %v3097 = vpop.f32.mrf.mxu0
      %v3098 = vpop.f32.mrf.mxu0
      %v3099 = vadd.f32 0.0, %v3098
      %v3100 = vpop.f32.mrf.mxu0
      %3101 = vmatprep.mubr.bf16.mxu0 0
      %3102 = vmatmul.mubr.bf16.gmra.mxu0 %v2999
      %v3103 = vpop.f32.mrf.mxu0
      %v3104 = vadd.f32 0.0, %v3103
      %v3105 = vpop.f32.mrf.mxu0
      %v3106 = vpop.f32.mrf.mxu0
      %v3107 = vadd.f32 0.0, %v3106
      %v3108 = vpop.f32.mrf.mxu0
      %3109 = vmatprep.mubr.bf16.mxu0 0
      %3110 = vmatmul.mubr.bf16.gmra.mxu0 %v3002
      %v3111 = vpop.f32.mrf.mxu0
      %v3112 = vadd.f32 0.0, %v3111
      %v3113 = vpop.f32.mrf.mxu0
      %v3114 = vpop.f32.mrf.mxu0
      %v3115 = vadd.f32 0.0, %v3114
      %v3116 = vpop.f32.mrf.mxu0
      %3117 = vmatprep.mubr.bf16.mxu0 0
      %3118 = vmatmul.mubr.bf16.gmra.mxu0 %v3005
      %v3119 = vpop.f32.mrf.mxu0
      %v3120 = vadd.f32 0.0, %v3119
      %v3121 = vpop.f32.mrf.mxu0
      %v3122 = vpop.f32.mrf.mxu0
      %v3123 = vadd.f32 0.0, %v3122
      %v3124 = vpop.f32.mrf.mxu0
      %3125 = vmatprep.mubr.bf16.mxu0 0
      %3126 = vmatmul.mubr.bf16.gmra.mxu0 %v3008
      %v3127 = vpop.f32.mrf.mxu0
      %v3128 = vadd.f32 0.0, %v3127
      %v3129 = vpop.f32.mrf.mxu0
      %v3130 = vpop.f32.mrf.mxu0
      %v3131 = vadd.f32 0.0, %v3130
      %v3132 = vpop.f32.mrf.mxu0
      %3133 = vmatprep.mubr.bf16.mxu0 0
      %3134 = vmatmul.mubr.bf16.gmra.mxu0 %v3011
      %v3135 = vpop.f32.mrf.mxu0
      %v3136 = vadd.f32 0.0, %v3135
      %v3137 = vpop.f32.mrf.mxu0
      %v3138 = vpop.f32.mrf.mxu0
      %v3139 = vadd.f32 0.0, %v3138
      %v3140 = vpop.f32.mrf.mxu0
      %3141 = vmatprep.mubr.bf16.mxu0 0
      %3142 = vmatmul.mubr.bf16.gmra.mxu0 %v3014
      %v3143 = vpop.f32.mrf.mxu0
      %v3144 = vadd.f32 0.0, %v3143
      %v3145 = vpop.f32.mrf.mxu0
      %v3146 = vpop.f32.mrf.mxu0
      %v3147 = vadd.f32 0.0, %v3146
      %v3148 = vpop.f32.mrf.mxu0
      %3149 = vmatprep.mubr.bf16.mxu0 0
      %3150 = vmatmul.mubr.bf16.gmra.mxu0 %v3017
      %v3151 = vpop.f32.mrf.mxu0
      %v3152 = vadd.f32 0.0, %v3151
      %v3153 = vpop.f32.mrf.mxu0
      %v3154 = vpop.f32.mrf.mxu0
      %v3155 = vadd.f32 0.0, %v3154
      %v3156 = vpop.f32.mrf.mxu0
      %3157 = vmatprep.mubr.bf16.mxu0 0
      %3158 = vmatmul.mubr.bf16.gmra.mxu0 %v3020
      %v3159 = vpop.f32.mrf.mxu0
      %v3160 = vadd.f32 0.0, %v3159
      %v3161 = vpop.f32.mrf.mxu0
      %v3162 = vpop.f32.mrf.mxu0
      %v3163 = vadd.f32 0.0, %v3162
      %v3164 = vpop.f32.mrf.mxu0
      %3165 = vmatprep.mubr.bf16.mxu0 0
      %3166 = vmatmul.mubr.bf16.gmra.mxu0 %v3023
      %v3167 = vpop.f32.mrf.mxu0
      %v3168 = vadd.f32 0.0, %v3167
      %v3169 = vpop.f32.mrf.mxu0
      %v3170 = vpop.f32.mrf.mxu0
      %v3171 = vadd.f32 0.0, %v3170
      %v3172 = vpop.f32.mrf.mxu0
      %3173 = vmatprep.mubr.bf16.mxu0 0
      %3174 = vmatmul.mubr.bf16.gmra.mxu0 %v3026
      %v3175 = vpop.f32.mrf.mxu0
      %v3176 = vadd.f32 0.0, %v3175
      %v3177 = vpop.f32.mrf.mxu0
      %v3178 = vpop.f32.mrf.mxu0
      %v3179 = vadd.f32 0.0, %v3178
      %v3180 = vpop.f32.mrf.mxu0
      %3181 = vmatprep.mubr.bf16.mxu0 0
      %3182 = vmatmul.mubr.bf16.gmra.mxu0 %v3029
      %v3183 = vpop.f32.mrf.mxu0
      %v3184 = vadd.f32 0.0, %v3183
      %v3185 = vpop.f32.mrf.mxu0
      %v3186 = vpop.f32.mrf.mxu0
      %v3187 = vadd.f32 0.0, %v3186
      %v3188 = vpop.f32.mrf.mxu0
      %3189 = vmatprep.mubr.bf16.mxu0 0
      %3190 = vmatmul.mubr.bf16.gmra.mxu0 %v3032
      %v3191 = vpop.f32.mrf.mxu0
      %v3192 = vadd.f32 0.0, %v3191
      %v3193 = vpop.f32.mrf.mxu0
      %v3194 = vpop.f32.mrf.mxu0
      %v3195 = vadd.f32 0.0, %v3194
      %v3196 = vpop.f32.mrf.mxu0
      %3197 = vdwg.mxu0
      %v3198 = vadd.f32 %v2472, %v3072
      %v3199 = vadd.f32 %v2473, %v3075
      %v3200 = vadd.f32 %v2474, %v3080
      %v3201 = vadd.f32 %v2475, %v3083
      %v3202 = vadd.f32 %v2476, %v3088
      %v3203 = vadd.f32 %v2477, %v3091
      %v3204 = vadd.f32 %v2478, %v3096
      %v3205 = vadd.f32 %v2479, %v3099
      %v3206 = vadd.f32 %v2480, %v3104
      %v3207 = vadd.f32 %v2481, %v3107
      %v3208 = vadd.f32 %v2482, %v3112
      %v3209 = vadd.f32 %v2483, %v3115
      %v3210 = vadd.f32 %v2484, %v3120
      %v3211 = vadd.f32 %v2485, %v3123
      %v3212 = vadd.f32 %v2486, %v3128
      %v3213 = vadd.f32 %v2487, %v3131
      %v3214 = vadd.f32 %v2488, %v3136
      %v3215 = vadd.f32 %v2489, %v3139
      %v3216 = vadd.f32 %v2490, %v3144
      %v3217 = vadd.f32 %v2491, %v3147
      %v3218 = vadd.f32 %v2492, %v3152
      %v3219 = vadd.f32 %v2493, %v3155
      %v3220 = vadd.f32 %v2494, %v3160
      %v3221 = vadd.f32 %v2495, %v3163
      %v3222 = vadd.f32 %v2496, %v3168
      %v3223 = vadd.f32 %v2497, %v3171
      %v3224 = vadd.f32 %v2498, %v3176
      %v3225 = vadd.f32 %v2499, %v3179
      %v3226 = vadd.f32 %v2500, %v3184
      %v3227 = vadd.f32 %v2501, %v3187
      %v3228 = vadd.f32 %v2502, %v3192
      %v3229 = vadd.f32 %v2503, %v3195
      %v3230 = vld [vmem:[%s2145] sm:$0xe]
      %v3231 = vld [vmem:[%s2145 + $0xc] sm:$0xe]
      %v3232 = vld [vmem:[%s2145 + $0x18] sm:$0xe]
      %v3233 = vld [vmem:[%s2145 + $0x24] sm:$0xe]
      %v3234 = vld [vmem:[%s2145 + $0x30] sm:$0xe]
      %v3235 = vld [vmem:[%s2145 + $0x3c] sm:$0xe]
      %v3236 = vld [vmem:[%s2145 + $0x48] sm:$0xe]
      %v3237 = vld [vmem:[%s2145 + $0x54] sm:$0xe]
      %v3238 = vld [vmem:[%s2145 + $0x60] sm:$0xe]
      %v3239 = vld [vmem:[%s2145 + $0x6c] sm:$0xe]
      %v3240 = vld [vmem:[%s2145 + $0x78] sm:$0xe]
      %v3241 = vld [vmem:[%s2145 + $0x84] sm:$0xe]
      %v3242 = vld [vmem:[%s2145 + $0x90] sm:$0xe]
      %v3243 = vld [vmem:[%s2145 + $0x9c] sm:$0xe]
      %v3244 = vld [vmem:[%s2145 + $0xa8] sm:$0xe]
      %v3245 = vld [vmem:[%s2145 + $0xb4] sm:$0xe]
      %v3294 = vrot.slane %v3230, 5
      %v3295 = vrot.slane %v3294, 4
      %v3296 = vrot.slane %v2505, 5
      %v3297 = vsel %vm1738, %v3295, %v3296
      %v3298 = vrot.slane %v3296, 4
      %v3299 = vrot.slane %v2506, 5
      %v3300 = vsel %vm1738, %v3298, %v3299
      %v3301 = vrot.slane %v3231, 5
      %v3302 = vrot.slane %v3301, 4
      %v3303 = vrot.slane %v2508, 5
      %v3304 = vsel %vm1738, %v3302, %v3303
      %v3305 = vrot.slane %v3303, 4
      %v3306 = vrot.slane %v2509, 5
      %v3307 = vsel %vm1738, %v3305, %v3306
      %v3308 = vrot.slane %v3232, 5
      %v3309 = vrot.slane %v3308, 4
      %v3310 = vrot.slane %v2511, 5
      %v3311 = vsel %vm1738, %v3309, %v3310
      %v3312 = vrot.slane %v3310, 4
      %v3313 = vrot.slane %v2512, 5
      %v3314 = vsel %vm1738, %v3312, %v3313
      %v3315 = vrot.slane %v3233, 5
      %v3316 = vrot.slane %v3315, 4
      %v3317 = vrot.slane %v2514, 5
      %v3318 = vsel %vm1738, %v3316, %v3317
      %v3319 = vrot.slane %v3317, 4
      %v3320 = vrot.slane %v2515, 5
      %v3321 = vsel %vm1738, %v3319, %v3320
      %v3322 = vrot.slane %v3234, 5
      %v3323 = vrot.slane %v3322, 4
      %v3324 = vrot.slane %v2517, 5
      %v3325 = vsel %vm1738, %v3323, %v3324
      %v3326 = vrot.slane %v3324, 4
      %v3327 = vrot.slane %v2518, 5
      %v3328 = vsel %vm1738, %v3326, %v3327
      %v3329 = vrot.slane %v3235, 5
      %v3330 = vrot.slane %v3329, 4
      %v3331 = vrot.slane %v2520, 5
      %v3332 = vsel %vm1738, %v3330, %v3331
      %v3333 = vrot.slane %v3331, 4
      %v3334 = vrot.slane %v2521, 5
      %v3335 = vsel %vm1738, %v3333, %v3334
      %v3336 = vrot.slane %v3236, 5
      %v3337 = vrot.slane %v3336, 4
      %v3338 = vrot.slane %v2523, 5
      %v3339 = vsel %vm1738, %v3337, %v3338
      %v3340 = vrot.slane %v3338, 4
      %v3341 = vrot.slane %v2524, 5
      %v3342 = vsel %vm1738, %v3340, %v3341
      %v3343 = vrot.slane %v3237, 5
      %v3344 = vrot.slane %v3343, 4
      %v3345 = vrot.slane %v2526, 5
      %v3346 = vsel %vm1738, %v3344, %v3345
      %v3347 = vrot.slane %v3345, 4
      %v3348 = vrot.slane %v2527, 5
      %v3349 = vsel %vm1738, %v3347, %v3348
      %v3350 = vrot.slane %v3238, 5
      %v3351 = vrot.slane %v3350, 4
      %v3352 = vrot.slane %v2529, 5
      %v3353 = vsel %vm1738, %v3351, %v3352
      %v3354 = vrot.slane %v3352, 4
      %v3355 = vrot.slane %v2530, 5
      %v3356 = vsel %vm1738, %v3354, %v3355
      %v3357 = vrot.slane %v3239, 5
      %v3358 = vrot.slane %v3357, 4
      %v3359 = vrot.slane %v2532, 5
      %v3360 = vsel %vm1738, %v3358, %v3359
      %v3361 = vrot.slane %v3359, 4
      %v3362 = vrot.slane %v2533, 5
      %v3363 = vsel %vm1738, %v3361, %v3362
      %v3364 = vrot.slane %v3240, 5
      %v3365 = vrot.slane %v3364, 4
      %v3366 = vrot.slane %v2535, 5
      %v3367 = vsel %vm1738, %v3365, %v3366
      %v3368 = vrot.slane %v3366, 4
      %v3369 = vrot.slane %v2536, 5
      %v3370 = vsel %vm1738, %v3368, %v3369
      %v3371 = vrot.slane %v3241, 5
      %v3372 = vrot.slane %v3371, 4
      %v3373 = vrot.slane %v2538, 5
      %v3374 = vsel %vm1738, %v3372, %v3373
      %v3375 = vrot.slane %v3373, 4
      %v3376 = vrot.slane %v2539, 5
      %v3377 = vsel %vm1738, %v3375, %v3376
      %v3378 = vrot.slane %v3242, 5
      %v3379 = vrot.slane %v3378, 4
      %v3380 = vrot.slane %v2541, 5
      %v3381 = vsel %vm1738, %v3379, %v3380
      %v3382 = vrot.slane %v3380, 4
      %v3383 = vrot.slane %v2542, 5
      %v3384 = vsel %vm1738, %v3382, %v3383
      %v3385 = vrot.slane %v3243, 5
      %v3386 = vrot.slane %v3385, 4
      %v3387 = vrot.slane %v2544, 5
      %v3388 = vsel %vm1738, %v3386, %v3387
      %v3389 = vrot.slane %v3387, 4
      %v3390 = vrot.slane %v2545, 5
      %v3391 = vsel %vm1738, %v3389, %v3390
      %v3392 = vrot.slane %v3244, 5
      %v3393 = vrot.slane %v3392, 4
      %v3394 = vrot.slane %v2547, 5
      %v3395 = vsel %vm1738, %v3393, %v3394
      %v3396 = vrot.slane %v3394, 4
      %v3397 = vrot.slane %v2548, 5
      %v3398 = vsel %vm1738, %v3396, %v3397
      %v3399 = vrot.slane %v3245, 5
      %v3400 = vrot.slane %v3399, 4
      %v3401 = vrot.slane %v2550, 5
      %v3402 = vsel %vm1738, %v3400, %v3401
      %v3403 = vrot.slane %v3401, 4
      %v3404 = vrot.slane %v2551, 5
      %v3405 = vsel %vm1738, %v3403, %v3404
      %s3406 = scalar_lea.vmem %s1, 10
      %v3407 = vld [vmem:[%s3406] sm:$0x3]
      %v3408 = vunpack.c.l.b16 %v3297
      %v3409 = vunpack.c.l.b16 %v3300
      %v3410 = vunpack.c.l.b16 %v3304
      %v3411 = vunpack.c.l.b16 %v3307
      %v3412 = vunpack.c.l.b16 %v3311
      %v3413 = vunpack.c.l.b16 %v3314
      %v3414 = vunpack.c.l.b16 %v3318
      %v3415 = vunpack.c.l.b16 %v3321
      %v3416 = vunpack.c.l.b16 %v3325
      %v3417 = vunpack.c.l.b16 %v3328
      %v3418 = vunpack.c.l.b16 %v3332
      %v3419 = vunpack.c.l.b16 %v3335
      %v3420 = vunpack.c.l.b16 %v3339
      %v3421 = vunpack.c.l.b16 %v3342
      %v3422 = vunpack.c.l.b16 %v3346
      %v3423 = vunpack.c.l.b16 %v3349
      %v3424 = vunpack.c.l.b16 %v3353
      %v3425 = vunpack.c.l.b16 %v3356
      %v3426 = vunpack.c.l.b16 %v3360
      %v3427 = vunpack.c.l.b16 %v3363
      %v3428 = vunpack.c.l.b16 %v3367
      %v3429 = vunpack.c.l.b16 %v3370
      %v3430 = vunpack.c.l.b16 %v3374
      %v3431 = vunpack.c.l.b16 %v3377
      %v3432 = vunpack.c.l.b16 %v3381
      %v3433 = vunpack.c.l.b16 %v3384
      %v3434 = vunpack.c.l.b16 %v3388
      %v3435 = vunpack.c.l.b16 %v3391
      %v3436 = vunpack.c.l.b16 %v3395
      %v3437 = vunpack.c.l.b16 %v3398
      %v3438 = vunpack.c.l.b16 %v3402
      %v3439 = vunpack.c.l.b16 %v3405
      %v3440 = vpack.c.b16 %v3409, %v3408
      %v3441 = vpack.c.b16 %v3411, %v3410
      %v3442 = vpack.c.b16 %v3413, %v3412
      %v3443 = vpack.c.b16 %v3415, %v3414
      %v3444 = vpack.c.b16 %v3417, %v3416
      %v3445 = vpack.c.b16 %v3419, %v3418
      %v3446 = vpack.c.b16 %v3421, %v3420
      %v3447 = vpack.c.b16 %v3423, %v3422
      %v3448 = vpack.c.b16 %v3425, %v3424
      %v3449 = vpack.c.b16 %v3427, %v3426
      %v3450 = vpack.c.b16 %v3429, %v3428
      %v3451 = vpack.c.b16 %v3431, %v3430
      %v3452 = vpack.c.b16 %v3433, %v3432
      %v3453 = vpack.c.b16 %v3435, %v3434
      %v3454 = vpack.c.b16 %v3437, %v3436
      %v3455 = vpack.c.b16 %v3439, %v3438
      %v3457 = vsel %vm232, %v3440, 0
      %v3460 = vsel %vm232, %v3441, 0
      %v3463 = vsel %vm232, %v3442, 0
      %v3466 = vsel %vm232, %v3443, 0
      %v3469 = vsel %vm232, %v3444, 0
      %v3472 = vsel %vm232, %v3445, 0
      %v3475 = vsel %vm232, %v3446, 0
      %v3478 = vsel %vm232, %v3447, 0
      %v3481 = vsel %vm232, %v3448, 0
      %v3484 = vsel %vm232, %v3449, 0
      %v3487 = vsel %vm232, %v3450, 0
      %v3490 = vsel %vm232, %v3451, 0
      %v3493 = vsel %vm232, %v3452, 0
      %v3496 = vsel %vm232, %v3453, 0
      %v3499 = vsel %vm232, %v3454, 0
      %v3502 = vsel %vm232, %v3455, 0
      %v3505 = vsel %vm1231, %v3407, 0
      %3507 = vmatprep.subr.bf16.mxu0 0
      %3508 = vmatpush1.bf16.msra.mxu0 0
      %3509 = vmatprep.subr.bf16.mxu0 0
      %3510 = vmatpush1.bf16.msra.mxu0 0
      %3511 = vmatprep.subr.bf16.mxu0 0
      %3512 = vmatpush1.bf16.msra.mxu0 0
      %3513 = vmatprep.subr.bf16.mxu0 0
      %3514 = vmatpush1.bf16.msra.mxu0 0
      %3515 = vmatprep.subr.bf16.mxu0 0
      %3516 = vmatpush1.bf16.msra.mxu0 0
      %3517 = vmatprep.subr.bf16.mxu0 0
      %3518 = vmatpush1.bf16.msra.mxu0 0
      %3519 = vmatprep.subr.bf16.mxu0 0
      %3520 = vmatpush1.bf16.msra.mxu0 0
      %3521 = vmatprep.subr.bf16.mxu0 0
      %3522 = vmatpush1.bf16.msra.mxu0 %v3505
      %3523 = vmatprep.subr.bf16.mxu0 0
      %3524 = vmatpush2.bf16.msra.mxu0 0
      %3525 = vmatprep.subr.bf16.mxu0 0
      %3526 = vmatpush2.bf16.msra.mxu0 0
      %3527 = vmatprep.subr.bf16.mxu0 0
      %3528 = vmatpush2.bf16.msra.mxu0 0
      %3529 = vmatprep.subr.bf16.mxu0 0
      %3530 = vmatpush2.bf16.msra.mxu0 0
      %3531 = vmatprep.subr.bf16.mxu0 0
      %3532 = vmatpush2.bf16.msra.mxu0 0
      %3533 = vmatprep.subr.bf16.mxu0 0
      %3534 = vmatpush2.bf16.msra.mxu0 0
      %3535 = vmatprep.subr.bf16.mxu0 0
      %3536 = vmatpush2.bf16.msra.mxu0 0
      %3537 = vmatprep.subr.bf16.mxu0 0
      %3538 = vmatpush2.bf16.msra.mxu0 0
      %3539 = vmatprep.mubr.bf16.mxu0 0
      %3540 = vmatmul.mubr.bf16.gmra.mxu0 %v3457
      %v3541 = vpop.f32.mrf.mxu0
      %v3542 = vadd.f32 0.0, %v3541
      %v3543 = vpop.f32.mrf.mxu0
      %v3544 = vpop.f32.mrf.mxu0
      %v3545 = vadd.f32 0.0, %v3544
      %v3546 = vpop.f32.mrf.mxu0
      %3547 = vmatprep.mubr.bf16.mxu0 0
      %3548 = vmatmul.mubr.bf16.gmra.mxu0 %v3460
      %v3549 = vpop.f32.mrf.mxu0
      %v3550 = vadd.f32 0.0, %v3549
      %v3551 = vpop.f32.mrf.mxu0
      %v3552 = vpop.f32.mrf.mxu0
      %v3553 = vadd.f32 0.0, %v3552
      %v3554 = vpop.f32.mrf.mxu0
      %3555 = vmatprep.mubr.bf16.mxu0 0
      %3556 = vmatmul.mubr.bf16.gmra.mxu0 %v3463
      %v3557 = vpop.f32.mrf.mxu0
      %v3558 = vadd.f32 0.0, %v3557
      %v3559 = vpop.f32.mrf.mxu0
      %v3560 = vpop.f32.mrf.mxu0
      %v3561 = vadd.f32 0.0, %v3560
      %v3562 = vpop.f32.mrf.mxu0
      %3563 = vmatprep.mubr.bf16.mxu0 0
      %3564 = vmatmul.mubr.bf16.gmra.mxu0 %v3466
      %v3565 = vpop.f32.mrf.mxu0
      %v3566 = vadd.f32 0.0, %v3565
      %v3567 = vpop.f32.mrf.mxu0
      %v3568 = vpop.f32.mrf.mxu0
      %v3569 = vadd.f32 0.0, %v3568
      %v3570 = vpop.f32.mrf.mxu0
      %3571 = vmatprep.mubr.bf16.mxu0 0
      %3572 = vmatmul.mubr.bf16.gmra.mxu0 %v3469
      %v3573 = vpop.f32.mrf.mxu0
      %v3574 = vadd.f32 0.0, %v3573
      %v3575 = vpop.f32.mrf.mxu0
      %v3576 = vpop.f32.mrf.mxu0
      %v3577 = vadd.f32 0.0, %v3576
      %v3578 = vpop.f32.mrf.mxu0
      %3579 = vmatprep.mubr.bf16.mxu0 0
      %3580 = vmatmul.mubr.bf16.gmra.mxu0 %v3472
      %v3581 = vpop.f32.mrf.mxu0
      %v3582 = vadd.f32 0.0, %v3581
      %v3583 = vpop.f32.mrf.mxu0
      %v3584 = vpop.f32.mrf.mxu0
      %v3585 = vadd.f32 0.0, %v3584
      %v3586 = vpop.f32.mrf.mxu0
      %3587 = vmatprep.mubr.bf16.mxu0 0
      %3588 = vmatmul.mubr.bf16.gmra.mxu0 %v3475
      %v3589 = vpop.f32.mrf.mxu0
      %v3590 = vadd.f32 0.0, %v3589
      %v3591 = vpop.f32.mrf.mxu0
      %v3592 = vpop.f32.mrf.mxu0
      %v3593 = vadd.f32 0.0, %v3592
      %v3594 = vpop.f32.mrf.mxu0
      %3595 = vmatprep.mubr.bf16.mxu0 0
      %3596 = vmatmul.mubr.bf16.gmra.mxu0 %v3478
      %v3597 = vpop.f32.mrf.mxu0
      %v3598 = vadd.f32 0.0, %v3597
      %v3599 = vpop.f32.mrf.mxu0
      %v3600 = vpop.f32.mrf.mxu0
      %v3601 = vadd.f32 0.0, %v3600
      %v3602 = vpop.f32.mrf.mxu0
      %3603 = vmatprep.mubr.bf16.mxu0 0
      %3604 = vmatmul.mubr.bf16.gmra.mxu0 %v3481
      %v3605 = vpop.f32.mrf.mxu0
      %v3606 = vadd.f32 0.0, %v3605
      %v3607 = vpop.f32.mrf.mxu0
      %v3608 = vpop.f32.mrf.mxu0
      %v3609 = vadd.f32 0.0, %v3608
      %v3610 = vpop.f32.mrf.mxu0
      %3611 = vmatprep.mubr.bf16.mxu0 0
      %3612 = vmatmul.mubr.bf16.gmra.mxu0 %v3484
      %v3613 = vpop.f32.mrf.mxu0
      %v3614 = vadd.f32 0.0, %v3613
      %v3615 = vpop.f32.mrf.mxu0
      %v3616 = vpop.f32.mrf.mxu0
      %v3617 = vadd.f32 0.0, %v3616
      %v3618 = vpop.f32.mrf.mxu0
      %3619 = vmatprep.mubr.bf16.mxu0 0
      %3620 = vmatmul.mubr.bf16.gmra.mxu0 %v3487
      %v3621 = vpop.f32.mrf.mxu0
      %v3622 = vadd.f32 0.0, %v3621
      %v3623 = vpop.f32.mrf.mxu0
      %v3624 = vpop.f32.mrf.mxu0
      %v3625 = vadd.f32 0.0, %v3624
      %v3626 = vpop.f32.mrf.mxu0
      %3627 = vmatprep.mubr.bf16.mxu0 0
      %3628 = vmatmul.mubr.bf16.gmra.mxu0 %v3490
      %v3629 = vpop.f32.mrf.mxu0
      %v3630 = vadd.f32 0.0, %v3629
      %v3631 = vpop.f32.mrf.mxu0
      %v3632 = vpop.f32.mrf.mxu0
      %v3633 = vadd.f32 0.0, %v3632
      %v3634 = vpop.f32.mrf.mxu0
      %3635 = vmatprep.mubr.bf16.mxu0 0
      %3636 = vmatmul.mubr.bf16.gmra.mxu0 %v3493
      %v3637 = vpop.f32.mrf.mxu0
      %v3638 = vadd.f32 0.0, %v3637
      %v3639 = vpop.f32.mrf.mxu0
      %v3640 = vpop.f32.mrf.mxu0
      %v3641 = vadd.f32 0.0, %v3640
      %v3642 = vpop.f32.mrf.mxu0
      %3643 = vmatprep.mubr.bf16.mxu0 0
      %3644 = vmatmul.mubr.bf16.gmra.mxu0 %v3496
      %v3645 = vpop.f32.mrf.mxu0
      %v3646 = vadd.f32 0.0, %v3645
      %v3647 = vpop.f32.mrf.mxu0
      %v3648 = vpop.f32.mrf.mxu0
      %v3649 = vadd.f32 0.0, %v3648
      %v3650 = vpop.f32.mrf.mxu0
      %3651 = vmatprep.mubr.bf16.mxu0 0
      %3652 = vmatmul.mubr.bf16.gmra.mxu0 %v3499
      %v3653 = vpop.f32.mrf.mxu0
      %v3654 = vadd.f32 0.0, %v3653
      %v3655 = vpop.f32.mrf.mxu0
      %v3656 = vpop.f32.mrf.mxu0
      %v3657 = vadd.f32 0.0, %v3656
      %v3658 = vpop.f32.mrf.mxu0
      %3659 = vmatprep.mubr.bf16.mxu0 0
      %3660 = vmatmul.mubr.bf16.gmra.mxu0 %v3502
      %v3661 = vpop.f32.mrf.mxu0
      %v3662 = vadd.f32 0.0, %v3661
      %v3663 = vpop.f32.mrf.mxu0
      %v3664 = vpop.f32.mrf.mxu0
      %v3665 = vadd.f32 0.0, %v3664
      %v3666 = vpop.f32.mrf.mxu0
      %3667 = vdwg.mxu0
      %v3668 = vadd.f32 %v3198, %v3542
      %v3669 = vadd.f32 %v3199, %v3545
      %v3670 = vadd.f32 %v3200, %v3550
      %v3671 = vadd.f32 %v3201, %v3553
      %v3672 = vadd.f32 %v3202, %v3558
      %v3673 = vadd.f32 %v3203, %v3561
      %v3674 = vadd.f32 %v3204, %v3566
      %v3675 = vadd.f32 %v3205, %v3569
      %v3676 = vadd.f32 %v3206, %v3574
      %v3677 = vadd.f32 %v3207, %v3577
      %v3678 = vadd.f32 %v3208, %v3582
      %v3679 = vadd.f32 %v3209, %v3585
      %v3680 = vadd.f32 %v3210, %v3590
      %v3681 = vadd.f32 %v3211, %v3593
      %v3682 = vadd.f32 %v3212, %v3598
      %v3683 = vadd.f32 %v3213, %v3601
      %v3684 = vadd.f32 %v3214, %v3606
      %v3685 = vadd.f32 %v3215, %v3609
      %v3686 = vadd.f32 %v3216, %v3614
      %v3687 = vadd.f32 %v3217, %v3617
      %v3688 = vadd.f32 %v3218, %v3622
      %v3689 = vadd.f32 %v3219, %v3625
      %v3690 = vadd.f32 %v3220, %v3630
      %v3691 = vadd.f32 %v3221, %v3633
      %v3692 = vadd.f32 %v3222, %v3638
      %v3693 = vadd.f32 %v3223, %v3641
      %v3694 = vadd.f32 %v3224, %v3646
      %v3695 = vadd.f32 %v3225, %v3649
      %v3696 = vadd.f32 %v3226, %v3654
      %v3697 = vadd.f32 %v3227, %v3657
      %v3698 = vadd.f32 %v3228, %v3662
      %v3699 = vadd.f32 %v3229, %v3665
      %s3700 = scalar_lea.vmem [#allocation3], 24
      %v3701 = vld [vmem:[%s3700] sm:$0xf]
      %v3702 = vld [vmem:[%s3700 + $0x4] sm:$0xf]
      %v3703 = vld [vmem:[%s3700 + $0xc] sm:$0xf]
      %v3704 = vld [vmem:[%s3700 + $0x10] sm:$0xf]
      %v3705 = vld [vmem:[%s3700 + $0x18] sm:$0xf]
      %v3706 = vld [vmem:[%s3700 + $0x1c] sm:$0xf]
      %v3707 = vld [vmem:[%s3700 + $0x24] sm:$0xf]
      %v3708 = vld [vmem:[%s3700 + $0x28] sm:$0xf]
      %v3709 = vld [vmem:[%s3700 + $0x30] sm:$0xf]
      %v3710 = vld [vmem:[%s3700 + $0x34] sm:$0xf]
      %v3711 = vld [vmem:[%s3700 + $0x3c] sm:$0xf]
      %v3712 = vld [vmem:[%s3700 + $0x40] sm:$0xf]
      %v3713 = vld [vmem:[%s3700 + $0x48] sm:$0xf]
      %v3714 = vld [vmem:[%s3700 + $0x4c] sm:$0xf]
      %v3715 = vld [vmem:[%s3700 + $0x54] sm:$0xf]
      %v3716 = vld [vmem:[%s3700 + $0x58] sm:$0xf]
      %v3717 = vld [vmem:[%s3700 + $0x60] sm:$0xf]
      %v3718 = vld [vmem:[%s3700 + $0x64] sm:$0xf]
      %v3719 = vld [vmem:[%s3700 + $0x6c] sm:$0xf]
      %v3720 = vld [vmem:[%s3700 + $0x70] sm:$0xf]
      %v3721 = vld [vmem:[%s3700 + $0x78] sm:$0xf]
      %v3722 = vld [vmem:[%s3700 + $0x7c] sm:$0xf]
      %v3723 = vld [vmem:[%s3700 + $0x84] sm:$0xf]
      %v3724 = vld [vmem:[%s3700 + $0x88] sm:$0xf]
      %v3725 = vld [vmem:[%s3700 + $0x90] sm:$0xf]
      %v3726 = vld [vmem:[%s3700 + $0x94] sm:$0xf]
      %v3727 = vld [vmem:[%s3700 + $0x9c] sm:$0xf]
      %v3728 = vld [vmem:[%s3700 + $0xa0] sm:$0xf]
      %v3729 = vld [vmem:[%s3700 + $0xa8] sm:$0xf]
      %v3730 = vld [vmem:[%s3700 + $0xac] sm:$0xf]
      %v3731 = vld [vmem:[%s3700 + $0xb4] sm:$0xf]
      %v3732 = vld [vmem:[%s3700 + $0xb8] sm:$0xf]
      %s3733 = scalar_lea.vmem %s1, 12
      %v3734 = vld [vmem:[%s3733] sm:$0x3]
      %v3767 = vunpack.c.l.b16 %v3701
      %v3768 = vunpack.c.l.b16 %v3702
      %v3769 = vunpack.c.l.b16 %v3703
      %v3770 = vunpack.c.l.b16 %v3704
      %v3771 = vunpack.c.l.b16 %v3705
      %v3772 = vunpack.c.l.b16 %v3706
      %v3773 = vunpack.c.l.b16 %v3707
      %v3774 = vunpack.c.l.b16 %v3708
      %v3775 = vunpack.c.l.b16 %v3709
      %v3776 = vunpack.c.l.b16 %v3710
      %v3777 = vunpack.c.l.b16 %v3711
      %v3778 = vunpack.c.l.b16 %v3712
      %v3779 = vunpack.c.l.b16 %v3713
      %v3780 = vunpack.c.l.b16 %v3714
      %v3781 = vunpack.c.l.b16 %v3715
      %v3782 = vunpack.c.l.b16 %v3716
      %v3783 = vunpack.c.l.b16 %v3717
      %v3784 = vunpack.c.l.b16 %v3718
      %v3785 = vunpack.c.l.b16 %v3719
      %v3786 = vunpack.c.l.b16 %v3720
      %v3787 = vunpack.c.l.b16 %v3721
      %v3788 = vunpack.c.l.b16 %v3722
      %v3789 = vunpack.c.l.b16 %v3723
      %v3790 = vunpack.c.l.b16 %v3724
      %v3791 = vunpack.c.l.b16 %v3725
      %v3792 = vunpack.c.l.b16 %v3726
      %v3793 = vunpack.c.l.b16 %v3727
      %v3794 = vunpack.c.l.b16 %v3728
      %v3795 = vunpack.c.l.b16 %v3729
      %v3796 = vunpack.c.l.b16 %v3730
      %v3797 = vunpack.c.l.b16 %v3731
      %v3798 = vunpack.c.l.b16 %v3732
      %v3799 = vpack.c.b16 %v3768, %v3767
      %v3800 = vpack.c.b16 %v3770, %v3769
      %v3801 = vpack.c.b16 %v3772, %v3771
      %v3802 = vpack.c.b16 %v3774, %v3773
      %v3803 = vpack.c.b16 %v3776, %v3775
      %v3804 = vpack.c.b16 %v3778, %v3777
      %v3805 = vpack.c.b16 %v3780, %v3779
      %v3806 = vpack.c.b16 %v3782, %v3781
      %v3807 = vpack.c.b16 %v3784, %v3783
      %v3808 = vpack.c.b16 %v3786, %v3785
      %v3809 = vpack.c.b16 %v3788, %v3787
      %v3810 = vpack.c.b16 %v3790, %v3789
      %v3811 = vpack.c.b16 %v3792, %v3791
      %v3812 = vpack.c.b16 %v3794, %v3793
      %v3813 = vpack.c.b16 %v3796, %v3795
      %v3814 = vpack.c.b16 %v3798, %v3797
      %v3816 = vsel %vm232, %v3799, 0
      %v3819 = vsel %vm232, %v3800, 0
      %v3822 = vsel %vm232, %v3801, 0
      %v3825 = vsel %vm232, %v3802, 0
      %v3828 = vsel %vm232, %v3803, 0
      %v3831 = vsel %vm232, %v3804, 0
      %v3834 = vsel %vm232, %v3805, 0
      %v3837 = vsel %vm232, %v3806, 0
      %v3840 = vsel %vm232, %v3807, 0
      %v3843 = vsel %vm232, %v3808, 0
      %v3846 = vsel %vm232, %v3809, 0
      %v3849 = vsel %vm232, %v3810, 0
      %v3852 = vsel %vm232, %v3811, 0
      %v3855 = vsel %vm232, %v3812, 0
      %v3858 = vsel %vm232, %v3813, 0
      %v3861 = vsel %vm232, %v3814, 0
      %v3864 = vsel %vm1231, %v3734, 0
      %3866 = vmatprep.subr.bf16.mxu0 0
      %3867 = vmatpush1.bf16.msra.mxu0 0
      %3868 = vmatprep.subr.bf16.mxu0 0
      %3869 = vmatpush1.bf16.msra.mxu0 0
      %3870 = vmatprep.subr.bf16.mxu0 0
      %3871 = vmatpush1.bf16.msra.mxu0 0
      %3872 = vmatprep.subr.bf16.mxu0 0
      %3873 = vmatpush1.bf16.msra.mxu0 0
      %3874 = vmatprep.subr.bf16.mxu0 0
      %3875 = vmatpush1.bf16.msra.mxu0 0
      %3876 = vmatprep.subr.bf16.mxu0 0
      %3877 = vmatpush1.bf16.msra.mxu0 0
      %3878 = vmatprep.subr.bf16.mxu0 0
      %3879 = vmatpush1.bf16.msra.mxu0 0
      %3880 = vmatprep.subr.bf16.mxu0 0
      %3881 = vmatpush1.bf16.msra.mxu0 %v3864
      %3882 = vmatprep.subr.bf16.mxu0 0
      %3883 = vmatpush2.bf16.msra.mxu0 0
      %3884 = vmatprep.subr.bf16.mxu0 0
      %3885 = vmatpush2.bf16.msra.mxu0 0
      %3886 = vmatprep.subr.bf16.mxu0 0
      %3887 = vmatpush2.bf16.msra.mxu0 0
      %3888 = vmatprep.subr.bf16.mxu0 0
      %3889 = vmatpush2.bf16.msra.mxu0 0
      %3890 = vmatprep.subr.bf16.mxu0 0
      %3891 = vmatpush2.bf16.msra.mxu0 0
      %3892 = vmatprep.subr.bf16.mxu0 0
      %3893 = vmatpush2.bf16.msra.mxu0 0
      %3894 = vmatprep.subr.bf16.mxu0 0
      %3895 = vmatpush2.bf16.msra.mxu0 0
      %3896 = vmatprep.subr.bf16.mxu0 0
      %3897 = vmatpush2.bf16.msra.mxu0 0
      %3898 = vmatprep.mubr.bf16.mxu0 0
      %3899 = vmatmul.mubr.bf16.gmra.mxu0 %v3816
      %v3900 = vpop.f32.mrf.mxu0
      %v3901 = vadd.f32 0.0, %v3900
      %v3902 = vpop.f32.mrf.mxu0
      %v3903 = vpop.f32.mrf.mxu0
      %v3904 = vadd.f32 0.0, %v3903
      %v3905 = vpop.f32.mrf.mxu0
      %3906 = vmatprep.mubr.bf16.mxu0 0
      %3907 = vmatmul.mubr.bf16.gmra.mxu0 %v3819
      %v3908 = vpop.f32.mrf.mxu0
      %v3909 = vadd.f32 0.0, %v3908
      %v3910 = vpop.f32.mrf.mxu0
      %v3911 = vpop.f32.mrf.mxu0
      %v3912 = vadd.f32 0.0, %v3911
      %v3913 = vpop.f32.mrf.mxu0
      %3914 = vmatprep.mubr.bf16.mxu0 0
      %3915 = vmatmul.mubr.bf16.gmra.mxu0 %v3822
      %v3916 = vpop.f32.mrf.mxu0
      %v3917 = vadd.f32 0.0, %v3916
      %v3918 = vpop.f32.mrf.mxu0
      %v3919 = vpop.f32.mrf.mxu0
      %v3920 = vadd.f32 0.0, %v3919
      %v3921 = vpop.f32.mrf.mxu0
      %3922 = vmatprep.mubr.bf16.mxu0 0
      %3923 = vmatmul.mubr.bf16.gmra.mxu0 %v3825
      %v3924 = vpop.f32.mrf.mxu0
      %v3925 = vadd.f32 0.0, %v3924
      %v3926 = vpop.f32.mrf.mxu0
      %v3927 = vpop.f32.mrf.mxu0
      %v3928 = vadd.f32 0.0, %v3927
      %v3929 = vpop.f32.mrf.mxu0
      %3930 = vmatprep.mubr.bf16.mxu0 0
      %3931 = vmatmul.mubr.bf16.gmra.mxu0 %v3828
      %v3932 = vpop.f32.mrf.mxu0
      %v3933 = vadd.f32 0.0, %v3932
      %v3934 = vpop.f32.mrf.mxu0
      %v3935 = vpop.f32.mrf.mxu0
      %v3936 = vadd.f32 0.0, %v3935
      %v3937 = vpop.f32.mrf.mxu0
      %3938 = vmatprep.mubr.bf16.mxu0 0
      %3939 = vmatmul.mubr.bf16.gmra.mxu0 %v3831
      %v3940 = vpop.f32.mrf.mxu0
      %v3941 = vadd.f32 0.0, %v3940
      %v3942 = vpop.f32.mrf.mxu0
      %v3943 = vpop.f32.mrf.mxu0
      %v3944 = vadd.f32 0.0, %v3943
      %v3945 = vpop.f32.mrf.mxu0
      %3946 = vmatprep.mubr.bf16.mxu0 0
      %3947 = vmatmul.mubr.bf16.gmra.mxu0 %v3834
      %v3948 = vpop.f32.mrf.mxu0
      %v3949 = vadd.f32 0.0, %v3948
      %v3950 = vpop.f32.mrf.mxu0
      %v3951 = vpop.f32.mrf.mxu0
      %v3952 = vadd.f32 0.0, %v3951
      %v3953 = vpop.f32.mrf.mxu0
      %3954 = vmatprep.mubr.bf16.mxu0 0
      %3955 = vmatmul.mubr.bf16.gmra.mxu0 %v3837
      %v3956 = vpop.f32.mrf.mxu0
      %v3957 = vadd.f32 0.0, %v3956
      %v3958 = vpop.f32.mrf.mxu0
      %v3959 = vpop.f32.mrf.mxu0
      %v3960 = vadd.f32 0.0, %v3959
      %v3961 = vpop.f32.mrf.mxu0
      %3962 = vmatprep.mubr.bf16.mxu0 0
      %3963 = vmatmul.mubr.bf16.gmra.mxu0 %v3840
      %v3964 = vpop.f32.mrf.mxu0
      %v3965 = vadd.f32 0.0, %v3964
      %v3966 = vpop.f32.mrf.mxu0
      %v3967 = vpop.f32.mrf.mxu0
      %v3968 = vadd.f32 0.0, %v3967
      %v3969 = vpop.f32.mrf.mxu0
      %3970 = vmatprep.mubr.bf16.mxu0 0
      %3971 = vmatmul.mubr.bf16.gmra.mxu0 %v3843
      %v3972 = vpop.f32.mrf.mxu0
      %v3973 = vadd.f32 0.0, %v3972
      %v3974 = vpop.f32.mrf.mxu0
      %v3975 = vpop.f32.mrf.mxu0
      %v3976 = vadd.f32 0.0, %v3975
      %v3977 = vpop.f32.mrf.mxu0
      %3978 = vmatprep.mubr.bf16.mxu0 0
      %3979 = vmatmul.mubr.bf16.gmra.mxu0 %v3846
      %v3980 = vpop.f32.mrf.mxu0
      %v3981 = vadd.f32 0.0, %v3980
      %v3982 = vpop.f32.mrf.mxu0
      %v3983 = vpop.f32.mrf.mxu0
      %v3984 = vadd.f32 0.0, %v3983
      %v3985 = vpop.f32.mrf.mxu0
      %3986 = vmatprep.mubr.bf16.mxu0 0
      %3987 = vmatmul.mubr.bf16.gmra.mxu0 %v3849
      %v3988 = vpop.f32.mrf.mxu0
      %v3989 = vadd.f32 0.0, %v3988
      %v3990 = vpop.f32.mrf.mxu0
      %v3991 = vpop.f32.mrf.mxu0
      %v3992 = vadd.f32 0.0, %v3991
      %v3993 = vpop.f32.mrf.mxu0
      %3994 = vmatprep.mubr.bf16.mxu0 0
      %3995 = vmatmul.mubr.bf16.gmra.mxu0 %v3852
      %v3996 = vpop.f32.mrf.mxu0
      %v3997 = vadd.f32 0.0, %v3996
      %v3998 = vpop.f32.mrf.mxu0
      %v3999 = vpop.f32.mrf.mxu0
      %v4000 = vadd.f32 0.0, %v3999
      %v4001 = vpop.f32.mrf.mxu0
      %4002 = vmatprep.mubr.bf16.mxu0 0
      %4003 = vmatmul.mubr.bf16.gmra.mxu0 %v3855
      %v4004 = vpop.f32.mrf.mxu0
      %v4005 = vadd.f32 0.0, %v4004
      %v4006 = vpop.f32.mrf.mxu0
      %v4007 = vpop.f32.mrf.mxu0
      %v4008 = vadd.f32 0.0, %v4007
      %v4009 = vpop.f32.mrf.mxu0
      %4010 = vmatprep.mubr.bf16.mxu0 0
      %4011 = vmatmul.mubr.bf16.gmra.mxu0 %v3858
      %v4012 = vpop.f32.mrf.mxu0
      %v4013 = vadd.f32 0.0, %v4012
      %v4014 = vpop.f32.mrf.mxu0
      %v4015 = vpop.f32.mrf.mxu0
      %v4016 = vadd.f32 0.0, %v4015
      %v4017 = vpop.f32.mrf.mxu0
      %4018 = vmatprep.mubr.bf16.mxu0 0
      %4019 = vmatmul.mubr.bf16.gmra.mxu0 %v3861
      %v4020 = vpop.f32.mrf.mxu0
      %v4021 = vadd.f32 0.0, %v4020
      %v4022 = vpop.f32.mrf.mxu0
      %v4023 = vpop.f32.mrf.mxu0
      %v4024 = vadd.f32 0.0, %v4023
      %v4025 = vpop.f32.mrf.mxu0
      %4026 = vdwg.mxu0
      %v4027 = vadd.f32 %v3668, %v3901
      %v4028 = vadd.f32 %v3669, %v3904
      %v4029 = vadd.f32 %v3670, %v3909
      %v4030 = vadd.f32 %v3671, %v3912
      %v4031 = vadd.f32 %v3672, %v3917
      %v4032 = vadd.f32 %v3673, %v3920
      %v4033 = vadd.f32 %v3674, %v3925
      %v4034 = vadd.f32 %v3675, %v3928
      %v4035 = vadd.f32 %v3676, %v3933
      %v4036 = vadd.f32 %v3677, %v3936
      %v4037 = vadd.f32 %v3678, %v3941
      %v4038 = vadd.f32 %v3679, %v3944
      %v4039 = vadd.f32 %v3680, %v3949
      %v4040 = vadd.f32 %v3681, %v3952
      %v4041 = vadd.f32 %v3682, %v3957
      %v4042 = vadd.f32 %v3683, %v3960
      %v4043 = vadd.f32 %v3684, %v3965
      %v4044 = vadd.f32 %v3685, %v3968
      %v4045 = vadd.f32 %v3686, %v3973
      %v4046 = vadd.f32 %v3687, %v3976
      %v4047 = vadd.f32 %v3688, %v3981
      %v4048 = vadd.f32 %v3689, %v3984
      %v4049 = vadd.f32 %v3690, %v3989
      %v4050 = vadd.f32 %v3691, %v3992
      %v4051 = vadd.f32 %v3692, %v3997
      %v4052 = vadd.f32 %v3693, %v4000
      %v4053 = vadd.f32 %v3694, %v4005
      %v4054 = vadd.f32 %v3695, %v4008
      %v4055 = vadd.f32 %v3696, %v4013
      %v4056 = vadd.f32 %v3697, %v4016
      %v4057 = vadd.f32 %v3698, %v4021
      %v4058 = vadd.f32 %v3699, %v4024
      %v4059 = vld [vmem:[%s3700] sm:$0xf]
      %v4060 = vld [vmem:[%s3700 + $0x4] sm:$0xf]
      %v4061 = vld [vmem:[%s3700 + $0x8] sm:$0x1]
      %v4062 = vld [vmem:[%s3700 + $0xc] sm:$0xf]
      %v4063 = vld [vmem:[%s3700 + $0x10] sm:$0xf]
      %v4064 = vld [vmem:[%s3700 + $0x14] sm:$0x1]
      %v4065 = vld [vmem:[%s3700 + $0x18] sm:$0xf]
      %v4066 = vld [vmem:[%s3700 + $0x1c] sm:$0xf]
      %v4067 = vld [vmem:[%s3700 + $0x20] sm:$0x1]
      %v4068 = vld [vmem:[%s3700 + $0x24] sm:$0xf]
      %v4069 = vld [vmem:[%s3700 + $0x28] sm:$0xf]
      %v4070 = vld [vmem:[%s3700 + $0x2c] sm:$0x1]
      %v4071 = vld [vmem:[%s3700 + $0x30] sm:$0xf]
      %v4072 = vld [vmem:[%s3700 + $0x34] sm:$0xf]
      %v4073 = vld [vmem:[%s3700 + $0x38] sm:$0x1]
      %v4074 = vld [vmem:[%s3700 + $0x3c] sm:$0xf]
      %v4075 = vld [vmem:[%s3700 + $0x40] sm:$0xf]
      %v4076 = vld [vmem:[%s3700 + $0x44] sm:$0x1]
      %v4077 = vld [vmem:[%s3700 + $0x48] sm:$0xf]
      %v4078 = vld [vmem:[%s3700 + $0x4c] sm:$0xf]
      %v4079 = vld [vmem:[%s3700 + $0x50] sm:$0x1]
      %v4080 = vld [vmem:[%s3700 + $0x54] sm:$0xf]
      %v4081 = vld [vmem:[%s3700 + $0x58] sm:$0xf]
      %v4082 = vld [vmem:[%s3700 + $0x5c] sm:$0x1]
      %v4083 = vld [vmem:[%s3700 + $0x60] sm:$0xf]
      %v4084 = vld [vmem:[%s3700 + $0x64] sm:$0xf]
      %v4085 = vld [vmem:[%s3700 + $0x68] sm:$0x1]
      %v4086 = vld [vmem:[%s3700 + $0x6c] sm:$0xf]
      %v4087 = vld [vmem:[%s3700 + $0x70] sm:$0xf]
      %v4088 = vld [vmem:[%s3700 + $0x74] sm:$0x1]
      %v4089 = vld [vmem:[%s3700 + $0x78] sm:$0xf]
      %v4090 = vld [vmem:[%s3700 + $0x7c] sm:$0xf]
      %v4091 = vld [vmem:[%s3700 + $0x80] sm:$0x1]
      %v4092 = vld [vmem:[%s3700 + $0x84] sm:$0xf]
      %v4093 = vld [vmem:[%s3700 + $0x88] sm:$0xf]
      %v4094 = vld [vmem:[%s3700 + $0x8c] sm:$0x1]
      %v4095 = vld [vmem:[%s3700 + $0x90] sm:$0xf]
      %v4096 = vld [vmem:[%s3700 + $0x94] sm:$0xf]
      %v4097 = vld [vmem:[%s3700 + $0x98] sm:$0x1]
      %v4098 = vld [vmem:[%s3700 + $0x9c] sm:$0xf]
      %v4099 = vld [vmem:[%s3700 + $0xa0] sm:$0xf]
      %v4100 = vld [vmem:[%s3700 + $0xa4] sm:$0x1]
      %v4101 = vld [vmem:[%s3700 + $0xa8] sm:$0xf]
      %v4102 = vld [vmem:[%s3700 + $0xac] sm:$0xf]
      %v4103 = vld [vmem:[%s3700 + $0xb0] sm:$0x1]
      %v4104 = vld [vmem:[%s3700 + $0xb4] sm:$0xf]
      %v4105 = vld [vmem:[%s3700 + $0xb8] sm:$0xf]
      %v4106 = vld [vmem:[%s3700 + $0xbc] sm:$0x1]
      %v4108 = vshrl.u32 %v4059, 16
      %v4110 = vrot.slane %v4108, 4
      %v4111 = vshll.u32 %v4059, 16
      %v4113 = vrot.slane %v4111, 5
      %v4114 = vor.u32 %v4110, %v4113
      %v4115 = vrot.slane %v4114, 4
      %v4117 = vshll.u32 %v4060, 16
      %v4119 = vrot.slane %v4117, 5
      %v4120 = vsel %vm748, %v4115, %v4119
      %v4121 = vshrl.u32 %v4060, 16
      %v4123 = vrot.slane %v4121, 4
      %v4124 = vor.u32 %v4123, %v4119
      %v4125 = vrot.slane %v4124, 4
      %v4127 = vshll.u32 %v4061, 16
      %v4129 = vrot.slane %v4127, 5
      %v4130 = vsel %vm748, %v4125, %v4129
      %v4132 = vshrl.u32 %v4062, 16
      %v4134 = vrot.slane %v4132, 4
      %v4135 = vshll.u32 %v4062, 16
      %v4137 = vrot.slane %v4135, 5
      %v4138 = vor.u32 %v4134, %v4137
      %v4139 = vrot.slane %v4138, 4
      %v4141 = vshll.u32 %v4063, 16
      %v4143 = vrot.slane %v4141, 5
      %v4144 = vsel %vm748, %v4139, %v4143
      %v4145 = vshrl.u32 %v4063, 16
      %v4147 = vrot.slane %v4145, 4
      %v4148 = vor.u32 %v4147, %v4143
      %v4149 = vrot.slane %v4148, 4
      %v4151 = vshll.u32 %v4064, 16
      %v4153 = vrot.slane %v4151, 5
      %v4154 = vsel %vm748, %v4149, %v4153
      %v4156 = vshrl.u32 %v4065, 16
      %v4158 = vrot.slane %v4156, 4
      %v4159 = vshll.u32 %v4065, 16
      %v4161 = vrot.slane %v4159, 5
      %v4162 = vor.u32 %v4158, %v4161
      %v4163 = vrot.slane %v4162, 4
      %v4165 = vshll.u32 %v4066, 16
      %v4167 = vrot.slane %v4165, 5
      %v4168 = vsel %vm748, %v4163, %v4167
      %v4169 = vshrl.u32 %v4066, 16
      %v4171 = vrot.slane %v4169, 4
      %v4172 = vor.u32 %v4171, %v4167
      %v4173 = vrot.slane %v4172, 4
      %v4175 = vshll.u32 %v4067, 16
      %v4177 = vrot.slane %v4175, 5
      %v4178 = vsel %vm748, %v4173, %v4177
      %v4180 = vshrl.u32 %v4068, 16
      %v4182 = vrot.slane %v4180, 4
      %v4183 = vshll.u32 %v4068, 16
      %v4185 = vrot.slane %v4183, 5
      %v4186 = vor.u32 %v4182, %v4185
      %v4187 = vrot.slane %v4186, 4
      %v4189 = vshll.u32 %v4069, 16
      %v4191 = vrot.slane %v4189, 5
      %v4192 = vsel %vm748, %v4187, %v4191
      %v4193 = vshrl.u32 %v4069, 16
      %v4195 = vrot.slane %v4193, 4
      %v4196 = vor.u32 %v4195, %v4191
      %v4197 = vrot.slane %v4196, 4
      %v4199 = vshll.u32 %v4070, 16
      %v4201 = vrot.slane %v4199, 5
      %v4202 = vsel %vm748, %v4197, %v4201
      %v4204 = vshrl.u32 %v4071, 16
      %v4206 = vrot.slane %v4204, 4
      %v4207 = vshll.u32 %v4071, 16
      %v4209 = vrot.slane %v4207, 5
      %v4210 = vor.u32 %v4206, %v4209
      %v4211 = vrot.slane %v4210, 4
      %v4213 = vshll.u32 %v4072, 16
      %v4215 = vrot.slane %v4213, 5
      %v4216 = vsel %vm748, %v4211, %v4215
      %v4217 = vshrl.u32 %v4072, 16
      %v4219 = vrot.slane %v4217, 4
      %v4220 = vor.u32 %v4219, %v4215
      %v4221 = vrot.slane %v4220, 4
      %v4223 = vshll.u32 %v4073, 16
      %v4225 = vrot.slane %v4223, 5
      %v4226 = vsel %vm748, %v4221, %v4225
      %v4228 = vshrl.u32 %v4074, 16
      %v4230 = vrot.slane %v4228, 4
      %v4231 = vshll.u32 %v4074, 16
      %v4233 = vrot.slane %v4231, 5
      %v4234 = vor.u32 %v4230, %v4233
      %v4235 = vrot.slane %v4234, 4
      %v4237 = vshll.u32 %v4075, 16
      %v4239 = vrot.slane %v4237, 5
      %v4240 = vsel %vm748, %v4235, %v4239
      %v4241 = vshrl.u32 %v4075, 16
      %v4243 = vrot.slane %v4241, 4
      %v4244 = vor.u32 %v4243, %v4239
      %v4245 = vrot.slane %v4244, 4
      %v4247 = vshll.u32 %v4076, 16
      %v4249 = vrot.slane %v4247, 5
      %v4250 = vsel %vm748, %v4245, %v4249
      %v4252 = vshrl.u32 %v4077, 16
      %v4254 = vrot.slane %v4252, 4
      %v4255 = vshll.u32 %v4077, 16
      %v4257 = vrot.slane %v4255, 5
      %v4258 = vor.u32 %v4254, %v4257
      %v4259 = vrot.slane %v4258, 4
      %v4261 = vshll.u32 %v4078, 16
      %v4263 = vrot.slane %v4261, 5
      %v4264 = vsel %vm748, %v4259, %v4263
      %v4265 = vshrl.u32 %v4078, 16
      %v4267 = vrot.slane %v4265, 4
      %v4268 = vor.u32 %v4267, %v4263
      %v4269 = vrot.slane %v4268, 4
      %v4271 = vshll.u32 %v4079, 16
      %v4273 = vrot.slane %v4271, 5
      %v4274 = vsel %vm748, %v4269, %v4273
      %v4276 = vshrl.u32 %v4080, 16
      %v4278 = vrot.slane %v4276, 4
      %v4279 = vshll.u32 %v4080, 16
      %v4281 = vrot.slane %v4279, 5
      %v4282 = vor.u32 %v4278, %v4281
      %v4283 = vrot.slane %v4282, 4
      %v4285 = vshll.u32 %v4081, 16
      %v4287 = vrot.slane %v4285, 5
      %v4288 = vsel %vm748, %v4283, %v4287
      %v4289 = vshrl.u32 %v4081, 16
      %v4291 = vrot.slane %v4289, 4
      %v4292 = vor.u32 %v4291, %v4287
      %v4293 = vrot.slane %v4292, 4
      %v4295 = vshll.u32 %v4082, 16
      %v4297 = vrot.slane %v4295, 5
      %v4298 = vsel %vm748, %v4293, %v4297
      %v4300 = vshrl.u32 %v4083, 16
      %v4302 = vrot.slane %v4300, 4
      %v4303 = vshll.u32 %v4083, 16
      %v4305 = vrot.slane %v4303, 5
      %v4306 = vor.u32 %v4302, %v4305
      %v4307 = vrot.slane %v4306, 4
      %v4309 = vshll.u32 %v4084, 16
      %v4311 = vrot.slane %v4309, 5
      %v4312 = vsel %vm748, %v4307, %v4311
      %v4313 = vshrl.u32 %v4084, 16
      %v4315 = vrot.slane %v4313, 4
      %v4316 = vor.u32 %v4315, %v4311
      %v4317 = vrot.slane %v4316, 4
      %v4319 = vshll.u32 %v4085, 16
      %v4321 = vrot.slane %v4319, 5
      %v4322 = vsel %vm748, %v4317, %v4321
      %v4324 = vshrl.u32 %v4086, 16
      %v4326 = vrot.slane %v4324, 4
      %v4327 = vshll.u32 %v4086, 16
      %v4329 = vrot.slane %v4327, 5
      %v4330 = vor.u32 %v4326, %v4329
      %v4331 = vrot.slane %v4330, 4
      %v4333 = vshll.u32 %v4087, 16
      %v4335 = vrot.slane %v4333, 5
      %v4336 = vsel %vm748, %v4331, %v4335
      %v4337 = vshrl.u32 %v4087, 16
      %v4339 = vrot.slane %v4337, 4
      %v4340 = vor.u32 %v4339, %v4335
      %v4341 = vrot.slane %v4340, 4
      %v4343 = vshll.u32 %v4088, 16
      %v4345 = vrot.slane %v4343, 5
      %v4346 = vsel %vm748, %v4341, %v4345
      %v4348 = vshrl.u32 %v4089, 16
      %v4350 = vrot.slane %v4348, 4
      %v4351 = vshll.u32 %v4089, 16
      %v4353 = vrot.slane %v4351, 5
      %v4354 = vor.u32 %v4350, %v4353
      %v4355 = vrot.slane %v4354, 4
      %v4357 = vshll.u32 %v4090, 16
      %v4359 = vrot.slane %v4357, 5
      %v4360 = vsel %vm748, %v4355, %v4359
      %v4361 = vshrl.u32 %v4090, 16
      %v4363 = vrot.slane %v4361, 4
      %v4364 = vor.u32 %v4363, %v4359
      %v4365 = vrot.slane %v4364, 4
      %v4367 = vshll.u32 %v4091, 16
      %v4369 = vrot.slane %v4367, 5
      %v4370 = vsel %vm748, %v4365, %v4369
      %v4372 = vshrl.u32 %v4092, 16
      %v4374 = vrot.slane %v4372, 4
      %v4375 = vshll.u32 %v4092, 16
      %v4377 = vrot.slane %v4375, 5
      %v4378 = vor.u32 %v4374, %v4377
      %v4379 = vrot.slane %v4378, 4
      %v4381 = vshll.u32 %v4093, 16
      %v4383 = vrot.slane %v4381, 5
      %v4384 = vsel %vm748, %v4379, %v4383
      %v4385 = vshrl.u32 %v4093, 16
      %v4387 = vrot.slane %v4385, 4
      %v4388 = vor.u32 %v4387, %v4383
      %v4389 = vrot.slane %v4388, 4
      %v4391 = vshll.u32 %v4094, 16
      %v4393 = vrot.slane %v4391, 5
      %v4394 = vsel %vm748, %v4389, %v4393
      %v4396 = vshrl.u32 %v4095, 16
      %v4398 = vrot.slane %v4396, 4
      %v4399 = vshll.u32 %v4095, 16
      %v4401 = vrot.slane %v4399, 5
      %v4402 = vor.u32 %v4398, %v4401
      %v4403 = vrot.slane %v4402, 4
      %v4405 = vshll.u32 %v4096, 16
      %v4407 = vrot.slane %v4405, 5
      %v4408 = vsel %vm748, %v4403, %v4407
      %v4409 = vshrl.u32 %v4096, 16
      %v4411 = vrot.slane %v4409, 4
      %v4412 = vor.u32 %v4411, %v4407
      %v4413 = vrot.slane %v4412, 4
      %v4415 = vshll.u32 %v4097, 16
      %v4417 = vrot.slane %v4415, 5
      %v4418 = vsel %vm748, %v4413, %v4417
      %v4420 = vshrl.u32 %v4098, 16
      %v4422 = vrot.slane %v4420, 4
      %v4423 = vshll.u32 %v4098, 16
      %v4425 = vrot.slane %v4423, 5
      %v4426 = vor.u32 %v4422, %v4425
      %v4427 = vrot.slane %v4426, 4
      %v4429 = vshll.u32 %v4099, 16
      %v4431 = vrot.slane %v4429, 5
      %v4432 = vsel %vm748, %v4427, %v4431
      %v4433 = vshrl.u32 %v4099, 16
      %v4435 = vrot.slane %v4433, 4
      %v4436 = vor.u32 %v4435, %v4431
      %v4437 = vrot.slane %v4436, 4
      %v4439 = vshll.u32 %v4100, 16
      %v4441 = vrot.slane %v4439, 5
      %v4442 = vsel %vm748, %v4437, %v4441
      %v4444 = vshrl.u32 %v4101, 16
      %v4446 = vrot.slane %v4444, 4
      %v4447 = vshll.u32 %v4101, 16
      %v4449 = vrot.slane %v4447, 5
      %v4450 = vor.u32 %v4446, %v4449
      %v4451 = vrot.slane %v4450, 4
      %v4453 = vshll.u32 %v4102, 16
      %v4455 = vrot.slane %v4453, 5
      %v4456 = vsel %vm748, %v4451, %v4455
      %v4457 = vshrl.u32 %v4102, 16
      %v4459 = vrot.slane %v4457, 4
      %v4460 = vor.u32 %v4459, %v4455
      %v4461 = vrot.slane %v4460, 4
      %v4463 = vshll.u32 %v4103, 16
      %v4465 = vrot.slane %v4463, 5
      %v4466 = vsel %vm748, %v4461, %v4465
      %v4468 = vshrl.u32 %v4104, 16
      %v4470 = vrot.slane %v4468, 4
      %v4471 = vshll.u32 %v4104, 16
      %v4473 = vrot.slane %v4471, 5
      %v4474 = vor.u32 %v4470, %v4473
      %v4475 = vrot.slane %v4474, 4
      %v4477 = vshll.u32 %v4105, 16
      %v4479 = vrot.slane %v4477, 5
      %v4480 = vsel %vm748, %v4475, %v4479
      %v4481 = vshrl.u32 %v4105, 16
      %v4483 = vrot.slane %v4481, 4
      %v4484 = vor.u32 %v4483, %v4479
      %v4485 = vrot.slane %v4484, 4
      %v4487 = vshll.u32 %v4106, 16
      %v4489 = vrot.slane %v4487, 5
      %v4490 = vsel %vm748, %v4485, %v4489
      %s4491 = scalar_lea.vmem %s1, 14
      %v4492 = vld [vmem:[%s4491] sm:$0x3]
      %v4493 = vunpack.c.l.b16 %v4120
      %v4494 = vunpack.c.l.b16 %v4130
      %v4495 = vunpack.c.l.b16 %v4144
      %v4496 = vunpack.c.l.b16 %v4154
      %v4497 = vunpack.c.l.b16 %v4168
      %v4498 = vunpack.c.l.b16 %v4178
      %v4499 = vunpack.c.l.b16 %v4192
      %v4500 = vunpack.c.l.b16 %v4202
      %v4501 = vunpack.c.l.b16 %v4216
      %v4502 = vunpack.c.l.b16 %v4226
      %v4503 = vunpack.c.l.b16 %v4240
      %v4504 = vunpack.c.l.b16 %v4250
      %v4505 = vunpack.c.l.b16 %v4264
      %v4506 = vunpack.c.l.b16 %v4274
      %v4507 = vunpack.c.l.b16 %v4288
      %v4508 = vunpack.c.l.b16 %v4298
      %v4509 = vunpack.c.l.b16 %v4312
      %v4510 = vunpack.c.l.b16 %v4322
      %v4511 = vunpack.c.l.b16 %v4336
      %v4512 = vunpack.c.l.b16 %v4346
      %v4513 = vunpack.c.l.b16 %v4360
      %v4514 = vunpack.c.l.b16 %v4370
      %v4515 = vunpack.c.l.b16 %v4384
      %v4516 = vunpack.c.l.b16 %v4394
      %v4517 = vunpack.c.l.b16 %v4408
      %v4518 = vunpack.c.l.b16 %v4418
      %v4519 = vunpack.c.l.b16 %v4432
      %v4520 = vunpack.c.l.b16 %v4442
      %v4521 = vunpack.c.l.b16 %v4456
      %v4522 = vunpack.c.l.b16 %v4466
      %v4523 = vunpack.c.l.b16 %v4480
      %v4524 = vunpack.c.l.b16 %v4490
      %v4525 = vpack.c.b16 %v4494, %v4493
      %v4526 = vpack.c.b16 %v4496, %v4495
      %v4527 = vpack.c.b16 %v4498, %v4497
      %v4528 = vpack.c.b16 %v4500, %v4499
      %v4529 = vpack.c.b16 %v4502, %v4501
      %v4530 = vpack.c.b16 %v4504, %v4503
      %v4531 = vpack.c.b16 %v4506, %v4505
      %v4532 = vpack.c.b16 %v4508, %v4507
      %v4533 = vpack.c.b16 %v4510, %v4509
      %v4534 = vpack.c.b16 %v4512, %v4511
      %v4535 = vpack.c.b16 %v4514, %v4513
      %v4536 = vpack.c.b16 %v4516, %v4515
      %v4537 = vpack.c.b16 %v4518, %v4517
      %v4538 = vpack.c.b16 %v4520, %v4519
      %v4539 = vpack.c.b16 %v4522, %v4521
      %v4540 = vpack.c.b16 %v4524, %v4523
      %v4542 = vsel %vm232, %v4525, 0
      %v4545 = vsel %vm232, %v4526, 0
      %v4548 = vsel %vm232, %v4527, 0
      %v4551 = vsel %vm232, %v4528, 0
      %v4554 = vsel %vm232, %v4529, 0
      %v4557 = vsel %vm232, %v4530, 0
      %v4560 = vsel %vm232, %v4531, 0
      %v4563 = vsel %vm232, %v4532, 0
      %v4566 = vsel %vm232, %v4533, 0
      %v4569 = vsel %vm232, %v4534, 0
      %v4572 = vsel %vm232, %v4535, 0
      %v4575 = vsel %vm232, %v4536, 0
      %v4578 = vsel %vm232, %v4537, 0
      %v4581 = vsel %vm232, %v4538, 0
      %v4584 = vsel %vm232, %v4539, 0
      %v4587 = vsel %vm232, %v4540, 0
      %v4590 = vsel %vm1231, %v4492, 0
      %4592 = vmatprep.subr.bf16.mxu0 0
      %4593 = vmatpush1.bf16.msra.mxu0 0
      %4594 = vmatprep.subr.bf16.mxu0 0
      %4595 = vmatpush1.bf16.msra.mxu0 0
      %4596 = vmatprep.subr.bf16.mxu0 0
      %4597 = vmatpush1.bf16.msra.mxu0 0
      %4598 = vmatprep.subr.bf16.mxu0 0
      %4599 = vmatpush1.bf16.msra.mxu0 0
      %4600 = vmatprep.subr.bf16.mxu0 0
      %4601 = vmatpush1.bf16.msra.mxu0 0
      %4602 = vmatprep.subr.bf16.mxu0 0
      %4603 = vmatpush1.bf16.msra.mxu0 0
      %4604 = vmatprep.subr.bf16.mxu0 0
      %4605 = vmatpush1.bf16.msra.mxu0 0
      %4606 = vmatprep.subr.bf16.mxu0 0
      %4607 = vmatpush1.bf16.msra.mxu0 %v4590
      %4608 = vmatprep.subr.bf16.mxu0 0
      %4609 = vmatpush2.bf16.msra.mxu0 0
      %4610 = vmatprep.subr.bf16.mxu0 0
      %4611 = vmatpush2.bf16.msra.mxu0 0
      %4612 = vmatprep.subr.bf16.mxu0 0
      %4613 = vmatpush2.bf16.msra.mxu0 0
      %4614 = vmatprep.subr.bf16.mxu0 0
      %4615 = vmatpush2.bf16.msra.mxu0 0
      %4616 = vmatprep.subr.bf16.mxu0 0
      %4617 = vmatpush2.bf16.msra.mxu0 0
      %4618 = vmatprep.subr.bf16.mxu0 0
      %4619 = vmatpush2.bf16.msra.mxu0 0
      %4620 = vmatprep.subr.bf16.mxu0 0
      %4621 = vmatpush2.bf16.msra.mxu0 0
      %4622 = vmatprep.subr.bf16.mxu0 0
      %4623 = vmatpush2.bf16.msra.mxu0 0
      %4624 = vmatprep.mubr.bf16.mxu0 0
      %4625 = vmatmul.mubr.bf16.gmra.mxu0 %v4542
      %v4626 = vpop.f32.mrf.mxu0
      %v4627 = vadd.f32 0.0, %v4626
      %v4628 = vpop.f32.mrf.mxu0
      %v4629 = vpop.f32.mrf.mxu0
      %v4630 = vadd.f32 0.0, %v4629
      %v4631 = vpop.f32.mrf.mxu0
      %4632 = vmatprep.mubr.bf16.mxu0 0
      %4633 = vmatmul.mubr.bf16.gmra.mxu0 %v4545
      %v4634 = vpop.f32.mrf.mxu0
      %v4635 = vadd.f32 0.0, %v4634
      %v4636 = vpop.f32.mrf.mxu0
      %v4637 = vpop.f32.mrf.mxu0
      %v4638 = vadd.f32 0.0, %v4637
      %v4639 = vpop.f32.mrf.mxu0
      %4640 = vmatprep.mubr.bf16.mxu0 0
      %4641 = vmatmul.mubr.bf16.gmra.mxu0 %v4548
      %v4642 = vpop.f32.mrf.mxu0
      %v4643 = vadd.f32 0.0, %v4642
      %v4644 = vpop.f32.mrf.mxu0
      %v4645 = vpop.f32.mrf.mxu0
      %v4646 = vadd.f32 0.0, %v4645
      %v4647 = vpop.f32.mrf.mxu0
      %4648 = vmatprep.mubr.bf16.mxu0 0
      %4649 = vmatmul.mubr.bf16.gmra.mxu0 %v4551
      %v4650 = vpop.f32.mrf.mxu0
      %v4651 = vadd.f32 0.0, %v4650
      %v4652 = vpop.f32.mrf.mxu0
      %v4653 = vpop.f32.mrf.mxu0
      %v4654 = vadd.f32 0.0, %v4653
      %v4655 = vpop.f32.mrf.mxu0
      %4656 = vmatprep.mubr.bf16.mxu0 0
      %4657 = vmatmul.mubr.bf16.gmra.mxu0 %v4554
      %v4658 = vpop.f32.mrf.mxu0
      %v4659 = vadd.f32 0.0, %v4658
      %v4660 = vpop.f32.mrf.mxu0
      %v4661 = vpop.f32.mrf.mxu0
      %v4662 = vadd.f32 0.0, %v4661
      %v4663 = vpop.f32.mrf.mxu0
      %4664 = vmatprep.mubr.bf16.mxu0 0
      %4665 = vmatmul.mubr.bf16.gmra.mxu0 %v4557
      %v4666 = vpop.f32.mrf.mxu0
      %v4667 = vadd.f32 0.0, %v4666
      %v4668 = vpop.f32.mrf.mxu0
      %v4669 = vpop.f32.mrf.mxu0
      %v4670 = vadd.f32 0.0, %v4669
      %v4671 = vpop.f32.mrf.mxu0
      %4672 = vmatprep.mubr.bf16.mxu0 0
      %4673 = vmatmul.mubr.bf16.gmra.mxu0 %v4560
      %v4674 = vpop.f32.mrf.mxu0
      %v4675 = vadd.f32 0.0, %v4674
      %v4676 = vpop.f32.mrf.mxu0
      %v4677 = vpop.f32.mrf.mxu0
      %v4678 = vadd.f32 0.0, %v4677
      %v4679 = vpop.f32.mrf.mxu0
      %4680 = vmatprep.mubr.bf16.mxu0 0
      %4681 = vmatmul.mubr.bf16.gmra.mxu0 %v4563
      %v4682 = vpop.f32.mrf.mxu0
      %v4683 = vadd.f32 0.0, %v4682
      %v4684 = vpop.f32.mrf.mxu0
      %v4685 = vpop.f32.mrf.mxu0
      %v4686 = vadd.f32 0.0, %v4685
      %v4687 = vpop.f32.mrf.mxu0
      %4688 = vmatprep.mubr.bf16.mxu0 0
      %4689 = vmatmul.mubr.bf16.gmra.mxu0 %v4566
      %v4690 = vpop.f32.mrf.mxu0
      %v4691 = vadd.f32 0.0, %v4690
      %v4692 = vpop.f32.mrf.mxu0
      %v4693 = vpop.f32.mrf.mxu0
      %v4694 = vadd.f32 0.0, %v4693
      %v4695 = vpop.f32.mrf.mxu0
      %4696 = vmatprep.mubr.bf16.mxu0 0
      %4697 = vmatmul.mubr.bf16.gmra.mxu0 %v4569
      %v4698 = vpop.f32.mrf.mxu0
      %v4699 = vadd.f32 0.0, %v4698
      %v4700 = vpop.f32.mrf.mxu0
      %v4701 = vpop.f32.mrf.mxu0
      %v4702 = vadd.f32 0.0, %v4701
      %v4703 = vpop.f32.mrf.mxu0
      %4704 = vmatprep.mubr.bf16.mxu0 0
      %4705 = vmatmul.mubr.bf16.gmra.mxu0 %v4572
      %v4706 = vpop.f32.mrf.mxu0
      %v4707 = vadd.f32 0.0, %v4706
      %v4708 = vpop.f32.mrf.mxu0
      %v4709 = vpop.f32.mrf.mxu0
      %v4710 = vadd.f32 0.0, %v4709
      %v4711 = vpop.f32.mrf.mxu0
      %4712 = vmatprep.mubr.bf16.mxu0 0
      %4713 = vmatmul.mubr.bf16.gmra.mxu0 %v4575
      %v4714 = vpop.f32.mrf.mxu0
      %v4715 = vadd.f32 0.0, %v4714
      %v4716 = vpop.f32.mrf.mxu0
      %v4717 = vpop.f32.mrf.mxu0
      %v4718 = vadd.f32 0.0, %v4717
      %v4719 = vpop.f32.mrf.mxu0
      %4720 = vmatprep.mubr.bf16.mxu0 0
      %4721 = vmatmul.mubr.bf16.gmra.mxu0 %v4578
      %v4722 = vpop.f32.mrf.mxu0
      %v4723 = vadd.f32 0.0, %v4722
      %v4724 = vpop.f32.mrf.mxu0
      %v4725 = vpop.f32.mrf.mxu0
      %v4726 = vadd.f32 0.0, %v4725
      %v4727 = vpop.f32.mrf.mxu0
      %4728 = vmatprep.mubr.bf16.mxu0 0
      %4729 = vmatmul.mubr.bf16.gmra.mxu0 %v4581
      %v4730 = vpop.f32.mrf.mxu0
      %v4731 = vadd.f32 0.0, %v4730
      %v4732 = vpop.f32.mrf.mxu0
      %v4733 = vpop.f32.mrf.mxu0
      %v4734 = vadd.f32 0.0, %v4733
      %v4735 = vpop.f32.mrf.mxu0
      %4736 = vmatprep.mubr.bf16.mxu0 0
      %4737 = vmatmul.mubr.bf16.gmra.mxu0 %v4584
      %v4738 = vpop.f32.mrf.mxu0
      %v4739 = vadd.f32 0.0, %v4738
      %v4740 = vpop.f32.mrf.mxu0
      %v4741 = vpop.f32.mrf.mxu0
      %v4742 = vadd.f32 0.0, %v4741
      %v4743 = vpop.f32.mrf.mxu0
      %4744 = vmatprep.mubr.bf16.mxu0 0
      %4745 = vmatmul.mubr.bf16.gmra.mxu0 %v4587
      %v4746 = vpop.f32.mrf.mxu0
      %v4747 = vadd.f32 0.0, %v4746
      %v4748 = vpop.f32.mrf.mxu0
      %v4749 = vpop.f32.mrf.mxu0
      %v4750 = vadd.f32 0.0, %v4749
      %v4751 = vpop.f32.mrf.mxu0
      %4752 = vdwg.mxu0
      %v4753 = vadd.f32 %v4027, %v4627
      %v4754 = vadd.f32 %v4028, %v4630
      %v4755 = vadd.f32 %v4029, %v4635
      %v4756 = vadd.f32 %v4030, %v4638
      %v4757 = vadd.f32 %v4031, %v4643
      %v4758 = vadd.f32 %v4032, %v4646
      %v4759 = vadd.f32 %v4033, %v4651
      %v4760 = vadd.f32 %v4034, %v4654
      %v4761 = vadd.f32 %v4035, %v4659
      %v4762 = vadd.f32 %v4036, %v4662
      %v4763 = vadd.f32 %v4037, %v4667
      %v4764 = vadd.f32 %v4038, %v4670
      %v4765 = vadd.f32 %v4039, %v4675
      %v4766 = vadd.f32 %v4040, %v4678
      %v4767 = vadd.f32 %v4041, %v4683
      %v4768 = vadd.f32 %v4042, %v4686
      %v4769 = vadd.f32 %v4043, %v4691
      %v4770 = vadd.f32 %v4044, %v4694
      %v4771 = vadd.f32 %v4045, %v4699
      %v4772 = vadd.f32 %v4046, %v4702
      %v4773 = vadd.f32 %v4047, %v4707
      %v4774 = vadd.f32 %v4048, %v4710
      %v4775 = vadd.f32 %v4049, %v4715
      %v4776 = vadd.f32 %v4050, %v4718
      %v4777 = vadd.f32 %v4051, %v4723
      %v4778 = vadd.f32 %v4052, %v4726
      %v4779 = vadd.f32 %v4053, %v4731
      %v4780 = vadd.f32 %v4054, %v4734
      %v4781 = vadd.f32 %v4055, %v4739
      %v4782 = vadd.f32 %v4056, %v4742
      %v4783 = vadd.f32 %v4057, %v4747
      %v4784 = vadd.f32 %v4058, %v4750
      %v4785 = vld [vmem:[%s3700] sm:$0xe]
      %v4786 = vld [vmem:[%s3700 + $0xc] sm:$0xe]
      %v4787 = vld [vmem:[%s3700 + $0x18] sm:$0xe]
      %v4788 = vld [vmem:[%s3700 + $0x24] sm:$0xe]
      %v4789 = vld [vmem:[%s3700 + $0x30] sm:$0xe]
      %v4790 = vld [vmem:[%s3700 + $0x3c] sm:$0xe]
      %v4791 = vld [vmem:[%s3700 + $0x48] sm:$0xe]
      %v4792 = vld [vmem:[%s3700 + $0x54] sm:$0xe]
      %v4793 = vld [vmem:[%s3700 + $0x60] sm:$0xe]
      %v4794 = vld [vmem:[%s3700 + $0x6c] sm:$0xe]
      %v4795 = vld [vmem:[%s3700 + $0x78] sm:$0xe]
      %v4796 = vld [vmem:[%s3700 + $0x84] sm:$0xe]
      %v4797 = vld [vmem:[%s3700 + $0x90] sm:$0xe]
      %v4798 = vld [vmem:[%s3700 + $0x9c] sm:$0xe]
      %v4799 = vld [vmem:[%s3700 + $0xa8] sm:$0xe]
      %v4800 = vld [vmem:[%s3700 + $0xb4] sm:$0xe]
      %v4849 = vrot.slane %v4785, 5
      %v4850 = vrot.slane %v4849, 4
      %v4851 = vrot.slane %v4060, 5
      %v4852 = vsel %vm1738, %v4850, %v4851
      %v4853 = vrot.slane %v4851, 4
      %v4854 = vrot.slane %v4061, 5
      %v4855 = vsel %vm1738, %v4853, %v4854
      %v4856 = vrot.slane %v4786, 5
      %v4857 = vrot.slane %v4856, 4
      %v4858 = vrot.slane %v4063, 5
      %v4859 = vsel %vm1738, %v4857, %v4858
      %v4860 = vrot.slane %v4858, 4
      %v4861 = vrot.slane %v4064, 5
      %v4862 = vsel %vm1738, %v4860, %v4861
      %v4863 = vrot.slane %v4787, 5
      %v4864 = vrot.slane %v4863, 4
      %v4865 = vrot.slane %v4066, 5
      %v4866 = vsel %vm1738, %v4864, %v4865
      %v4867 = vrot.slane %v4865, 4
      %v4868 = vrot.slane %v4067, 5
      %v4869 = vsel %vm1738, %v4867, %v4868
      %v4870 = vrot.slane %v4788, 5
      %v4871 = vrot.slane %v4870, 4
      %v4872 = vrot.slane %v4069, 5
      %v4873 = vsel %vm1738, %v4871, %v4872
      %v4874 = vrot.slane %v4872, 4
      %v4875 = vrot.slane %v4070, 5
      %v4876 = vsel %vm1738, %v4874, %v4875
      %v4877 = vrot.slane %v4789, 5
      %v4878 = vrot.slane %v4877, 4
      %v4879 = vrot.slane %v4072, 5
      %v4880 = vsel %vm1738, %v4878, %v4879
      %v4881 = vrot.slane %v4879, 4
      %v4882 = vrot.slane %v4073, 5
      %v4883 = vsel %vm1738, %v4881, %v4882
      %v4884 = vrot.slane %v4790, 5
      %v4885 = vrot.slane %v4884, 4
      %v4886 = vrot.slane %v4075, 5
      %v4887 = vsel %vm1738, %v4885, %v4886
      %v4888 = vrot.slane %v4886, 4
      %v4889 = vrot.slane %v4076, 5
      %v4890 = vsel %vm1738, %v4888, %v4889
      %v4891 = vrot.slane %v4791, 5
      %v4892 = vrot.slane %v4891, 4
      %v4893 = vrot.slane %v4078, 5
      %v4894 = vsel %vm1738, %v4892, %v4893
      %v4895 = vrot.slane %v4893, 4
      %v4896 = vrot.slane %v4079, 5
      %v4897 = vsel %vm1738, %v4895, %v4896
      %v4898 = vrot.slane %v4792, 5
      %v4899 = vrot.slane %v4898, 4
      %v4900 = vrot.slane %v4081, 5
      %v4901 = vsel %vm1738, %v4899, %v4900
      %v4902 = vrot.slane %v4900, 4
      %v4903 = vrot.slane %v4082, 5
      %v4904 = vsel %vm1738, %v4902, %v4903
      %v4905 = vrot.slane %v4793, 5
      %v4906 = vrot.slane %v4905, 4
      %v4907 = vrot.slane %v4084, 5
      %v4908 = vsel %vm1738, %v4906, %v4907
      %v4909 = vrot.slane %v4907, 4
      %v4910 = vrot.slane %v4085, 5
      %v4911 = vsel %vm1738, %v4909, %v4910
      %v4912 = vrot.slane %v4794, 5
      %v4913 = vrot.slane %v4912, 4
      %v4914 = vrot.slane %v4087, 5
      %v4915 = vsel %vm1738, %v4913, %v4914
      %v4916 = vrot.slane %v4914, 4
      %v4917 = vrot.slane %v4088, 5
      %v4918 = vsel %vm1738, %v4916, %v4917
      %v4919 = vrot.slane %v4795, 5
      %v4920 = vrot.slane %v4919, 4
      %v4921 = vrot.slane %v4090, 5
      %v4922 = vsel %vm1738, %v4920, %v4921
      %v4923 = vrot.slane %v4921, 4
      %v4924 = vrot.slane %v4091, 5
      %v4925 = vsel %vm1738, %v4923, %v4924
      %v4926 = vrot.slane %v4796, 5
      %v4927 = vrot.slane %v4926, 4
      %v4928 = vrot.slane %v4093, 5
      %v4929 = vsel %vm1738, %v4927, %v4928
      %v4930 = vrot.slane %v4928, 4
      %v4931 = vrot.slane %v4094, 5
      %v4932 = vsel %vm1738, %v4930, %v4931
      %v4933 = vrot.slane %v4797, 5
      %v4934 = vrot.slane %v4933, 4
      %v4935 = vrot.slane %v4096, 5
      %v4936 = vsel %vm1738, %v4934, %v4935
      %v4937 = vrot.slane %v4935, 4
      %v4938 = vrot.slane %v4097, 5
      %v4939 = vsel %vm1738, %v4937, %v4938
      %v4940 = vrot.slane %v4798, 5
      %v4941 = vrot.slane %v4940, 4
      %v4942 = vrot.slane %v4099, 5
      %v4943 = vsel %vm1738, %v4941, %v4942
      %v4944 = vrot.slane %v4942, 4
      %v4945 = vrot.slane %v4100, 5
      %v4946 = vsel %vm1738, %v4944, %v4945
      %v4947 = vrot.slane %v4799, 5
      %v4948 = vrot.slane %v4947, 4
      %v4949 = vrot.slane %v4102, 5
      %v4950 = vsel %vm1738, %v4948, %v4949
      %v4951 = vrot.slane %v4949, 4
      %v4952 = vrot.slane %v4103, 5
      %v4953 = vsel %vm1738, %v4951, %v4952
      %v4954 = vrot.slane %v4800, 5
      %v4955 = vrot.slane %v4954, 4
      %v4956 = vrot.slane %v4105, 5
      %v4957 = vsel %vm1738, %v4955, %v4956
      %v4958 = vrot.slane %v4956, 4
      %v4959 = vrot.slane %v4106, 5
      %v4960 = vsel %vm1738, %v4958, %v4959
      %s4961 = scalar_lea.vmem %s1, 16
      %v4962 = vld [vmem:[%s4961] sm:$0x3]
      %v4963 = vunpack.c.l.b16 %v4852
      %v4964 = vunpack.c.l.b16 %v4855
      %v4965 = vunpack.c.l.b16 %v4859
      %v4966 = vunpack.c.l.b16 %v4862
      %v4967 = vunpack.c.l.b16 %v4866
      %v4968 = vunpack.c.l.b16 %v4869
      %v4969 = vunpack.c.l.b16 %v4873
      %v4970 = vunpack.c.l.b16 %v4876
      %v4971 = vunpack.c.l.b16 %v4880
      %v4972 = vunpack.c.l.b16 %v4883
      %v4973 = vunpack.c.l.b16 %v4887
      %v4974 = vunpack.c.l.b16 %v4890
      %v4975 = vunpack.c.l.b16 %v4894
      %v4976 = vunpack.c.l.b16 %v4897
      %v4977 = vunpack.c.l.b16 %v4901
      %v4978 = vunpack.c.l.b16 %v4904
      %v4979 = vunpack.c.l.b16 %v4908
      %v4980 = vunpack.c.l.b16 %v4911
      %v4981 = vunpack.c.l.b16 %v4915
      %v4982 = vunpack.c.l.b16 %v4918
      %v4983 = vunpack.c.l.b16 %v4922
      %v4984 = vunpack.c.l.b16 %v4925
      %v4985 = vunpack.c.l.b16 %v4929
      %v4986 = vunpack.c.l.b16 %v4932
      %v4987 = vunpack.c.l.b16 %v4936
      %v4988 = vunpack.c.l.b16 %v4939
      %v4989 = vunpack.c.l.b16 %v4943
      %v4990 = vunpack.c.l.b16 %v4946
      %v4991 = vunpack.c.l.b16 %v4950
      %v4992 = vunpack.c.l.b16 %v4953
      %v4993 = vunpack.c.l.b16 %v4957
      %v4994 = vunpack.c.l.b16 %v4960
      %v4995 = vpack.c.b16 %v4964, %v4963
      %v4996 = vpack.c.b16 %v4966, %v4965
      %v4997 = vpack.c.b16 %v4968, %v4967
      %v4998 = vpack.c.b16 %v4970, %v4969
      %v4999 = vpack.c.b16 %v4972, %v4971
      %v5000 = vpack.c.b16 %v4974, %v4973
      %v5001 = vpack.c.b16 %v4976, %v4975
      %v5002 = vpack.c.b16 %v4978, %v4977
      %v5003 = vpack.c.b16 %v4980, %v4979
      %v5004 = vpack.c.b16 %v4982, %v4981
      %v5005 = vpack.c.b16 %v4984, %v4983
      %v5006 = vpack.c.b16 %v4986, %v4985
      %v5007 = vpack.c.b16 %v4988, %v4987
      %v5008 = vpack.c.b16 %v4990, %v4989
      %v5009 = vpack.c.b16 %v4992, %v4991
      %v5010 = vpack.c.b16 %v4994, %v4993
      %v5012 = vsel %vm232, %v4995, 0
      %v5015 = vsel %vm232, %v4996, 0
      %v5018 = vsel %vm232, %v4997, 0
      %v5021 = vsel %vm232, %v4998, 0
      %v5024 = vsel %vm232, %v4999, 0
      %v5027 = vsel %vm232, %v5000, 0
      %v5030 = vsel %vm232, %v5001, 0
      %v5033 = vsel %vm232, %v5002, 0
      %v5036 = vsel %vm232, %v5003, 0
      %v5039 = vsel %vm232, %v5004, 0
      %v5042 = vsel %vm232, %v5005, 0
      %v5045 = vsel %vm232, %v5006, 0
      %v5048 = vsel %vm232, %v5007, 0
      %v5051 = vsel %vm232, %v5008, 0
      %v5054 = vsel %vm232, %v5009, 0
      %v5057 = vsel %vm232, %v5010, 0
      %v5060 = vsel %vm1231, %v4962, 0
      %5062 = vmatprep.subr.bf16.mxu0 0
      %5063 = vmatpush1.bf16.msra.mxu0 0
      %5064 = vmatprep.subr.bf16.mxu0 0
      %5065 = vmatpush1.bf16.msra.mxu0 0
      %5066 = vmatprep.subr.bf16.mxu0 0
      %5067 = vmatpush1.bf16.msra.mxu0 0
      %5068 = vmatprep.subr.bf16.mxu0 0
      %5069 = vmatpush1.bf16.msra.mxu0 0
      %5070 = vmatprep.subr.bf16.mxu0 0
      %5071 = vmatpush1.bf16.msra.mxu0 0
      %5072 = vmatprep.subr.bf16.mxu0 0
      %5073 = vmatpush1.bf16.msra.mxu0 0
      %5074 = vmatprep.subr.bf16.mxu0 0
      %5075 = vmatpush1.bf16.msra.mxu0 0
      %5076 = vmatprep.subr.bf16.mxu0 0
      %5077 = vmatpush1.bf16.msra.mxu0 %v5060
      %5078 = vmatprep.subr.bf16.mxu0 0
      %5079 = vmatpush2.bf16.msra.mxu0 0
      %5080 = vmatprep.subr.bf16.mxu0 0
      %5081 = vmatpush2.bf16.msra.mxu0 0
      %5082 = vmatprep.subr.bf16.mxu0 0
      %5083 = vmatpush2.bf16.msra.mxu0 0
      %5084 = vmatprep.subr.bf16.mxu0 0
      %5085 = vmatpush2.bf16.msra.mxu0 0
      %5086 = vmatprep.subr.bf16.mxu0 0
      %5087 = vmatpush2.bf16.msra.mxu0 0
      %5088 = vmatprep.subr.bf16.mxu0 0
      %5089 = vmatpush2.bf16.msra.mxu0 0
      %5090 = vmatprep.subr.bf16.mxu0 0
      %5091 = vmatpush2.bf16.msra.mxu0 0
      %5092 = vmatprep.subr.bf16.mxu0 0
      %5093 = vmatpush2.bf16.msra.mxu0 0
      %5094 = vmatprep.mubr.bf16.mxu0 0
      %5095 = vmatmul.mubr.bf16.gmra.mxu0 %v5012
      %v5096 = vpop.f32.mrf.mxu0
      %v5097 = vadd.f32 0.0, %v5096
      %v5098 = vpop.f32.mrf.mxu0
      %v5099 = vpop.f32.mrf.mxu0
      %v5100 = vadd.f32 0.0, %v5099
      %v5101 = vpop.f32.mrf.mxu0
      %5102 = vmatprep.mubr.bf16.mxu0 0
      %5103 = vmatmul.mubr.bf16.gmra.mxu0 %v5015
      %v5104 = vpop.f32.mrf.mxu0
      %v5105 = vadd.f32 0.0, %v5104
      %v5106 = vpop.f32.mrf.mxu0
      %v5107 = vpop.f32.mrf.mxu0
      %v5108 = vadd.f32 0.0, %v5107
      %v5109 = vpop.f32.mrf.mxu0
      %5110 = vmatprep.mubr.bf16.mxu0 0
      %5111 = vmatmul.mubr.bf16.gmra.mxu0 %v5018
      %v5112 = vpop.f32.mrf.mxu0
      %v5113 = vadd.f32 0.0, %v5112
      %v5114 = vpop.f32.mrf.mxu0
      %v5115 = vpop.f32.mrf.mxu0
      %v5116 = vadd.f32 0.0, %v5115
      %v5117 = vpop.f32.mrf.mxu0
      %5118 = vmatprep.mubr.bf16.mxu0 0
      %5119 = vmatmul.mubr.bf16.gmra.mxu0 %v5021
      %v5120 = vpop.f32.mrf.mxu0
      %v5121 = vadd.f32 0.0, %v5120
      %v5122 = vpop.f32.mrf.mxu0
      %v5123 = vpop.f32.mrf.mxu0
      %v5124 = vadd.f32 0.0, %v5123
      %v5125 = vpop.f32.mrf.mxu0
      %5126 = vmatprep.mubr.bf16.mxu0 0
      %5127 = vmatmul.mubr.bf16.gmra.mxu0 %v5024
      %v5128 = vpop.f32.mrf.mxu0
      %v5129 = vadd.f32 0.0, %v5128
      %v5130 = vpop.f32.mrf.mxu0
      %v5131 = vpop.f32.mrf.mxu0
      %v5132 = vadd.f32 0.0, %v5131
      %v5133 = vpop.f32.mrf.mxu0
      %5134 = vmatprep.mubr.bf16.mxu0 0
      %5135 = vmatmul.mubr.bf16.gmra.mxu0 %v5027
      %v5136 = vpop.f32.mrf.mxu0
      %v5137 = vadd.f32 0.0, %v5136
      %v5138 = vpop.f32.mrf.mxu0
      %v5139 = vpop.f32.mrf.mxu0
      %v5140 = vadd.f32 0.0, %v5139
      %v5141 = vpop.f32.mrf.mxu0
      %5142 = vmatprep.mubr.bf16.mxu0 0
      %5143 = vmatmul.mubr.bf16.gmra.mxu0 %v5030
      %v5144 = vpop.f32.mrf.mxu0
      %v5145 = vadd.f32 0.0, %v5144
      %v5146 = vpop.f32.mrf.mxu0
      %v5147 = vpop.f32.mrf.mxu0
      %v5148 = vadd.f32 0.0, %v5147
      %v5149 = vpop.f32.mrf.mxu0
      %5150 = vmatprep.mubr.bf16.mxu0 0
      %5151 = vmatmul.mubr.bf16.gmra.mxu0 %v5033
      %v5152 = vpop.f32.mrf.mxu0
      %v5153 = vadd.f32 0.0, %v5152
      %v5154 = vpop.f32.mrf.mxu0
      %v5155 = vpop.f32.mrf.mxu0
      %v5156 = vadd.f32 0.0, %v5155
      %v5157 = vpop.f32.mrf.mxu0
      %5158 = vmatprep.mubr.bf16.mxu0 0
      %5159 = vmatmul.mubr.bf16.gmra.mxu0 %v5036
      %v5160 = vpop.f32.mrf.mxu0
      %v5161 = vadd.f32 0.0, %v5160
      %v5162 = vpop.f32.mrf.mxu0
      %v5163 = vpop.f32.mrf.mxu0
      %v5164 = vadd.f32 0.0, %v5163
      %v5165 = vpop.f32.mrf.mxu0
      %5166 = vmatprep.mubr.bf16.mxu0 0
      %5167 = vmatmul.mubr.bf16.gmra.mxu0 %v5039
      %v5168 = vpop.f32.mrf.mxu0
      %v5169 = vadd.f32 0.0, %v5168
      %v5170 = vpop.f32.mrf.mxu0
      %v5171 = vpop.f32.mrf.mxu0
      %v5172 = vadd.f32 0.0, %v5171
      %v5173 = vpop.f32.mrf.mxu0
      %5174 = vmatprep.mubr.bf16.mxu0 0
      %5175 = vmatmul.mubr.bf16.gmra.mxu0 %v5042
      %v5176 = vpop.f32.mrf.mxu0
      %v5177 = vadd.f32 0.0, %v5176
      %v5178 = vpop.f32.mrf.mxu0
      %v5179 = vpop.f32.mrf.mxu0
      %v5180 = vadd.f32 0.0, %v5179
      %v5181 = vpop.f32.mrf.mxu0
      %5182 = vmatprep.mubr.bf16.mxu0 0
      %5183 = vmatmul.mubr.bf16.gmra.mxu0 %v5045
      %v5184 = vpop.f32.mrf.mxu0
      %v5185 = vadd.f32 0.0, %v5184
      %v5186 = vpop.f32.mrf.mxu0
      %v5187 = vpop.f32.mrf.mxu0
      %v5188 = vadd.f32 0.0, %v5187
      %v5189 = vpop.f32.mrf.mxu0
      %5190 = vmatprep.mubr.bf16.mxu0 0
      %5191 = vmatmul.mubr.bf16.gmra.mxu0 %v5048
      %v5192 = vpop.f32.mrf.mxu0
      %v5193 = vadd.f32 0.0, %v5192
      %v5194 = vpop.f32.mrf.mxu0
      %v5195 = vpop.f32.mrf.mxu0
      %v5196 = vadd.f32 0.0, %v5195
      %v5197 = vpop.f32.mrf.mxu0
      %5198 = vmatprep.mubr.bf16.mxu0 0
      %5199 = vmatmul.mubr.bf16.gmra.mxu0 %v5051
      %v5200 = vpop.f32.mrf.mxu0
      %v5201 = vadd.f32 0.0, %v5200
      %v5202 = vpop.f32.mrf.mxu0
      %v5203 = vpop.f32.mrf.mxu0
      %v5204 = vadd.f32 0.0, %v5203
      %v5205 = vpop.f32.mrf.mxu0
      %5206 = vmatprep.mubr.bf16.mxu0 0
      %5207 = vmatmul.mubr.bf16.gmra.mxu0 %v5054
      %v5208 = vpop.f32.mrf.mxu0
      %v5209 = vadd.f32 0.0, %v5208
      %v5210 = vpop.f32.mrf.mxu0
      %v5211 = vpop.f32.mrf.mxu0
      %v5212 = vadd.f32 0.0, %v5211
      %v5213 = vpop.f32.mrf.mxu0
      %5214 = vmatprep.mubr.bf16.mxu0 0
      %5215 = vmatmul.mubr.bf16.gmra.mxu0 %v5057
      %v5216 = vpop.f32.mrf.mxu0
      %v5217 = vadd.f32 0.0, %v5216
      %v5218 = vpop.f32.mrf.mxu0
      %v5219 = vpop.f32.mrf.mxu0
      %v5220 = vadd.f32 0.0, %v5219
      %v5221 = vpop.f32.mrf.mxu0
      %5222 = vdwg.mxu0
      %v5223 = vadd.f32 %v4753, %v5097
      %v5224 = vadd.f32 %v4754, %v5100
      %v5225 = vadd.f32 %v4755, %v5105
      %v5226 = vadd.f32 %v4756, %v5108
      %v5227 = vadd.f32 %v4757, %v5113
      %v5228 = vadd.f32 %v4758, %v5116
      %v5229 = vadd.f32 %v4759, %v5121
      %v5230 = vadd.f32 %v4760, %v5124
      %v5231 = vadd.f32 %v4761, %v5129
      %v5232 = vadd.f32 %v4762, %v5132
      %v5233 = vadd.f32 %v4763, %v5137
      %v5234 = vadd.f32 %v4764, %v5140
      %v5235 = vadd.f32 %v4765, %v5145
      %v5236 = vadd.f32 %v4766, %v5148
      %v5237 = vadd.f32 %v4767, %v5153
      %v5238 = vadd.f32 %v4768, %v5156
      %v5239 = vadd.f32 %v4769, %v5161
      %v5240 = vadd.f32 %v4770, %v5164
      %v5241 = vadd.f32 %v4771, %v5169
      %v5242 = vadd.f32 %v4772, %v5172
      %v5243 = vadd.f32 %v4773, %v5177
      %v5244 = vadd.f32 %v4774, %v5180
      %v5245 = vadd.f32 %v4775, %v5185
      %v5246 = vadd.f32 %v4776, %v5188
      %v5247 = vadd.f32 %v4777, %v5193
      %v5248 = vadd.f32 %v4778, %v5196
      %v5249 = vadd.f32 %v4779, %v5201
      %v5250 = vadd.f32 %v4780, %v5204
      %v5251 = vadd.f32 %v4781, %v5209
      %v5252 = vadd.f32 %v4782, %v5212
      %v5253 = vadd.f32 %v4783, %v5217
      %v5254 = vadd.f32 %v4784, %v5220
      %v5255 = vld [vmem:[%s3] sm:$0x1]
      %v5256 = vld [vmem:[%s3 + $0x1] sm:$0x1]
      %v5257 = vsel %vm232, %v5223, 0.0
      %v5258 = vsel %vm232, %v5224, 0.0
      %v5259 = vadd.f32 %v5257, %v5258
      %v5260 = vsel %vm232, %v5225, 0.0
      %v5261 = vadd.f32 %v5259, %v5260
      %v5262 = vsel %vm232, %v5226, 0.0
      %v5263 = vadd.f32 %v5261, %v5262
      %v5264 = vsel %vm232, %v5227, 0.0
      %v5265 = vadd.f32 %v5263, %v5264
      %v5266 = vsel %vm232, %v5228, 0.0
      %v5267 = vadd.f32 %v5265, %v5266
      %v5268 = vsel %vm232, %v5229, 0.0
      %v5269 = vadd.f32 %v5267, %v5268
      %v5270 = vsel %vm232, %v5230, 0.0
      %v5271 = vadd.f32 %v5269, %v5270
      %v5272 = vsel %vm232, %v5231, 0.0
      %v5273 = vadd.f32 %v5271, %v5272
      %v5274 = vsel %vm232, %v5232, 0.0
      %v5275 = vadd.f32 %v5273, %v5274
      %v5276 = vsel %vm232, %v5233, 0.0
      %v5277 = vadd.f32 %v5275, %v5276
      %v5278 = vsel %vm232, %v5234, 0.0
      %v5279 = vadd.f32 %v5277, %v5278
      %v5280 = vsel %vm232, %v5235, 0.0
      %v5281 = vadd.f32 %v5279, %v5280
      %v5282 = vsel %vm232, %v5236, 0.0
      %v5283 = vadd.f32 %v5281, %v5282
      %v5284 = vsel %vm232, %v5237, 0.0
      %v5285 = vadd.f32 %v5283, %v5284
      %v5286 = vsel %vm232, %v5238, 0.0
      %v5287 = vadd.f32 %v5285, %v5286
      %v5288 = vsel %vm232, %v5239, 0.0
      %v5289 = vadd.f32 %v5287, %v5288
      %v5290 = vsel %vm232, %v5240, 0.0
      %v5291 = vadd.f32 %v5289, %v5290
      %v5292 = vsel %vm232, %v5241, 0.0
      %v5293 = vadd.f32 %v5291, %v5292
      %v5294 = vsel %vm232, %v5242, 0.0
      %v5295 = vadd.f32 %v5293, %v5294
      %v5296 = vsel %vm232, %v5243, 0.0
      %v5297 = vadd.f32 %v5295, %v5296
      %v5298 = vsel %vm232, %v5244, 0.0
      %v5299 = vadd.f32 %v5297, %v5298
      %v5300 = vsel %vm232, %v5245, 0.0
      %v5301 = vadd.f32 %v5299, %v5300
      %v5302 = vsel %vm232, %v5246, 0.0
      %v5303 = vadd.f32 %v5301, %v5302
      %v5304 = vsel %vm232, %v5247, 0.0
      %v5305 = vadd.f32 %v5303, %v5304
      %v5306 = vsel %vm232, %v5248, 0.0
      %v5307 = vadd.f32 %v5305, %v5306
      %v5308 = vsel %vm232, %v5249, 0.0
      %v5309 = vadd.f32 %v5307, %v5308
      %v5310 = vsel %vm232, %v5250, 0.0
      %v5311 = vadd.f32 %v5309, %v5310
      %v5312 = vsel %vm232, %v5251, 0.0
      %v5313 = vadd.f32 %v5311, %v5312
      %v5314 = vsel %vm232, %v5252, 0.0
      %v5315 = vadd.f32 %v5313, %v5314
      %v5316 = vsel %vm232, %v5253, 0.0
      %v5317 = vadd.f32 %v5315, %v5316
      %v5318 = vsel %vm232, %v5254, 0.0
      %v5319 = vadd.f32 %v5317, %v5318
      %v5320 = vrot.slane %v5319, 4
      %v5321 = vadd.f32 %v5319, %v5320
      %v5322 = vrot.slane %v5321, 2
      %v5323 = vadd.f32 %v5321, %v5322
      %v5324 = vrot.slane %v5323, 1
      %v5325 = vadd.f32 %v5323, %v5324
      %v5326 = vmul.f32 %v5325, 0.00390625
      %v5327 = vmul.f32 %v5223, %v5223
      %v5328 = vmul.f32 %v5224, %v5224
      %v5329 = vmul.f32 %v5225, %v5225
      %v5330 = vmul.f32 %v5226, %v5226
      %v5331 = vmul.f32 %v5227, %v5227
      %v5332 = vmul.f32 %v5228, %v5228
      %v5333 = vmul.f32 %v5229, %v5229
      %v5334 = vmul.f32 %v5230, %v5230
      %v5335 = vmul.f32 %v5231, %v5231
      %v5336 = vmul.f32 %v5232, %v5232
      %v5337 = vmul.f32 %v5233, %v5233
      %v5338 = vmul.f32 %v5234, %v5234
      %v5339 = vmul.f32 %v5235, %v5235
      %v5340 = vmul.f32 %v5236, %v5236
      %v5341 = vmul.f32 %v5237, %v5237
      %v5342 = vmul.f32 %v5238, %v5238
      %v5343 = vmul.f32 %v5239, %v5239
      %v5344 = vmul.f32 %v5240, %v5240
      %v5345 = vmul.f32 %v5241, %v5241
      %v5346 = vmul.f32 %v5242, %v5242
      %v5347 = vmul.f32 %v5243, %v5243
      %v5348 = vmul.f32 %v5244, %v5244
      %v5349 = vmul.f32 %v5245, %v5245
      %v5350 = vmul.f32 %v5246, %v5246
      %v5351 = vmul.f32 %v5247, %v5247
      %v5352 = vmul.f32 %v5248, %v5248
      %v5353 = vmul.f32 %v5249, %v5249
      %v5354 = vmul.f32 %v5250, %v5250
      %v5355 = vmul.f32 %v5251, %v5251
      %v5356 = vmul.f32 %v5252, %v5252
      %v5357 = vmul.f32 %v5253, %v5253
      %v5358 = vmul.f32 %v5254, %v5254
      %v5359 = vsel %vm232, %v5327, 0.0
      %v5360 = vsel %vm232, %v5328, 0.0
      %v5361 = vadd.f32 %v5359, %v5360
      %v5362 = vsel %vm232, %v5329, 0.0
      %v5363 = vadd.f32 %v5361, %v5362
      %v5364 = vsel %vm232, %v5330, 0.0
      %v5365 = vadd.f32 %v5363, %v5364
      %v5366 = vsel %vm232, %v5331, 0.0
      %v5367 = vadd.f32 %v5365, %v5366
      %v5368 = vsel %vm232, %v5332, 0.0
      %v5369 = vadd.f32 %v5367, %v5368
      %v5370 = vsel %vm232, %v5333, 0.0
      %v5371 = vadd.f32 %v5369, %v5370
      %v5372 = vsel %vm232, %v5334, 0.0
      %v5373 = vadd.f32 %v5371, %v5372
      %v5374 = vsel %vm232, %v5335, 0.0
      %v5375 = vadd.f32 %v5373, %v5374
      %v5376 = vsel %vm232, %v5336, 0.0
      %v5377 = vadd.f32 %v5375, %v5376
      %v5378 = vsel %vm232, %v5337, 0.0
      %v5379 = vadd.f32 %v5377, %v5378
      %v5380 = vsel %vm232, %v5338, 0.0
      %v5381 = vadd.f32 %v5379, %v5380
      %v5382 = vsel %vm232, %v5339, 0.0
      %v5383 = vadd.f32 %v5381, %v5382
      %v5384 = vsel %vm232, %v5340, 0.0
      %v5385 = vadd.f32 %v5383, %v5384
      %v5386 = vsel %vm232, %v5341, 0.0
      %v5387 = vadd.f32 %v5385, %v5386
      %v5388 = vsel %vm232, %v5342, 0.0
      %v5389 = vadd.f32 %v5387, %v5388
      %v5390 = vsel %vm232, %v5343, 0.0
      %v5391 = vadd.f32 %v5389, %v5390
      %v5392 = vsel %vm232, %v5344, 0.0
      %v5393 = vadd.f32 %v5391, %v5392
      %v5394 = vsel %vm232, %v5345, 0.0
      %v5395 = vadd.f32 %v5393, %v5394
      %v5396 = vsel %vm232, %v5346, 0.0
      %v5397 = vadd.f32 %v5395, %v5396
      %v5398 = vsel %vm232, %v5347, 0.0
      %v5399 = vadd.f32 %v5397, %v5398
      %v5400 = vsel %vm232, %v5348, 0.0
      %v5401 = vadd.f32 %v5399, %v5400
      %v5402 = vsel %vm232, %v5349, 0.0
      %v5403 = vadd.f32 %v5401, %v5402
      %v5404 = vsel %vm232, %v5350, 0.0
      %v5405 = vadd.f32 %v5403, %v5404
      %v5406 = vsel %vm232, %v5351, 0.0
      %v5407 = vadd.f32 %v5405, %v5406
      %v5408 = vsel %vm232, %v5352, 0.0
      %v5409 = vadd.f32 %v5407, %v5408
      %v5410 = vsel %vm232, %v5353, 0.0
      %v5411 = vadd.f32 %v5409, %v5410
      %v5412 = vsel %vm232, %v5354, 0.0
      %v5413 = vadd.f32 %v5411, %v5412
      %v5414 = vsel %vm232, %v5355, 0.0
      %v5415 = vadd.f32 %v5413, %v5414
      %v5416 = vsel %vm232, %v5356, 0.0
      %v5417 = vadd.f32 %v5415, %v5416
      %v5418 = vsel %vm232, %v5357, 0.0
      %v5419 = vadd.f32 %v5417, %v5418
      %v5420 = vsel %vm232, %v5358, 0.0
      %v5421 = vadd.f32 %v5419, %v5420
      %v5422 = vrot.slane %v5421, 4
      %v5423 = vadd.f32 %v5421, %v5422
      %v5424 = vrot.slane %v5423, 2
      %v5425 = vadd.f32 %v5423, %v5424
      %v5426 = vrot.slane %v5425, 1
      %v5427 = vadd.f32 %v5425, %v5426
      %v5428 = vmul.f32 %v5427, 0.00390625
      %v5429 = vmul.f32 %v5326, %v5326
      %v5430 = vsub.f32 %v5428, %v5429
      %v5431 = vmax.f32 %v5430, 0.0
      %v5432 = vadd.f32 %v5431, 1e-05
      %v5433 = vrsqrt.pop %v5432
      %v5434 = vmul.f32 %v5255, %v5433
      %v5435 = vmul.f32 %v5326, %v5434
      %v5436 = vsub.f32 %v5256, %v5435
      %v5437 = vlaneseq
      %v5438 = vshrl.u32 %v5437, 7
      %v5439 = vsub.s32 0, %v5438
      %v5440 = vrot.slane %v5434, %v5439
      %v5441 = vmul.f32 %v5223, %v5440
      %v5442 = vmul.f32 %v5224, %v5440
      %v5443 = vmul.f32 %v5225, %v5440
      %v5444 = vmul.f32 %v5226, %v5440
      %v5445 = vmul.f32 %v5227, %v5440
      %v5446 = vmul.f32 %v5228, %v5440
      %v5447 = vmul.f32 %v5229, %v5440
      %v5448 = vmul.f32 %v5230, %v5440
      %v5449 = vmul.f32 %v5231, %v5440
      %v5450 = vmul.f32 %v5232, %v5440
      %v5451 = vmul.f32 %v5233, %v5440
      %v5452 = vmul.f32 %v5234, %v5440
      %v5453 = vmul.f32 %v5235, %v5440
      %v5454 = vmul.f32 %v5236, %v5440
      %v5455 = vmul.f32 %v5237, %v5440
      %v5456 = vmul.f32 %v5238, %v5440
      %v5457 = vmul.f32 %v5239, %v5440
      %v5458 = vmul.f32 %v5240, %v5440
      %v5459 = vmul.f32 %v5241, %v5440
      %v5460 = vmul.f32 %v5242, %v5440
      %v5461 = vmul.f32 %v5243, %v5440
      %v5462 = vmul.f32 %v5244, %v5440
      %v5463 = vmul.f32 %v5245, %v5440
      %v5464 = vmul.f32 %v5246, %v5440
      %v5465 = vmul.f32 %v5247, %v5440
      %v5466 = vmul.f32 %v5248, %v5440
      %v5467 = vmul.f32 %v5249, %v5440
      %v5468 = vmul.f32 %v5250, %v5440
      %v5469 = vmul.f32 %v5251, %v5440
      %v5470 = vmul.f32 %v5252, %v5440
      %v5471 = vmul.f32 %v5253, %v5440
      %v5472 = vmul.f32 %v5254, %v5440
      %v5473 = vlaneseq
      %v5474 = vshrl.u32 %v5473, 7
      %v5475 = vsub.s32 0, %v5474
      %v5476 = vrot.slane %v5436, %v5475
      %v5477 = vadd.f32 %v5441, %v5476
      %v5478 = vadd.f32 %v5442, %v5476
      %v5479 = vadd.f32 %v5443, %v5476
      %v5480 = vadd.f32 %v5444, %v5476
      %v5481 = vadd.f32 %v5445, %v5476
      %v5482 = vadd.f32 %v5446, %v5476
      %v5483 = vadd.f32 %v5447, %v5476
      %v5484 = vadd.f32 %v5448, %v5476
      %v5485 = vadd.f32 %v5449, %v5476
      %v5486 = vadd.f32 %v5450, %v5476
      %v5487 = vadd.f32 %v5451, %v5476
      %v5488 = vadd.f32 %v5452, %v5476
      %v5489 = vadd.f32 %v5453, %v5476
      %v5490 = vadd.f32 %v5454, %v5476
      %v5491 = vadd.f32 %v5455, %v5476
      %v5492 = vadd.f32 %v5456, %v5476
      %v5493 = vadd.f32 %v5457, %v5476
      %v5494 = vadd.f32 %v5458, %v5476
      %v5495 = vadd.f32 %v5459, %v5476
      %v5496 = vadd.f32 %v5460, %v5476
      %v5497 = vadd.f32 %v5461, %v5476
      %v5498 = vadd.f32 %v5462, %v5476
      %v5499 = vadd.f32 %v5463, %v5476
      %v5500 = vadd.f32 %v5464, %v5476
      %v5501 = vadd.f32 %v5465, %v5476
      %v5502 = vadd.f32 %v5466, %v5476
      %v5503 = vadd.f32 %v5467, %v5476
      %v5504 = vadd.f32 %v5468, %v5476
      %v5505 = vadd.f32 %v5469, %v5476
      %v5506 = vadd.f32 %v5470, %v5476
      %v5507 = vadd.f32 %v5471, %v5476
      %v5508 = vadd.f32 %v5472, %v5476
      %v5509 = vmax.f32 %v5477, 0.0
      %v5510 = vmax.f32 %v5478, 0.0
      %v5511 = vmax.f32 %v5479, 0.0
      %v5512 = vmax.f32 %v5480, 0.0
      %v5513 = vmax.f32 %v5481, 0.0
      %v5514 = vmax.f32 %v5482, 0.0
      %v5515 = vmax.f32 %v5483, 0.0
      %v5516 = vmax.f32 %v5484, 0.0
      %v5517 = vmax.f32 %v5485, 0.0
      %v5518 = vmax.f32 %v5486, 0.0
      %v5519 = vmax.f32 %v5487, 0.0
      %v5520 = vmax.f32 %v5488, 0.0
      %v5521 = vmax.f32 %v5489, 0.0
      %v5522 = vmax.f32 %v5490, 0.0
      %v5523 = vmax.f32 %v5491, 0.0
      %v5524 = vmax.f32 %v5492, 0.0
      %v5525 = vmax.f32 %v5493, 0.0
      %v5526 = vmax.f32 %v5494, 0.0
      %v5527 = vmax.f32 %v5495, 0.0
      %v5528 = vmax.f32 %v5496, 0.0
      %v5529 = vmax.f32 %v5497, 0.0
      %v5530 = vmax.f32 %v5498, 0.0
      %v5531 = vmax.f32 %v5499, 0.0
      %v5532 = vmax.f32 %v5500, 0.0
      %v5533 = vmax.f32 %v5501, 0.0
      %v5534 = vmax.f32 %v5502, 0.0
      %v5535 = vmax.f32 %v5503, 0.0
      %v5536 = vmax.f32 %v5504, 0.0
      %v5537 = vmax.f32 %v5505, 0.0
      %v5538 = vmax.f32 %v5506, 0.0
      %v5539 = vmax.f32 %v5507, 0.0
      %v5540 = vmax.f32 %v5508, 0.0
      %5541 = vst.msk [vmem:[%s231 + $0x1] sm:$0xff] %vm232, %v5509
      %5542 = vst.msk [vmem:[%s231 + $0x9] sm:$0xff] %vm232, %v5510
      %5543 = vst.msk [vmem:[%s231 + $0x19] sm:$0xff] %vm232, %v5511
      %5544 = vst.msk [vmem:[%s231 + $0x21] sm:$0xff] %vm232, %v5512
      %5545 = vst.msk [vmem:[%s231 + $0x31] sm:$0xff] %vm232, %v5513
      %5546 = vst.msk [vmem:[%s231 + $0x39] sm:$0xff] %vm232, %v5514
      %5547 = vst.msk [vmem:[%s231 + $0x49] sm:$0xff] %vm232, %v5515
      %5548 = vst.msk [vmem:[%s231 + $0x51] sm:$0xff] %vm232, %v5516
      %5549 = vst.msk [vmem:[%s231 + $0x61] sm:$0xff] %vm232, %v5517
      %5550 = vst.msk [vmem:[%s231 + $0x69] sm:$0xff] %vm232, %v5518
      %5551 = vst.msk [vmem:[%s231 + $0x79] sm:$0xff] %vm232, %v5519
      %5552 = vst.msk [vmem:[%s231 + $0x81] sm:$0xff] %vm232, %v5520
      %5553 = vst.msk [vmem:[%s231 + $0x91] sm:$0xff] %vm232, %v5521
      %5554 = vst.msk [vmem:[%s231 + $0x99] sm:$0xff] %vm232, %v5522
      %5555 = vst.msk [vmem:[%s231 + $0xa9] sm:$0xff] %vm232, %v5523
      %5556 = vst.msk [vmem:[%s231 + $0xb1] sm:$0xff] %vm232, %v5524
      %5557 = vst.msk [vmem:[%s231 + $0xc1] sm:$0xff] %vm232, %v5525
      %5558 = vst.msk [vmem:[%s231 + $0xc9] sm:$0xff] %vm232, %v5526
      %5559 = vst.msk [vmem:[%s231 + $0xd9] sm:$0xff] %vm232, %v5527
      %5560 = vst.msk [vmem:[%s231 + $0xe1] sm:$0xff] %vm232, %v5528
      %5561 = vst.msk [vmem:[%s231 + $0xf1] sm:$0xff] %vm232, %v5529
      %5562 = vst.msk [vmem:[%s231 + $0xf9] sm:$0xff] %vm232, %v5530
      %5563 = vst.msk [vmem:[%s231 + $0x109] sm:$0xff] %vm232, %v5531
      %5564 = vst.msk [vmem:[%s231 + $0x111] sm:$0xff] %vm232, %v5532
      %5565 = vst.msk [vmem:[%s231 + $0x121] sm:$0xff] %vm232, %v5533
      %5566 = vst.msk [vmem:[%s231 + $0x129] sm:$0xff] %vm232, %v5534
      %5567 = vst.msk [vmem:[%s231 + $0x139] sm:$0xff] %vm232, %v5535
      %5568 = vst.msk [vmem:[%s231 + $0x141] sm:$0xff] %vm232, %v5536
      %5569 = vst.msk [vmem:[%s231 + $0x151] sm:$0xff] %vm232, %v5537
      %5570 = vst.msk [vmem:[%s231 + $0x159] sm:$0xff] %vm232, %v5538
      %5571 = vst.msk [vmem:[%s231 + $0x169] sm:$0xff] %vm232, %v5539
      %5572 = vst.msk [vmem:[%s231 + $0x171] sm:$0xff] %vm232, %v5540
      %v5573 = vld [vmem:[%s265] sm:$0xff]
      %v5574 = vld [vmem:[%s265 + $0x8] sm:$0xff]
      %v5575 = vld [vmem:[%s265 + $0x10] sm:$0x3]
      %5576 = vst.msk [vmem:[#allocation2] sm:$0xff] %vm232, %v5573
      %5577 = vst.msk [vmem:[#allocation2 + $0x8] sm:$0xff] %vm232, %v5574
      %5578 = vst.msk [vmem:[#allocation2 + $0x10] sm:$0x3] %vm271, %v5575
      %v5579 = vld [vmem:[%s273] sm:$0xff]
      %v5580 = vld [vmem:[%s273 + $0x8] sm:$0xff]
      %v5581 = vld [vmem:[%s273 + $0x10] sm:$0x3]
      %5582 = vst.msk [vmem:[%s277] sm:$0xff] %vm232, %v5579
      %5583 = vst.msk [vmem:[%s277 + $0x8] sm:$0xff] %vm232, %v5580
      %5584 = vst.msk [vmem:[%s277 + $0x10] sm:$0x3] %vm271, %v5581
      %v5585 = vld [vmem:[#allocation2 + $0x2] sm:$0x1]
      %v5586 = vld [vmem:[#allocation2 + $0x1a] sm:$0x1]
      %v5587 = vld [vmem:[#allocation2 + $0x32] sm:$0x1]
      %v5588 = vld [vmem:[#allocation2 + $0x4a] sm:$0x1]
      %v5589 = vld [vmem:[#allocation2 + $0x62] sm:$0x1]
      %v5590 = vld [vmem:[#allocation2 + $0x7a] sm:$0x1]
      %v5591 = vld [vmem:[#allocation2 + $0x92] sm:$0x1]
      %v5592 = vld [vmem:[#allocation2 + $0xaa] sm:$0x1]
      %v5593 = vld [vmem:[#allocation2 + $0xc2] sm:$0x1]
      %v5594 = vld [vmem:[#allocation2 + $0xda] sm:$0x1]
      %v5595 = vld [vmem:[#allocation2 + $0xf2] sm:$0x1]
      %v5596 = vld [vmem:[#allocation2 + $0x10a] sm:$0x1]
      %v5597 = vld [vmem:[#allocation2 + $0x122] sm:$0x1]
      %v5598 = vld [vmem:[#allocation2 + $0x13a] sm:$0x1]
      %v5599 = vld [vmem:[#allocation2 + $0x152] sm:$0x1]
      %v5600 = vld [vmem:[#allocation2 + $0x16a] sm:$0x1]
      %v5601 = vld [vmem:[#allocation2 + $0x182] sm:$0x1]
      %v5602 = vld [vmem:[#allocation2 + $0x19a] sm:$0x1]
      %5603 = vst.msk [vmem:[#allocation2] sm:$0x1] %vm299, %v5585
      %5604 = vst.msk [vmem:[#allocation2 + $0x18] sm:$0x1] %vm299, %v5586
      %5605 = vst.msk [vmem:[#allocation2 + $0x30] sm:$0x1] %vm299, %v5587
      %5606 = vst.msk [vmem:[#allocation2 + $0x48] sm:$0x1] %vm299, %v5588
      %5607 = vst.msk [vmem:[#allocation2 + $0x60] sm:$0x1] %vm299, %v5589
      %5608 = vst.msk [vmem:[#allocation2 + $0x78] sm:$0x1] %vm299, %v5590
      %5609 = vst.msk [vmem:[#allocation2 + $0x90] sm:$0x1] %vm299, %v5591
      %5610 = vst.msk [vmem:[#allocation2 + $0xa8] sm:$0x1] %vm299, %v5592
      %5611 = vst.msk [vmem:[#allocation2 + $0xc0] sm:$0x1] %vm299, %v5593
      %5612 = vst.msk [vmem:[#allocation2 + $0xd8] sm:$0x1] %vm299, %v5594
      %5613 = vst.msk [vmem:[#allocation2 + $0xf0] sm:$0x1] %vm299, %v5595
      %5614 = vst.msk [vmem:[#allocation2 + $0x108] sm:$0x1] %vm299, %v5596
      %5615 = vst.msk [vmem:[#allocation2 + $0x120] sm:$0x1] %vm299, %v5597
      %5616 = vst.msk [vmem:[#allocation2 + $0x138] sm:$0x1] %vm299, %v5598
      %5617 = vst.msk [vmem:[#allocation2 + $0x150] sm:$0x1] %vm299, %v5599
      %5618 = vst.msk [vmem:[#allocation2 + $0x168] sm:$0x1] %vm299, %v5600
      %5619 = vst.msk [vmem:[#allocation2 + $0x180] sm:$0x1] %vm299, %v5601
      %5620 = vst.msk [vmem:[#allocation2 + $0x198] sm:$0x1] %vm299, %v5602
      %v5621 = vld [vmem:[#allocation2 + $0xf] sm:$0x1]
      %v5622 = vld [vmem:[#allocation2 + $0x27] sm:$0x1]
      %v5623 = vld [vmem:[#allocation2 + $0x3f] sm:$0x1]
      %v5624 = vld [vmem:[#allocation2 + $0x57] sm:$0x1]
      %v5625 = vld [vmem:[#allocation2 + $0x6f] sm:$0x1]
      %v5626 = vld [vmem:[#allocation2 + $0x87] sm:$0x1]
      %v5627 = vld [vmem:[#allocation2 + $0x9f] sm:$0x1]
      %v5628 = vld [vmem:[#allocation2 + $0xb7] sm:$0x1]
      %v5629 = vld [vmem:[#allocation2 + $0xcf] sm:$0x1]
      %v5630 = vld [vmem:[#allocation2 + $0xe7] sm:$0x1]
      %v5631 = vld [vmem:[#allocation2 + $0xff] sm:$0x1]
      %v5632 = vld [vmem:[#allocation2 + $0x117] sm:$0x1]
      %v5633 = vld [vmem:[#allocation2 + $0x12f] sm:$0x1]
      %v5634 = vld [vmem:[#allocation2 + $0x147] sm:$0x1]
      %v5635 = vld [vmem:[#allocation2 + $0x15f] sm:$0x1]
      %v5636 = vld [vmem:[#allocation2 + $0x177] sm:$0x1]
      %v5637 = vld [vmem:[#allocation2 + $0x18f] sm:$0x1]
      %v5638 = vld [vmem:[#allocation2 + $0x1a7] sm:$0x1]
      %5639 = vst.msk [vmem:[#allocation2 + $0x11] sm:$0x1] %vm299, %v5621
      %5640 = vst.msk [vmem:[#allocation2 + $0x29] sm:$0x1] %vm299, %v5622
      %5641 = vst.msk [vmem:[#allocation2 + $0x41] sm:$0x1] %vm299, %v5623
      %5642 = vst.msk [vmem:[#allocation2 + $0x59] sm:$0x1] %vm299, %v5624
      %5643 = vst.msk [vmem:[#allocation2 + $0x71] sm:$0x1] %vm299, %v5625
      %5644 = vst.msk [vmem:[#allocation2 + $0x89] sm:$0x1] %vm299, %v5626
      %5645 = vst.msk [vmem:[#allocation2 + $0xa1] sm:$0x1] %vm299, %v5627
      %5646 = vst.msk [vmem:[#allocation2 + $0xb9] sm:$0x1] %vm299, %v5628
      %5647 = vst.msk [vmem:[#allocation2 + $0xd1] sm:$0x1] %vm299, %v5629
      %5648 = vst.msk [vmem:[#allocation2 + $0xe9] sm:$0x1] %vm299, %v5630
      %5649 = vst.msk [vmem:[#allocation2 + $0x101] sm:$0x1] %vm299, %v5631
      %5650 = vst.msk [vmem:[#allocation2 + $0x119] sm:$0x1] %vm299, %v5632
      %5651 = vst.msk [vmem:[#allocation2 + $0x131] sm:$0x1] %vm299, %v5633
      %5652 = vst.msk [vmem:[#allocation2 + $0x149] sm:$0x1] %vm299, %v5634
      %5653 = vst.msk [vmem:[#allocation2 + $0x161] sm:$0x1] %vm299, %v5635
      %5654 = vst.msk [vmem:[#allocation2 + $0x179] sm:$0x1] %vm299, %v5636
      %5655 = vst.msk [vmem:[#allocation2 + $0x191] sm:$0x1] %vm299, %v5637
      %5656 = vst.msk [vmem:[#allocation2 + $0x1a9] sm:$0x1] %vm299, %v5638
      %v5657 = vld [vmem:[#allocation2] sm:$0xff]
      %v5658 = vld [vmem:[#allocation2 + $0x8] sm:$0xff]
      %v5659 = vld [vmem:[#allocation2 + $0x10] sm:$0x3]
      %v5660 = vld [vmem:[#allocation2 + $0x18] sm:$0xff]
      %v5661 = vld [vmem:[#allocation2 + $0x20] sm:$0xff]
      %v5662 = vld [vmem:[#allocation2 + $0x28] sm:$0x3]
      %v5663 = vld [vmem:[#allocation2 + $0x30] sm:$0xff]
      %v5664 = vld [vmem:[#allocation2 + $0x38] sm:$0xff]
      %v5665 = vld [vmem:[#allocation2 + $0x40] sm:$0x3]
      %v5666 = vld [vmem:[#allocation2 + $0x48] sm:$0xff]
      %v5667 = vld [vmem:[#allocation2 + $0x50] sm:$0xff]
      %v5668 = vld [vmem:[#allocation2 + $0x58] sm:$0x3]
      %v5669 = vld [vmem:[#allocation2 + $0x60] sm:$0xff]
      %v5670 = vld [vmem:[#allocation2 + $0x68] sm:$0xff]
      %v5671 = vld [vmem:[#allocation2 + $0x70] sm:$0x3]
      %v5672 = vld [vmem:[#allocation2 + $0x78] sm:$0xff]
      %v5673 = vld [vmem:[#allocation2 + $0x80] sm:$0xff]
      %v5674 = vld [vmem:[#allocation2 + $0x88] sm:$0x3]
      %v5675 = vld [vmem:[#allocation2 + $0x90] sm:$0xff]
      %v5676 = vld [vmem:[#allocation2 + $0x98] sm:$0xff]
      %v5677 = vld [vmem:[#allocation2 + $0xa0] sm:$0x3]
      %v5678 = vld [vmem:[#allocation2 + $0xa8] sm:$0xff]
      %v5679 = vld [vmem:[#allocation2 + $0xb0] sm:$0xff]
      %v5680 = vld [vmem:[#allocation2 + $0xb8] sm:$0x3]
      %v5681 = vld [vmem:[#allocation2 + $0xc0] sm:$0xff]
      %v5682 = vld [vmem:[#allocation2 + $0xc8] sm:$0xff]
      %v5683 = vld [vmem:[#allocation2 + $0xd0] sm:$0x3]
      %v5684 = vld [vmem:[#allocation2 + $0xd8] sm:$0xff]
      %v5685 = vld [vmem:[#allocation2 + $0xe0] sm:$0xff]
      %v5686 = vld [vmem:[#allocation2 + $0xe8] sm:$0x3]
      %v5687 = vld [vmem:[#allocation2 + $0xf0] sm:$0xff]
      %v5688 = vld [vmem:[#allocation2 + $0xf8] sm:$0xff]
      %v5689 = vld [vmem:[#allocation2 + $0x100] sm:$0x3]
      %v5690 = vld [vmem:[#allocation2 + $0x108] sm:$0xff]
      %v5691 = vld [vmem:[#allocation2 + $0x110] sm:$0xff]
      %v5692 = vld [vmem:[#allocation2 + $0x118] sm:$0x3]
      %v5693 = vld [vmem:[#allocation2 + $0x120] sm:$0xff]
      %v5694 = vld [vmem:[#allocation2 + $0x128] sm:$0xff]
      %v5695 = vld [vmem:[#allocation2 + $0x130] sm:$0x3]
      %v5696 = vld [vmem:[#allocation2 + $0x138] sm:$0xff]
      %v5697 = vld [vmem:[#allocation2 + $0x140] sm:$0xff]
      %v5698 = vld [vmem:[#allocation2 + $0x148] sm:$0x3]
      %v5699 = vld [vmem:[#allocation2 + $0x150] sm:$0xff]
      %v5700 = vld [vmem:[#allocation2 + $0x158] sm:$0xff]
      %v5701 = vld [vmem:[#allocation2 + $0x160] sm:$0x3]
      %v5702 = vld [vmem:[#allocation2 + $0x168] sm:$0xff]
      %v5703 = vld [vmem:[#allocation2 + $0x170] sm:$0xff]
      %v5704 = vld [vmem:[#allocation2 + $0x178] sm:$0x3]
      %v5705 = vld [vmem:[#allocation2 + $0x180] sm:$0xff]
      %v5706 = vld [vmem:[#allocation2 + $0x188] sm:$0xff]
      %v5707 = vld [vmem:[#allocation2 + $0x190] sm:$0x3]
      %v5708 = vld [vmem:[#allocation2 + $0x198] sm:$0xff]
      %v5709 = vld [vmem:[#allocation2 + $0x1a0] sm:$0xff]
      %v5710 = vld [vmem:[#allocation2 + $0x1a8] sm:$0x3]
      %v5711 = vpack.c.bf16 %v5658, %v5657
      %v5712 = vpack.c.bf16 %v5659, %v5659
      %v5713 = vpack.c.bf16 %v5661, %v5660
      %v5714 = vpack.c.bf16 %v5662, %v5662
      %v5715 = vpack.c.bf16 %v5664, %v5663
      %v5716 = vpack.c.bf16 %v5665, %v5665
      %v5717 = vpack.c.bf16 %v5667, %v5666
      %v5718 = vpack.c.bf16 %v5668, %v5668
      %v5719 = vpack.c.bf16 %v5670, %v5669
      %v5720 = vpack.c.bf16 %v5671, %v5671
      %v5721 = vpack.c.bf16 %v5673, %v5672
      %v5722 = vpack.c.bf16 %v5674, %v5674
      %v5723 = vpack.c.bf16 %v5676, %v5675
      %v5724 = vpack.c.bf16 %v5677, %v5677
      %v5725 = vpack.c.bf16 %v5679, %v5678
      %v5726 = vpack.c.bf16 %v5680, %v5680
      %v5727 = vpack.c.bf16 %v5682, %v5681
      %v5728 = vpack.c.bf16 %v5683, %v5683
      %v5729 = vpack.c.bf16 %v5685, %v5684
      %v5730 = vpack.c.bf16 %v5686, %v5686
      %v5731 = vpack.c.bf16 %v5688, %v5687
      %v5732 = vpack.c.bf16 %v5689, %v5689
      %v5733 = vpack.c.bf16 %v5691, %v5690
      %v5734 = vpack.c.bf16 %v5692, %v5692
      %v5735 = vpack.c.bf16 %v5694, %v5693
      %v5736 = vpack.c.bf16 %v5695, %v5695
      %v5737 = vpack.c.bf16 %v5697, %v5696
      %v5738 = vpack.c.bf16 %v5698, %v5698
      %v5739 = vpack.c.bf16 %v5700, %v5699
      %v5740 = vpack.c.bf16 %v5701, %v5701
      %v5741 = vpack.c.bf16 %v5703, %v5702
      %v5742 = vpack.c.bf16 %v5704, %v5704
      %v5743 = vpack.c.bf16 %v5706, %v5705
      %v5744 = vpack.c.bf16 %v5707, %v5707
      %v5745 = vpack.c.bf16 %v5709, %v5708
      %v5746 = vpack.c.bf16 %v5710, %v5710
      %v5783 = vunpack.c.l.b16 %v5711
      %v5784 = vunpack.c.h.b16 %v5711
      %v5785 = vunpack.c.l.b16 %v5712
      %v5786 = vunpack.c.l.b16 %v5713
      %v5787 = vunpack.c.h.b16 %v5713
      %v5788 = vunpack.c.l.b16 %v5714
      %v5789 = vunpack.c.l.b16 %v5715
      %v5790 = vunpack.c.h.b16 %v5715
      %v5791 = vunpack.c.l.b16 %v5716
      %v5792 = vunpack.c.l.b16 %v5717
      %v5793 = vunpack.c.h.b16 %v5717
      %v5794 = vunpack.c.l.b16 %v5718
      %v5795 = vunpack.c.l.b16 %v5719
      %v5796 = vunpack.c.h.b16 %v5719
      %v5797 = vunpack.c.l.b16 %v5720
      %v5798 = vunpack.c.l.b16 %v5721
      %v5799 = vunpack.c.h.b16 %v5721
      %v5800 = vunpack.c.l.b16 %v5722
      %v5801 = vunpack.c.l.b16 %v5723
      %v5802 = vunpack.c.h.b16 %v5723
      %v5803 = vunpack.c.l.b16 %v5724
      %v5804 = vunpack.c.l.b16 %v5725
      %v5805 = vunpack.c.h.b16 %v5725
      %v5806 = vunpack.c.l.b16 %v5726
      %v5807 = vunpack.c.l.b16 %v5727
      %v5808 = vunpack.c.h.b16 %v5727
      %v5809 = vunpack.c.l.b16 %v5728
      %v5810 = vunpack.c.l.b16 %v5729
      %v5811 = vunpack.c.h.b16 %v5729
      %v5812 = vunpack.c.l.b16 %v5730
      %v5813 = vunpack.c.l.b16 %v5731
      %v5814 = vunpack.c.h.b16 %v5731
      %v5815 = vunpack.c.l.b16 %v5732
      %v5816 = vunpack.c.l.b16 %v5733
      %v5817 = vunpack.c.h.b16 %v5733
      %v5818 = vunpack.c.l.b16 %v5734
      %v5819 = vunpack.c.l.b16 %v5735
      %v5820 = vunpack.c.h.b16 %v5735
      %v5821 = vunpack.c.l.b16 %v5736
      %v5822 = vunpack.c.l.b16 %v5737
      %v5823 = vunpack.c.h.b16 %v5737
      %v5824 = vunpack.c.l.b16 %v5738
      %v5825 = vunpack.c.l.b16 %v5739
      %v5826 = vunpack.c.h.b16 %v5739
      %v5827 = vunpack.c.l.b16 %v5740
      %v5828 = vunpack.c.l.b16 %v5741
      %v5829 = vunpack.c.h.b16 %v5741
      %v5830 = vunpack.c.l.b16 %v5742
      %v5831 = vunpack.c.l.b16 %v5743
      %v5832 = vunpack.c.h.b16 %v5743
      %v5833 = vunpack.c.l.b16 %v5744
      %v5834 = vunpack.c.l.b16 %v5745
      %v5835 = vunpack.c.h.b16 %v5745
      %v5836 = vunpack.c.l.b16 %v5746
      %v5837 = vpack.c.b16 %v5783, %v5783
      %v5838 = vpack.c.b16 %v5784, %v5784
      %v5839 = vpack.c.b16 %v5785, %v5785
      %v5840 = vpack.c.b16 %v5786, %v5786
      %v5841 = vpack.c.b16 %v5787, %v5787
      %v5842 = vpack.c.b16 %v5788, %v5788
      %v5843 = vpack.c.b16 %v5789, %v5789
      %v5844 = vpack.c.b16 %v5790, %v5790
      %v5845 = vpack.c.b16 %v5791, %v5791
      %v5846 = vpack.c.b16 %v5792, %v5792
      %v5847 = vpack.c.b16 %v5793, %v5793
      %v5848 = vpack.c.b16 %v5794, %v5794
      %v5849 = vpack.c.b16 %v5795, %v5795
      %v5850 = vpack.c.b16 %v5796, %v5796
      %v5851 = vpack.c.b16 %v5797, %v5797
      %v5852 = vpack.c.b16 %v5798, %v5798
      %v5853 = vpack.c.b16 %v5799, %v5799
      %v5854 = vpack.c.b16 %v5800, %v5800
      %v5855 = vpack.c.b16 %v5801, %v5801
      %v5856 = vpack.c.b16 %v5802, %v5802
      %v5857 = vpack.c.b16 %v5803, %v5803
      %v5858 = vpack.c.b16 %v5804, %v5804
      %v5859 = vpack.c.b16 %v5805, %v5805
      %v5860 = vpack.c.b16 %v5806, %v5806
      %v5861 = vpack.c.b16 %v5807, %v5807
      %v5862 = vpack.c.b16 %v5808, %v5808
      %v5863 = vpack.c.b16 %v5809, %v5809
      %v5864 = vpack.c.b16 %v5810, %v5810
      %v5865 = vpack.c.b16 %v5811, %v5811
      %v5866 = vpack.c.b16 %v5812, %v5812
      %v5867 = vpack.c.b16 %v5813, %v5813
      %v5868 = vpack.c.b16 %v5814, %v5814
      %v5869 = vpack.c.b16 %v5815, %v5815
      %v5870 = vpack.c.b16 %v5816, %v5816
      %v5871 = vpack.c.b16 %v5817, %v5817
      %v5872 = vpack.c.b16 %v5818, %v5818
      %v5873 = vpack.c.b16 %v5819, %v5819
      %v5874 = vpack.c.b16 %v5820, %v5820
      %v5875 = vpack.c.b16 %v5821, %v5821
      %v5876 = vpack.c.b16 %v5822, %v5822
      %v5877 = vpack.c.b16 %v5823, %v5823
      %v5878 = vpack.c.b16 %v5824, %v5824
      %v5879 = vpack.c.b16 %v5825, %v5825
      %v5880 = vpack.c.b16 %v5826, %v5826
      %v5881 = vpack.c.b16 %v5827, %v5827
      %v5882 = vpack.c.b16 %v5828, %v5828
      %v5883 = vpack.c.b16 %v5829, %v5829
      %v5884 = vpack.c.b16 %v5830, %v5830
      %v5885 = vpack.c.b16 %v5831, %v5831
      %v5886 = vpack.c.b16 %v5832, %v5832
      %v5887 = vpack.c.b16 %v5833, %v5833
      %v5888 = vpack.c.b16 %v5834, %v5834
      %v5889 = vpack.c.b16 %v5835, %v5835
      %v5890 = vpack.c.b16 %v5836, %v5836
      %5945 = vst.msk [vmem:[#allocation3] sm:$0xf] %vm642, %v5837
      %5946 = vst.msk [vmem:[#allocation3 + $0x4] sm:$0xf] %vm642, %v5838
      %5947 = vst.msk [vmem:[#allocation3 + $0x8] sm:$0x1] %vm299, %v5839
      %5948 = vst.msk [vmem:[#allocation3 + $0xc] sm:$0xf] %vm642, %v5840
      %5949 = vst.msk [vmem:[#allocation3 + $0x10] sm:$0xf] %vm642, %v5841
      %5950 = vst.msk [vmem:[#allocation3 + $0x14] sm:$0x1] %vm299, %v5842
      %5951 = vst.msk [vmem:[#allocation3 + $0x18] sm:$0xf] %vm642, %v5843
      %5952 = vst.msk [vmem:[#allocation3 + $0x1c] sm:$0xf] %vm642, %v5844
      %5953 = vst.msk [vmem:[#allocation3 + $0x20] sm:$0x1] %vm299, %v5845
      %5954 = vst.msk [vmem:[#allocation3 + $0x24] sm:$0xf] %vm642, %v5846
      %5955 = vst.msk [vmem:[#allocation3 + $0x28] sm:$0xf] %vm642, %v5847
      %5956 = vst.msk [vmem:[#allocation3 + $0x2c] sm:$0x1] %vm299, %v5848
      %5957 = vst.msk [vmem:[#allocation3 + $0x30] sm:$0xf] %vm642, %v5849
      %5958 = vst.msk [vmem:[#allocation3 + $0x34] sm:$0xf] %vm642, %v5850
      %5959 = vst.msk [vmem:[#allocation3 + $0x38] sm:$0x1] %vm299, %v5851
      %5960 = vst.msk [vmem:[#allocation3 + $0x3c] sm:$0xf] %vm642, %v5852
      %5961 = vst.msk [vmem:[#allocation3 + $0x40] sm:$0xf] %vm642, %v5853
      %5962 = vst.msk [vmem:[#allocation3 + $0x44] sm:$0x1] %vm299, %v5854
      %5963 = vst.msk [vmem:[#allocation3 + $0x48] sm:$0xf] %vm642, %v5855
      %5964 = vst.msk [vmem:[#allocation3 + $0x4c] sm:$0xf] %vm642, %v5856
      %5965 = vst.msk [vmem:[#allocation3 + $0x50] sm:$0x1] %vm299, %v5857
      %5966 = vst.msk [vmem:[#allocation3 + $0x54] sm:$0xf] %vm642, %v5858
      %5967 = vst.msk [vmem:[#allocation3 + $0x58] sm:$0xf] %vm642, %v5859
      %5968 = vst.msk [vmem:[#allocation3 + $0x5c] sm:$0x1] %vm299, %v5860
      %5969 = vst.msk [vmem:[#allocation3 + $0x60] sm:$0xf] %vm642, %v5861
      %5970 = vst.msk [vmem:[#allocation3 + $0x64] sm:$0xf] %vm642, %v5862
      %5971 = vst.msk [vmem:[#allocation3 + $0x68] sm:$0x1] %vm299, %v5863
      %5972 = vst.msk [vmem:[#allocation3 + $0x6c] sm:$0xf] %vm642, %v5864
      %5973 = vst.msk [vmem:[#allocation3 + $0x70] sm:$0xf] %vm642, %v5865
      %5974 = vst.msk [vmem:[#allocation3 + $0x74] sm:$0x1] %vm299, %v5866
      %5975 = vst.msk [vmem:[#allocation3 + $0x78] sm:$0xf] %vm642, %v5867
      %5976 = vst.msk [vmem:[#allocation3 + $0x7c] sm:$0xf] %vm642, %v5868
      %5977 = vst.msk [vmem:[#allocation3 + $0x80] sm:$0x1] %vm299, %v5869
      %5978 = vst.msk [vmem:[#allocation3 + $0x84] sm:$0xf] %vm642, %v5870
      %5979 = vst.msk [vmem:[#allocation3 + $0x88] sm:$0xf] %vm642, %v5871
      %5980 = vst.msk [vmem:[#allocation3 + $0x8c] sm:$0x1] %vm299, %v5872
      %5981 = vst.msk [vmem:[#allocation3 + $0x90] sm:$0xf] %vm642, %v5873
      %5982 = vst.msk [vmem:[#allocation3 + $0x94] sm:$0xf] %vm642, %v5874
      %5983 = vst.msk [vmem:[#allocation3 + $0x98] sm:$0x1] %vm299, %v5875
      %5984 = vst.msk [vmem:[#allocation3 + $0x9c] sm:$0xf] %vm642, %v5876
      %5985 = vst.msk [vmem:[#allocation3 + $0xa0] sm:$0xf] %vm642, %v5877
      %5986 = vst.msk [vmem:[#allocation3 + $0xa4] sm:$0x1] %vm299, %v5878
      %5987 = vst.msk [vmem:[#allocation3 + $0xa8] sm:$0xf] %vm642, %v5879
      %5988 = vst.msk [vmem:[#allocation3 + $0xac] sm:$0xf] %vm642, %v5880
      %5989 = vst.msk [vmem:[#allocation3 + $0xb0] sm:$0x1] %vm299, %v5881
      %5990 = vst.msk [vmem:[#allocation3 + $0xb4] sm:$0xf] %vm642, %v5882
      %5991 = vst.msk [vmem:[#allocation3 + $0xb8] sm:$0xf] %vm642, %v5883
      %5992 = vst.msk [vmem:[#allocation3 + $0xbc] sm:$0x1] %vm299, %v5884
      %5993 = vst.msk [vmem:[#allocation3 + $0xc0] sm:$0xf] %vm642, %v5885
      %5994 = vst.msk [vmem:[#allocation3 + $0xc4] sm:$0xf] %vm642, %v5886
      %5995 = vst.msk [vmem:[#allocation3 + $0xc8] sm:$0x1] %vm299, %v5887
      %5996 = vst.msk [vmem:[#allocation3 + $0xcc] sm:$0xf] %vm642, %v5888
      %5997 = vst.msk [vmem:[#allocation3 + $0xd0] sm:$0xf] %vm642, %v5889
      %5998 = vst.msk [vmem:[#allocation3 + $0xd4] sm:$0x1] %vm299, %v5890
      %v5999 = vld [vmem:[#allocation3] sm:$0xf]
      %v6000 = vld [vmem:[#allocation3 + $0x4] sm:$0xf]
      %v6001 = vld [vmem:[#allocation3 + $0xc] sm:$0xf]
      %v6002 = vld [vmem:[#allocation3 + $0x10] sm:$0xf]
      %v6003 = vld [vmem:[#allocation3 + $0x18] sm:$0xf]
      %v6004 = vld [vmem:[#allocation3 + $0x1c] sm:$0xf]
      %v6005 = vld [vmem:[#allocation3 + $0x24] sm:$0xf]
      %v6006 = vld [vmem:[#allocation3 + $0x28] sm:$0xf]
      %v6007 = vld [vmem:[#allocation3 + $0x30] sm:$0xf]
      %v6008 = vld [vmem:[#allocation3 + $0x34] sm:$0xf]
      %v6009 = vld [vmem:[#allocation3 + $0x3c] sm:$0xf]
      %v6010 = vld [vmem:[#allocation3 + $0x40] sm:$0xf]
      %v6011 = vld [vmem:[#allocation3 + $0x48] sm:$0xf]
      %v6012 = vld [vmem:[#allocation3 + $0x4c] sm:$0xf]
      %v6013 = vld [vmem:[#allocation3 + $0x54] sm:$0xf]
      %v6014 = vld [vmem:[#allocation3 + $0x58] sm:$0xf]
      %v6015 = vld [vmem:[#allocation3 + $0x60] sm:$0xf]
      %v6016 = vld [vmem:[#allocation3 + $0x64] sm:$0xf]
      %v6017 = vld [vmem:[#allocation3 + $0x6c] sm:$0xf]
      %v6018 = vld [vmem:[#allocation3 + $0x70] sm:$0xf]
      %v6019 = vld [vmem:[#allocation3 + $0x78] sm:$0xf]
      %v6020 = vld [vmem:[#allocation3 + $0x7c] sm:$0xf]
      %v6021 = vld [vmem:[#allocation3 + $0x84] sm:$0xf]
      %v6022 = vld [vmem:[#allocation3 + $0x88] sm:$0xf]
      %v6023 = vld [vmem:[#allocation3 + $0x90] sm:$0xf]
      %v6024 = vld [vmem:[#allocation3 + $0x94] sm:$0xf]
      %v6025 = vld [vmem:[#allocation3 + $0x9c] sm:$0xf]
      %v6026 = vld [vmem:[#allocation3 + $0xa0] sm:$0xf]
      %v6027 = vld [vmem:[#allocation3 + $0xa8] sm:$0xf]
      %v6028 = vld [vmem:[#allocation3 + $0xac] sm:$0xf]
      %v6029 = vld [vmem:[#allocation3 + $0xb4] sm:$0xf]
      %v6030 = vld [vmem:[#allocation3 + $0xb8] sm:$0xf]
      %v6031 = vld [vmem:[%s2] sm:$0x3]
      %v6032 = vld [vmem:[#allocation3 + $0x8] sm:$0x1]
      %v6033 = vld [vmem:[#allocation3 + $0x14] sm:$0x1]
      %v6034 = vld [vmem:[#allocation3 + $0x20] sm:$0x1]
      %v6035 = vld [vmem:[#allocation3 + $0x2c] sm:$0x1]
      %v6036 = vld [vmem:[#allocation3 + $0x38] sm:$0x1]
      %v6037 = vld [vmem:[#allocation3 + $0x44] sm:$0x1]
      %v6038 = vld [vmem:[#allocation3 + $0x50] sm:$0x1]
      %v6039 = vld [vmem:[#allocation3 + $0x5c] sm:$0x1]
      %v6040 = vld [vmem:[#allocation3 + $0x68] sm:$0x1]
      %v6041 = vld [vmem:[#allocation3 + $0x74] sm:$0x1]
      %v6042 = vld [vmem:[#allocation3 + $0x80] sm:$0x1]
      %v6043 = vld [vmem:[#allocation3 + $0x8c] sm:$0x1]
      %v6044 = vld [vmem:[#allocation3 + $0x98] sm:$0x1]
      %v6045 = vld [vmem:[#allocation3 + $0xa4] sm:$0x1]
      %v6046 = vld [vmem:[#allocation3 + $0xb0] sm:$0x1]
      %v6047 = vld [vmem:[#allocation3 + $0xbc] sm:$0x1]
      %v6049 = vshrl.u32 %v5999, 16
      %v6051 = vrot.slane %v6049, 4
      %v6052 = vshll.u32 %v5999, 16
      %v6054 = vrot.slane %v6052, 5
      %v6055 = vor.u32 %v6051, %v6054
      %v6056 = vrot.slane %v6055, 4
      %v6058 = vshll.u32 %v6000, 16
      %v6060 = vrot.slane %v6058, 5
      %v6061 = vsel %vm748, %v6056, %v6060
      %v6062 = vshrl.u32 %v6000, 16
      %v6064 = vrot.slane %v6062, 4
      %v6065 = vor.u32 %v6064, %v6060
      %v6066 = vrot.slane %v6065, 4
      %v6068 = vshll.u32 %v6032, 16
      %v6070 = vrot.slane %v6068, 5
      %v6071 = vsel %vm748, %v6066, %v6070
      %v6073 = vshrl.u32 %v6001, 16
      %v6075 = vrot.slane %v6073, 4
      %v6076 = vshll.u32 %v6001, 16
      %v6078 = vrot.slane %v6076, 5
      %v6079 = vor.u32 %v6075, %v6078
      %v6080 = vrot.slane %v6079, 4
      %v6082 = vshll.u32 %v6002, 16
      %v6084 = vrot.slane %v6082, 5
      %v6085 = vsel %vm748, %v6080, %v6084
      %v6086 = vshrl.u32 %v6002, 16
      %v6088 = vrot.slane %v6086, 4
      %v6089 = vor.u32 %v6088, %v6084
      %v6090 = vrot.slane %v6089, 4
      %v6092 = vshll.u32 %v6033, 16
      %v6094 = vrot.slane %v6092, 5
      %v6095 = vsel %vm748, %v6090, %v6094
      %v6097 = vshrl.u32 %v6003, 16
      %v6099 = vrot.slane %v6097, 4
      %v6100 = vshll.u32 %v6003, 16
      %v6102 = vrot.slane %v6100, 5
      %v6103 = vor.u32 %v6099, %v6102
      %v6104 = vrot.slane %v6103, 4
      %v6106 = vshll.u32 %v6004, 16
      %v6108 = vrot.slane %v6106, 5
      %v6109 = vsel %vm748, %v6104, %v6108
      %v6110 = vshrl.u32 %v6004, 16
      %v6112 = vrot.slane %v6110, 4
      %v6113 = vor.u32 %v6112, %v6108
      %v6114 = vrot.slane %v6113, 4
      %v6116 = vshll.u32 %v6034, 16
      %v6118 = vrot.slane %v6116, 5
      %v6119 = vsel %vm748, %v6114, %v6118
      %v6121 = vshrl.u32 %v6005, 16
      %v6123 = vrot.slane %v6121, 4
      %v6124 = vshll.u32 %v6005, 16
      %v6126 = vrot.slane %v6124, 5
      %v6127 = vor.u32 %v6123, %v6126
      %v6128 = vrot.slane %v6127, 4
      %v6130 = vshll.u32 %v6006, 16
      %v6132 = vrot.slane %v6130, 5
      %v6133 = vsel %vm748, %v6128, %v6132
      %v6134 = vshrl.u32 %v6006, 16
      %v6136 = vrot.slane %v6134, 4
      %v6137 = vor.u32 %v6136, %v6132
      %v6138 = vrot.slane %v6137, 4
      %v6140 = vshll.u32 %v6035, 16
      %v6142 = vrot.slane %v6140, 5
      %v6143 = vsel %vm748, %v6138, %v6142
      %v6145 = vshrl.u32 %v6007, 16
      %v6147 = vrot.slane %v6145, 4
      %v6148 = vshll.u32 %v6007, 16
      %v6150 = vrot.slane %v6148, 5
      %v6151 = vor.u32 %v6147, %v6150
      %v6152 = vrot.slane %v6151, 4
      %v6154 = vshll.u32 %v6008, 16
      %v6156 = vrot.slane %v6154, 5
      %v6157 = vsel %vm748, %v6152, %v6156
      %v6158 = vshrl.u32 %v6008, 16
      %v6160 = vrot.slane %v6158, 4
      %v6161 = vor.u32 %v6160, %v6156
      %v6162 = vrot.slane %v6161, 4
      %v6164 = vshll.u32 %v6036, 16
      %v6166 = vrot.slane %v6164, 5
      %v6167 = vsel %vm748, %v6162, %v6166
      %v6169 = vshrl.u32 %v6009, 16
      %v6171 = vrot.slane %v6169, 4
      %v6172 = vshll.u32 %v6009, 16
      %v6174 = vrot.slane %v6172, 5
      %v6175 = vor.u32 %v6171, %v6174
      %v6176 = vrot.slane %v6175, 4
      %v6178 = vshll.u32 %v6010, 16
      %v6180 = vrot.slane %v6178, 5
      %v6181 = vsel %vm748, %v6176, %v6180
      %v6182 = vshrl.u32 %v6010, 16
      %v6184 = vrot.slane %v6182, 4
      %v6185 = vor.u32 %v6184, %v6180
      %v6186 = vrot.slane %v6185, 4
      %v6188 = vshll.u32 %v6037, 16
      %v6190 = vrot.slane %v6188, 5
      %v6191 = vsel %vm748, %v6186, %v6190
      %v6193 = vshrl.u32 %v6011, 16
      %v6195 = vrot.slane %v6193, 4
      %v6196 = vshll.u32 %v6011, 16
      %v6198 = vrot.slane %v6196, 5
      %v6199 = vor.u32 %v6195, %v6198
      %v6200 = vrot.slane %v6199, 4
      %v6202 = vshll.u32 %v6012, 16
      %v6204 = vrot.slane %v6202, 5
      %v6205 = vsel %vm748, %v6200, %v6204
      %v6206 = vshrl.u32 %v6012, 16
      %v6208 = vrot.slane %v6206, 4
      %v6209 = vor.u32 %v6208, %v6204
      %v6210 = vrot.slane %v6209, 4
      %v6212 = vshll.u32 %v6038, 16
      %v6214 = vrot.slane %v6212, 5
      %v6215 = vsel %vm748, %v6210, %v6214
      %v6217 = vshrl.u32 %v6013, 16
      %v6219 = vrot.slane %v6217, 4
      %v6220 = vshll.u32 %v6013, 16
      %v6222 = vrot.slane %v6220, 5
      %v6223 = vor.u32 %v6219, %v6222
      %v6224 = vrot.slane %v6223, 4
      %v6226 = vshll.u32 %v6014, 16
      %v6228 = vrot.slane %v6226, 5
      %v6229 = vsel %vm748, %v6224, %v6228
      %v6230 = vshrl.u32 %v6014, 16
      %v6232 = vrot.slane %v6230, 4
      %v6233 = vor.u32 %v6232, %v6228
      %v6234 = vrot.slane %v6233, 4
      %v6236 = vshll.u32 %v6039, 16
      %v6238 = vrot.slane %v6236, 5
      %v6239 = vsel %vm748, %v6234, %v6238
      %v6241 = vshrl.u32 %v6015, 16
      %v6243 = vrot.slane %v6241, 4
      %v6244 = vshll.u32 %v6015, 16
      %v6246 = vrot.slane %v6244, 5
      %v6247 = vor.u32 %v6243, %v6246
      %v6248 = vrot.slane %v6247, 4
      %v6250 = vshll.u32 %v6016, 16
      %v6252 = vrot.slane %v6250, 5
      %v6253 = vsel %vm748, %v6248, %v6252
      %v6254 = vshrl.u32 %v6016, 16
      %v6256 = vrot.slane %v6254, 4
      %v6257 = vor.u32 %v6256, %v6252
      %v6258 = vrot.slane %v6257, 4
      %v6260 = vshll.u32 %v6040, 16
      %v6262 = vrot.slane %v6260, 5
      %v6263 = vsel %vm748, %v6258, %v6262
      %v6265 = vshrl.u32 %v6017, 16
      %v6267 = vrot.slane %v6265, 4
      %v6268 = vshll.u32 %v6017, 16
      %v6270 = vrot.slane %v6268, 5
      %v6271 = vor.u32 %v6267, %v6270
      %v6272 = vrot.slane %v6271, 4
      %v6274 = vshll.u32 %v6018, 16
      %v6276 = vrot.slane %v6274, 5
      %v6277 = vsel %vm748, %v6272, %v6276
      %v6278 = vshrl.u32 %v6018, 16
      %v6280 = vrot.slane %v6278, 4
      %v6281 = vor.u32 %v6280, %v6276
      %v6282 = vrot.slane %v6281, 4
      %v6284 = vshll.u32 %v6041, 16
      %v6286 = vrot.slane %v6284, 5
      %v6287 = vsel %vm748, %v6282, %v6286
      %v6289 = vshrl.u32 %v6019, 16
      %v6291 = vrot.slane %v6289, 4
      %v6292 = vshll.u32 %v6019, 16
      %v6294 = vrot.slane %v6292, 5
      %v6295 = vor.u32 %v6291, %v6294
      %v6296 = vrot.slane %v6295, 4
      %v6298 = vshll.u32 %v6020, 16
      %v6300 = vrot.slane %v6298, 5
      %v6301 = vsel %vm748, %v6296, %v6300
      %v6302 = vshrl.u32 %v6020, 16
      %v6304 = vrot.slane %v6302, 4
      %v6305 = vor.u32 %v6304, %v6300
      %v6306 = vrot.slane %v6305, 4
      %v6308 = vshll.u32 %v6042, 16
      %v6310 = vrot.slane %v6308, 5
      %v6311 = vsel %vm748, %v6306, %v6310
      %v6313 = vshrl.u32 %v6021, 16
      %v6315 = vrot.slane %v6313, 4
      %v6316 = vshll.u32 %v6021, 16
      %v6318 = vrot.slane %v6316, 5
      %v6319 = vor.u32 %v6315, %v6318
      %v6320 = vrot.slane %v6319, 4
      %v6322 = vshll.u32 %v6022, 16
      %v6324 = vrot.slane %v6322, 5
      %v6325 = vsel %vm748, %v6320, %v6324
      %v6326 = vshrl.u32 %v6022, 16
      %v6328 = vrot.slane %v6326, 4
      %v6329 = vor.u32 %v6328, %v6324
      %v6330 = vrot.slane %v6329, 4
      %v6332 = vshll.u32 %v6043, 16
      %v6334 = vrot.slane %v6332, 5
      %v6335 = vsel %vm748, %v6330, %v6334
      %v6337 = vshrl.u32 %v6023, 16
      %v6339 = vrot.slane %v6337, 4
      %v6340 = vshll.u32 %v6023, 16
      %v6342 = vrot.slane %v6340, 5
      %v6343 = vor.u32 %v6339, %v6342
      %v6344 = vrot.slane %v6343, 4
      %v6346 = vshll.u32 %v6024, 16
      %v6348 = vrot.slane %v6346, 5
      %v6349 = vsel %vm748, %v6344, %v6348
      %v6350 = vshrl.u32 %v6024, 16
      %v6352 = vrot.slane %v6350, 4
      %v6353 = vor.u32 %v6352, %v6348
      %v6354 = vrot.slane %v6353, 4
      %v6356 = vshll.u32 %v6044, 16
      %v6358 = vrot.slane %v6356, 5
      %v6359 = vsel %vm748, %v6354, %v6358
      %v6361 = vshrl.u32 %v6025, 16
      %v6363 = vrot.slane %v6361, 4
      %v6364 = vshll.u32 %v6025, 16
      %v6366 = vrot.slane %v6364, 5
      %v6367 = vor.u32 %v6363, %v6366
      %v6368 = vrot.slane %v6367, 4
      %v6370 = vshll.u32 %v6026, 16
      %v6372 = vrot.slane %v6370, 5
      %v6373 = vsel %vm748, %v6368, %v6372
      %v6374 = vshrl.u32 %v6026, 16
      %v6376 = vrot.slane %v6374, 4
      %v6377 = vor.u32 %v6376, %v6372
      %v6378 = vrot.slane %v6377, 4
      %v6380 = vshll.u32 %v6045, 16
      %v6382 = vrot.slane %v6380, 5
      %v6383 = vsel %vm748, %v6378, %v6382
      %v6385 = vshrl.u32 %v6027, 16
      %v6387 = vrot.slane %v6385, 4
      %v6388 = vshll.u32 %v6027, 16
      %v6390 = vrot.slane %v6388, 5
      %v6391 = vor.u32 %v6387, %v6390
      %v6392 = vrot.slane %v6391, 4
      %v6394 = vshll.u32 %v6028, 16
      %v6396 = vrot.slane %v6394, 5
      %v6397 = vsel %vm748, %v6392, %v6396
      %v6398 = vshrl.u32 %v6028, 16
      %v6400 = vrot.slane %v6398, 4
      %v6401 = vor.u32 %v6400, %v6396
      %v6402 = vrot.slane %v6401, 4
      %v6404 = vshll.u32 %v6046, 16
      %v6406 = vrot.slane %v6404, 5
      %v6407 = vsel %vm748, %v6402, %v6406
      %v6409 = vshrl.u32 %v6029, 16
      %v6411 = vrot.slane %v6409, 4
      %v6412 = vshll.u32 %v6029, 16
      %v6414 = vrot.slane %v6412, 5
      %v6415 = vor.u32 %v6411, %v6414
      %v6416 = vrot.slane %v6415, 4
      %v6418 = vshll.u32 %v6030, 16
      %v6420 = vrot.slane %v6418, 5
      %v6421 = vsel %vm748, %v6416, %v6420
      %v6422 = vshrl.u32 %v6030, 16
      %v6424 = vrot.slane %v6422, 4
      %v6425 = vor.u32 %v6424, %v6420
      %v6426 = vrot.slane %v6425, 4
      %v6428 = vshll.u32 %v6047, 16
      %v6430 = vrot.slane %v6428, 5
      %v6431 = vsel %vm748, %v6426, %v6430
      %s6432 = scalar_lea.vmem %s2, 2
      %v6433 = vld [vmem:[%s6432] sm:$0x3]
      %v6434 = vunpack.c.l.b16 %v6061
      %v6435 = vunpack.c.l.b16 %v6071
      %v6436 = vunpack.c.l.b16 %v6085
      %v6437 = vunpack.c.l.b16 %v6095
      %v6438 = vunpack.c.l.b16 %v6109
      %v6439 = vunpack.c.l.b16 %v6119
      %v6440 = vunpack.c.l.b16 %v6133
      %v6441 = vunpack.c.l.b16 %v6143
      %v6442 = vunpack.c.l.b16 %v6157
      %v6443 = vunpack.c.l.b16 %v6167
      %v6444 = vunpack.c.l.b16 %v6181
      %v6445 = vunpack.c.l.b16 %v6191
      %v6446 = vunpack.c.l.b16 %v6205
      %v6447 = vunpack.c.l.b16 %v6215
      %v6448 = vunpack.c.l.b16 %v6229
      %v6449 = vunpack.c.l.b16 %v6239
      %v6450 = vunpack.c.l.b16 %v6253
      %v6451 = vunpack.c.l.b16 %v6263
      %v6452 = vunpack.c.l.b16 %v6277
      %v6453 = vunpack.c.l.b16 %v6287
      %v6454 = vunpack.c.l.b16 %v6301
      %v6455 = vunpack.c.l.b16 %v6311
      %v6456 = vunpack.c.l.b16 %v6325
      %v6457 = vunpack.c.l.b16 %v6335
      %v6458 = vunpack.c.l.b16 %v6349
      %v6459 = vunpack.c.l.b16 %v6359
      %v6460 = vunpack.c.l.b16 %v6373
      %v6461 = vunpack.c.l.b16 %v6383
      %v6462 = vunpack.c.l.b16 %v6397
      %v6463 = vunpack.c.l.b16 %v6407
      %v6464 = vunpack.c.l.b16 %v6421
      %v6465 = vunpack.c.l.b16 %v6431
      %v6466 = vpack.c.b16 %v6435, %v6434
      %v6467 = vpack.c.b16 %v6437, %v6436
      %v6468 = vpack.c.b16 %v6439, %v6438
      %v6469 = vpack.c.b16 %v6441, %v6440
      %v6470 = vpack.c.b16 %v6443, %v6442
      %v6471 = vpack.c.b16 %v6445, %v6444
      %v6472 = vpack.c.b16 %v6447, %v6446
      %v6473 = vpack.c.b16 %v6449, %v6448
      %v6474 = vpack.c.b16 %v6451, %v6450
      %v6475 = vpack.c.b16 %v6453, %v6452
      %v6476 = vpack.c.b16 %v6455, %v6454
      %v6477 = vpack.c.b16 %v6457, %v6456
      %v6478 = vpack.c.b16 %v6459, %v6458
      %v6479 = vpack.c.b16 %v6461, %v6460
      %v6480 = vpack.c.b16 %v6463, %v6462
      %v6481 = vpack.c.b16 %v6465, %v6464
      %v6483 = vsel %vm232, %v6466, 0
      %v6486 = vsel %vm232, %v6467, 0
      %v6489 = vsel %vm232, %v6468, 0
      %v6492 = vsel %vm232, %v6469, 0
      %v6495 = vsel %vm232, %v6470, 0
      %v6498 = vsel %vm232, %v6471, 0
      %v6501 = vsel %vm232, %v6472, 0
      %v6504 = vsel %vm232, %v6473, 0
      %v6507 = vsel %vm232, %v6474, 0
      %v6510 = vsel %vm232, %v6475, 0
      %v6513 = vsel %vm232, %v6476, 0
      %v6516 = vsel %vm232, %v6477, 0
      %v6519 = vsel %vm232, %v6478, 0
      %v6522 = vsel %vm232, %v6479, 0
      %v6525 = vsel %vm232, %v6480, 0
      %v6528 = vsel %vm232, %v6481, 0
      %v6531 = vsel %vm1231, %v6433, 0
      %6533 = vmatprep.subr.bf16.mxu0 0
      %6534 = vmatpush1.bf16.msra.mxu0 0
      %6535 = vmatprep.subr.bf16.mxu0 0
      %6536 = vmatpush1.bf16.msra.mxu0 0
      %6537 = vmatprep.subr.bf16.mxu0 0
      %6538 = vmatpush1.bf16.msra.mxu0 0
      %6539 = vmatprep.subr.bf16.mxu0 0
      %6540 = vmatpush1.bf16.msra.mxu0 0
      %6541 = vmatprep.subr.bf16.mxu0 0
      %6542 = vmatpush1.bf16.msra.mxu0 0
      %6543 = vmatprep.subr.bf16.mxu0 0
      %6544 = vmatpush1.bf16.msra.mxu0 0
      %6545 = vmatprep.subr.bf16.mxu0 0
      %6546 = vmatpush1.bf16.msra.mxu0 0
      %6547 = vmatprep.subr.bf16.mxu0 0
      %6548 = vmatpush1.bf16.msra.mxu0 %v6531
      %6549 = vmatprep.subr.bf16.mxu0 0
      %6550 = vmatpush2.bf16.msra.mxu0 0
      %6551 = vmatprep.subr.bf16.mxu0 0
      %6552 = vmatpush2.bf16.msra.mxu0 0
      %6553 = vmatprep.subr.bf16.mxu0 0
      %6554 = vmatpush2.bf16.msra.mxu0 0
      %6555 = vmatprep.subr.bf16.mxu0 0
      %6556 = vmatpush2.bf16.msra.mxu0 0
      %6557 = vmatprep.subr.bf16.mxu0 0
      %6558 = vmatpush2.bf16.msra.mxu0 0
      %6559 = vmatprep.subr.bf16.mxu0 0
      %6560 = vmatpush2.bf16.msra.mxu0 0
      %6561 = vmatprep.subr.bf16.mxu0 0
      %6562 = vmatpush2.bf16.msra.mxu0 0
      %6563 = vmatprep.subr.bf16.mxu0 0
      %6564 = vmatpush2.bf16.msra.mxu0 0
      %6565 = vmatprep.mubr.bf16.mxu0 0
      %6566 = vmatmul.mubr.bf16.gmra.mxu0 %v6483
      %v6567 = vpop.f32.mrf.mxu0
      %v6568 = vadd.f32 0.0, %v6567
      %v6569 = vpop.f32.mrf.mxu0
      %v6570 = vpop.f32.mrf.mxu0
      %v6571 = vadd.f32 0.0, %v6570
      %v6572 = vpop.f32.mrf.mxu0
      %6573 = vmatprep.mubr.bf16.mxu0 0
      %6574 = vmatmul.mubr.bf16.gmra.mxu0 %v6486
      %v6575 = vpop.f32.mrf.mxu0
      %v6576 = vadd.f32 0.0, %v6575
      %v6577 = vpop.f32.mrf.mxu0
      %v6578 = vpop.f32.mrf.mxu0
      %v6579 = vadd.f32 0.0, %v6578
      %v6580 = vpop.f32.mrf.mxu0
      %6581 = vmatprep.mubr.bf16.mxu0 0
      %6582 = vmatmul.mubr.bf16.gmra.mxu0 %v6489
      %v6583 = vpop.f32.mrf.mxu0
      %v6584 = vadd.f32 0.0, %v6583
      %v6585 = vpop.f32.mrf.mxu0
      %v6586 = vpop.f32.mrf.mxu0
      %v6587 = vadd.f32 0.0, %v6586
      %v6588 = vpop.f32.mrf.mxu0
      %6589 = vmatprep.mubr.bf16.mxu0 0
      %6590 = vmatmul.mubr.bf16.gmra.mxu0 %v6492
      %v6591 = vpop.f32.mrf.mxu0
      %v6592 = vadd.f32 0.0, %v6591
      %v6593 = vpop.f32.mrf.mxu0
      %v6594 = vpop.f32.mrf.mxu0
      %v6595 = vadd.f32 0.0, %v6594
      %v6596 = vpop.f32.mrf.mxu0
      %6597 = vmatprep.mubr.bf16.mxu0 0
      %6598 = vmatmul.mubr.bf16.gmra.mxu0 %v6495
      %v6599 = vpop.f32.mrf.mxu0
      %v6600 = vadd.f32 0.0, %v6599
      %v6601 = vpop.f32.mrf.mxu0
      %v6602 = vpop.f32.mrf.mxu0
      %v6603 = vadd.f32 0.0, %v6602
      %v6604 = vpop.f32.mrf.mxu0
      %6605 = vmatprep.mubr.bf16.mxu0 0
      %6606 = vmatmul.mubr.bf16.gmra.mxu0 %v6498
      %v6607 = vpop.f32.mrf.mxu0
      %v6608 = vadd.f32 0.0, %v6607
      %v6609 = vpop.f32.mrf.mxu0
      %v6610 = vpop.f32.mrf.mxu0
      %v6611 = vadd.f32 0.0, %v6610
      %v6612 = vpop.f32.mrf.mxu0
      %6613 = vmatprep.mubr.bf16.mxu0 0
      %6614 = vmatmul.mubr.bf16.gmra.mxu0 %v6501
      %v6615 = vpop.f32.mrf.mxu0
      %v6616 = vadd.f32 0.0, %v6615
      %v6617 = vpop.f32.mrf.mxu0
      %v6618 = vpop.f32.mrf.mxu0
      %v6619 = vadd.f32 0.0, %v6618
      %v6620 = vpop.f32.mrf.mxu0
      %6621 = vmatprep.mubr.bf16.mxu0 0
      %6622 = vmatmul.mubr.bf16.gmra.mxu0 %v6504
      %v6623 = vpop.f32.mrf.mxu0
      %v6624 = vadd.f32 0.0, %v6623
      %v6625 = vpop.f32.mrf.mxu0
      %v6626 = vpop.f32.mrf.mxu0
      %v6627 = vadd.f32 0.0, %v6626
      %v6628 = vpop.f32.mrf.mxu0
      %6629 = vmatprep.mubr.bf16.mxu0 0
      %6630 = vmatmul.mubr.bf16.gmra.mxu0 %v6507
      %v6631 = vpop.f32.mrf.mxu0
      %v6632 = vadd.f32 0.0, %v6631
      %v6633 = vpop.f32.mrf.mxu0
      %v6634 = vpop.f32.mrf.mxu0
      %v6635 = vadd.f32 0.0, %v6634
      %v6636 = vpop.f32.mrf.mxu0
      %6637 = vmatprep.mubr.bf16.mxu0 0
      %6638 = vmatmul.mubr.bf16.gmra.mxu0 %v6510
      %v6639 = vpop.f32.mrf.mxu0
      %v6640 = vadd.f32 0.0, %v6639
      %v6641 = vpop.f32.mrf.mxu0
      %v6642 = vpop.f32.mrf.mxu0
      %v6643 = vadd.f32 0.0, %v6642
      %v6644 = vpop.f32.mrf.mxu0
      %6645 = vmatprep.mubr.bf16.mxu0 0
      %6646 = vmatmul.mubr.bf16.gmra.mxu0 %v6513
      %v6647 = vpop.f32.mrf.mxu0
      %v6648 = vadd.f32 0.0, %v6647
      %v6649 = vpop.f32.mrf.mxu0
      %v6650 = vpop.f32.mrf.mxu0
      %v6651 = vadd.f32 0.0, %v6650
      %v6652 = vpop.f32.mrf.mxu0
      %6653 = vmatprep.mubr.bf16.mxu0 0
      %6654 = vmatmul.mubr.bf16.gmra.mxu0 %v6516
      %v6655 = vpop.f32.mrf.mxu0
      %v6656 = vadd.f32 0.0, %v6655
      %v6657 = vpop.f32.mrf.mxu0
      %v6658 = vpop.f32.mrf.mxu0
      %v6659 = vadd.f32 0.0, %v6658
      %v6660 = vpop.f32.mrf.mxu0
      %6661 = vmatprep.mubr.bf16.mxu0 0
      %6662 = vmatmul.mubr.bf16.gmra.mxu0 %v6519
      %v6663 = vpop.f32.mrf.mxu0
      %v6664 = vadd.f32 0.0, %v6663
      %v6665 = vpop.f32.mrf.mxu0
      %v6666 = vpop.f32.mrf.mxu0
      %v6667 = vadd.f32 0.0, %v6666
      %v6668 = vpop.f32.mrf.mxu0
      %6669 = vmatprep.mubr.bf16.mxu0 0
      %6670 = vmatmul.mubr.bf16.gmra.mxu0 %v6522
      %v6671 = vpop.f32.mrf.mxu0
      %v6672 = vadd.f32 0.0, %v6671
      %v6673 = vpop.f32.mrf.mxu0
      %v6674 = vpop.f32.mrf.mxu0
      %v6675 = vadd.f32 0.0, %v6674
      %v6676 = vpop.f32.mrf.mxu0
      %6677 = vmatprep.mubr.bf16.mxu0 0
      %6678 = vmatmul.mubr.bf16.gmra.mxu0 %v6525
      %v6679 = vpop.f32.mrf.mxu0
      %v6680 = vadd.f32 0.0, %v6679
      %v6681 = vpop.f32.mrf.mxu0
      %v6682 = vpop.f32.mrf.mxu0
      %v6683 = vadd.f32 0.0, %v6682
      %v6684 = vpop.f32.mrf.mxu0
      %6685 = vmatprep.mubr.bf16.mxu0 0
      %6686 = vmatmul.mubr.bf16.gmra.mxu0 %v6528
      %v6687 = vpop.f32.mrf.mxu0
      %v6688 = vadd.f32 0.0, %v6687
      %v6689 = vpop.f32.mrf.mxu0
      %v6690 = vpop.f32.mrf.mxu0
      %v6691 = vadd.f32 0.0, %v6690
      %v6692 = vpop.f32.mrf.mxu0
      %6693 = vdwg.mxu0
      %v6726 = vunpack.c.l.b16 %v5999
      %v6727 = vunpack.c.l.b16 %v6000
      %v6728 = vunpack.c.l.b16 %v6001
      %v6729 = vunpack.c.l.b16 %v6002
      %v6730 = vunpack.c.l.b16 %v6003
      %v6731 = vunpack.c.l.b16 %v6004
      %v6732 = vunpack.c.l.b16 %v6005
      %v6733 = vunpack.c.l.b16 %v6006
      %v6734 = vunpack.c.l.b16 %v6007
      %v6735 = vunpack.c.l.b16 %v6008
      %v6736 = vunpack.c.l.b16 %v6009
      %v6737 = vunpack.c.l.b16 %v6010
      %v6738 = vunpack.c.l.b16 %v6011
      %v6739 = vunpack.c.l.b16 %v6012
      %v6740 = vunpack.c.l.b16 %v6013
      %v6741 = vunpack.c.l.b16 %v6014
      %v6742 = vunpack.c.l.b16 %v6015
      %v6743 = vunpack.c.l.b16 %v6016
      %v6744 = vunpack.c.l.b16 %v6017
      %v6745 = vunpack.c.l.b16 %v6018
      %v6746 = vunpack.c.l.b16 %v6019
      %v6747 = vunpack.c.l.b16 %v6020
      %v6748 = vunpack.c.l.b16 %v6021
      %v6749 = vunpack.c.l.b16 %v6022
      %v6750 = vunpack.c.l.b16 %v6023
      %v6751 = vunpack.c.l.b16 %v6024
      %v6752 = vunpack.c.l.b16 %v6025
      %v6753 = vunpack.c.l.b16 %v6026
      %v6754 = vunpack.c.l.b16 %v6027
      %v6755 = vunpack.c.l.b16 %v6028
      %v6756 = vunpack.c.l.b16 %v6029
      %v6757 = vunpack.c.l.b16 %v6030
      %v6758 = vpack.c.b16 %v6727, %v6726
      %v6759 = vpack.c.b16 %v6729, %v6728
      %v6760 = vpack.c.b16 %v6731, %v6730
      %v6761 = vpack.c.b16 %v6733, %v6732
      %v6762 = vpack.c.b16 %v6735, %v6734
      %v6763 = vpack.c.b16 %v6737, %v6736
      %v6764 = vpack.c.b16 %v6739, %v6738
      %v6765 = vpack.c.b16 %v6741, %v6740
      %v6766 = vpack.c.b16 %v6743, %v6742
      %v6767 = vpack.c.b16 %v6745, %v6744
      %v6768 = vpack.c.b16 %v6747, %v6746
      %v6769 = vpack.c.b16 %v6749, %v6748
      %v6770 = vpack.c.b16 %v6751, %v6750
      %v6771 = vpack.c.b16 %v6753, %v6752
      %v6772 = vpack.c.b16 %v6755, %v6754
      %v6773 = vpack.c.b16 %v6757, %v6756
      %v6775 = vsel %vm232, %v6758, 0
      %v6778 = vsel %vm232, %v6759, 0
      %v6781 = vsel %vm232, %v6760, 0
      %v6784 = vsel %vm232, %v6761, 0
      %v6787 = vsel %vm232, %v6762, 0
      %v6790 = vsel %vm232, %v6763, 0
      %v6793 = vsel %vm232, %v6764, 0
      %v6796 = vsel %vm232, %v6765, 0
      %v6799 = vsel %vm232, %v6766, 0
      %v6802 = vsel %vm232, %v6767, 0
      %v6805 = vsel %vm232, %v6768, 0
      %v6808 = vsel %vm232, %v6769, 0
      %v6811 = vsel %vm232, %v6770, 0
      %v6814 = vsel %vm232, %v6771, 0
      %v6817 = vsel %vm232, %v6772, 0
      %v6820 = vsel %vm232, %v6773, 0
      %v6823 = vsel %vm1231, %v6031, 0
      %6825 = vmatprep.subr.bf16.mxu0 0
      %6826 = vmatpush1.bf16.msra.mxu0 0
      %6827 = vmatprep.subr.bf16.mxu0 0
      %6828 = vmatpush1.bf16.msra.mxu0 0
      %6829 = vmatprep.subr.bf16.mxu0 0
      %6830 = vmatpush1.bf16.msra.mxu0 0
      %6831 = vmatprep.subr.bf16.mxu0 0
      %6832 = vmatpush1.bf16.msra.mxu0 0
      %6833 = vmatprep.subr.bf16.mxu0 0
      %6834 = vmatpush1.bf16.msra.mxu0 0
      %6835 = vmatprep.subr.bf16.mxu0 0
      %6836 = vmatpush1.bf16.msra.mxu0 0
      %6837 = vmatprep.subr.bf16.mxu0 0
      %6838 = vmatpush1.bf16.msra.mxu0 0
      %6839 = vmatprep.subr.bf16.mxu0 0
      %6840 = vmatpush1.bf16.msra.mxu0 %v6823
      %6841 = vmatprep.subr.bf16.mxu0 0
      %6842 = vmatpush2.bf16.msra.mxu0 0
      %6843 = vmatprep.subr.bf16.mxu0 0
      %6844 = vmatpush2.bf16.msra.mxu0 0
      %6845 = vmatprep.subr.bf16.mxu0 0
      %6846 = vmatpush2.bf16.msra.mxu0 0
      %6847 = vmatprep.subr.bf16.mxu0 0
      %6848 = vmatpush2.bf16.msra.mxu0 0
      %6849 = vmatprep.subr.bf16.mxu0 0
      %6850 = vmatpush2.bf16.msra.mxu0 0
      %6851 = vmatprep.subr.bf16.mxu0 0
      %6852 = vmatpush2.bf16.msra.mxu0 0
      %6853 = vmatprep.subr.bf16.mxu0 0
      %6854 = vmatpush2.bf16.msra.mxu0 0
      %6855 = vmatprep.subr.bf16.mxu0 0
      %6856 = vmatpush2.bf16.msra.mxu0 0
      %6857 = vmatprep.mubr.bf16.mxu0 0
      %6858 = vmatmul.mubr.bf16.gmra.mxu0 %v6775
      %v6859 = vpop.f32.mrf.mxu0
      %v6860 = vadd.f32 %v6568, %v6859
      %v6861 = vpop.f32.mrf.mxu0
      %v6862 = vpop.f32.mrf.mxu0
      %v6863 = vadd.f32 %v6571, %v6862
      %v6864 = vpop.f32.mrf.mxu0
      %6865 = vmatprep.mubr.bf16.mxu0 0
      %6866 = vmatmul.mubr.bf16.gmra.mxu0 %v6778
      %v6867 = vpop.f32.mrf.mxu0
      %v6868 = vadd.f32 %v6576, %v6867
      %v6869 = vpop.f32.mrf.mxu0
      %v6870 = vpop.f32.mrf.mxu0
      %v6871 = vadd.f32 %v6579, %v6870
      %v6872 = vpop.f32.mrf.mxu0
      %6873 = vmatprep.mubr.bf16.mxu0 0
      %6874 = vmatmul.mubr.bf16.gmra.mxu0 %v6781
      %v6875 = vpop.f32.mrf.mxu0
      %v6876 = vadd.f32 %v6584, %v6875
      %v6877 = vpop.f32.mrf.mxu0
      %v6878 = vpop.f32.mrf.mxu0
      %v6879 = vadd.f32 %v6587, %v6878
      %v6880 = vpop.f32.mrf.mxu0
      %6881 = vmatprep.mubr.bf16.mxu0 0
      %6882 = vmatmul.mubr.bf16.gmra.mxu0 %v6784
      %v6883 = vpop.f32.mrf.mxu0
      %v6884 = vadd.f32 %v6592, %v6883
      %v6885 = vpop.f32.mrf.mxu0
      %v6886 = vpop.f32.mrf.mxu0
      %v6887 = vadd.f32 %v6595, %v6886
      %v6888 = vpop.f32.mrf.mxu0
      %6889 = vmatprep.mubr.bf16.mxu0 0
      %6890 = vmatmul.mubr.bf16.gmra.mxu0 %v6787
      %v6891 = vpop.f32.mrf.mxu0
      %v6892 = vadd.f32 %v6600, %v6891
      %v6893 = vpop.f32.mrf.mxu0
      %v6894 = vpop.f32.mrf.mxu0
      %v6895 = vadd.f32 %v6603, %v6894
      %v6896 = vpop.f32.mrf.mxu0
      %6897 = vmatprep.mubr.bf16.mxu0 0
      %6898 = vmatmul.mubr.bf16.gmra.mxu0 %v6790
      %v6899 = vpop.f32.mrf.mxu0
      %v6900 = vadd.f32 %v6608, %v6899
      %v6901 = vpop.f32.mrf.mxu0
      %v6902 = vpop.f32.mrf.mxu0
      %v6903 = vadd.f32 %v6611, %v6902
      %v6904 = vpop.f32.mrf.mxu0
      %6905 = vmatprep.mubr.bf16.mxu0 0
      %6906 = vmatmul.mubr.bf16.gmra.mxu0 %v6793
      %v6907 = vpop.f32.mrf.mxu0
      %v6908 = vadd.f32 %v6616, %v6907
      %v6909 = vpop.f32.mrf.mxu0
      %v6910 = vpop.f32.mrf.mxu0
      %v6911 = vadd.f32 %v6619, %v6910
      %v6912 = vpop.f32.mrf.mxu0
      %6913 = vmatprep.mubr.bf16.mxu0 0
      %6914 = vmatmul.mubr.bf16.gmra.mxu0 %v6796
      %v6915 = vpop.f32.mrf.mxu0
      %v6916 = vadd.f32 %v6624, %v6915
      %v6917 = vpop.f32.mrf.mxu0
      %v6918 = vpop.f32.mrf.mxu0
      %v6919 = vadd.f32 %v6627, %v6918
      %v6920 = vpop.f32.mrf.mxu0
      %6921 = vmatprep.mubr.bf16.mxu0 0
      %6922 = vmatmul.mubr.bf16.gmra.mxu0 %v6799
      %v6923 = vpop.f32.mrf.mxu0
      %v6924 = vadd.f32 %v6632, %v6923
      %v6925 = vpop.f32.mrf.mxu0
      %v6926 = vpop.f32.mrf.mxu0
      %v6927 = vadd.f32 %v6635, %v6926
      %v6928 = vpop.f32.mrf.mxu0
      %6929 = vmatprep.mubr.bf16.mxu0 0
      %6930 = vmatmul.mubr.bf16.gmra.mxu0 %v6802
      %v6931 = vpop.f32.mrf.mxu0
      %v6932 = vadd.f32 %v6640, %v6931
      %v6933 = vpop.f32.mrf.mxu0
      %v6934 = vpop.f32.mrf.mxu0
      %v6935 = vadd.f32 %v6643, %v6934
      %v6936 = vpop.f32.mrf.mxu0
      %6937 = vmatprep.mubr.bf16.mxu0 0
      %6938 = vmatmul.mubr.bf16.gmra.mxu0 %v6805
      %v6939 = vpop.f32.mrf.mxu0
      %v6940 = vadd.f32 %v6648, %v6939
      %v6941 = vpop.f32.mrf.mxu0
      %v6942 = vpop.f32.mrf.mxu0
      %v6943 = vadd.f32 %v6651, %v6942
      %v6944 = vpop.f32.mrf.mxu0
      %6945 = vmatprep.mubr.bf16.mxu0 0
      %6946 = vmatmul.mubr.bf16.gmra.mxu0 %v6808
      %v6947 = vpop.f32.mrf.mxu0
      %v6948 = vadd.f32 %v6656, %v6947
      %v6949 = vpop.f32.mrf.mxu0
      %v6950 = vpop.f32.mrf.mxu0
      %v6951 = vadd.f32 %v6659, %v6950
      %v6952 = vpop.f32.mrf.mxu0
      %6953 = vmatprep.mubr.bf16.mxu0 0
      %6954 = vmatmul.mubr.bf16.gmra.mxu0 %v6811
      %v6955 = vpop.f32.mrf.mxu0
      %v6956 = vadd.f32 %v6664, %v6955
      %v6957 = vpop.f32.mrf.mxu0
      %v6958 = vpop.f32.mrf.mxu0
      %v6959 = vadd.f32 %v6667, %v6958
      %v6960 = vpop.f32.mrf.mxu0
      %6961 = vmatprep.mubr.bf16.mxu0 0
      %6962 = vmatmul.mubr.bf16.gmra.mxu0 %v6814
      %v6963 = vpop.f32.mrf.mxu0
      %v6964 = vadd.f32 %v6672, %v6963
      %v6965 = vpop.f32.mrf.mxu0
      %v6966 = vpop.f32.mrf.mxu0
      %v6967 = vadd.f32 %v6675, %v6966
      %v6968 = vpop.f32.mrf.mxu0
      %6969 = vmatprep.mubr.bf16.mxu0 0
      %6970 = vmatmul.mubr.bf16.gmra.mxu0 %v6817
      %v6971 = vpop.f32.mrf.mxu0
      %v6972 = vadd.f32 %v6680, %v6971
      %v6973 = vpop.f32.mrf.mxu0
      %v6974 = vpop.f32.mrf.mxu0
      %v6975 = vadd.f32 %v6683, %v6974
      %v6976 = vpop.f32.mrf.mxu0
      %6977 = vmatprep.mubr.bf16.mxu0 0
      %6978 = vmatmul.mubr.bf16.gmra.mxu0 %v6820
      %v6979 = vpop.f32.mrf.mxu0
      %v6980 = vadd.f32 %v6688, %v6979
      %v6981 = vpop.f32.mrf.mxu0
      %v6982 = vpop.f32.mrf.mxu0
      %v6983 = vadd.f32 %v6691, %v6982
      %v6984 = vpop.f32.mrf.mxu0
      %6985 = vdwg.mxu0
      %v6986 = vld [vmem:[#allocation3] sm:$0xe]
      %v6987 = vld [vmem:[#allocation3 + $0xc] sm:$0xe]
      %v6988 = vld [vmem:[#allocation3 + $0x18] sm:$0xe]
      %v6989 = vld [vmem:[#allocation3 + $0x24] sm:$0xe]
      %v6990 = vld [vmem:[#allocation3 + $0x30] sm:$0xe]
      %v6991 = vld [vmem:[#allocation3 + $0x3c] sm:$0xe]
      %v6992 = vld [vmem:[#allocation3 + $0x48] sm:$0xe]
      %v6993 = vld [vmem:[#allocation3 + $0x54] sm:$0xe]
      %v6994 = vld [vmem:[#allocation3 + $0x60] sm:$0xe]
      %v6995 = vld [vmem:[#allocation3 + $0x6c] sm:$0xe]
      %v6996 = vld [vmem:[#allocation3 + $0x78] sm:$0xe]
      %v6997 = vld [vmem:[#allocation3 + $0x84] sm:$0xe]
      %v6998 = vld [vmem:[#allocation3 + $0x90] sm:$0xe]
      %v6999 = vld [vmem:[#allocation3 + $0x9c] sm:$0xe]
      %v7000 = vld [vmem:[#allocation3 + $0xa8] sm:$0xe]
      %v7001 = vld [vmem:[#allocation3 + $0xb4] sm:$0xe]
      %v7034 = vrot.slane %v6986, 5
      %v7035 = vrot.slane %v7034, 4
      %v7036 = vrot.slane %v6000, 5
      %v7037 = vsel %vm1738, %v7035, %v7036
      %v7038 = vrot.slane %v7036, 4
      %v7039 = vrot.slane %v6032, 5
      %v7040 = vsel %vm1738, %v7038, %v7039
      %v7041 = vrot.slane %v6987, 5
      %v7042 = vrot.slane %v7041, 4
      %v7043 = vrot.slane %v6002, 5
      %v7044 = vsel %vm1738, %v7042, %v7043
      %v7045 = vrot.slane %v7043, 4
      %v7046 = vrot.slane %v6033, 5
      %v7047 = vsel %vm1738, %v7045, %v7046
      %v7048 = vrot.slane %v6988, 5
      %v7049 = vrot.slane %v7048, 4
      %v7050 = vrot.slane %v6004, 5
      %v7051 = vsel %vm1738, %v7049, %v7050
      %v7052 = vrot.slane %v7050, 4
      %v7053 = vrot.slane %v6034, 5
      %v7054 = vsel %vm1738, %v7052, %v7053
      %v7055 = vrot.slane %v6989, 5
      %v7056 = vrot.slane %v7055, 4
      %v7057 = vrot.slane %v6006, 5
      %v7058 = vsel %vm1738, %v7056, %v7057
      %v7059 = vrot.slane %v7057, 4
      %v7060 = vrot.slane %v6035, 5
      %v7061 = vsel %vm1738, %v7059, %v7060
      %v7062 = vrot.slane %v6990, 5
      %v7063 = vrot.slane %v7062, 4
      %v7064 = vrot.slane %v6008, 5
      %v7065 = vsel %vm1738, %v7063, %v7064
      %v7066 = vrot.slane %v7064, 4
      %v7067 = vrot.slane %v6036, 5
      %v7068 = vsel %vm1738, %v7066, %v7067
      %v7069 = vrot.slane %v6991, 5
      %v7070 = vrot.slane %v7069, 4
      %v7071 = vrot.slane %v6010, 5
      %v7072 = vsel %vm1738, %v7070, %v7071
      %v7073 = vrot.slane %v7071, 4
      %v7074 = vrot.slane %v6037, 5
      %v7075 = vsel %vm1738, %v7073, %v7074
      %v7076 = vrot.slane %v6992, 5
      %v7077 = vrot.slane %v7076, 4
      %v7078 = vrot.slane %v6012, 5
      %v7079 = vsel %vm1738, %v7077, %v7078
      %v7080 = vrot.slane %v7078, 4
      %v7081 = vrot.slane %v6038, 5
      %v7082 = vsel %vm1738, %v7080, %v7081
      %v7083 = vrot.slane %v6993, 5
      %v7084 = vrot.slane %v7083, 4
      %v7085 = vrot.slane %v6014, 5
      %v7086 = vsel %vm1738, %v7084, %v7085
      %v7087 = vrot.slane %v7085, 4
      %v7088 = vrot.slane %v6039, 5
      %v7089 = vsel %vm1738, %v7087, %v7088
      %v7090 = vrot.slane %v6994, 5
      %v7091 = vrot.slane %v7090, 4
      %v7092 = vrot.slane %v6016, 5
      %v7093 = vsel %vm1738, %v7091, %v7092
      %v7094 = vrot.slane %v7092, 4
      %v7095 = vrot.slane %v6040, 5
      %v7096 = vsel %vm1738, %v7094, %v7095
      %v7097 = vrot.slane %v6995, 5
      %v7098 = vrot.slane %v7097, 4
      %v7099 = vrot.slane %v6018, 5
      %v7100 = vsel %vm1738, %v7098, %v7099
      %v7101 = vrot.slane %v7099, 4
      %v7102 = vrot.slane %v6041, 5
      %v7103 = vsel %vm1738, %v7101, %v7102
      %v7104 = vrot.slane %v6996, 5
      %v7105 = vrot.slane %v7104, 4
      %v7106 = vrot.slane %v6020, 5
      %v7107 = vsel %vm1738, %v7105, %v7106
      %v7108 = vrot.slane %v7106, 4
      %v7109 = vrot.slane %v6042, 5
      %v7110 = vsel %vm1738, %v7108, %v7109
      %v7111 = vrot.slane %v6997, 5
      %v7112 = vrot.slane %v7111, 4
      %v7113 = vrot.slane %v6022, 5
      %v7114 = vsel %vm1738, %v7112, %v7113
      %v7115 = vrot.slane %v7113, 4
      %v7116 = vrot.slane %v6043, 5
      %v7117 = vsel %vm1738, %v7115, %v7116
      %v7118 = vrot.slane %v6998, 5
      %v7119 = vrot.slane %v7118, 4
      %v7120 = vrot.slane %v6024, 5
      %v7121 = vsel %vm1738, %v7119, %v7120
      %v7122 = vrot.slane %v7120, 4
      %v7123 = vrot.slane %v6044, 5
      %v7124 = vsel %vm1738, %v7122, %v7123
      %v7125 = vrot.slane %v6999, 5
      %v7126 = vrot.slane %v7125, 4
      %v7127 = vrot.slane %v6026, 5
      %v7128 = vsel %vm1738, %v7126, %v7127
      %v7129 = vrot.slane %v7127, 4
      %v7130 = vrot.slane %v6045, 5
      %v7131 = vsel %vm1738, %v7129, %v7130
      %v7132 = vrot.slane %v7000, 5
      %v7133 = vrot.slane %v7132, 4
      %v7134 = vrot.slane %v6028, 5
      %v7135 = vsel %vm1738, %v7133, %v7134
      %v7136 = vrot.slane %v7134, 4
      %v7137 = vrot.slane %v6046, 5
      %v7138 = vsel %vm1738, %v7136, %v7137
      %v7139 = vrot.slane %v7001, 5
      %v7140 = vrot.slane %v7139, 4
      %v7141 = vrot.slane %v6030, 5
      %v7142 = vsel %vm1738, %v7140, %v7141
      %v7143 = vrot.slane %v7141, 4
      %v7144 = vrot.slane %v6047, 5
      %v7145 = vsel %vm1738, %v7143, %v7144
      %s7146 = scalar_lea.vmem %s2, 4
      %v7147 = vld [vmem:[%s7146] sm:$0x3]
      %v7148 = vunpack.c.l.b16 %v7037
      %v7149 = vunpack.c.l.b16 %v7040
      %v7150 = vunpack.c.l.b16 %v7044
      %v7151 = vunpack.c.l.b16 %v7047
      %v7152 = vunpack.c.l.b16 %v7051
      %v7153 = vunpack.c.l.b16 %v7054
      %v7154 = vunpack.c.l.b16 %v7058
      %v7155 = vunpack.c.l.b16 %v7061
      %v7156 = vunpack.c.l.b16 %v7065
      %v7157 = vunpack.c.l.b16 %v7068
      %v7158 = vunpack.c.l.b16 %v7072
      %v7159 = vunpack.c.l.b16 %v7075
      %v7160 = vunpack.c.l.b16 %v7079
      %v7161 = vunpack.c.l.b16 %v7082
      %v7162 = vunpack.c.l.b16 %v7086
      %v7163 = vunpack.c.l.b16 %v7089
      %v7164 = vunpack.c.l.b16 %v7093
      %v7165 = vunpack.c.l.b16 %v7096
      %v7166 = vunpack.c.l.b16 %v7100
      %v7167 = vunpack.c.l.b16 %v7103
      %v7168 = vunpack.c.l.b16 %v7107
      %v7169 = vunpack.c.l.b16 %v7110
      %v7170 = vunpack.c.l.b16 %v7114
      %v7171 = vunpack.c.l.b16 %v7117
      %v7172 = vunpack.c.l.b16 %v7121
      %v7173 = vunpack.c.l.b16 %v7124
      %v7174 = vunpack.c.l.b16 %v7128
      %v7175 = vunpack.c.l.b16 %v7131
      %v7176 = vunpack.c.l.b16 %v7135
      %v7177 = vunpack.c.l.b16 %v7138
      %v7178 = vunpack.c.l.b16 %v7142
      %v7179 = vunpack.c.l.b16 %v7145
      %v7180 = vpack.c.b16 %v7149, %v7148
      %v7181 = vpack.c.b16 %v7151, %v7150
      %v7182 = vpack.c.b16 %v7153, %v7152
      %v7183 = vpack.c.b16 %v7155, %v7154
      %v7184 = vpack.c.b16 %v7157, %v7156
      %v7185 = vpack.c.b16 %v7159, %v7158
      %v7186 = vpack.c.b16 %v7161, %v7160
      %v7187 = vpack.c.b16 %v7163, %v7162
      %v7188 = vpack.c.b16 %v7165, %v7164
      %v7189 = vpack.c.b16 %v7167, %v7166
      %v7190 = vpack.c.b16 %v7169, %v7168
      %v7191 = vpack.c.b16 %v7171, %v7170
      %v7192 = vpack.c.b16 %v7173, %v7172
      %v7193 = vpack.c.b16 %v7175, %v7174
      %v7194 = vpack.c.b16 %v7177, %v7176
      %v7195 = vpack.c.b16 %v7179, %v7178
      %v7197 = vsel %vm232, %v7180, 0
      %v7200 = vsel %vm232, %v7181, 0
      %v7203 = vsel %vm232, %v7182, 0
      %v7206 = vsel %vm232, %v7183, 0
      %v7209 = vsel %vm232, %v7184, 0
      %v7212 = vsel %vm232, %v7185, 0
      %v7215 = vsel %vm232, %v7186, 0
      %v7218 = vsel %vm232, %v7187, 0
      %v7221 = vsel %vm232, %v7188, 0
      %v7224 = vsel %vm232, %v7189, 0
      %v7227 = vsel %vm232, %v7190, 0
      %v7230 = vsel %vm232, %v7191, 0
      %v7233 = vsel %vm232, %v7192, 0
      %v7236 = vsel %vm232, %v7193, 0
      %v7239 = vsel %vm232, %v7194, 0
      %v7242 = vsel %vm232, %v7195, 0
      %v7245 = vsel %vm1231, %v7147, 0
      %7247 = vmatprep.subr.bf16.mxu0 0
      %7248 = vmatpush1.bf16.msra.mxu0 0
      %7249 = vmatprep.subr.bf16.mxu0 0
      %7250 = vmatpush1.bf16.msra.mxu0 0
      %7251 = vmatprep.subr.bf16.mxu0 0
      %7252 = vmatpush1.bf16.msra.mxu0 0
      %7253 = vmatprep.subr.bf16.mxu0 0
      %7254 = vmatpush1.bf16.msra.mxu0 0
      %7255 = vmatprep.subr.bf16.mxu0 0
      %7256 = vmatpush1.bf16.msra.mxu0 0
      %7257 = vmatprep.subr.bf16.mxu0 0
      %7258 = vmatpush1.bf16.msra.mxu0 0
      %7259 = vmatprep.subr.bf16.mxu0 0
      %7260 = vmatpush1.bf16.msra.mxu0 0
      %7261 = vmatprep.subr.bf16.mxu0 0
      %7262 = vmatpush1.bf16.msra.mxu0 %v7245
      %7263 = vmatprep.subr.bf16.mxu0 0
      %7264 = vmatpush2.bf16.msra.mxu0 0
      %7265 = vmatprep.subr.bf16.mxu0 0
      %7266 = vmatpush2.bf16.msra.mxu0 0
      %7267 = vmatprep.subr.bf16.mxu0 0
      %7268 = vmatpush2.bf16.msra.mxu0 0
      %7269 = vmatprep.subr.bf16.mxu0 0
      %7270 = vmatpush2.bf16.msra.mxu0 0
      %7271 = vmatprep.subr.bf16.mxu0 0
      %7272 = vmatpush2.bf16.msra.mxu0 0
      %7273 = vmatprep.subr.bf16.mxu0 0
      %7274 = vmatpush2.bf16.msra.mxu0 0
      %7275 = vmatprep.subr.bf16.mxu0 0
      %7276 = vmatpush2.bf16.msra.mxu0 0
      %7277 = vmatprep.subr.bf16.mxu0 0
      %7278 = vmatpush2.bf16.msra.mxu0 0
      %7279 = vmatprep.mubr.bf16.mxu0 0
      %7280 = vmatmul.mubr.bf16.gmra.mxu0 %v7197
      %v7281 = vpop.f32.mrf.mxu0
      %v7282 = vadd.f32 0.0, %v7281
      %v7283 = vpop.f32.mrf.mxu0
      %v7284 = vpop.f32.mrf.mxu0
      %v7285 = vadd.f32 0.0, %v7284
      %v7286 = vpop.f32.mrf.mxu0
      %7287 = vmatprep.mubr.bf16.mxu0 0
      %7288 = vmatmul.mubr.bf16.gmra.mxu0 %v7200
      %v7289 = vpop.f32.mrf.mxu0
      %v7290 = vadd.f32 0.0, %v7289
      %v7291 = vpop.f32.mrf.mxu0
      %v7292 = vpop.f32.mrf.mxu0
      %v7293 = vadd.f32 0.0, %v7292
      %v7294 = vpop.f32.mrf.mxu0
      %7295 = vmatprep.mubr.bf16.mxu0 0
      %7296 = vmatmul.mubr.bf16.gmra.mxu0 %v7203
      %v7297 = vpop.f32.mrf.mxu0
      %v7298 = vadd.f32 0.0, %v7297
      %v7299 = vpop.f32.mrf.mxu0
      %v7300 = vpop.f32.mrf.mxu0
      %v7301 = vadd.f32 0.0, %v7300
      %v7302 = vpop.f32.mrf.mxu0
      %7303 = vmatprep.mubr.bf16.mxu0 0
      %7304 = vmatmul.mubr.bf16.gmra.mxu0 %v7206
      %v7305 = vpop.f32.mrf.mxu0
      %v7306 = vadd.f32 0.0, %v7305
      %v7307 = vpop.f32.mrf.mxu0
      %v7308 = vpop.f32.mrf.mxu0
      %v7309 = vadd.f32 0.0, %v7308
      %v7310 = vpop.f32.mrf.mxu0
      %7311 = vmatprep.mubr.bf16.mxu0 0
      %7312 = vmatmul.mubr.bf16.gmra.mxu0 %v7209
      %v7313 = vpop.f32.mrf.mxu0
      %v7314 = vadd.f32 0.0, %v7313
      %v7315 = vpop.f32.mrf.mxu0
      %v7316 = vpop.f32.mrf.mxu0
      %v7317 = vadd.f32 0.0, %v7316
      %v7318 = vpop.f32.mrf.mxu0
      %7319 = vmatprep.mubr.bf16.mxu0 0
      %7320 = vmatmul.mubr.bf16.gmra.mxu0 %v7212
      %v7321 = vpop.f32.mrf.mxu0
      %v7322 = vadd.f32 0.0, %v7321
      %v7323 = vpop.f32.mrf.mxu0
      %v7324 = vpop.f32.mrf.mxu0
      %v7325 = vadd.f32 0.0, %v7324
      %v7326 = vpop.f32.mrf.mxu0
      %7327 = vmatprep.mubr.bf16.mxu0 0
      %7328 = vmatmul.mubr.bf16.gmra.mxu0 %v7215
      %v7329 = vpop.f32.mrf.mxu0
      %v7330 = vadd.f32 0.0, %v7329
      %v7331 = vpop.f32.mrf.mxu0
      %v7332 = vpop.f32.mrf.mxu0
      %v7333 = vadd.f32 0.0, %v7332
      %v7334 = vpop.f32.mrf.mxu0
      %7335 = vmatprep.mubr.bf16.mxu0 0
      %7336 = vmatmul.mubr.bf16.gmra.mxu0 %v7218
      %v7337 = vpop.f32.mrf.mxu0
      %v7338 = vadd.f32 0.0, %v7337
      %v7339 = vpop.f32.mrf.mxu0
      %v7340 = vpop.f32.mrf.mxu0
      %v7341 = vadd.f32 0.0, %v7340
      %v7342 = vpop.f32.mrf.mxu0
      %7343 = vmatprep.mubr.bf16.mxu0 0
      %7344 = vmatmul.mubr.bf16.gmra.mxu0 %v7221
      %v7345 = vpop.f32.mrf.mxu0
      %v7346 = vadd.f32 0.0, %v7345
      %v7347 = vpop.f32.mrf.mxu0
      %v7348 = vpop.f32.mrf.mxu0
      %v7349 = vadd.f32 0.0, %v7348
      %v7350 = vpop.f32.mrf.mxu0
      %7351 = vmatprep.mubr.bf16.mxu0 0
      %7352 = vmatmul.mubr.bf16.gmra.mxu0 %v7224
      %v7353 = vpop.f32.mrf.mxu0
      %v7354 = vadd.f32 0.0, %v7353
      %v7355 = vpop.f32.mrf.mxu0
      %v7356 = vpop.f32.mrf.mxu0
      %v7357 = vadd.f32 0.0, %v7356
      %v7358 = vpop.f32.mrf.mxu0
      %7359 = vmatprep.mubr.bf16.mxu0 0
      %7360 = vmatmul.mubr.bf16.gmra.mxu0 %v7227
      %v7361 = vpop.f32.mrf.mxu0
      %v7362 = vadd.f32 0.0, %v7361
      %v7363 = vpop.f32.mrf.mxu0
      %v7364 = vpop.f32.mrf.mxu0
      %v7365 = vadd.f32 0.0, %v7364
      %v7366 = vpop.f32.mrf.mxu0
      %7367 = vmatprep.mubr.bf16.mxu0 0
      %7368 = vmatmul.mubr.bf16.gmra.mxu0 %v7230
      %v7369 = vpop.f32.mrf.mxu0
      %v7370 = vadd.f32 0.0, %v7369
      %v7371 = vpop.f32.mrf.mxu0
      %v7372 = vpop.f32.mrf.mxu0
      %v7373 = vadd.f32 0.0, %v7372
      %v7374 = vpop.f32.mrf.mxu0
      %7375 = vmatprep.mubr.bf16.mxu0 0
      %7376 = vmatmul.mubr.bf16.gmra.mxu0 %v7233
      %v7377 = vpop.f32.mrf.mxu0
      %v7378 = vadd.f32 0.0, %v7377
      %v7379 = vpop.f32.mrf.mxu0
      %v7380 = vpop.f32.mrf.mxu0
      %v7381 = vadd.f32 0.0, %v7380
      %v7382 = vpop.f32.mrf.mxu0
      %7383 = vmatprep.mubr.bf16.mxu0 0
      %7384 = vmatmul.mubr.bf16.gmra.mxu0 %v7236
      %v7385 = vpop.f32.mrf.mxu0
      %v7386 = vadd.f32 0.0, %v7385
      %v7387 = vpop.f32.mrf.mxu0
      %v7388 = vpop.f32.mrf.mxu0
      %v7389 = vadd.f32 0.0, %v7388
      %v7390 = vpop.f32.mrf.mxu0
      %7391 = vmatprep.mubr.bf16.mxu0 0
      %7392 = vmatmul.mubr.bf16.gmra.mxu0 %v7239
      %v7393 = vpop.f32.mrf.mxu0
      %v7394 = vadd.f32 0.0, %v7393
      %v7395 = vpop.f32.mrf.mxu0
      %v7396 = vpop.f32.mrf.mxu0
      %v7397 = vadd.f32 0.0, %v7396
      %v7398 = vpop.f32.mrf.mxu0
      %7399 = vmatprep.mubr.bf16.mxu0 0
      %7400 = vmatmul.mubr.bf16.gmra.mxu0 %v7242
      %v7401 = vpop.f32.mrf.mxu0
      %v7402 = vadd.f32 0.0, %v7401
      %v7403 = vpop.f32.mrf.mxu0
      %v7404 = vpop.f32.mrf.mxu0
      %v7405 = vadd.f32 0.0, %v7404
      %v7406 = vpop.f32.mrf.mxu0
      %7407 = vdwg.mxu0
      %v7408 = vadd.f32 %v6860, %v7282
      %v7409 = vadd.f32 %v6863, %v7285
      %v7410 = vadd.f32 %v6868, %v7290
      %v7411 = vadd.f32 %v6871, %v7293
      %v7412 = vadd.f32 %v6876, %v7298
      %v7413 = vadd.f32 %v6879, %v7301
      %v7414 = vadd.f32 %v6884, %v7306
      %v7415 = vadd.f32 %v6887, %v7309
      %v7416 = vadd.f32 %v6892, %v7314
      %v7417 = vadd.f32 %v6895, %v7317
      %v7418 = vadd.f32 %v6900, %v7322
      %v7419 = vadd.f32 %v6903, %v7325
      %v7420 = vadd.f32 %v6908, %v7330
      %v7421 = vadd.f32 %v6911, %v7333
      %v7422 = vadd.f32 %v6916, %v7338
      %v7423 = vadd.f32 %v6919, %v7341
      %v7424 = vadd.f32 %v6924, %v7346
      %v7425 = vadd.f32 %v6927, %v7349
      %v7426 = vadd.f32 %v6932, %v7354
      %v7427 = vadd.f32 %v6935, %v7357
      %v7428 = vadd.f32 %v6940, %v7362
      %v7429 = vadd.f32 %v6943, %v7365
      %v7430 = vadd.f32 %v6948, %v7370
      %v7431 = vadd.f32 %v6951, %v7373
      %v7432 = vadd.f32 %v6956, %v7378
      %v7433 = vadd.f32 %v6959, %v7381
      %v7434 = vadd.f32 %v6964, %v7386
      %v7435 = vadd.f32 %v6967, %v7389
      %v7436 = vadd.f32 %v6972, %v7394
      %v7437 = vadd.f32 %v6975, %v7397
      %v7438 = vadd.f32 %v6980, %v7402
      %v7439 = vadd.f32 %v6983, %v7405
      %v7440 = vld [vmem:[%s2145] sm:$0xf]
      %v7441 = vld [vmem:[%s2145 + $0x4] sm:$0xf]
      %v7442 = vld [vmem:[%s2145 + $0xc] sm:$0xf]
      %v7443 = vld [vmem:[%s2145 + $0x10] sm:$0xf]
      %v7444 = vld [vmem:[%s2145 + $0x18] sm:$0xf]
      %v7445 = vld [vmem:[%s2145 + $0x1c] sm:$0xf]
      %v7446 = vld [vmem:[%s2145 + $0x24] sm:$0xf]
      %v7447 = vld [vmem:[%s2145 + $0x28] sm:$0xf]
      %v7448 = vld [vmem:[%s2145 + $0x30] sm:$0xf]
      %v7449 = vld [vmem:[%s2145 + $0x34] sm:$0xf]
      %v7450 = vld [vmem:[%s2145 + $0x3c] sm:$0xf]
      %v7451 = vld [vmem:[%s2145 + $0x40] sm:$0xf]
      %v7452 = vld [vmem:[%s2145 + $0x48] sm:$0xf]
      %v7453 = vld [vmem:[%s2145 + $0x4c] sm:$0xf]
      %v7454 = vld [vmem:[%s2145 + $0x54] sm:$0xf]
      %v7455 = vld [vmem:[%s2145 + $0x58] sm:$0xf]
      %v7456 = vld [vmem:[%s2145 + $0x60] sm:$0xf]
      %v7457 = vld [vmem:[%s2145 + $0x64] sm:$0xf]
      %v7458 = vld [vmem:[%s2145 + $0x6c] sm:$0xf]
      %v7459 = vld [vmem:[%s2145 + $0x70] sm:$0xf]
      %v7460 = vld [vmem:[%s2145 + $0x78] sm:$0xf]
      %v7461 = vld [vmem:[%s2145 + $0x7c] sm:$0xf]
      %v7462 = vld [vmem:[%s2145 + $0x84] sm:$0xf]
      %v7463 = vld [vmem:[%s2145 + $0x88] sm:$0xf]
      %v7464 = vld [vmem:[%s2145 + $0x90] sm:$0xf]
      %v7465 = vld [vmem:[%s2145 + $0x94] sm:$0xf]
      %v7466 = vld [vmem:[%s2145 + $0x9c] sm:$0xf]
      %v7467 = vld [vmem:[%s2145 + $0xa0] sm:$0xf]
      %v7468 = vld [vmem:[%s2145 + $0xa8] sm:$0xf]
      %v7469 = vld [vmem:[%s2145 + $0xac] sm:$0xf]
      %v7470 = vld [vmem:[%s2145 + $0xb4] sm:$0xf]
      %v7471 = vld [vmem:[%s2145 + $0xb8] sm:$0xf]
      %s7472 = scalar_lea.vmem %s2, 6
      %v7473 = vld [vmem:[%s7472] sm:$0x3]
      %v7506 = vunpack.c.l.b16 %v7440
      %v7507 = vunpack.c.l.b16 %v7441
      %v7508 = vunpack.c.l.b16 %v7442
      %v7509 = vunpack.c.l.b16 %v7443
      %v7510 = vunpack.c.l.b16 %v7444
      %v7511 = vunpack.c.l.b16 %v7445
      %v7512 = vunpack.c.l.b16 %v7446
      %v7513 = vunpack.c.l.b16 %v7447
      %v7514 = vunpack.c.l.b16 %v7448
      %v7515 = vunpack.c.l.b16 %v7449
      %v7516 = vunpack.c.l.b16 %v7450
      %v7517 = vunpack.c.l.b16 %v7451
      %v7518 = vunpack.c.l.b16 %v7452
      %v7519 = vunpack.c.l.b16 %v7453
      %v7520 = vunpack.c.l.b16 %v7454
      %v7521 = vunpack.c.l.b16 %v7455
      %v7522 = vunpack.c.l.b16 %v7456
      %v7523 = vunpack.c.l.b16 %v7457
      %v7524 = vunpack.c.l.b16 %v7458
      %v7525 = vunpack.c.l.b16 %v7459
      %v7526 = vunpack.c.l.b16 %v7460
      %v7527 = vunpack.c.l.b16 %v7461
      %v7528 = vunpack.c.l.b16 %v7462
      %v7529 = vunpack.c.l.b16 %v7463
      %v7530 = vunpack.c.l.b16 %v7464
      %v7531 = vunpack.c.l.b16 %v7465
      %v7532 = vunpack.c.l.b16 %v7466
      %v7533 = vunpack.c.l.b16 %v7467
      %v7534 = vunpack.c.l.b16 %v7468
      %v7535 = vunpack.c.l.b16 %v7469
      %v7536 = vunpack.c.l.b16 %v7470
      %v7537 = vunpack.c.l.b16 %v7471
      %v7538 = vpack.c.b16 %v7507, %v7506
      %v7539 = vpack.c.b16 %v7509, %v7508
      %v7540 = vpack.c.b16 %v7511, %v7510
      %v7541 = vpack.c.b16 %v7513, %v7512
      %v7542 = vpack.c.b16 %v7515, %v7514
      %v7543 = vpack.c.b16 %v7517, %v7516
      %v7544 = vpack.c.b16 %v7519, %v7518
      %v7545 = vpack.c.b16 %v7521, %v7520
      %v7546 = vpack.c.b16 %v7523, %v7522
      %v7547 = vpack.c.b16 %v7525, %v7524
      %v7548 = vpack.c.b16 %v7527, %v7526
      %v7549 = vpack.c.b16 %v7529, %v7528
      %v7550 = vpack.c.b16 %v7531, %v7530
      %v7551 = vpack.c.b16 %v7533, %v7532
      %v7552 = vpack.c.b16 %v7535, %v7534
      %v7553 = vpack.c.b16 %v7537, %v7536
      %v7555 = vsel %vm232, %v7538, 0
      %v7558 = vsel %vm232, %v7539, 0
      %v7561 = vsel %vm232, %v7540, 0
      %v7564 = vsel %vm232, %v7541, 0
      %v7567 = vsel %vm232, %v7542, 0
      %v7570 = vsel %vm232, %v7543, 0
      %v7573 = vsel %vm232, %v7544, 0
      %v7576 = vsel %vm232, %v7545, 0
      %v7579 = vsel %vm232, %v7546, 0
      %v7582 = vsel %vm232, %v7547, 0
      %v7585 = vsel %vm232, %v7548, 0
      %v7588 = vsel %vm232, %v7549, 0
      %v7591 = vsel %vm232, %v7550, 0
      %v7594 = vsel %vm232, %v7551, 0
      %v7597 = vsel %vm232, %v7552, 0
      %v7600 = vsel %vm232, %v7553, 0
      %v7603 = vsel %vm1231, %v7473, 0
      %7605 = vmatprep.subr.bf16.mxu0 0
      %7606 = vmatpush1.bf16.msra.mxu0 0
      %7607 = vmatprep.subr.bf16.mxu0 0
      %7608 = vmatpush1.bf16.msra.mxu0 0
      %7609 = vmatprep.subr.bf16.mxu0 0
      %7610 = vmatpush1.bf16.msra.mxu0 0
      %7611 = vmatprep.subr.bf16.mxu0 0
      %7612 = vmatpush1.bf16.msra.mxu0 0
      %7613 = vmatprep.subr.bf16.mxu0 0
      %7614 = vmatpush1.bf16.msra.mxu0 0
      %7615 = vmatprep.subr.bf16.mxu0 0
      %7616 = vmatpush1.bf16.msra.mxu0 0
      %7617 = vmatprep.subr.bf16.mxu0 0
      %7618 = vmatpush1.bf16.msra.mxu0 0
      %7619 = vmatprep.subr.bf16.mxu0 0
      %7620 = vmatpush1.bf16.msra.mxu0 %v7603
      %7621 = vmatprep.subr.bf16.mxu0 0
      %7622 = vmatpush2.bf16.msra.mxu0 0
      %7623 = vmatprep.subr.bf16.mxu0 0
      %7624 = vmatpush2.bf16.msra.mxu0 0
      %7625 = vmatprep.subr.bf16.mxu0 0
      %7626 = vmatpush2.bf16.msra.mxu0 0
      %7627 = vmatprep.subr.bf16.mxu0 0
      %7628 = vmatpush2.bf16.msra.mxu0 0
      %7629 = vmatprep.subr.bf16.mxu0 0
      %7630 = vmatpush2.bf16.msra.mxu0 0
      %7631 = vmatprep.subr.bf16.mxu0 0
      %7632 = vmatpush2.bf16.msra.mxu0 0
      %7633 = vmatprep.subr.bf16.mxu0 0
      %7634 = vmatpush2.bf16.msra.mxu0 0
      %7635 = vmatprep.subr.bf16.mxu0 0
      %7636 = vmatpush2.bf16.msra.mxu0 0
      %7637 = vmatprep.mubr.bf16.mxu0 0
      %7638 = vmatmul.mubr.bf16.gmra.mxu0 %v7555
      %v7639 = vpop.f32.mrf.mxu0
      %v7640 = vadd.f32 0.0, %v7639
      %v7641 = vpop.f32.mrf.mxu0
      %v7642 = vpop.f32.mrf.mxu0
      %v7643 = vadd.f32 0.0, %v7642
      %v7644 = vpop.f32.mrf.mxu0
      %7645 = vmatprep.mubr.bf16.mxu0 0
      %7646 = vmatmul.mubr.bf16.gmra.mxu0 %v7558
      %v7647 = vpop.f32.mrf.mxu0
      %v7648 = vadd.f32 0.0, %v7647
      %v7649 = vpop.f32.mrf.mxu0
      %v7650 = vpop.f32.mrf.mxu0
      %v7651 = vadd.f32 0.0, %v7650
      %v7652 = vpop.f32.mrf.mxu0
      %7653 = vmatprep.mubr.bf16.mxu0 0
      %7654 = vmatmul.mubr.bf16.gmra.mxu0 %v7561
      %v7655 = vpop.f32.mrf.mxu0
      %v7656 = vadd.f32 0.0, %v7655
      %v7657 = vpop.f32.mrf.mxu0
      %v7658 = vpop.f32.mrf.mxu0
      %v7659 = vadd.f32 0.0, %v7658
      %v7660 = vpop.f32.mrf.mxu0
      %7661 = vmatprep.mubr.bf16.mxu0 0
      %7662 = vmatmul.mubr.bf16.gmra.mxu0 %v7564
      %v7663 = vpop.f32.mrf.mxu0
      %v7664 = vadd.f32 0.0, %v7663
      %v7665 = vpop.f32.mrf.mxu0
      %v7666 = vpop.f32.mrf.mxu0
      %v7667 = vadd.f32 0.0, %v7666
      %v7668 = vpop.f32.mrf.mxu0
      %7669 = vmatprep.mubr.bf16.mxu0 0
      %7670 = vmatmul.mubr.bf16.gmra.mxu0 %v7567
      %v7671 = vpop.f32.mrf.mxu0
      %v7672 = vadd.f32 0.0, %v7671
      %v7673 = vpop.f32.mrf.mxu0
      %v7674 = vpop.f32.mrf.mxu0
      %v7675 = vadd.f32 0.0, %v7674
      %v7676 = vpop.f32.mrf.mxu0
      %7677 = vmatprep.mubr.bf16.mxu0 0
      %7678 = vmatmul.mubr.bf16.gmra.mxu0 %v7570
      %v7679 = vpop.f32.mrf.mxu0
      %v7680 = vadd.f32 0.0, %v7679
      %v7681 = vpop.f32.mrf.mxu0
      %v7682 = vpop.f32.mrf.mxu0
      %v7683 = vadd.f32 0.0, %v7682
      %v7684 = vpop.f32.mrf.mxu0
      %7685 = vmatprep.mubr.bf16.mxu0 0
      %7686 = vmatmul.mubr.bf16.gmra.mxu0 %v7573
      %v7687 = vpop.f32.mrf.mxu0
      %v7688 = vadd.f32 0.0, %v7687
      %v7689 = vpop.f32.mrf.mxu0
      %v7690 = vpop.f32.mrf.mxu0
      %v7691 = vadd.f32 0.0, %v7690
      %v7692 = vpop.f32.mrf.mxu0
      %7693 = vmatprep.mubr.bf16.mxu0 0
      %7694 = vmatmul.mubr.bf16.gmra.mxu0 %v7576
      %v7695 = vpop.f32.mrf.mxu0
      %v7696 = vadd.f32 0.0, %v7695
      %v7697 = vpop.f32.mrf.mxu0
      %v7698 = vpop.f32.mrf.mxu0
      %v7699 = vadd.f32 0.0, %v7698
      %v7700 = vpop.f32.mrf.mxu0
      %7701 = vmatprep.mubr.bf16.mxu0 0
      %7702 = vmatmul.mubr.bf16.gmra.mxu0 %v7579
      %v7703 = vpop.f32.mrf.mxu0
      %v7704 = vadd.f32 0.0, %v7703
      %v7705 = vpop.f32.mrf.mxu0
      %v7706 = vpop.f32.mrf.mxu0
      %v7707 = vadd.f32 0.0, %v7706
      %v7708 = vpop.f32.mrf.mxu0
      %7709 = vmatprep.mubr.bf16.mxu0 0
      %7710 = vmatmul.mubr.bf16.gmra.mxu0 %v7582
      %v7711 = vpop.f32.mrf.mxu0
      %v7712 = vadd.f32 0.0, %v7711
      %v7713 = vpop.f32.mrf.mxu0
      %v7714 = vpop.f32.mrf.mxu0
      %v7715 = vadd.f32 0.0, %v7714
      %v7716 = vpop.f32.mrf.mxu0
      %7717 = vmatprep.mubr.bf16.mxu0 0
      %7718 = vmatmul.mubr.bf16.gmra.mxu0 %v7585
      %v7719 = vpop.f32.mrf.mxu0
      %v7720 = vadd.f32 0.0, %v7719
      %v7721 = vpop.f32.mrf.mxu0
      %v7722 = vpop.f32.mrf.mxu0
      %v7723 = vadd.f32 0.0, %v7722
      %v7724 = vpop.f32.mrf.mxu0
      %7725 = vmatprep.mubr.bf16.mxu0 0
      %7726 = vmatmul.mubr.bf16.gmra.mxu0 %v7588
      %v7727 = vpop.f32.mrf.mxu0
      %v7728 = vadd.f32 0.0, %v7727
      %v7729 = vpop.f32.mrf.mxu0
      %v7730 = vpop.f32.mrf.mxu0
      %v7731 = vadd.f32 0.0, %v7730
      %v7732 = vpop.f32.mrf.mxu0
      %7733 = vmatprep.mubr.bf16.mxu0 0
      %7734 = vmatmul.mubr.bf16.gmra.mxu0 %v7591
      %v7735 = vpop.f32.mrf.mxu0
      %v7736 = vadd.f32 0.0, %v7735
      %v7737 = vpop.f32.mrf.mxu0
      %v7738 = vpop.f32.mrf.mxu0
      %v7739 = vadd.f32 0.0, %v7738
      %v7740 = vpop.f32.mrf.mxu0
      %7741 = vmatprep.mubr.bf16.mxu0 0
      %7742 = vmatmul.mubr.bf16.gmra.mxu0 %v7594
      %v7743 = vpop.f32.mrf.mxu0
      %v7744 = vadd.f32 0.0, %v7743
      %v7745 = vpop.f32.mrf.mxu0
      %v7746 = vpop.f32.mrf.mxu0
      %v7747 = vadd.f32 0.0, %v7746
      %v7748 = vpop.f32.mrf.mxu0
      %7749 = vmatprep.mubr.bf16.mxu0 0
      %7750 = vmatmul.mubr.bf16.gmra.mxu0 %v7597
      %v7751 = vpop.f32.mrf.mxu0
      %v7752 = vadd.f32 0.0, %v7751
      %v7753 = vpop.f32.mrf.mxu0
      %v7754 = vpop.f32.mrf.mxu0
      %v7755 = vadd.f32 0.0, %v7754
      %v7756 = vpop.f32.mrf.mxu0
      %7757 = vmatprep.mubr.bf16.mxu0 0
      %7758 = vmatmul.mubr.bf16.gmra.mxu0 %v7600
      %v7759 = vpop.f32.mrf.mxu0
      %v7760 = vadd.f32 0.0, %v7759
      %v7761 = vpop.f32.mrf.mxu0
      %v7762 = vpop.f32.mrf.mxu0
      %v7763 = vadd.f32 0.0, %v7762
      %v7764 = vpop.f32.mrf.mxu0
      %7765 = vdwg.mxu0
      %v7766 = vadd.f32 %v7408, %v7640
      %v7767 = vadd.f32 %v7409, %v7643
      %v7768 = vadd.f32 %v7410, %v7648
      %v7769 = vadd.f32 %v7411, %v7651
      %v7770 = vadd.f32 %v7412, %v7656
      %v7771 = vadd.f32 %v7413, %v7659
      %v7772 = vadd.f32 %v7414, %v7664
      %v7773 = vadd.f32 %v7415, %v7667
      %v7774 = vadd.f32 %v7416, %v7672
      %v7775 = vadd.f32 %v7417, %v7675
      %v7776 = vadd.f32 %v7418, %v7680
      %v7777 = vadd.f32 %v7419, %v7683
      %v7778 = vadd.f32 %v7420, %v7688
      %v7779 = vadd.f32 %v7421, %v7691
      %v7780 = vadd.f32 %v7422, %v7696
      %v7781 = vadd.f32 %v7423, %v7699
      %v7782 = vadd.f32 %v7424, %v7704
      %v7783 = vadd.f32 %v7425, %v7707
      %v7784 = vadd.f32 %v7426, %v7712
      %v7785 = vadd.f32 %v7427, %v7715
      %v7786 = vadd.f32 %v7428, %v7720
      %v7787 = vadd.f32 %v7429, %v7723
      %v7788 = vadd.f32 %v7430, %v7728
      %v7789 = vadd.f32 %v7431, %v7731
      %v7790 = vadd.f32 %v7432, %v7736
      %v7791 = vadd.f32 %v7433, %v7739
      %v7792 = vadd.f32 %v7434, %v7744
      %v7793 = vadd.f32 %v7435, %v7747
      %v7794 = vadd.f32 %v7436, %v7752
      %v7795 = vadd.f32 %v7437, %v7755
      %v7796 = vadd.f32 %v7438, %v7760
      %v7797 = vadd.f32 %v7439, %v7763
      %v7798 = vld [vmem:[%s2145] sm:$0xf]
      %v7799 = vld [vmem:[%s2145 + $0x4] sm:$0xf]
      %v7800 = vld [vmem:[%s2145 + $0x8] sm:$0x1]
      %v7801 = vld [vmem:[%s2145 + $0xc] sm:$0xf]
      %v7802 = vld [vmem:[%s2145 + $0x10] sm:$0xf]
      %v7803 = vld [vmem:[%s2145 + $0x14] sm:$0x1]
      %v7804 = vld [vmem:[%s2145 + $0x18] sm:$0xf]
      %v7805 = vld [vmem:[%s2145 + $0x1c] sm:$0xf]
      %v7806 = vld [vmem:[%s2145 + $0x20] sm:$0x1]
      %v7807 = vld [vmem:[%s2145 + $0x24] sm:$0xf]
      %v7808 = vld [vmem:[%s2145 + $0x28] sm:$0xf]
      %v7809 = vld [vmem:[%s2145 + $0x2c] sm:$0x1]
      %v7810 = vld [vmem:[%s2145 + $0x30] sm:$0xf]
      %v7811 = vld [vmem:[%s2145 + $0x34] sm:$0xf]
      %v7812 = vld [vmem:[%s2145 + $0x38] sm:$0x1]
      %v7813 = vld [vmem:[%s2145 + $0x3c] sm:$0xf]
      %v7814 = vld [vmem:[%s2145 + $0x40] sm:$0xf]
      %v7815 = vld [vmem:[%s2145 + $0x44] sm:$0x1]
      %v7816 = vld [vmem:[%s2145 + $0x48] sm:$0xf]
      %v7817 = vld [vmem:[%s2145 + $0x4c] sm:$0xf]
      %v7818 = vld [vmem:[%s2145 + $0x50] sm:$0x1]
      %v7819 = vld [vmem:[%s2145 + $0x54] sm:$0xf]
      %v7820 = vld [vmem:[%s2145 + $0x58] sm:$0xf]
      %v7821 = vld [vmem:[%s2145 + $0x5c] sm:$0x1]
      %v7822 = vld [vmem:[%s2145 + $0x60] sm:$0xf]
      %v7823 = vld [vmem:[%s2145 + $0x64] sm:$0xf]
      %v7824 = vld [vmem:[%s2145 + $0x68] sm:$0x1]
      %v7825 = vld [vmem:[%s2145 + $0x6c] sm:$0xf]
      %v7826 = vld [vmem:[%s2145 + $0x70] sm:$0xf]
      %v7827 = vld [vmem:[%s2145 + $0x74] sm:$0x1]
      %v7828 = vld [vmem:[%s2145 + $0x78] sm:$0xf]
      %v7829 = vld [vmem:[%s2145 + $0x7c] sm:$0xf]
      %v7830 = vld [vmem:[%s2145 + $0x80] sm:$0x1]
      %v7831 = vld [vmem:[%s2145 + $0x84] sm:$0xf]
      %v7832 = vld [vmem:[%s2145 + $0x88] sm:$0xf]
      %v7833 = vld [vmem:[%s2145 + $0x8c] sm:$0x1]
      %v7834 = vld [vmem:[%s2145 + $0x90] sm:$0xf]
      %v7835 = vld [vmem:[%s2145 + $0x94] sm:$0xf]
      %v7836 = vld [vmem:[%s2145 + $0x98] sm:$0x1]
      %v7837 = vld [vmem:[%s2145 + $0x9c] sm:$0xf]
      %v7838 = vld [vmem:[%s2145 + $0xa0] sm:$0xf]
      %v7839 = vld [vmem:[%s2145 + $0xa4] sm:$0x1]
      %v7840 = vld [vmem:[%s2145 + $0xa8] sm:$0xf]
      %v7841 = vld [vmem:[%s2145 + $0xac] sm:$0xf]
      %v7842 = vld [vmem:[%s2145 + $0xb0] sm:$0x1]
      %v7843 = vld [vmem:[%s2145 + $0xb4] sm:$0xf]
      %v7844 = vld [vmem:[%s2145 + $0xb8] sm:$0xf]
      %v7845 = vld [vmem:[%s2145 + $0xbc] sm:$0x1]
      %v7847 = vshrl.u32 %v7798, 16
      %v7849 = vrot.slane %v7847, 4
      %v7850 = vshll.u32 %v7798, 16
      %v7852 = vrot.slane %v7850, 5
      %v7853 = vor.u32 %v7849, %v7852
      %v7854 = vrot.slane %v7853, 4
      %v7856 = vshll.u32 %v7799, 16
      %v7858 = vrot.slane %v7856, 5
      %v7859 = vsel %vm748, %v7854, %v7858
      %v7860 = vshrl.u32 %v7799, 16
      %v7862 = vrot.slane %v7860, 4
      %v7863 = vor.u32 %v7862, %v7858
      %v7864 = vrot.slane %v7863, 4
      %v7866 = vshll.u32 %v7800, 16
      %v7868 = vrot.slane %v7866, 5
      %v7869 = vsel %vm748, %v7864, %v7868
      %v7871 = vshrl.u32 %v7801, 16
      %v7873 = vrot.slane %v7871, 4
      %v7874 = vshll.u32 %v7801, 16
      %v7876 = vrot.slane %v7874, 5
      %v7877 = vor.u32 %v7873, %v7876
      %v7878 = vrot.slane %v7877, 4
      %v7880 = vshll.u32 %v7802, 16
      %v7882 = vrot.slane %v7880, 5
      %v7883 = vsel %vm748, %v7878, %v7882
      %v7884 = vshrl.u32 %v7802, 16
      %v7886 = vrot.slane %v7884, 4
      %v7887 = vor.u32 %v7886, %v7882
      %v7888 = vrot.slane %v7887, 4
      %v7890 = vshll.u32 %v7803, 16
      %v7892 = vrot.slane %v7890, 5
      %v7893 = vsel %vm748, %v7888, %v7892
      %v7895 = vshrl.u32 %v7804, 16
      %v7897 = vrot.slane %v7895, 4
      %v7898 = vshll.u32 %v7804, 16
      %v7900 = vrot.slane %v7898, 5
      %v7901 = vor.u32 %v7897, %v7900
      %v7902 = vrot.slane %v7901, 4
      %v7904 = vshll.u32 %v7805, 16
      %v7906 = vrot.slane %v7904, 5
      %v7907 = vsel %vm748, %v7902, %v7906
      %v7908 = vshrl.u32 %v7805, 16
      %v7910 = vrot.slane %v7908, 4
      %v7911 = vor.u32 %v7910, %v7906
      %v7912 = vrot.slane %v7911, 4
      %v7914 = vshll.u32 %v7806, 16
      %v7916 = vrot.slane %v7914, 5
      %v7917 = vsel %vm748, %v7912, %v7916
      %v7919 = vshrl.u32 %v7807, 16
      %v7921 = vrot.slane %v7919, 4
      %v7922 = vshll.u32 %v7807, 16
      %v7924 = vrot.slane %v7922, 5
      %v7925 = vor.u32 %v7921, %v7924
      %v7926 = vrot.slane %v7925, 4
      %v7928 = vshll.u32 %v7808, 16
      %v7930 = vrot.slane %v7928, 5
      %v7931 = vsel %vm748, %v7926, %v7930
      %v7932 = vshrl.u32 %v7808, 16
      %v7934 = vrot.slane %v7932, 4
      %v7935 = vor.u32 %v7934, %v7930
      %v7936 = vrot.slane %v7935, 4
      %v7938 = vshll.u32 %v7809, 16
      %v7940 = vrot.slane %v7938, 5
      %v7941 = vsel %vm748, %v7936, %v7940
      %v7943 = vshrl.u32 %v7810, 16
      %v7945 = vrot.slane %v7943, 4
      %v7946 = vshll.u32 %v7810, 16
      %v7948 = vrot.slane %v7946, 5
      %v7949 = vor.u32 %v7945, %v7948
      %v7950 = vrot.slane %v7949, 4
      %v7952 = vshll.u32 %v7811, 16
      %v7954 = vrot.slane %v7952, 5
      %v7955 = vsel %vm748, %v7950, %v7954
      %v7956 = vshrl.u32 %v7811, 16
      %v7958 = vrot.slane %v7956, 4
      %v7959 = vor.u32 %v7958, %v7954
      %v7960 = vrot.slane %v7959, 4
      %v7962 = vshll.u32 %v7812, 16
      %v7964 = vrot.slane %v7962, 5
      %v7965 = vsel %vm748, %v7960, %v7964
      %v7967 = vshrl.u32 %v7813, 16
      %v7969 = vrot.slane %v7967, 4
      %v7970 = vshll.u32 %v7813, 16
      %v7972 = vrot.slane %v7970, 5
      %v7973 = vor.u32 %v7969, %v7972
      %v7974 = vrot.slane %v7973, 4
      %v7976 = vshll.u32 %v7814, 16
      %v7978 = vrot.slane %v7976, 5
      %v7979 = vsel %vm748, %v7974, %v7978
      %v7980 = vshrl.u32 %v7814, 16
      %v7982 = vrot.slane %v7980, 4
      %v7983 = vor.u32 %v7982, %v7978
      %v7984 = vrot.slane %v7983, 4
      %v7986 = vshll.u32 %v7815, 16
      %v7988 = vrot.slane %v7986, 5
      %v7989 = vsel %vm748, %v7984, %v7988
      %v7991 = vshrl.u32 %v7816, 16
      %v7993 = vrot.slane %v7991, 4
      %v7994 = vshll.u32 %v7816, 16
      %v7996 = vrot.slane %v7994, 5
      %v7997 = vor.u32 %v7993, %v7996
      %v7998 = vrot.slane %v7997, 4
      %v8000 = vshll.u32 %v7817, 16
      %v8002 = vrot.slane %v8000, 5
      %v8003 = vsel %vm748, %v7998, %v8002
      %v8004 = vshrl.u32 %v7817, 16
      %v8006 = vrot.slane %v8004, 4
      %v8007 = vor.u32 %v8006, %v8002
      %v8008 = vrot.slane %v8007, 4
      %v8010 = vshll.u32 %v7818, 16
      %v8012 = vrot.slane %v8010, 5
      %v8013 = vsel %vm748, %v8008, %v8012
      %v8015 = vshrl.u32 %v7819, 16
      %v8017 = vrot.slane %v8015, 4
      %v8018 = vshll.u32 %v7819, 16
      %v8020 = vrot.slane %v8018, 5
      %v8021 = vor.u32 %v8017, %v8020
      %v8022 = vrot.slane %v8021, 4
      %v8024 = vshll.u32 %v7820, 16
      %v8026 = vrot.slane %v8024, 5
      %v8027 = vsel %vm748, %v8022, %v8026
      %v8028 = vshrl.u32 %v7820, 16
      %v8030 = vrot.slane %v8028, 4
      %v8031 = vor.u32 %v8030, %v8026
      %v8032 = vrot.slane %v8031, 4
      %v8034 = vshll.u32 %v7821, 16
      %v8036 = vrot.slane %v8034, 5
      %v8037 = vsel %vm748, %v8032, %v8036
      %v8039 = vshrl.u32 %v7822, 16
      %v8041 = vrot.slane %v8039, 4
      %v8042 = vshll.u32 %v7822, 16
      %v8044 = vrot.slane %v8042, 5
      %v8045 = vor.u32 %v8041, %v8044
      %v8046 = vrot.slane %v8045, 4
      %v8048 = vshll.u32 %v7823, 16
      %v8050 = vrot.slane %v8048, 5
      %v8051 = vsel %vm748, %v8046, %v8050
      %v8052 = vshrl.u32 %v7823, 16
      %v8054 = vrot.slane %v8052, 4
      %v8055 = vor.u32 %v8054, %v8050
      %v8056 = vrot.slane %v8055, 4
      %v8058 = vshll.u32 %v7824, 16
      %v8060 = vrot.slane %v8058, 5
      %v8061 = vsel %vm748, %v8056, %v8060
      %v8063 = vshrl.u32 %v7825, 16
      %v8065 = vrot.slane %v8063, 4
      %v8066 = vshll.u32 %v7825, 16
      %v8068 = vrot.slane %v8066, 5
      %v8069 = vor.u32 %v8065, %v8068
      %v8070 = vrot.slane %v8069, 4
      %v8072 = vshll.u32 %v7826, 16
      %v8074 = vrot.slane %v8072, 5
      %v8075 = vsel %vm748, %v8070, %v8074
      %v8076 = vshrl.u32 %v7826, 16
      %v8078 = vrot.slane %v8076, 4
      %v8079 = vor.u32 %v8078, %v8074
      %v8080 = vrot.slane %v8079, 4
      %v8082 = vshll.u32 %v7827, 16
      %v8084 = vrot.slane %v8082, 5
      %v8085 = vsel %vm748, %v8080, %v8084
      %v8087 = vshrl.u32 %v7828, 16
      %v8089 = vrot.slane %v8087, 4
      %v8090 = vshll.u32 %v7828, 16
      %v8092 = vrot.slane %v8090, 5
      %v8093 = vor.u32 %v8089, %v8092
      %v8094 = vrot.slane %v8093, 4
      %v8096 = vshll.u32 %v7829, 16
      %v8098 = vrot.slane %v8096, 5
      %v8099 = vsel %vm748, %v8094, %v8098
      %v8100 = vshrl.u32 %v7829, 16
      %v8102 = vrot.slane %v8100, 4
      %v8103 = vor.u32 %v8102, %v8098
      %v8104 = vrot.slane %v8103, 4
      %v8106 = vshll.u32 %v7830, 16
      %v8108 = vrot.slane %v8106, 5
      %v8109 = vsel %vm748, %v8104, %v8108
      %v8111 = vshrl.u32 %v7831, 16
      %v8113 = vrot.slane %v8111, 4
      %v8114 = vshll.u32 %v7831, 16
      %v8116 = vrot.slane %v8114, 5
      %v8117 = vor.u32 %v8113, %v8116
      %v8118 = vrot.slane %v8117, 4
      %v8120 = vshll.u32 %v7832, 16
      %v8122 = vrot.slane %v8120, 5
      %v8123 = vsel %vm748, %v8118, %v8122
      %v8124 = vshrl.u32 %v7832, 16
      %v8126 = vrot.slane %v8124, 4
      %v8127 = vor.u32 %v8126, %v8122
      %v8128 = vrot.slane %v8127, 4
      %v8130 = vshll.u32 %v7833, 16
      %v8132 = vrot.slane %v8130, 5
      %v8133 = vsel %vm748, %v8128, %v8132
      %v8135 = vshrl.u32 %v7834, 16
      %v8137 = vrot.slane %v8135, 4
      %v8138 = vshll.u32 %v7834, 16
      %v8140 = vrot.slane %v8138, 5
      %v8141 = vor.u32 %v8137, %v8140
      %v8142 = vrot.slane %v8141, 4
      %v8144 = vshll.u32 %v7835, 16
      %v8146 = vrot.slane %v8144, 5
      %v8147 = vsel %vm748, %v8142, %v8146
      %v8148 = vshrl.u32 %v7835, 16
      %v8150 = vrot.slane %v8148, 4
      %v8151 = vor.u32 %v8150, %v8146
      %v8152 = vrot.slane %v8151, 4
      %v8154 = vshll.u32 %v7836, 16
      %v8156 = vrot.slane %v8154, 5
      %v8157 = vsel %vm748, %v8152, %v8156
      %v8159 = vshrl.u32 %v7837, 16
      %v8161 = vrot.slane %v8159, 4
      %v8162 = vshll.u32 %v7837, 16
      %v8164 = vrot.slane %v8162, 5
      %v8165 = vor.u32 %v8161, %v8164
      %v8166 = vrot.slane %v8165, 4
      %v8168 = vshll.u32 %v7838, 16
      %v8170 = vrot.slane %v8168, 5
      %v8171 = vsel %vm748, %v8166, %v8170
      %v8172 = vshrl.u32 %v7838, 16
      %v8174 = vrot.slane %v8172, 4
      %v8175 = vor.u32 %v8174, %v8170
      %v8176 = vrot.slane %v8175, 4
      %v8178 = vshll.u32 %v7839, 16
      %v8180 = vrot.slane %v8178, 5
      %v8181 = vsel %vm748, %v8176, %v8180
      %v8183 = vshrl.u32 %v7840, 16
      %v8185 = vrot.slane %v8183, 4
      %v8186 = vshll.u32 %v7840, 16
      %v8188 = vrot.slane %v8186, 5
      %v8189 = vor.u32 %v8185, %v8188
      %v8190 = vrot.slane %v8189, 4
      %v8192 = vshll.u32 %v7841, 16
      %v8194 = vrot.slane %v8192, 5
      %v8195 = vsel %vm748, %v8190, %v8194
      %v8196 = vshrl.u32 %v7841, 16
      %v8198 = vrot.slane %v8196, 4
      %v8199 = vor.u32 %v8198, %v8194
      %v8200 = vrot.slane %v8199, 4
      %v8202 = vshll.u32 %v7842, 16
      %v8204 = vrot.slane %v8202, 5
      %v8205 = vsel %vm748, %v8200, %v8204
      %v8207 = vshrl.u32 %v7843, 16
      %v8209 = vrot.slane %v8207, 4
      %v8210 = vshll.u32 %v7843, 16
      %v8212 = vrot.slane %v8210, 5
      %v8213 = vor.u32 %v8209, %v8212
      %v8214 = vrot.slane %v8213, 4
      %v8216 = vshll.u32 %v7844, 16
      %v8218 = vrot.slane %v8216, 5
      %v8219 = vsel %vm748, %v8214, %v8218
      %v8220 = vshrl.u32 %v7844, 16
      %v8222 = vrot.slane %v8220, 4
      %v8223 = vor.u32 %v8222, %v8218
      %v8224 = vrot.slane %v8223, 4
      %v8226 = vshll.u32 %v7845, 16
      %v8228 = vrot.slane %v8226, 5
      %v8229 = vsel %vm748, %v8224, %v8228
      %s8230 = scalar_lea.vmem %s2, 8
      %v8231 = vld [vmem:[%s8230] sm:$0x3]
      %v8232 = vunpack.c.l.b16 %v7859
      %v8233 = vunpack.c.l.b16 %v7869
      %v8234 = vunpack.c.l.b16 %v7883
      %v8235 = vunpack.c.l.b16 %v7893
      %v8236 = vunpack.c.l.b16 %v7907
      %v8237 = vunpack.c.l.b16 %v7917
      %v8238 = vunpack.c.l.b16 %v7931
      %v8239 = vunpack.c.l.b16 %v7941
      %v8240 = vunpack.c.l.b16 %v7955
      %v8241 = vunpack.c.l.b16 %v7965
      %v8242 = vunpack.c.l.b16 %v7979
      %v8243 = vunpack.c.l.b16 %v7989
      %v8244 = vunpack.c.l.b16 %v8003
      %v8245 = vunpack.c.l.b16 %v8013
      %v8246 = vunpack.c.l.b16 %v8027
      %v8247 = vunpack.c.l.b16 %v8037
      %v8248 = vunpack.c.l.b16 %v8051
      %v8249 = vunpack.c.l.b16 %v8061
      %v8250 = vunpack.c.l.b16 %v8075
      %v8251 = vunpack.c.l.b16 %v8085
      %v8252 = vunpack.c.l.b16 %v8099
      %v8253 = vunpack.c.l.b16 %v8109
      %v8254 = vunpack.c.l.b16 %v8123
      %v8255 = vunpack.c.l.b16 %v8133
      %v8256 = vunpack.c.l.b16 %v8147
      %v8257 = vunpack.c.l.b16 %v8157
      %v8258 = vunpack.c.l.b16 %v8171
      %v8259 = vunpack.c.l.b16 %v8181
      %v8260 = vunpack.c.l.b16 %v8195
      %v8261 = vunpack.c.l.b16 %v8205
      %v8262 = vunpack.c.l.b16 %v8219
      %v8263 = vunpack.c.l.b16 %v8229
      %v8264 = vpack.c.b16 %v8233, %v8232
      %v8265 = vpack.c.b16 %v8235, %v8234
      %v8266 = vpack.c.b16 %v8237, %v8236
      %v8267 = vpack.c.b16 %v8239, %v8238
      %v8268 = vpack.c.b16 %v8241, %v8240
      %v8269 = vpack.c.b16 %v8243, %v8242
      %v8270 = vpack.c.b16 %v8245, %v8244
      %v8271 = vpack.c.b16 %v8247, %v8246
      %v8272 = vpack.c.b16 %v8249, %v8248
      %v8273 = vpack.c.b16 %v8251, %v8250
      %v8274 = vpack.c.b16 %v8253, %v8252
      %v8275 = vpack.c.b16 %v8255, %v8254
      %v8276 = vpack.c.b16 %v8257, %v8256
      %v8277 = vpack.c.b16 %v8259, %v8258
      %v8278 = vpack.c.b16 %v8261, %v8260
      %v8279 = vpack.c.b16 %v8263, %v8262
      %v8281 = vsel %vm232, %v8264, 0
      %v8284 = vsel %vm232, %v8265, 0
      %v8287 = vsel %vm232, %v8266, 0
      %v8290 = vsel %vm232, %v8267, 0
      %v8293 = vsel %vm232, %v8268, 0
      %v8296 = vsel %vm232, %v8269, 0
      %v8299 = vsel %vm232, %v8270, 0
      %v8302 = vsel %vm232, %v8271, 0
      %v8305 = vsel %vm232, %v8272, 0
      %v8308 = vsel %vm232, %v8273, 0
      %v8311 = vsel %vm232, %v8274, 0
      %v8314 = vsel %vm232, %v8275, 0
      %v8317 = vsel %vm232, %v8276, 0
      %v8320 = vsel %vm232, %v8277, 0
      %v8323 = vsel %vm232, %v8278, 0
      %v8326 = vsel %vm232, %v8279, 0
      %v8329 = vsel %vm1231, %v8231, 0
      %8331 = vmatprep.subr.bf16.mxu0 0
      %8332 = vmatpush1.bf16.msra.mxu0 0
      %8333 = vmatprep.subr.bf16.mxu0 0
      %8334 = vmatpush1.bf16.msra.mxu0 0
      %8335 = vmatprep.subr.bf16.mxu0 0
      %8336 = vmatpush1.bf16.msra.mxu0 0
      %8337 = vmatprep.subr.bf16.mxu0 0
      %8338 = vmatpush1.bf16.msra.mxu0 0
      %8339 = vmatprep.subr.bf16.mxu0 0
      %8340 = vmatpush1.bf16.msra.mxu0 0
      %8341 = vmatprep.subr.bf16.mxu0 0
      %8342 = vmatpush1.bf16.msra.mxu0 0
      %8343 = vmatprep.subr.bf16.mxu0 0
      %8344 = vmatpush1.bf16.msra.mxu0 0
      %8345 = vmatprep.subr.bf16.mxu0 0
      %8346 = vmatpush1.bf16.msra.mxu0 %v8329
      %8347 = vmatprep.subr.bf16.mxu0 0
      %8348 = vmatpush2.bf16.msra.mxu0 0
      %8349 = vmatprep.subr.bf16.mxu0 0
      %8350 = vmatpush2.bf16.msra.mxu0 0
      %8351 = vmatprep.subr.bf16.mxu0 0
      %8352 = vmatpush2.bf16.msra.mxu0 0
      %8353 = vmatprep.subr.bf16.mxu0 0
      %8354 = vmatpush2.bf16.msra.mxu0 0
      %8355 = vmatprep.subr.bf16.mxu0 0
      %8356 = vmatpush2.bf16.msra.mxu0 0
      %8357 = vmatprep.subr.bf16.mxu0 0
      %8358 = vmatpush2.bf16.msra.mxu0 0
      %8359 = vmatprep.subr.bf16.mxu0 0
      %8360 = vmatpush2.bf16.msra.mxu0 0
      %8361 = vmatprep.subr.bf16.mxu0 0
      %8362 = vmatpush2.bf16.msra.mxu0 0
      %8363 = vmatprep.mubr.bf16.mxu0 0
      %8364 = vmatmul.mubr.bf16.gmra.mxu0 %v8281
      %v8365 = vpop.f32.mrf.mxu0
      %v8366 = vadd.f32 0.0, %v8365
      %v8367 = vpop.f32.mrf.mxu0
      %v8368 = vpop.f32.mrf.mxu0
      %v8369 = vadd.f32 0.0, %v8368
      %v8370 = vpop.f32.mrf.mxu0
      %8371 = vmatprep.mubr.bf16.mxu0 0
      %8372 = vmatmul.mubr.bf16.gmra.mxu0 %v8284
      %v8373 = vpop.f32.mrf.mxu0
      %v8374 = vadd.f32 0.0, %v8373
      %v8375 = vpop.f32.mrf.mxu0
      %v8376 = vpop.f32.mrf.mxu0
      %v8377 = vadd.f32 0.0, %v8376
      %v8378 = vpop.f32.mrf.mxu0
      %8379 = vmatprep.mubr.bf16.mxu0 0
      %8380 = vmatmul.mubr.bf16.gmra.mxu0 %v8287
      %v8381 = vpop.f32.mrf.mxu0
      %v8382 = vadd.f32 0.0, %v8381
      %v8383 = vpop.f32.mrf.mxu0
      %v8384 = vpop.f32.mrf.mxu0
      %v8385 = vadd.f32 0.0, %v8384
      %v8386 = vpop.f32.mrf.mxu0
      %8387 = vmatprep.mubr.bf16.mxu0 0
      %8388 = vmatmul.mubr.bf16.gmra.mxu0 %v8290
      %v8389 = vpop.f32.mrf.mxu0
      %v8390 = vadd.f32 0.0, %v8389
      %v8391 = vpop.f32.mrf.mxu0
      %v8392 = vpop.f32.mrf.mxu0
      %v8393 = vadd.f32 0.0, %v8392
      %v8394 = vpop.f32.mrf.mxu0
      %8395 = vmatprep.mubr.bf16.mxu0 0
      %8396 = vmatmul.mubr.bf16.gmra.mxu0 %v8293
      %v8397 = vpop.f32.mrf.mxu0
      %v8398 = vadd.f32 0.0, %v8397
      %v8399 = vpop.f32.mrf.mxu0
      %v8400 = vpop.f32.mrf.mxu0
      %v8401 = vadd.f32 0.0, %v8400
      %v8402 = vpop.f32.mrf.mxu0
      %8403 = vmatprep.mubr.bf16.mxu0 0
      %8404 = vmatmul.mubr.bf16.gmra.mxu0 %v8296
      %v8405 = vpop.f32.mrf.mxu0
      %v8406 = vadd.f32 0.0, %v8405
      %v8407 = vpop.f32.mrf.mxu0
      %v8408 = vpop.f32.mrf.mxu0
      %v8409 = vadd.f32 0.0, %v8408
      %v8410 = vpop.f32.mrf.mxu0
      %8411 = vmatprep.mubr.bf16.mxu0 0
      %8412 = vmatmul.mubr.bf16.gmra.mxu0 %v8299
      %v8413 = vpop.f32.mrf.mxu0
      %v8414 = vadd.f32 0.0, %v8413
      %v8415 = vpop.f32.mrf.mxu0
      %v8416 = vpop.f32.mrf.mxu0
      %v8417 = vadd.f32 0.0, %v8416
      %v8418 = vpop.f32.mrf.mxu0
      %8419 = vmatprep.mubr.bf16.mxu0 0
      %8420 = vmatmul.mubr.bf16.gmra.mxu0 %v8302
      %v8421 = vpop.f32.mrf.mxu0
      %v8422 = vadd.f32 0.0, %v8421
      %v8423 = vpop.f32.mrf.mxu0
      %v8424 = vpop.f32.mrf.mxu0
      %v8425 = vadd.f32 0.0, %v8424
      %v8426 = vpop.f32.mrf.mxu0
      %8427 = vmatprep.mubr.bf16.mxu0 0
      %8428 = vmatmul.mubr.bf16.gmra.mxu0 %v8305
      %v8429 = vpop.f32.mrf.mxu0
      %v8430 = vadd.f32 0.0, %v8429
      %v8431 = vpop.f32.mrf.mxu0
      %v8432 = vpop.f32.mrf.mxu0
      %v8433 = vadd.f32 0.0, %v8432
      %v8434 = vpop.f32.mrf.mxu0
      %8435 = vmatprep.mubr.bf16.mxu0 0
      %8436 = vmatmul.mubr.bf16.gmra.mxu0 %v8308
      %v8437 = vpop.f32.mrf.mxu0
      %v8438 = vadd.f32 0.0, %v8437
      %v8439 = vpop.f32.mrf.mxu0
      %v8440 = vpop.f32.mrf.mxu0
      %v8441 = vadd.f32 0.0, %v8440
      %v8442 = vpop.f32.mrf.mxu0
      %8443 = vmatprep.mubr.bf16.mxu0 0
      %8444 = vmatmul.mubr.bf16.gmra.mxu0 %v8311
      %v8445 = vpop.f32.mrf.mxu0
      %v8446 = vadd.f32 0.0, %v8445
      %v8447 = vpop.f32.mrf.mxu0
      %v8448 = vpop.f32.mrf.mxu0
      %v8449 = vadd.f32 0.0, %v8448
      %v8450 = vpop.f32.mrf.mxu0
      %8451 = vmatprep.mubr.bf16.mxu0 0
      %8452 = vmatmul.mubr.bf16.gmra.mxu0 %v8314
      %v8453 = vpop.f32.mrf.mxu0
      %v8454 = vadd.f32 0.0, %v8453
      %v8455 = vpop.f32.mrf.mxu0
      %v8456 = vpop.f32.mrf.mxu0
      %v8457 = vadd.f32 0.0, %v8456
      %v8458 = vpop.f32.mrf.mxu0
      %8459 = vmatprep.mubr.bf16.mxu0 0
      %8460 = vmatmul.mubr.bf16.gmra.mxu0 %v8317
      %v8461 = vpop.f32.mrf.mxu0
      %v8462 = vadd.f32 0.0, %v8461
      %v8463 = vpop.f32.mrf.mxu0
      %v8464 = vpop.f32.mrf.mxu0
      %v8465 = vadd.f32 0.0, %v8464
      %v8466 = vpop.f32.mrf.mxu0
      %8467 = vmatprep.mubr.bf16.mxu0 0
      %8468 = vmatmul.mubr.bf16.gmra.mxu0 %v8320
      %v8469 = vpop.f32.mrf.mxu0
      %v8470 = vadd.f32 0.0, %v8469
      %v8471 = vpop.f32.mrf.mxu0
      %v8472 = vpop.f32.mrf.mxu0
      %v8473 = vadd.f32 0.0, %v8472
      %v8474 = vpop.f32.mrf.mxu0
      %8475 = vmatprep.mubr.bf16.mxu0 0
      %8476 = vmatmul.mubr.bf16.gmra.mxu0 %v8323
      %v8477 = vpop.f32.mrf.mxu0
      %v8478 = vadd.f32 0.0, %v8477
      %v8479 = vpop.f32.mrf.mxu0
      %v8480 = vpop.f32.mrf.mxu0
      %v8481 = vadd.f32 0.0, %v8480
      %v8482 = vpop.f32.mrf.mxu0
      %8483 = vmatprep.mubr.bf16.mxu0 0
      %8484 = vmatmul.mubr.bf16.gmra.mxu0 %v8326
      %v8485 = vpop.f32.mrf.mxu0
      %v8486 = vadd.f32 0.0, %v8485
      %v8487 = vpop.f32.mrf.mxu0
      %v8488 = vpop.f32.mrf.mxu0
      %v8489 = vadd.f32 0.0, %v8488
      %v8490 = vpop.f32.mrf.mxu0
      %8491 = vdwg.mxu0
      %v8492 = vadd.f32 %v7766, %v8366
      %v8493 = vadd.f32 %v7767, %v8369
      %v8494 = vadd.f32 %v7768, %v8374
      %v8495 = vadd.f32 %v7769, %v8377
      %v8496 = vadd.f32 %v7770, %v8382
      %v8497 = vadd.f32 %v7771, %v8385
      %v8498 = vadd.f32 %v7772, %v8390
      %v8499 = vadd.f32 %v7773, %v8393
      %v8500 = vadd.f32 %v7774, %v8398
      %v8501 = vadd.f32 %v7775, %v8401
      %v8502 = vadd.f32 %v7776, %v8406
      %v8503 = vadd.f32 %v7777, %v8409
      %v8504 = vadd.f32 %v7778, %v8414
      %v8505 = vadd.f32 %v7779, %v8417
      %v8506 = vadd.f32 %v7780, %v8422
      %v8507 = vadd.f32 %v7781, %v8425
      %v8508 = vadd.f32 %v7782, %v8430
      %v8509 = vadd.f32 %v7783, %v8433
      %v8510 = vadd.f32 %v7784, %v8438
      %v8511 = vadd.f32 %v7785, %v8441
      %v8512 = vadd.f32 %v7786, %v8446
      %v8513 = vadd.f32 %v7787, %v8449
      %v8514 = vadd.f32 %v7788, %v8454
      %v8515 = vadd.f32 %v7789, %v8457
      %v8516 = vadd.f32 %v7790, %v8462
      %v8517 = vadd.f32 %v7791, %v8465
      %v8518 = vadd.f32 %v7792, %v8470
      %v8519 = vadd.f32 %v7793, %v8473
      %v8520 = vadd.f32 %v7794, %v8478
      %v8521 = vadd.f32 %v7795, %v8481
      %v8522 = vadd.f32 %v7796, %v8486
      %v8523 = vadd.f32 %v7797, %v8489
      %v8524 = vld [vmem:[%s2145] sm:$0xe]
      %v8525 = vld [vmem:[%s2145 + $0xc] sm:$0xe]
      %v8526 = vld [vmem:[%s2145 + $0x18] sm:$0xe]
      %v8527 = vld [vmem:[%s2145 + $0x24] sm:$0xe]
      %v8528 = vld [vmem:[%s2145 + $0x30] sm:$0xe]
      %v8529 = vld [vmem:[%s2145 + $0x3c] sm:$0xe]
      %v8530 = vld [vmem:[%s2145 + $0x48] sm:$0xe]
      %v8531 = vld [vmem:[%s2145 + $0x54] sm:$0xe]
      %v8532 = vld [vmem:[%s2145 + $0x60] sm:$0xe]
      %v8533 = vld [vmem:[%s2145 + $0x6c] sm:$0xe]
      %v8534 = vld [vmem:[%s2145 + $0x78] sm:$0xe]
      %v8535 = vld [vmem:[%s2145 + $0x84] sm:$0xe]
      %v8536 = vld [vmem:[%s2145 + $0x90] sm:$0xe]
      %v8537 = vld [vmem:[%s2145 + $0x9c] sm:$0xe]
      %v8538 = vld [vmem:[%s2145 + $0xa8] sm:$0xe]
      %v8539 = vld [vmem:[%s2145 + $0xb4] sm:$0xe]
      %v8588 = vrot.slane %v8524, 5
      %v8589 = vrot.slane %v8588, 4
      %v8590 = vrot.slane %v7799, 5
      %v8591 = vsel %vm1738, %v8589, %v8590
      %v8592 = vrot.slane %v8590, 4
      %v8593 = vrot.slane %v7800, 5
      %v8594 = vsel %vm1738, %v8592, %v8593
      %v8595 = vrot.slane %v8525, 5
      %v8596 = vrot.slane %v8595, 4
      %v8597 = vrot.slane %v7802, 5
      %v8598 = vsel %vm1738, %v8596, %v8597
      %v8599 = vrot.slane %v8597, 4
      %v8600 = vrot.slane %v7803, 5
      %v8601 = vsel %vm1738, %v8599, %v8600
      %v8602 = vrot.slane %v8526, 5
      %v8603 = vrot.slane %v8602, 4
      %v8604 = vrot.slane %v7805, 5
      %v8605 = vsel %vm1738, %v8603, %v8604
      %v8606 = vrot.slane %v8604, 4
      %v8607 = vrot.slane %v7806, 5
      %v8608 = vsel %vm1738, %v8606, %v8607
      %v8609 = vrot.slane %v8527, 5
      %v8610 = vrot.slane %v8609, 4
      %v8611 = vrot.slane %v7808, 5
      %v8612 = vsel %vm1738, %v8610, %v8611
      %v8613 = vrot.slane %v8611, 4
      %v8614 = vrot.slane %v7809, 5
      %v8615 = vsel %vm1738, %v8613, %v8614
      %v8616 = vrot.slane %v8528, 5
      %v8617 = vrot.slane %v8616, 4
      %v8618 = vrot.slane %v7811, 5
      %v8619 = vsel %vm1738, %v8617, %v8618
      %v8620 = vrot.slane %v8618, 4
      %v8621 = vrot.slane %v7812, 5
      %v8622 = vsel %vm1738, %v8620, %v8621
      %v8623 = vrot.slane %v8529, 5
      %v8624 = vrot.slane %v8623, 4
      %v8625 = vrot.slane %v7814, 5
      %v8626 = vsel %vm1738, %v8624, %v8625
      %v8627 = vrot.slane %v8625, 4
      %v8628 = vrot.slane %v7815, 5
      %v8629 = vsel %vm1738, %v8627, %v8628
      %v8630 = vrot.slane %v8530, 5
      %v8631 = vrot.slane %v8630, 4
      %v8632 = vrot.slane %v7817, 5
      %v8633 = vsel %vm1738, %v8631, %v8632
      %v8634 = vrot.slane %v8632, 4
      %v8635 = vrot.slane %v7818, 5
      %v8636 = vsel %vm1738, %v8634, %v8635
      %v8637 = vrot.slane %v8531, 5
      %v8638 = vrot.slane %v8637, 4
      %v8639 = vrot.slane %v7820, 5
      %v8640 = vsel %vm1738, %v8638, %v8639
      %v8641 = vrot.slane %v8639, 4
      %v8642 = vrot.slane %v7821, 5
      %v8643 = vsel %vm1738, %v8641, %v8642
      %v8644 = vrot.slane %v8532, 5
      %v8645 = vrot.slane %v8644, 4
      %v8646 = vrot.slane %v7823, 5
      %v8647 = vsel %vm1738, %v8645, %v8646
      %v8648 = vrot.slane %v8646, 4
      %v8649 = vrot.slane %v7824, 5
      %v8650 = vsel %vm1738, %v8648, %v8649
      %v8651 = vrot.slane %v8533, 5
      %v8652 = vrot.slane %v8651, 4
      %v8653 = vrot.slane %v7826, 5
      %v8654 = vsel %vm1738, %v8652, %v8653
      %v8655 = vrot.slane %v8653, 4
      %v8656 = vrot.slane %v7827, 5
      %v8657 = vsel %vm1738, %v8655, %v8656
      %v8658 = vrot.slane %v8534, 5
      %v8659 = vrot.slane %v8658, 4
      %v8660 = vrot.slane %v7829, 5
      %v8661 = vsel %vm1738, %v8659, %v8660
      %v8662 = vrot.slane %v8660, 4
      %v8663 = vrot.slane %v7830, 5
      %v8664 = vsel %vm1738, %v8662, %v8663
      %v8665 = vrot.slane %v8535, 5
      %v8666 = vrot.slane %v8665, 4
      %v8667 = vrot.slane %v7832, 5
      %v8668 = vsel %vm1738, %v8666, %v8667
      %v8669 = vrot.slane %v8667, 4
      %v8670 = vrot.slane %v7833, 5
      %v8671 = vsel %vm1738, %v8669, %v8670
      %v8672 = vrot.slane %v8536, 5
      %v8673 = vrot.slane %v8672, 4
      %v8674 = vrot.slane %v7835, 5
      %v8675 = vsel %vm1738, %v8673, %v8674
      %v8676 = vrot.slane %v8674, 4
      %v8677 = vrot.slane %v7836, 5
      %v8678 = vsel %vm1738, %v8676, %v8677
      %v8679 = vrot.slane %v8537, 5
      %v8680 = vrot.slane %v8679, 4
      %v8681 = vrot.slane %v7838, 5
      %v8682 = vsel %vm1738, %v8680, %v8681
      %v8683 = vrot.slane %v8681, 4
      %v8684 = vrot.slane %v7839, 5
      %v8685 = vsel %vm1738, %v8683, %v8684
      %v8686 = vrot.slane %v8538, 5
      %v8687 = vrot.slane %v8686, 4
      %v8688 = vrot.slane %v7841, 5
      %v8689 = vsel %vm1738, %v8687, %v8688
      %v8690 = vrot.slane %v8688, 4
      %v8691 = vrot.slane %v7842, 5
      %v8692 = vsel %vm1738, %v8690, %v8691
      %v8693 = vrot.slane %v8539, 5
      %v8694 = vrot.slane %v8693, 4
      %v8695 = vrot.slane %v7844, 5
      %v8696 = vsel %vm1738, %v8694, %v8695
      %v8697 = vrot.slane %v8695, 4
      %v8698 = vrot.slane %v7845, 5
      %v8699 = vsel %vm1738, %v8697, %v8698
      %s8700 = scalar_lea.vmem %s2, 10
      %v8701 = vld [vmem:[%s8700] sm:$0x3]
      %v8702 = vunpack.c.l.b16 %v8591
      %v8703 = vunpack.c.l.b16 %v8594
      %v8704 = vunpack.c.l.b16 %v8598
      %v8705 = vunpack.c.l.b16 %v8601
      %v8706 = vunpack.c.l.b16 %v8605
      %v8707 = vunpack.c.l.b16 %v8608
      %v8708 = vunpack.c.l.b16 %v8612
      %v8709 = vunpack.c.l.b16 %v8615
      %v8710 = vunpack.c.l.b16 %v8619
      %v8711 = vunpack.c.l.b16 %v8622
      %v8712 = vunpack.c.l.b16 %v8626
      %v8713 = vunpack.c.l.b16 %v8629
      %v8714 = vunpack.c.l.b16 %v8633
      %v8715 = vunpack.c.l.b16 %v8636
      %v8716 = vunpack.c.l.b16 %v8640
      %v8717 = vunpack.c.l.b16 %v8643
      %v8718 = vunpack.c.l.b16 %v8647
      %v8719 = vunpack.c.l.b16 %v8650
      %v8720 = vunpack.c.l.b16 %v8654
      %v8721 = vunpack.c.l.b16 %v8657
      %v8722 = vunpack.c.l.b16 %v8661
      %v8723 = vunpack.c.l.b16 %v8664
      %v8724 = vunpack.c.l.b16 %v8668
      %v8725 = vunpack.c.l.b16 %v8671
      %v8726 = vunpack.c.l.b16 %v8675
      %v8727 = vunpack.c.l.b16 %v8678
      %v8728 = vunpack.c.l.b16 %v8682
      %v8729 = vunpack.c.l.b16 %v8685
      %v8730 = vunpack.c.l.b16 %v8689
      %v8731 = vunpack.c.l.b16 %v8692
      %v8732 = vunpack.c.l.b16 %v8696
      %v8733 = vunpack.c.l.b16 %v8699
      %v8734 = vpack.c.b16 %v8703, %v8702
      %v8735 = vpack.c.b16 %v8705, %v8704
      %v8736 = vpack.c.b16 %v8707, %v8706
      %v8737 = vpack.c.b16 %v8709, %v8708
      %v8738 = vpack.c.b16 %v8711, %v8710
      %v8739 = vpack.c.b16 %v8713, %v8712
      %v8740 = vpack.c.b16 %v8715, %v8714
      %v8741 = vpack.c.b16 %v8717, %v8716
      %v8742 = vpack.c.b16 %v8719, %v8718
      %v8743 = vpack.c.b16 %v8721, %v8720
      %v8744 = vpack.c.b16 %v8723, %v8722
      %v8745 = vpack.c.b16 %v8725, %v8724
      %v8746 = vpack.c.b16 %v8727, %v8726
      %v8747 = vpack.c.b16 %v8729, %v8728
      %v8748 = vpack.c.b16 %v8731, %v8730
      %v8749 = vpack.c.b16 %v8733, %v8732
      %v8751 = vsel %vm232, %v8734, 0
      %v8754 = vsel %vm232, %v8735, 0
      %v8757 = vsel %vm232, %v8736, 0
      %v8760 = vsel %vm232, %v8737, 0
      %v8763 = vsel %vm232, %v8738, 0
      %v8766 = vsel %vm232, %v8739, 0
      %v8769 = vsel %vm232, %v8740, 0
      %v8772 = vsel %vm232, %v8741, 0
      %v8775 = vsel %vm232, %v8742, 0
      %v8778 = vsel %vm232, %v8743, 0
      %v8781 = vsel %vm232, %v8744, 0
      %v8784 = vsel %vm232, %v8745, 0
      %v8787 = vsel %vm232, %v8746, 0
      %v8790 = vsel %vm232, %v8747, 0
      %v8793 = vsel %vm232, %v8748, 0
      %v8796 = vsel %vm232, %v8749, 0
      %v8799 = vsel %vm1231, %v8701, 0
      %8801 = vmatprep.subr.bf16.mxu0 0
      %8802 = vmatpush1.bf16.msra.mxu0 0
      %8803 = vmatprep.subr.bf16.mxu0 0
      %8804 = vmatpush1.bf16.msra.mxu0 0
      %8805 = vmatprep.subr.bf16.mxu0 0
      %8806 = vmatpush1.bf16.msra.mxu0 0
      %8807 = vmatprep.subr.bf16.mxu0 0
      %8808 = vmatpush1.bf16.msra.mxu0 0
      %8809 = vmatprep.subr.bf16.mxu0 0
      %8810 = vmatpush1.bf16.msra.mxu0 0
      %8811 = vmatprep.subr.bf16.mxu0 0
      %8812 = vmatpush1.bf16.msra.mxu0 0
      %8813 = vmatprep.subr.bf16.mxu0 0
      %8814 = vmatpush1.bf16.msra.mxu0 0
      %8815 = vmatprep.subr.bf16.mxu0 0
      %8816 = vmatpush1.bf16.msra.mxu0 %v8799
      %8817 = vmatprep.subr.bf16.mxu0 0
      %8818 = vmatpush2.bf16.msra.mxu0 0
      %8819 = vmatprep.subr.bf16.mxu0 0
      %8820 = vmatpush2.bf16.msra.mxu0 0
      %8821 = vmatprep.subr.bf16.mxu0 0
      %8822 = vmatpush2.bf16.msra.mxu0 0
      %8823 = vmatprep.subr.bf16.mxu0 0
      %8824 = vmatpush2.bf16.msra.mxu0 0
      %8825 = vmatprep.subr.bf16.mxu0 0
      %8826 = vmatpush2.bf16.msra.mxu0 0
      %8827 = vmatprep.subr.bf16.mxu0 0
      %8828 = vmatpush2.bf16.msra.mxu0 0
      %8829 = vmatprep.subr.bf16.mxu0 0
      %8830 = vmatpush2.bf16.msra.mxu0 0
      %8831 = vmatprep.subr.bf16.mxu0 0
      %8832 = vmatpush2.bf16.msra.mxu0 0
      %8833 = vmatprep.mubr.bf16.mxu0 0
      %8834 = vmatmul.mubr.bf16.gmra.mxu0 %v8751
      %v8835 = vpop.f32.mrf.mxu0
      %v8836 = vadd.f32 0.0, %v8835
      %v8837 = vpop.f32.mrf.mxu0
      %v8838 = vpop.f32.mrf.mxu0
      %v8839 = vadd.f32 0.0, %v8838
      %v8840 = vpop.f32.mrf.mxu0
      %8841 = vmatprep.mubr.bf16.mxu0 0
      %8842 = vmatmul.mubr.bf16.gmra.mxu0 %v8754
      %v8843 = vpop.f32.mrf.mxu0
      %v8844 = vadd.f32 0.0, %v8843
      %v8845 = vpop.f32.mrf.mxu0
      %v8846 = vpop.f32.mrf.mxu0
      %v8847 = vadd.f32 0.0, %v8846
      %v8848 = vpop.f32.mrf.mxu0
      %8849 = vmatprep.mubr.bf16.mxu0 0
      %8850 = vmatmul.mubr.bf16.gmra.mxu0 %v8757
      %v8851 = vpop.f32.mrf.mxu0
      %v8852 = vadd.f32 0.0, %v8851
      %v8853 = vpop.f32.mrf.mxu0
      %v8854 = vpop.f32.mrf.mxu0
      %v8855 = vadd.f32 0.0, %v8854
      %v8856 = vpop.f32.mrf.mxu0
      %8857 = vmatprep.mubr.bf16.mxu0 0
      %8858 = vmatmul.mubr.bf16.gmra.mxu0 %v8760
      %v8859 = vpop.f32.mrf.mxu0
      %v8860 = vadd.f32 0.0, %v8859
      %v8861 = vpop.f32.mrf.mxu0
      %v8862 = vpop.f32.mrf.mxu0
      %v8863 = vadd.f32 0.0, %v8862
      %v8864 = vpop.f32.mrf.mxu0
      %8865 = vmatprep.mubr.bf16.mxu0 0
      %8866 = vmatmul.mubr.bf16.gmra.mxu0 %v8763
      %v8867 = vpop.f32.mrf.mxu0
      %v8868 = vadd.f32 0.0, %v8867
      %v8869 = vpop.f32.mrf.mxu0
      %v8870 = vpop.f32.mrf.mxu0
      %v8871 = vadd.f32 0.0, %v8870
      %v8872 = vpop.f32.mrf.mxu0
      %8873 = vmatprep.mubr.bf16.mxu0 0
      %8874 = vmatmul.mubr.bf16.gmra.mxu0 %v8766
      %v8875 = vpop.f32.mrf.mxu0
      %v8876 = vadd.f32 0.0, %v8875
      %v8877 = vpop.f32.mrf.mxu0
      %v8878 = vpop.f32.mrf.mxu0
      %v8879 = vadd.f32 0.0, %v8878
      %v8880 = vpop.f32.mrf.mxu0
      %8881 = vmatprep.mubr.bf16.mxu0 0
      %8882 = vmatmul.mubr.bf16.gmra.mxu0 %v8769
      %v8883 = vpop.f32.mrf.mxu0
      %v8884 = vadd.f32 0.0, %v8883
      %v8885 = vpop.f32.mrf.mxu0
      %v8886 = vpop.f32.mrf.mxu0
      %v8887 = vadd.f32 0.0, %v8886
      %v8888 = vpop.f32.mrf.mxu0
      %8889 = vmatprep.mubr.bf16.mxu0 0
      %8890 = vmatmul.mubr.bf16.gmra.mxu0 %v8772
      %v8891 = vpop.f32.mrf.mxu0
      %v8892 = vadd.f32 0.0, %v8891
      %v8893 = vpop.f32.mrf.mxu0
      %v8894 = vpop.f32.mrf.mxu0
      %v8895 = vadd.f32 0.0, %v8894
      %v8896 = vpop.f32.mrf.mxu0
      %8897 = vmatprep.mubr.bf16.mxu0 0
      %8898 = vmatmul.mubr.bf16.gmra.mxu0 %v8775
      %v8899 = vpop.f32.mrf.mxu0
      %v8900 = vadd.f32 0.0, %v8899
      %v8901 = vpop.f32.mrf.mxu0
      %v8902 = vpop.f32.mrf.mxu0
      %v8903 = vadd.f32 0.0, %v8902
      %v8904 = vpop.f32.mrf.mxu0
      %8905 = vmatprep.mubr.bf16.mxu0 0
      %8906 = vmatmul.mubr.bf16.gmra.mxu0 %v8778
      %v8907 = vpop.f32.mrf.mxu0
      %v8908 = vadd.f32 0.0, %v8907
      %v8909 = vpop.f32.mrf.mxu0
      %v8910 = vpop.f32.mrf.mxu0
      %v8911 = vadd.f32 0.0, %v8910
      %v8912 = vpop.f32.mrf.mxu0
      %8913 = vmatprep.mubr.bf16.mxu0 0
      %8914 = vmatmul.mubr.bf16.gmra.mxu0 %v8781
      %v8915 = vpop.f32.mrf.mxu0
      %v8916 = vadd.f32 0.0, %v8915
      %v8917 = vpop.f32.mrf.mxu0
      %v8918 = vpop.f32.mrf.mxu0
      %v8919 = vadd.f32 0.0, %v8918
      %v8920 = vpop.f32.mrf.mxu0
      %8921 = vmatprep.mubr.bf16.mxu0 0
      %8922 = vmatmul.mubr.bf16.gmra.mxu0 %v8784
      %v8923 = vpop.f32.mrf.mxu0
      %v8924 = vadd.f32 0.0, %v8923
      %v8925 = vpop.f32.mrf.mxu0
      %v8926 = vpop.f32.mrf.mxu0
      %v8927 = vadd.f32 0.0, %v8926
      %v8928 = vpop.f32.mrf.mxu0
      %8929 = vmatprep.mubr.bf16.mxu0 0
      %8930 = vmatmul.mubr.bf16.gmra.mxu0 %v8787
      %v8931 = vpop.f32.mrf.mxu0
      %v8932 = vadd.f32 0.0, %v8931
      %v8933 = vpop.f32.mrf.mxu0
      %v8934 = vpop.f32.mrf.mxu0
      %v8935 = vadd.f32 0.0, %v8934
      %v8936 = vpop.f32.mrf.mxu0
      %8937 = vmatprep.mubr.bf16.mxu0 0
      %8938 = vmatmul.mubr.bf16.gmra.mxu0 %v8790
      %v8939 = vpop.f32.mrf.mxu0
      %v8940 = vadd.f32 0.0, %v8939
      %v8941 = vpop.f32.mrf.mxu0
      %v8942 = vpop.f32.mrf.mxu0
      %v8943 = vadd.f32 0.0, %v8942
      %v8944 = vpop.f32.mrf.mxu0
      %8945 = vmatprep.mubr.bf16.mxu0 0
      %8946 = vmatmul.mubr.bf16.gmra.mxu0 %v8793
      %v8947 = vpop.f32.mrf.mxu0
      %v8948 = vadd.f32 0.0, %v8947
      %v8949 = vpop.f32.mrf.mxu0
      %v8950 = vpop.f32.mrf.mxu0
      %v8951 = vadd.f32 0.0, %v8950
      %v8952 = vpop.f32.mrf.mxu0
      %8953 = vmatprep.mubr.bf16.mxu0 0
      %8954 = vmatmul.mubr.bf16.gmra.mxu0 %v8796
      %v8955 = vpop.f32.mrf.mxu0
      %v8956 = vadd.f32 0.0, %v8955
      %v8957 = vpop.f32.mrf.mxu0
      %v8958 = vpop.f32.mrf.mxu0
      %v8959 = vadd.f32 0.0, %v8958
      %v8960 = vpop.f32.mrf.mxu0
      %8961 = vdwg.mxu0
      %v8962 = vadd.f32 %v8492, %v8836
      %v8963 = vadd.f32 %v8493, %v8839
      %v8964 = vadd.f32 %v8494, %v8844
      %v8965 = vadd.f32 %v8495, %v8847
      %v8966 = vadd.f32 %v8496, %v8852
      %v8967 = vadd.f32 %v8497, %v8855
      %v8968 = vadd.f32 %v8498, %v8860
      %v8969 = vadd.f32 %v8499, %v8863
      %v8970 = vadd.f32 %v8500, %v8868
      %v8971 = vadd.f32 %v8501, %v8871
      %v8972 = vadd.f32 %v8502, %v8876
      %v8973 = vadd.f32 %v8503, %v8879
      %v8974 = vadd.f32 %v8504, %v8884
      %v8975 = vadd.f32 %v8505, %v8887
      %v8976 = vadd.f32 %v8506, %v8892
      %v8977 = vadd.f32 %v8507, %v8895
      %v8978 = vadd.f32 %v8508, %v8900
      %v8979 = vadd.f32 %v8509, %v8903
      %v8980 = vadd.f32 %v8510, %v8908
      %v8981 = vadd.f32 %v8511, %v8911
      %v8982 = vadd.f32 %v8512, %v8916
      %v8983 = vadd.f32 %v8513, %v8919
      %v8984 = vadd.f32 %v8514, %v8924
      %v8985 = vadd.f32 %v8515, %v8927
      %v8986 = vadd.f32 %v8516, %v8932
      %v8987 = vadd.f32 %v8517, %v8935
      %v8988 = vadd.f32 %v8518, %v8940
      %v8989 = vadd.f32 %v8519, %v8943
      %v8990 = vadd.f32 %v8520, %v8948
      %v8991 = vadd.f32 %v8521, %v8951
      %v8992 = vadd.f32 %v8522, %v8956
      %v8993 = vadd.f32 %v8523, %v8959
      %v8994 = vld [vmem:[%s3700] sm:$0xf]
      %v8995 = vld [vmem:[%s3700 + $0x4] sm:$0xf]
      %v8996 = vld [vmem:[%s3700 + $0xc] sm:$0xf]
      %v8997 = vld [vmem:[%s3700 + $0x10] sm:$0xf]
      %v8998 = vld [vmem:[%s3700 + $0x18] sm:$0xf]
      %v8999 = vld [vmem:[%s3700 + $0x1c] sm:$0xf]
      %v9000 = vld [vmem:[%s3700 + $0x24] sm:$0xf]
      %v9001 = vld [vmem:[%s3700 + $0x28] sm:$0xf]
      %v9002 = vld [vmem:[%s3700 + $0x30] sm:$0xf]
      %v9003 = vld [vmem:[%s3700 + $0x34] sm:$0xf]
      %v9004 = vld [vmem:[%s3700 + $0x3c] sm:$0xf]
      %v9005 = vld [vmem:[%s3700 + $0x40] sm:$0xf]
      %v9006 = vld [vmem:[%s3700 + $0x48] sm:$0xf]
      %v9007 = vld [vmem:[%s3700 + $0x4c] sm:$0xf]
      %v9008 = vld [vmem:[%s3700 + $0x54] sm:$0xf]
      %v9009 = vld [vmem:[%s3700 + $0x58] sm:$0xf]
      %v9010 = vld [vmem:[%s3700 + $0x60] sm:$0xf]
      %v9011 = vld [vmem:[%s3700 + $0x64] sm:$0xf]
      %v9012 = vld [vmem:[%s3700 + $0x6c] sm:$0xf]
      %v9013 = vld [vmem:[%s3700 + $0x70] sm:$0xf]
      %v9014 = vld [vmem:[%s3700 + $0x78] sm:$0xf]
      %v9015 = vld [vmem:[%s3700 + $0x7c] sm:$0xf]
      %v9016 = vld [vmem:[%s3700 + $0x84] sm:$0xf]
      %v9017 = vld [vmem:[%s3700 + $0x88] sm:$0xf]
      %v9018 = vld [vmem:[%s3700 + $0x90] sm:$0xf]
      %v9019 = vld [vmem:[%s3700 + $0x94] sm:$0xf]
      %v9020 = vld [vmem:[%s3700 + $0x9c] sm:$0xf]
      %v9021 = vld [vmem:[%s3700 + $0xa0] sm:$0xf]
      %v9022 = vld [vmem:[%s3700 + $0xa8] sm:$0xf]
      %v9023 = vld [vmem:[%s3700 + $0xac] sm:$0xf]
      %v9024 = vld [vmem:[%s3700 + $0xb4] sm:$0xf]
      %v9025 = vld [vmem:[%s3700 + $0xb8] sm:$0xf]
      %s9026 = scalar_lea.vmem %s2, 12
      %v9027 = vld [vmem:[%s9026] sm:$0x3]
      %v9060 = vunpack.c.l.b16 %v8994
      %v9061 = vunpack.c.l.b16 %v8995
      %v9062 = vunpack.c.l.b16 %v8996
      %v9063 = vunpack.c.l.b16 %v8997
      %v9064 = vunpack.c.l.b16 %v8998
      %v9065 = vunpack.c.l.b16 %v8999
      %v9066 = vunpack.c.l.b16 %v9000
      %v9067 = vunpack.c.l.b16 %v9001
      %v9068 = vunpack.c.l.b16 %v9002
      %v9069 = vunpack.c.l.b16 %v9003
      %v9070 = vunpack.c.l.b16 %v9004
      %v9071 = vunpack.c.l.b16 %v9005
      %v9072 = vunpack.c.l.b16 %v9006
      %v9073 = vunpack.c.l.b16 %v9007
      %v9074 = vunpack.c.l.b16 %v9008
      %v9075 = vunpack.c.l.b16 %v9009
      %v9076 = vunpack.c.l.b16 %v9010
      %v9077 = vunpack.c.l.b16 %v9011
      %v9078 = vunpack.c.l.b16 %v9012
      %v9079 = vunpack.c.l.b16 %v9013
      %v9080 = vunpack.c.l.b16 %v9014
      %v9081 = vunpack.c.l.b16 %v9015
      %v9082 = vunpack.c.l.b16 %v9016
      %v9083 = vunpack.c.l.b16 %v9017
      %v9084 = vunpack.c.l.b16 %v9018
      %v9085 = vunpack.c.l.b16 %v9019
      %v9086 = vunpack.c.l.b16 %v9020
      %v9087 = vunpack.c.l.b16 %v9021
      %v9088 = vunpack.c.l.b16 %v9022
      %v9089 = vunpack.c.l.b16 %v9023
      %v9090 = vunpack.c.l.b16 %v9024
      %v9091 = vunpack.c.l.b16 %v9025
      %v9092 = vpack.c.b16 %v9061, %v9060
      %v9093 = vpack.c.b16 %v9063, %v9062
      %v9094 = vpack.c.b16 %v9065, %v9064
      %v9095 = vpack.c.b16 %v9067, %v9066
      %v9096 = vpack.c.b16 %v9069, %v9068
      %v9097 = vpack.c.b16 %v9071, %v9070
      %v9098 = vpack.c.b16 %v9073, %v9072
      %v9099 = vpack.c.b16 %v9075, %v9074
      %v9100 = vpack.c.b16 %v9077, %v9076
      %v9101 = vpack.c.b16 %v9079, %v9078
      %v9102 = vpack.c.b16 %v9081, %v9080
      %v9103 = vpack.c.b16 %v9083, %v9082
      %v9104 = vpack.c.b16 %v9085, %v9084
      %v9105 = vpack.c.b16 %v9087, %v9086
      %v9106 = vpack.c.b16 %v9089, %v9088
      %v9107 = vpack.c.b16 %v9091, %v9090
      %v9109 = vsel %vm232, %v9092, 0
      %v9112 = vsel %vm232, %v9093, 0
      %v9115 = vsel %vm232, %v9094, 0
      %v9118 = vsel %vm232, %v9095, 0
      %v9121 = vsel %vm232, %v9096, 0
      %v9124 = vsel %vm232, %v9097, 0
      %v9127 = vsel %vm232, %v9098, 0
      %v9130 = vsel %vm232, %v9099, 0
      %v9133 = vsel %vm232, %v9100, 0
      %v9136 = vsel %vm232, %v9101, 0
      %v9139 = vsel %vm232, %v9102, 0
      %v9142 = vsel %vm232, %v9103, 0
      %v9145 = vsel %vm232, %v9104, 0
      %v9148 = vsel %vm232, %v9105, 0
      %v9151 = vsel %vm232, %v9106, 0
      %v9154 = vsel %vm232, %v9107, 0
      %v9157 = vsel %vm1231, %v9027, 0
      %9159 = vmatprep.subr.bf16.mxu0 0
      %9160 = vmatpush1.bf16.msra.mxu0 0
      %9161 = vmatprep.subr.bf16.mxu0 0
      %9162 = vmatpush1.bf16.msra.mxu0 0
      %9163 = vmatprep.subr.bf16.mxu0 0
      %9164 = vmatpush1.bf16.msra.mxu0 0
      %9165 = vmatprep.subr.bf16.mxu0 0
      %9166 = vmatpush1.bf16.msra.mxu0 0
      %9167 = vmatprep.subr.bf16.mxu0 0
      %9168 = vmatpush1.bf16.msra.mxu0 0
      %9169 = vmatprep.subr.bf16.mxu0 0
      %9170 = vmatpush1.bf16.msra.mxu0 0
      %9171 = vmatprep.subr.bf16.mxu0 0
      %9172 = vmatpush1.bf16.msra.mxu0 0
      %9173 = vmatprep.subr.bf16.mxu0 0
      %9174 = vmatpush1.bf16.msra.mxu0 %v9157
      %9175 = vmatprep.subr.bf16.mxu0 0
      %9176 = vmatpush2.bf16.msra.mxu0 0
      %9177 = vmatprep.subr.bf16.mxu0 0
      %9178 = vmatpush2.bf16.msra.mxu0 0
      %9179 = vmatprep.subr.bf16.mxu0 0
      %9180 = vmatpush2.bf16.msra.mxu0 0
      %9181 = vmatprep.subr.bf16.mxu0 0
      %9182 = vmatpush2.bf16.msra.mxu0 0
      %9183 = vmatprep.subr.bf16.mxu0 0
      %9184 = vmatpush2.bf16.msra.mxu0 0
      %9185 = vmatprep.subr.bf16.mxu0 0
      %9186 = vmatpush2.bf16.msra.mxu0 0
      %9187 = vmatprep.subr.bf16.mxu0 0
      %9188 = vmatpush2.bf16.msra.mxu0 0
      %9189 = vmatprep.subr.bf16.mxu0 0
      %9190 = vmatpush2.bf16.msra.mxu0 0
      %9191 = vmatprep.mubr.bf16.mxu0 0
      %9192 = vmatmul.mubr.bf16.gmra.mxu0 %v9109
      %v9193 = vpop.f32.mrf.mxu0
      %v9194 = vadd.f32 0.0, %v9193
      %v9195 = vpop.f32.mrf.mxu0
      %v9196 = vpop.f32.mrf.mxu0
      %v9197 = vadd.f32 0.0, %v9196
      %v9198 = vpop.f32.mrf.mxu0
      %9199 = vmatprep.mubr.bf16.mxu0 0
      %9200 = vmatmul.mubr.bf16.gmra.mxu0 %v9112
      %v9201 = vpop.f32.mrf.mxu0
      %v9202 = vadd.f32 0.0, %v9201
      %v9203 = vpop.f32.mrf.mxu0
      %v9204 = vpop.f32.mrf.mxu0
      %v9205 = vadd.f32 0.0, %v9204
      %v9206 = vpop.f32.mrf.mxu0
      %9207 = vmatprep.mubr.bf16.mxu0 0
      %9208 = vmatmul.mubr.bf16.gmra.mxu0 %v9115
      %v9209 = vpop.f32.mrf.mxu0
      %v9210 = vadd.f32 0.0, %v9209
      %v9211 = vpop.f32.mrf.mxu0
      %v9212 = vpop.f32.mrf.mxu0
      %v9213 = vadd.f32 0.0, %v9212
      %v9214 = vpop.f32.mrf.mxu0
      %9215 = vmatprep.mubr.bf16.mxu0 0
      %9216 = vmatmul.mubr.bf16.gmra.mxu0 %v9118
      %v9217 = vpop.f32.mrf.mxu0
      %v9218 = vadd.f32 0.0, %v9217
      %v9219 = vpop.f32.mrf.mxu0
      %v9220 = vpop.f32.mrf.mxu0
      %v9221 = vadd.f32 0.0, %v9220
      %v9222 = vpop.f32.mrf.mxu0
      %9223 = vmatprep.mubr.bf16.mxu0 0
      %9224 = vmatmul.mubr.bf16.gmra.mxu0 %v9121
      %v9225 = vpop.f32.mrf.mxu0
      %v9226 = vadd.f32 0.0, %v9225
      %v9227 = vpop.f32.mrf.mxu0
      %v9228 = vpop.f32.mrf.mxu0
      %v9229 = vadd.f32 0.0, %v9228
      %v9230 = vpop.f32.mrf.mxu0
      %9231 = vmatprep.mubr.bf16.mxu0 0
      %9232 = vmatmul.mubr.bf16.gmra.mxu0 %v9124
      %v9233 = vpop.f32.mrf.mxu0
      %v9234 = vadd.f32 0.0, %v9233
      %v9235 = vpop.f32.mrf.mxu0
      %v9236 = vpop.f32.mrf.mxu0
      %v9237 = vadd.f32 0.0, %v9236
      %v9238 = vpop.f32.mrf.mxu0
      %9239 = vmatprep.mubr.bf16.mxu0 0
      %9240 = vmatmul.mubr.bf16.gmra.mxu0 %v9127
      %v9241 = vpop.f32.mrf.mxu0
      %v9242 = vadd.f32 0.0, %v9241
      %v9243 = vpop.f32.mrf.mxu0
      %v9244 = vpop.f32.mrf.mxu0
      %v9245 = vadd.f32 0.0, %v9244
      %v9246 = vpop.f32.mrf.mxu0
      %9247 = vmatprep.mubr.bf16.mxu0 0
      %9248 = vmatmul.mubr.bf16.gmra.mxu0 %v9130
      %v9249 = vpop.f32.mrf.mxu0
      %v9250 = vadd.f32 0.0, %v9249
      %v9251 = vpop.f32.mrf.mxu0
      %v9252 = vpop.f32.mrf.mxu0
      %v9253 = vadd.f32 0.0, %v9252
      %v9254 = vpop.f32.mrf.mxu0
      %9255 = vmatprep.mubr.bf16.mxu0 0
      %9256 = vmatmul.mubr.bf16.gmra.mxu0 %v9133
      %v9257 = vpop.f32.mrf.mxu0
      %v9258 = vadd.f32 0.0, %v9257
      %v9259 = vpop.f32.mrf.mxu0
      %v9260 = vpop.f32.mrf.mxu0
      %v9261 = vadd.f32 0.0, %v9260
      %v9262 = vpop.f32.mrf.mxu0
      %9263 = vmatprep.mubr.bf16.mxu0 0
      %9264 = vmatmul.mubr.bf16.gmra.mxu0 %v9136
      %v9265 = vpop.f32.mrf.mxu0
      %v9266 = vadd.f32 0.0, %v9265
      %v9267 = vpop.f32.mrf.mxu0
      %v9268 = vpop.f32.mrf.mxu0
      %v9269 = vadd.f32 0.0, %v9268
      %v9270 = vpop.f32.mrf.mxu0
      %9271 = vmatprep.mubr.bf16.mxu0 0
      %9272 = vmatmul.mubr.bf16.gmra.mxu0 %v9139
      %v9273 = vpop.f32.mrf.mxu0
      %v9274 = vadd.f32 0.0, %v9273
      %v9275 = vpop.f32.mrf.mxu0
      %v9276 = vpop.f32.mrf.mxu0
      %v9277 = vadd.f32 0.0, %v9276
      %v9278 = vpop.f32.mrf.mxu0
      %9279 = vmatprep.mubr.bf16.mxu0 0
      %9280 = vmatmul.mubr.bf16.gmra.mxu0 %v9142
      %v9281 = vpop.f32.mrf.mxu0
      %v9282 = vadd.f32 0.0, %v9281
      %v9283 = vpop.f32.mrf.mxu0
      %v9284 = vpop.f32.mrf.mxu0
      %v9285 = vadd.f32 0.0, %v9284
      %v9286 = vpop.f32.mrf.mxu0
      %9287 = vmatprep.mubr.bf16.mxu0 0
      %9288 = vmatmul.mubr.bf16.gmra.mxu0 %v9145
      %v9289 = vpop.f32.mrf.mxu0
      %v9290 = vadd.f32 0.0, %v9289
      %v9291 = vpop.f32.mrf.mxu0
      %v9292 = vpop.f32.mrf.mxu0
      %v9293 = vadd.f32 0.0, %v9292
      %v9294 = vpop.f32.mrf.mxu0
      %9295 = vmatprep.mubr.bf16.mxu0 0
      %9296 = vmatmul.mubr.bf16.gmra.mxu0 %v9148
      %v9297 = vpop.f32.mrf.mxu0
      %v9298 = vadd.f32 0.0, %v9297
      %v9299 = vpop.f32.mrf.mxu0
      %v9300 = vpop.f32.mrf.mxu0
      %v9301 = vadd.f32 0.0, %v9300
      %v9302 = vpop.f32.mrf.mxu0
      %9303 = vmatprep.mubr.bf16.mxu0 0
      %9304 = vmatmul.mubr.bf16.gmra.mxu0 %v9151
      %v9305 = vpop.f32.mrf.mxu0
      %v9306 = vadd.f32 0.0, %v9305
      %v9307 = vpop.f32.mrf.mxu0
      %v9308 = vpop.f32.mrf.mxu0
      %v9309 = vadd.f32 0.0, %v9308
      %v9310 = vpop.f32.mrf.mxu0
      %9311 = vmatprep.mubr.bf16.mxu0 0
      %9312 = vmatmul.mubr.bf16.gmra.mxu0 %v9154
      %v9313 = vpop.f32.mrf.mxu0
      %v9314 = vadd.f32 0.0, %v9313
      %v9315 = vpop.f32.mrf.mxu0
      %v9316 = vpop.f32.mrf.mxu0
      %v9317 = vadd.f32 0.0, %v9316
      %v9318 = vpop.f32.mrf.mxu0
      %9319 = vdwg.mxu0
      %v9320 = vadd.f32 %v8962, %v9194
      %v9321 = vadd.f32 %v8963, %v9197
      %v9322 = vadd.f32 %v8964, %v9202
      %v9323 = vadd.f32 %v8965, %v9205
      %v9324 = vadd.f32 %v8966, %v9210
      %v9325 = vadd.f32 %v8967, %v9213
      %v9326 = vadd.f32 %v8968, %v9218
      %v9327 = vadd.f32 %v8969, %v9221
      %v9328 = vadd.f32 %v8970, %v9226
      %v9329 = vadd.f32 %v8971, %v9229
      %v9330 = vadd.f32 %v8972, %v9234
      %v9331 = vadd.f32 %v8973, %v9237
      %v9332 = vadd.f32 %v8974, %v9242
      %v9333 = vadd.f32 %v8975, %v9245
      %v9334 = vadd.f32 %v8976, %v9250
      %v9335 = vadd.f32 %v8977, %v9253
      %v9336 = vadd.f32 %v8978, %v9258
      %v9337 = vadd.f32 %v8979, %v9261
      %v9338 = vadd.f32 %v8980, %v9266
      %v9339 = vadd.f32 %v8981, %v9269
      %v9340 = vadd.f32 %v8982, %v9274
      %v9341 = vadd.f32 %v8983, %v9277
      %v9342 = vadd.f32 %v8984, %v9282
      %v9343 = vadd.f32 %v8985, %v9285
      %v9344 = vadd.f32 %v8986, %v9290
      %v9345 = vadd.f32 %v8987, %v9293
      %v9346 = vadd.f32 %v8988, %v9298
      %v9347 = vadd.f32 %v8989, %v9301
      %v9348 = vadd.f32 %v8990, %v9306
      %v9349 = vadd.f32 %v8991, %v9309
      %v9350 = vadd.f32 %v8992, %v9314
      %v9351 = vadd.f32 %v8993, %v9317
      %v9352 = vld [vmem:[%s3700] sm:$0xf]
      %v9353 = vld [vmem:[%s3700 + $0x4] sm:$0xf]
      %v9354 = vld [vmem:[%s3700 + $0x8] sm:$0x1]
      %v9355 = vld [vmem:[%s3700 + $0xc] sm:$0xf]
      %v9356 = vld [vmem:[%s3700 + $0x10] sm:$0xf]
      %v9357 = vld [vmem:[%s3700 + $0x14] sm:$0x1]
      %v9358 = vld [vmem:[%s3700 + $0x18] sm:$0xf]
      %v9359 = vld [vmem:[%s3700 + $0x1c] sm:$0xf]
      %v9360 = vld [vmem:[%s3700 + $0x20] sm:$0x1]
      %v9361 = vld [vmem:[%s3700 + $0x24] sm:$0xf]
      %v9362 = vld [vmem:[%s3700 + $0x28] sm:$0xf]
      %v9363 = vld [vmem:[%s3700 + $0x2c] sm:$0x1]
      %v9364 = vld [vmem:[%s3700 + $0x30] sm:$0xf]
      %v9365 = vld [vmem:[%s3700 + $0x34] sm:$0xf]
      %v9366 = vld [vmem:[%s3700 + $0x38] sm:$0x1]
      %v9367 = vld [vmem:[%s3700 + $0x3c] sm:$0xf]
      %v9368 = vld [vmem:[%s3700 + $0x40] sm:$0xf]
      %v9369 = vld [vmem:[%s3700 + $0x44] sm:$0x1]
      %v9370 = vld [vmem:[%s3700 + $0x48] sm:$0xf]
      %v9371 = vld [vmem:[%s3700 + $0x4c] sm:$0xf]
      %v9372 = vld [vmem:[%s3700 + $0x50] sm:$0x1]
      %v9373 = vld [vmem:[%s3700 + $0x54] sm:$0xf]
      %v9374 = vld [vmem:[%s3700 + $0x58] sm:$0xf]
      %v9375 = vld [vmem:[%s3700 + $0x5c] sm:$0x1]
      %v9376 = vld [vmem:[%s3700 + $0x60] sm:$0xf]
      %v9377 = vld [vmem:[%s3700 + $0x64] sm:$0xf]
      %v9378 = vld [vmem:[%s3700 + $0x68] sm:$0x1]
      %v9379 = vld [vmem:[%s3700 + $0x6c] sm:$0xf]
      %v9380 = vld [vmem:[%s3700 + $0x70] sm:$0xf]
      %v9381 = vld [vmem:[%s3700 + $0x74] sm:$0x1]
      %v9382 = vld [vmem:[%s3700 + $0x78] sm:$0xf]
      %v9383 = vld [vmem:[%s3700 + $0x7c] sm:$0xf]
      %v9384 = vld [vmem:[%s3700 + $0x80] sm:$0x1]
      %v9385 = vld [vmem:[%s3700 + $0x84] sm:$0xf]
      %v9386 = vld [vmem:[%s3700 + $0x88] sm:$0xf]
      %v9387 = vld [vmem:[%s3700 + $0x8c] sm:$0x1]
      %v9388 = vld [vmem:[%s3700 + $0x90] sm:$0xf]
      %v9389 = vld [vmem:[%s3700 + $0x94] sm:$0xf]
      %v9390 = vld [vmem:[%s3700 + $0x98] sm:$0x1]
      %v9391 = vld [vmem:[%s3700 + $0x9c] sm:$0xf]
      %v9392 = vld [vmem:[%s3700 + $0xa0] sm:$0xf]
      %v9393 = vld [vmem:[%s3700 + $0xa4] sm:$0x1]
      %v9394 = vld [vmem:[%s3700 + $0xa8] sm:$0xf]
      %v9395 = vld [vmem:[%s3700 + $0xac] sm:$0xf]
      %v9396 = vld [vmem:[%s3700 + $0xb0] sm:$0x1]
      %v9397 = vld [vmem:[%s3700 + $0xb4] sm:$0xf]
      %v9398 = vld [vmem:[%s3700 + $0xb8] sm:$0xf]
      %v9399 = vld [vmem:[%s3700 + $0xbc] sm:$0x1]
      %v9401 = vshrl.u32 %v9352, 16
      %v9403 = vrot.slane %v9401, 4
      %v9404 = vshll.u32 %v9352, 16
      %v9406 = vrot.slane %v9404, 5
      %v9407 = vor.u32 %v9403, %v9406
      %v9408 = vrot.slane %v9407, 4
      %v9410 = vshll.u32 %v9353, 16
      %v9412 = vrot.slane %v9410, 5
      %v9413 = vsel %vm748, %v9408, %v9412
      %v9414 = vshrl.u32 %v9353, 16
      %v9416 = vrot.slane %v9414, 4
      %v9417 = vor.u32 %v9416, %v9412
      %v9418 = vrot.slane %v9417, 4
      %v9420 = vshll.u32 %v9354, 16
      %v9422 = vrot.slane %v9420, 5
      %v9423 = vsel %vm748, %v9418, %v9422
      %v9425 = vshrl.u32 %v9355, 16
      %v9427 = vrot.slane %v9425, 4
      %v9428 = vshll.u32 %v9355, 16
      %v9430 = vrot.slane %v9428, 5
      %v9431 = vor.u32 %v9427, %v9430
      %v9432 = vrot.slane %v9431, 4
      %v9434 = vshll.u32 %v9356, 16
      %v9436 = vrot.slane %v9434, 5
      %v9437 = vsel %vm748, %v9432, %v9436
      %v9438 = vshrl.u32 %v9356, 16
      %v9440 = vrot.slane %v9438, 4
      %v9441 = vor.u32 %v9440, %v9436
      %v9442 = vrot.slane %v9441, 4
      %v9444 = vshll.u32 %v9357, 16
      %v9446 = vrot.slane %v9444, 5
      %v9447 = vsel %vm748, %v9442, %v9446
      %v9449 = vshrl.u32 %v9358, 16
      %v9451 = vrot.slane %v9449, 4
      %v9452 = vshll.u32 %v9358, 16
      %v9454 = vrot.slane %v9452, 5
      %v9455 = vor.u32 %v9451, %v9454
      %v9456 = vrot.slane %v9455, 4
      %v9458 = vshll.u32 %v9359, 16
      %v9460 = vrot.slane %v9458, 5
      %v9461 = vsel %vm748, %v9456, %v9460
      %v9462 = vshrl.u32 %v9359, 16
      %v9464 = vrot.slane %v9462, 4
      %v9465 = vor.u32 %v9464, %v9460
      %v9466 = vrot.slane %v9465, 4
      %v9468 = vshll.u32 %v9360, 16
      %v9470 = vrot.slane %v9468, 5
      %v9471 = vsel %vm748, %v9466, %v9470
      %v9473 = vshrl.u32 %v9361, 16
      %v9475 = vrot.slane %v9473, 4
      %v9476 = vshll.u32 %v9361, 16
      %v9478 = vrot.slane %v9476, 5
      %v9479 = vor.u32 %v9475, %v9478
      %v9480 = vrot.slane %v9479, 4
      %v9482 = vshll.u32 %v9362, 16
      %v9484 = vrot.slane %v9482, 5
      %v9485 = vsel %vm748, %v9480, %v9484
      %v9486 = vshrl.u32 %v9362, 16
      %v9488 = vrot.slane %v9486, 4
      %v9489 = vor.u32 %v9488, %v9484
      %v9490 = vrot.slane %v9489, 4
      %v9492 = vshll.u32 %v9363, 16
      %v9494 = vrot.slane %v9492, 5
      %v9495 = vsel %vm748, %v9490, %v9494
      %v9497 = vshrl.u32 %v9364, 16
      %v9499 = vrot.slane %v9497, 4
      %v9500 = vshll.u32 %v9364, 16
      %v9502 = vrot.slane %v9500, 5
      %v9503 = vor.u32 %v9499, %v9502
      %v9504 = vrot.slane %v9503, 4
      %v9506 = vshll.u32 %v9365, 16
      %v9508 = vrot.slane %v9506, 5
      %v9509 = vsel %vm748, %v9504, %v9508
      %v9510 = vshrl.u32 %v9365, 16
      %v9512 = vrot.slane %v9510, 4
      %v9513 = vor.u32 %v9512, %v9508
      %v9514 = vrot.slane %v9513, 4
      %v9516 = vshll.u32 %v9366, 16
      %v9518 = vrot.slane %v9516, 5
      %v9519 = vsel %vm748, %v9514, %v9518
      %v9521 = vshrl.u32 %v9367, 16
      %v9523 = vrot.slane %v9521, 4
      %v9524 = vshll.u32 %v9367, 16
      %v9526 = vrot.slane %v9524, 5
      %v9527 = vor.u32 %v9523, %v9526
      %v9528 = vrot.slane %v9527, 4
      %v9530 = vshll.u32 %v9368, 16
      %v9532 = vrot.slane %v9530, 5
      %v9533 = vsel %vm748, %v9528, %v9532
      %v9534 = vshrl.u32 %v9368, 16
      %v9536 = vrot.slane %v9534, 4
      %v9537 = vor.u32 %v9536, %v9532
      %v9538 = vrot.slane %v9537, 4
      %v9540 = vshll.u32 %v9369, 16
      %v9542 = vrot.slane %v9540, 5
      %v9543 = vsel %vm748, %v9538, %v9542
      %v9545 = vshrl.u32 %v9370, 16
      %v9547 = vrot.slane %v9545, 4
      %v9548 = vshll.u32 %v9370, 16
      %v9550 = vrot.slane %v9548, 5
      %v9551 = vor.u32 %v9547, %v9550
      %v9552 = vrot.slane %v9551, 4
      %v9554 = vshll.u32 %v9371, 16
      %v9556 = vrot.slane %v9554, 5
      %v9557 = vsel %vm748, %v9552, %v9556
      %v9558 = vshrl.u32 %v9371, 16
      %v9560 = vrot.slane %v9558, 4
      %v9561 = vor.u32 %v9560, %v9556
      %v9562 = vrot.slane %v9561, 4
      %v9564 = vshll.u32 %v9372, 16
      %v9566 = vrot.slane %v9564, 5
      %v9567 = vsel %vm748, %v9562, %v9566
      %v9569 = vshrl.u32 %v9373, 16
      %v9571 = vrot.slane %v9569, 4
      %v9572 = vshll.u32 %v9373, 16
      %v9574 = vrot.slane %v9572, 5
      %v9575 = vor.u32 %v9571, %v9574
      %v9576 = vrot.slane %v9575, 4
      %v9578 = vshll.u32 %v9374, 16
      %v9580 = vrot.slane %v9578, 5
      %v9581 = vsel %vm748, %v9576, %v9580
      %v9582 = vshrl.u32 %v9374, 16
      %v9584 = vrot.slane %v9582, 4
      %v9585 = vor.u32 %v9584, %v9580
      %v9586 = vrot.slane %v9585, 4
      %v9588 = vshll.u32 %v9375, 16
      %v9590 = vrot.slane %v9588, 5
      %v9591 = vsel %vm748, %v9586, %v9590
      %v9593 = vshrl.u32 %v9376, 16
      %v9595 = vrot.slane %v9593, 4
      %v9596 = vshll.u32 %v9376, 16
      %v9598 = vrot.slane %v9596, 5
      %v9599 = vor.u32 %v9595, %v9598
      %v9600 = vrot.slane %v9599, 4
      %v9602 = vshll.u32 %v9377, 16
      %v9604 = vrot.slane %v9602, 5
      %v9605 = vsel %vm748, %v9600, %v9604
      %v9606 = vshrl.u32 %v9377, 16
      %v9608 = vrot.slane %v9606, 4
      %v9609 = vor.u32 %v9608, %v9604
      %v9610 = vrot.slane %v9609, 4
      %v9612 = vshll.u32 %v9378, 16
      %v9614 = vrot.slane %v9612, 5
      %v9615 = vsel %vm748, %v9610, %v9614
      %v9617 = vshrl.u32 %v9379, 16
      %v9619 = vrot.slane %v9617, 4
      %v9620 = vshll.u32 %v9379, 16
      %v9622 = vrot.slane %v9620, 5
      %v9623 = vor.u32 %v9619, %v9622
      %v9624 = vrot.slane %v9623, 4
      %v9626 = vshll.u32 %v9380, 16
      %v9628 = vrot.slane %v9626, 5
      %v9629 = vsel %vm748, %v9624, %v9628
      %v9630 = vshrl.u32 %v9380, 16
      %v9632 = vrot.slane %v9630, 4
      %v9633 = vor.u32 %v9632, %v9628
      %v9634 = vrot.slane %v9633, 4
      %v9636 = vshll.u32 %v9381, 16
      %v9638 = vrot.slane %v9636, 5
      %v9639 = vsel %vm748, %v9634, %v9638
      %v9641 = vshrl.u32 %v9382, 16
      %v9643 = vrot.slane %v9641, 4
      %v9644 = vshll.u32 %v9382, 16
      %v9646 = vrot.slane %v9644, 5
      %v9647 = vor.u32 %v9643, %v9646
      %v9648 = vrot.slane %v9647, 4
      %v9650 = vshll.u32 %v9383, 16
      %v9652 = vrot.slane %v9650, 5
      %v9653 = vsel %vm748, %v9648, %v9652
      %v9654 = vshrl.u32 %v9383, 16
      %v9656 = vrot.slane %v9654, 4
      %v9657 = vor.u32 %v9656, %v9652
      %v9658 = vrot.slane %v9657, 4
      %v9660 = vshll.u32 %v9384, 16
      %v9662 = vrot.slane %v9660, 5
      %v9663 = vsel %vm748, %v9658, %v9662
      %v9665 = vshrl.u32 %v9385, 16
      %v9667 = vrot.slane %v9665, 4
      %v9668 = vshll.u32 %v9385, 16
      %v9670 = vrot.slane %v9668, 5
      %v9671 = vor.u32 %v9667, %v9670
      %v9672 = vrot.slane %v9671, 4
      %v9674 = vshll.u32 %v9386, 16
      %v9676 = vrot.slane %v9674, 5
      %v9677 = vsel %vm748, %v9672, %v9676
      %v9678 = vshrl.u32 %v9386, 16
      %v9680 = vrot.slane %v9678, 4
      %v9681 = vor.u32 %v9680, %v9676
      %v9682 = vrot.slane %v9681, 4
      %v9684 = vshll.u32 %v9387, 16
      %v9686 = vrot.slane %v9684, 5
      %v9687 = vsel %vm748, %v9682, %v9686
      %v9689 = vshrl.u32 %v9388, 16
      %v9691 = vrot.slane %v9689, 4
      %v9692 = vshll.u32 %v9388, 16
      %v9694 = vrot.slane %v9692, 5
      %v9695 = vor.u32 %v9691, %v9694
      %v9696 = vrot.slane %v9695, 4
      %v9698 = vshll.u32 %v9389, 16
      %v9700 = vrot.slane %v9698, 5
      %v9701 = vsel %vm748, %v9696, %v9700
      %v9702 = vshrl.u32 %v9389, 16
      %v9704 = vrot.slane %v9702, 4
      %v9705 = vor.u32 %v9704, %v9700
      %v9706 = vrot.slane %v9705, 4
      %v9708 = vshll.u32 %v9390, 16
      %v9710 = vrot.slane %v9708, 5
      %v9711 = vsel %vm748, %v9706, %v9710
      %v9713 = vshrl.u32 %v9391, 16
      %v9715 = vrot.slane %v9713, 4
      %v9716 = vshll.u32 %v9391, 16
      %v9718 = vrot.slane %v9716, 5
      %v9719 = vor.u32 %v9715, %v9718
      %v9720 = vrot.slane %v9719, 4
      %v9722 = vshll.u32 %v9392, 16
      %v9724 = vrot.slane %v9722, 5
      %v9725 = vsel %vm748, %v9720, %v9724
      %v9726 = vshrl.u32 %v9392, 16
      %v9728 = vrot.slane %v9726, 4
      %v9729 = vor.u32 %v9728, %v9724
      %v9730 = vrot.slane %v9729, 4
      %v9732 = vshll.u32 %v9393, 16
      %v9734 = vrot.slane %v9732, 5
      %v9735 = vsel %vm748, %v9730, %v9734
      %v9737 = vshrl.u32 %v9394, 16
      %v9739 = vrot.slane %v9737, 4
      %v9740 = vshll.u32 %v9394, 16
      %v9742 = vrot.slane %v9740, 5
      %v9743 = vor.u32 %v9739, %v9742
      %v9744 = vrot.slane %v9743, 4
      %v9746 = vshll.u32 %v9395, 16
      %v9748 = vrot.slane %v9746, 5
      %v9749 = vsel %vm748, %v9744, %v9748
      %v9750 = vshrl.u32 %v9395, 16
      %v9752 = vrot.slane %v9750, 4
      %v9753 = vor.u32 %v9752, %v9748
      %v9754 = vrot.slane %v9753, 4
      %v9756 = vshll.u32 %v9396, 16
      %v9758 = vrot.slane %v9756, 5
      %v9759 = vsel %vm748, %v9754, %v9758
      %v9761 = vshrl.u32 %v9397, 16
      %v9763 = vrot.slane %v9761, 4
      %v9764 = vshll.u32 %v9397, 16
      %v9766 = vrot.slane %v9764, 5
      %v9767 = vor.u32 %v9763, %v9766
      %v9768 = vrot.slane %v9767, 4
      %v9770 = vshll.u32 %v9398, 16
      %v9772 = vrot.slane %v9770, 5
      %v9773 = vsel %vm748, %v9768, %v9772
      %v9774 = vshrl.u32 %v9398, 16
      %v9776 = vrot.slane %v9774, 4
      %v9777 = vor.u32 %v9776, %v9772
      %v9778 = vrot.slane %v9777, 4
      %v9780 = vshll.u32 %v9399, 16
      %v9782 = vrot.slane %v9780, 5
      %v9783 = vsel %vm748, %v9778, %v9782
      %s9784 = scalar_lea.vmem %s2, 14
      %v9785 = vld [vmem:[%s9784] sm:$0x3]
      %v9786 = vunpack.c.l.b16 %v9413
      %v9787 = vunpack.c.l.b16 %v9423
      %v9788 = vunpack.c.l.b16 %v9437
      %v9789 = vunpack.c.l.b16 %v9447
      %v9790 = vunpack.c.l.b16 %v9461
      %v9791 = vunpack.c.l.b16 %v9471
      %v9792 = vunpack.c.l.b16 %v9485
      %v9793 = vunpack.c.l.b16 %v9495
      %v9794 = vunpack.c.l.b16 %v9509
      %v9795 = vunpack.c.l.b16 %v9519
      %v9796 = vunpack.c.l.b16 %v9533
      %v9797 = vunpack.c.l.b16 %v9543
      %v9798 = vunpack.c.l.b16 %v9557
      %v9799 = vunpack.c.l.b16 %v9567
      %v9800 = vunpack.c.l.b16 %v9581
      %v9801 = vunpack.c.l.b16 %v9591
      %v9802 = vunpack.c.l.b16 %v9605
      %v9803 = vunpack.c.l.b16 %v9615
      %v9804 = vunpack.c.l.b16 %v9629
      %v9805 = vunpack.c.l.b16 %v9639
      %v9806 = vunpack.c.l.b16 %v9653
      %v9807 = vunpack.c.l.b16 %v9663
      %v9808 = vunpack.c.l.b16 %v9677
      %v9809 = vunpack.c.l.b16 %v9687
      %v9810 = vunpack.c.l.b16 %v9701
      %v9811 = vunpack.c.l.b16 %v9711
      %v9812 = vunpack.c.l.b16 %v9725
      %v9813 = vunpack.c.l.b16 %v9735
      %v9814 = vunpack.c.l.b16 %v9749
      %v9815 = vunpack.c.l.b16 %v9759
      %v9816 = vunpack.c.l.b16 %v9773
      %v9817 = vunpack.c.l.b16 %v9783
      %v9818 = vpack.c.b16 %v9787, %v9786
      %v9819 = vpack.c.b16 %v9789, %v9788
      %v9820 = vpack.c.b16 %v9791, %v9790
      %v9821 = vpack.c.b16 %v9793, %v9792
      %v9822 = vpack.c.b16 %v9795, %v9794
      %v9823 = vpack.c.b16 %v9797, %v9796
      %v9824 = vpack.c.b16 %v9799, %v9798
      %v9825 = vpack.c.b16 %v9801, %v9800
      %v9826 = vpack.c.b16 %v9803, %v9802
      %v9827 = vpack.c.b16 %v9805, %v9804
      %v9828 = vpack.c.b16 %v9807, %v9806
      %v9829 = vpack.c.b16 %v9809, %v9808
      %v9830 = vpack.c.b16 %v9811, %v9810
      %v9831 = vpack.c.b16 %v9813, %v9812
      %v9832 = vpack.c.b16 %v9815, %v9814
      %v9833 = vpack.c.b16 %v9817, %v9816
      %v9835 = vsel %vm232, %v9818, 0
      %v9838 = vsel %vm232, %v9819, 0
      %v9841 = vsel %vm232, %v9820, 0
      %v9844 = vsel %vm232, %v9821, 0
      %v9847 = vsel %vm232, %v9822, 0
      %v9850 = vsel %vm232, %v9823, 0
      %v9853 = vsel %vm232, %v9824, 0
      %v9856 = vsel %vm232, %v9825, 0
      %v9859 = vsel %vm232, %v9826, 0
      %v9862 = vsel %vm232, %v9827, 0
      %v9865 = vsel %vm232, %v9828, 0
      %v9868 = vsel %vm232, %v9829, 0
      %v9871 = vsel %vm232, %v9830, 0
      %v9874 = vsel %vm232, %v9831, 0
      %v9877 = vsel %vm232, %v9832, 0
      %v9880 = vsel %vm232, %v9833, 0
      %v9883 = vsel %vm1231, %v9785, 0
      %9885 = vmatprep.subr.bf16.mxu0 0
      %9886 = vmatpush1.bf16.msra.mxu0 0
      %9887 = vmatprep.subr.bf16.mxu0 0
      %9888 = vmatpush1.bf16.msra.mxu0 0
      %9889 = vmatprep.subr.bf16.mxu0 0
      %9890 = vmatpush1.bf16.msra.mxu0 0
      %9891 = vmatprep.subr.bf16.mxu0 0
      %9892 = vmatpush1.bf16.msra.mxu0 0
      %9893 = vmatprep.subr.bf16.mxu0 0
      %9894 = vmatpush1.bf16.msra.mxu0 0
      %9895 = vmatprep.subr.bf16.mxu0 0
      %9896 = vmatpush1.bf16.msra.mxu0 0
      %9897 = vmatprep.subr.bf16.mxu0 0
      %9898 = vmatpush1.bf16.msra.mxu0 0
      %9899 = vmatprep.subr.bf16.mxu0 0
      %9900 = vmatpush1.bf16.msra.mxu0 %v9883
      %9901 = vmatprep.subr.bf16.mxu0 0
      %9902 = vmatpush2.bf16.msra.mxu0 0
      %9903 = vmatprep.subr.bf16.mxu0 0
      %9904 = vmatpush2.bf16.msra.mxu0 0
      %9905 = vmatprep.subr.bf16.mxu0 0
      %9906 = vmatpush2.bf16.msra.mxu0 0
      %9907 = vmatprep.subr.bf16.mxu0 0
      %9908 = vmatpush2.bf16.msra.mxu0 0
      %9909 = vmatprep.subr.bf16.mxu0 0
      %9910 = vmatpush2.bf16.msra.mxu0 0
      %9911 = vmatprep.subr.bf16.mxu0 0
      %9912 = vmatpush2.bf16.msra.mxu0 0
      %9913 = vmatprep.subr.bf16.mxu0 0
      %9914 = vmatpush2.bf16.msra.mxu0 0
      %9915 = vmatprep.subr.bf16.mxu0 0
      %9916 = vmatpush2.bf16.msra.mxu0 0
      %9917 = vmatprep.mubr.bf16.mxu0 0
      %9918 = vmatmul.mubr.bf16.gmra.mxu0 %v9835
      %v9919 = vpop.f32.mrf.mxu0
      %v9920 = vadd.f32 0.0, %v9919
      %v9921 = vpop.f32.mrf.mxu0
      %v9922 = vpop.f32.mrf.mxu0
      %v9923 = vadd.f32 0.0, %v9922
      %v9924 = vpop.f32.mrf.mxu0
      %9925 = vmatprep.mubr.bf16.mxu0 0
      %9926 = vmatmul.mubr.bf16.gmra.mxu0 %v9838
      %v9927 = vpop.f32.mrf.mxu0
      %v9928 = vadd.f32 0.0, %v9927
      %v9929 = vpop.f32.mrf.mxu0
      %v9930 = vpop.f32.mrf.mxu0
      %v9931 = vadd.f32 0.0, %v9930
      %v9932 = vpop.f32.mrf.mxu0
      %9933 = vmatprep.mubr.bf16.mxu0 0
      %9934 = vmatmul.mubr.bf16.gmra.mxu0 %v9841
      %v9935 = vpop.f32.mrf.mxu0
      %v9936 = vadd.f32 0.0, %v9935
      %v9937 = vpop.f32.mrf.mxu0
      %v9938 = vpop.f32.mrf.mxu0
      %v9939 = vadd.f32 0.0, %v9938
      %v9940 = vpop.f32.mrf.mxu0
      %9941 = vmatprep.mubr.bf16.mxu0 0
      %9942 = vmatmul.mubr.bf16.gmra.mxu0 %v9844
      %v9943 = vpop.f32.mrf.mxu0
      %v9944 = vadd.f32 0.0, %v9943
      %v9945 = vpop.f32.mrf.mxu0
      %v9946 = vpop.f32.mrf.mxu0
      %v9947 = vadd.f32 0.0, %v9946
      %v9948 = vpop.f32.mrf.mxu0
      %9949 = vmatprep.mubr.bf16.mxu0 0
      %9950 = vmatmul.mubr.bf16.gmra.mxu0 %v9847
      %v9951 = vpop.f32.mrf.mxu0
      %v9952 = vadd.f32 0.0, %v9951
      %v9953 = vpop.f32.mrf.mxu0
      %v9954 = vpop.f32.mrf.mxu0
      %v9955 = vadd.f32 0.0, %v9954
      %v9956 = vpop.f32.mrf.mxu0
      %9957 = vmatprep.mubr.bf16.mxu0 0
      %9958 = vmatmul.mubr.bf16.gmra.mxu0 %v9850
      %v9959 = vpop.f32.mrf.mxu0
      %v9960 = vadd.f32 0.0, %v9959
      %v9961 = vpop.f32.mrf.mxu0
      %v9962 = vpop.f32.mrf.mxu0
      %v9963 = vadd.f32 0.0, %v9962
      %v9964 = vpop.f32.mrf.mxu0
      %9965 = vmatprep.mubr.bf16.mxu0 0
      %9966 = vmatmul.mubr.bf16.gmra.mxu0 %v9853
      %v9967 = vpop.f32.mrf.mxu0
      %v9968 = vadd.f32 0.0, %v9967
      %v9969 = vpop.f32.mrf.mxu0
      %v9970 = vpop.f32.mrf.mxu0
      %v9971 = vadd.f32 0.0, %v9970
      %v9972 = vpop.f32.mrf.mxu0
      %9973 = vmatprep.mubr.bf16.mxu0 0
      %9974 = vmatmul.mubr.bf16.gmra.mxu0 %v9856
      %v9975 = vpop.f32.mrf.mxu0
      %v9976 = vadd.f32 0.0, %v9975
      %v9977 = vpop.f32.mrf.mxu0
      %v9978 = vpop.f32.mrf.mxu0
      %v9979 = vadd.f32 0.0, %v9978
      %v9980 = vpop.f32.mrf.mxu0
      %9981 = vmatprep.mubr.bf16.mxu0 0
      %9982 = vmatmul.mubr.bf16.gmra.mxu0 %v9859
      %v9983 = vpop.f32.mrf.mxu0
      %v9984 = vadd.f32 0.0, %v9983
      %v9985 = vpop.f32.mrf.mxu0
      %v9986 = vpop.f32.mrf.mxu0
      %v9987 = vadd.f32 0.0, %v9986
      %v9988 = vpop.f32.mrf.mxu0
      %9989 = vmatprep.mubr.bf16.mxu0 0
      %9990 = vmatmul.mubr.bf16.gmra.mxu0 %v9862
      %v9991 = vpop.f32.mrf.mxu0
      %v9992 = vadd.f32 0.0, %v9991
      %v9993 = vpop.f32.mrf.mxu0
      %v9994 = vpop.f32.mrf.mxu0
      %v9995 = vadd.f32 0.0, %v9994
      %v9996 = vpop.f32.mrf.mxu0
      %9997 = vmatprep.mubr.bf16.mxu0 0
      %9998 = vmatmul.mubr.bf16.gmra.mxu0 %v9865
      %v9999 = vpop.f32.mrf.mxu0
      %v10000 = vadd.f32 0.0, %v9999
      %v10001 = vpop.f32.mrf.mxu0
      %v10002 = vpop.f32.mrf.mxu0
      %v10003 = vadd.f32 0.0, %v10002
      %v10004 = vpop.f32.mrf.mxu0
      %10005 = vmatprep.mubr.bf16.mxu0 0
      %10006 = vmatmul.mubr.bf16.gmra.mxu0 %v9868
      %v10007 = vpop.f32.mrf.mxu0
      %v10008 = vadd.f32 0.0, %v10007
      %v10009 = vpop.f32.mrf.mxu0
      %v10010 = vpop.f32.mrf.mxu0
      %v10011 = vadd.f32 0.0, %v10010
      %v10012 = vpop.f32.mrf.mxu0
      %10013 = vmatprep.mubr.bf16.mxu0 0
      %10014 = vmatmul.mubr.bf16.gmra.mxu0 %v9871
      %v10015 = vpop.f32.mrf.mxu0
      %v10016 = vadd.f32 0.0, %v10015
      %v10017 = vpop.f32.mrf.mxu0
      %v10018 = vpop.f32.mrf.mxu0
      %v10019 = vadd.f32 0.0, %v10018
      %v10020 = vpop.f32.mrf.mxu0
      %10021 = vmatprep.mubr.bf16.mxu0 0
      %10022 = vmatmul.mubr.bf16.gmra.mxu0 %v9874
      %v10023 = vpop.f32.mrf.mxu0
      %v10024 = vadd.f32 0.0, %v10023
      %v10025 = vpop.f32.mrf.mxu0
      %v10026 = vpop.f32.mrf.mxu0
      %v10027 = vadd.f32 0.0, %v10026
      %v10028 = vpop.f32.mrf.mxu0
      %10029 = vmatprep.mubr.bf16.mxu0 0
      %10030 = vmatmul.mubr.bf16.gmra.mxu0 %v9877
      %v10031 = vpop.f32.mrf.mxu0
      %v10032 = vadd.f32 0.0, %v10031
      %v10033 = vpop.f32.mrf.mxu0
      %v10034 = vpop.f32.mrf.mxu0
      %v10035 = vadd.f32 0.0, %v10034
      %v10036 = vpop.f32.mrf.mxu0
      %10037 = vmatprep.mubr.bf16.mxu0 0
      %10038 = vmatmul.mubr.bf16.gmra.mxu0 %v9880
      %v10039 = vpop.f32.mrf.mxu0
      %v10040 = vadd.f32 0.0, %v10039
      %v10041 = vpop.f32.mrf.mxu0
      %v10042 = vpop.f32.mrf.mxu0
      %v10043 = vadd.f32 0.0, %v10042
      %v10044 = vpop.f32.mrf.mxu0
      %10045 = vdwg.mxu0
      %v10046 = vadd.f32 %v9320, %v9920
      %v10047 = vadd.f32 %v9321, %v9923
      %v10048 = vadd.f32 %v9322, %v9928
      %v10049 = vadd.f32 %v9323, %v9931
      %v10050 = vadd.f32 %v9324, %v9936
      %v10051 = vadd.f32 %v9325, %v9939
      %v10052 = vadd.f32 %v9326, %v9944
      %v10053 = vadd.f32 %v9327, %v9947
      %v10054 = vadd.f32 %v9328, %v9952
      %v10055 = vadd.f32 %v9329, %v9955
      %v10056 = vadd.f32 %v9330, %v9960
      %v10057 = vadd.f32 %v9331, %v9963
      %v10058 = vadd.f32 %v9332, %v9968
      %v10059 = vadd.f32 %v9333, %v9971
      %v10060 = vadd.f32 %v9334, %v9976
      %v10061 = vadd.f32 %v9335, %v9979
      %v10062 = vadd.f32 %v9336, %v9984
      %v10063 = vadd.f32 %v9337, %v9987
      %v10064 = vadd.f32 %v9338, %v9992
      %v10065 = vadd.f32 %v9339, %v9995
      %v10066 = vadd.f32 %v9340, %v10000
      %v10067 = vadd.f32 %v9341, %v10003
      %v10068 = vadd.f32 %v9342, %v10008
      %v10069 = vadd.f32 %v9343, %v10011
      %v10070 = vadd.f32 %v9344, %v10016
      %v10071 = vadd.f32 %v9345, %v10019
      %v10072 = vadd.f32 %v9346, %v10024
      %v10073 = vadd.f32 %v9347, %v10027
      %v10074 = vadd.f32 %v9348, %v10032
      %v10075 = vadd.f32 %v9349, %v10035
      %v10076 = vadd.f32 %v9350, %v10040
      %v10077 = vadd.f32 %v9351, %v10043
      %v10078 = vld [vmem:[%s3700] sm:$0xe]
      %v10079 = vld [vmem:[%s3700 + $0xc] sm:$0xe]
      %v10080 = vld [vmem:[%s3700 + $0x18] sm:$0xe]
      %v10081 = vld [vmem:[%s3700 + $0x24] sm:$0xe]
      %v10082 = vld [vmem:[%s3700 + $0x30] sm:$0xe]
      %v10083 = vld [vmem:[%s3700 + $0x3c] sm:$0xe]
      %v10084 = vld [vmem:[%s3700 + $0x48] sm:$0xe]
      %v10085 = vld [vmem:[%s3700 + $0x54] sm:$0xe]
      %v10086 = vld [vmem:[%s3700 + $0x60] sm:$0xe]
      %v10087 = vld [vmem:[%s3700 + $0x6c] sm:$0xe]
      %v10088 = vld [vmem:[%s3700 + $0x78] sm:$0xe]
      %v10089 = vld [vmem:[%s3700 + $0x84] sm:$0xe]
      %v10090 = vld [vmem:[%s3700 + $0x90] sm:$0xe]
      %v10091 = vld [vmem:[%s3700 + $0x9c] sm:$0xe]
      %v10092 = vld [vmem:[%s3700 + $0xa8] sm:$0xe]
      %v10093 = vld [vmem:[%s3700 + $0xb4] sm:$0xe]
      %v10142 = vrot.slane %v10078, 5
      %v10143 = vrot.slane %v10142, 4
      %v10144 = vrot.slane %v9353, 5
      %v10145 = vsel %vm1738, %v10143, %v10144
      %v10146 = vrot.slane %v10144, 4
      %v10147 = vrot.slane %v9354, 5
      %v10148 = vsel %vm1738, %v10146, %v10147
      %v10149 = vrot.slane %v10079, 5
      %v10150 = vrot.slane %v10149, 4
      %v10151 = vrot.slane %v9356, 5
      %v10152 = vsel %vm1738, %v10150, %v10151
      %v10153 = vrot.slane %v10151, 4
      %v10154 = vrot.slane %v9357, 5
      %v10155 = vsel %vm1738, %v10153, %v10154
      %v10156 = vrot.slane %v10080, 5
      %v10157 = vrot.slane %v10156, 4
      %v10158 = vrot.slane %v9359, 5
      %v10159 = vsel %vm1738, %v10157, %v10158
      %v10160 = vrot.slane %v10158, 4
      %v10161 = vrot.slane %v9360, 5
      %v10162 = vsel %vm1738, %v10160, %v10161
      %v10163 = vrot.slane %v10081, 5
      %v10164 = vrot.slane %v10163, 4
      %v10165 = vrot.slane %v9362, 5
      %v10166 = vsel %vm1738, %v10164, %v10165
      %v10167 = vrot.slane %v10165, 4
      %v10168 = vrot.slane %v9363, 5
      %v10169 = vsel %vm1738, %v10167, %v10168
      %v10170 = vrot.slane %v10082, 5
      %v10171 = vrot.slane %v10170, 4
      %v10172 = vrot.slane %v9365, 5
      %v10173 = vsel %vm1738, %v10171, %v10172
      %v10174 = vrot.slane %v10172, 4
      %v10175 = vrot.slane %v9366, 5
      %v10176 = vsel %vm1738, %v10174, %v10175
      %v10177 = vrot.slane %v10083, 5
      %v10178 = vrot.slane %v10177, 4
      %v10179 = vrot.slane %v9368, 5
      %v10180 = vsel %vm1738, %v10178, %v10179
      %v10181 = vrot.slane %v10179, 4
      %v10182 = vrot.slane %v9369, 5
      %v10183 = vsel %vm1738, %v10181, %v10182
      %v10184 = vrot.slane %v10084, 5
      %v10185 = vrot.slane %v10184, 4
      %v10186 = vrot.slane %v9371, 5
      %v10187 = vsel %vm1738, %v10185, %v10186
      %v10188 = vrot.slane %v10186, 4
      %v10189 = vrot.slane %v9372, 5
      %v10190 = vsel %vm1738, %v10188, %v10189
      %v10191 = vrot.slane %v10085, 5
      %v10192 = vrot.slane %v10191, 4
      %v10193 = vrot.slane %v9374, 5
      %v10194 = vsel %vm1738, %v10192, %v10193
      %v10195 = vrot.slane %v10193, 4
      %v10196 = vrot.slane %v9375, 5
      %v10197 = vsel %vm1738, %v10195, %v10196
      %v10198 = vrot.slane %v10086, 5
      %v10199 = vrot.slane %v10198, 4
      %v10200 = vrot.slane %v9377, 5
      %v10201 = vsel %vm1738, %v10199, %v10200
      %v10202 = vrot.slane %v10200, 4
      %v10203 = vrot.slane %v9378, 5
      %v10204 = vsel %vm1738, %v10202, %v10203
      %v10205 = vrot.slane %v10087, 5
      %v10206 = vrot.slane %v10205, 4
      %v10207 = vrot.slane %v9380, 5
      %v10208 = vsel %vm1738, %v10206, %v10207
      %v10209 = vrot.slane %v10207, 4
      %v10210 = vrot.slane %v9381, 5
      %v10211 = vsel %vm1738, %v10209, %v10210
      %v10212 = vrot.slane %v10088, 5
      %v10213 = vrot.slane %v10212, 4
      %v10214 = vrot.slane %v9383, 5
      %v10215 = vsel %vm1738, %v10213, %v10214
      %v10216 = vrot.slane %v10214, 4
      %v10217 = vrot.slane %v9384, 5
      %v10218 = vsel %vm1738, %v10216, %v10217
      %v10219 = vrot.slane %v10089, 5
      %v10220 = vrot.slane %v10219, 4
      %v10221 = vrot.slane %v9386, 5
      %v10222 = vsel %vm1738, %v10220, %v10221
      %v10223 = vrot.slane %v10221, 4
      %v10224 = vrot.slane %v9387, 5
      %v10225 = vsel %vm1738, %v10223, %v10224
      %v10226 = vrot.slane %v10090, 5
      %v10227 = vrot.slane %v10226, 4
      %v10228 = vrot.slane %v9389, 5
      %v10229 = vsel %vm1738, %v10227, %v10228
      %v10230 = vrot.slane %v10228, 4
      %v10231 = vrot.slane %v9390, 5
      %v10232 = vsel %vm1738, %v10230, %v10231
      %v10233 = vrot.slane %v10091, 5
      %v10234 = vrot.slane %v10233, 4
      %v10235 = vrot.slane %v9392, 5
      %v10236 = vsel %vm1738, %v10234, %v10235
      %v10237 = vrot.slane %v10235, 4
      %v10238 = vrot.slane %v9393, 5
      %v10239 = vsel %vm1738, %v10237, %v10238
      %v10240 = vrot.slane %v10092, 5
      %v10241 = vrot.slane %v10240, 4
      %v10242 = vrot.slane %v9395, 5
      %v10243 = vsel %vm1738, %v10241, %v10242
      %v10244 = vrot.slane %v10242, 4
      %v10245 = vrot.slane %v9396, 5
      %v10246 = vsel %vm1738, %v10244, %v10245
      %v10247 = vrot.slane %v10093, 5
      %v10248 = vrot.slane %v10247, 4
      %v10249 = vrot.slane %v9398, 5
      %v10250 = vsel %vm1738, %v10248, %v10249
      %v10251 = vrot.slane %v10249, 4
      %v10252 = vrot.slane %v9399, 5
      %v10253 = vsel %vm1738, %v10251, %v10252
      %s10254 = scalar_lea.vmem %s2, 16
      %v10255 = vld [vmem:[%s10254] sm:$0x3]
      %v10256 = vunpack.c.l.b16 %v10145
      %v10257 = vunpack.c.l.b16 %v10148
      %v10258 = vunpack.c.l.b16 %v10152
      %v10259 = vunpack.c.l.b16 %v10155
      %v10260 = vunpack.c.l.b16 %v10159
      %v10261 = vunpack.c.l.b16 %v10162
      %v10262 = vunpack.c.l.b16 %v10166
      %v10263 = vunpack.c.l.b16 %v10169
      %v10264 = vunpack.c.l.b16 %v10173
      %v10265 = vunpack.c.l.b16 %v10176
      %v10266 = vunpack.c.l.b16 %v10180
      %v10267 = vunpack.c.l.b16 %v10183
      %v10268 = vunpack.c.l.b16 %v10187
      %v10269 = vunpack.c.l.b16 %v10190
      %v10270 = vunpack.c.l.b16 %v10194
      %v10271 = vunpack.c.l.b16 %v10197
      %v10272 = vunpack.c.l.b16 %v10201
      %v10273 = vunpack.c.l.b16 %v10204
      %v10274 = vunpack.c.l.b16 %v10208
      %v10275 = vunpack.c.l.b16 %v10211
      %v10276 = vunpack.c.l.b16 %v10215
      %v10277 = vunpack.c.l.b16 %v10218
      %v10278 = vunpack.c.l.b16 %v10222
      %v10279 = vunpack.c.l.b16 %v10225
      %v10280 = vunpack.c.l.b16 %v10229
      %v10281 = vunpack.c.l.b16 %v10232
      %v10282 = vunpack.c.l.b16 %v10236
      %v10283 = vunpack.c.l.b16 %v10239
      %v10284 = vunpack.c.l.b16 %v10243
      %v10285 = vunpack.c.l.b16 %v10246
      %v10286 = vunpack.c.l.b16 %v10250
      %v10287 = vunpack.c.l.b16 %v10253
      %v10288 = vpack.c.b16 %v10257, %v10256
      %v10289 = vpack.c.b16 %v10259, %v10258
      %v10290 = vpack.c.b16 %v10261, %v10260
      %v10291 = vpack.c.b16 %v10263, %v10262
      %v10292 = vpack.c.b16 %v10265, %v10264
      %v10293 = vpack.c.b16 %v10267, %v10266
      %v10294 = vpack.c.b16 %v10269, %v10268
      %v10295 = vpack.c.b16 %v10271, %v10270
      %v10296 = vpack.c.b16 %v10273, %v10272
      %v10297 = vpack.c.b16 %v10275, %v10274
      %v10298 = vpack.c.b16 %v10277, %v10276
      %v10299 = vpack.c.b16 %v10279, %v10278
      %v10300 = vpack.c.b16 %v10281, %v10280
      %v10301 = vpack.c.b16 %v10283, %v10282
      %v10302 = vpack.c.b16 %v10285, %v10284
      %v10303 = vpack.c.b16 %v10287, %v10286
      %v10305 = vsel %vm232, %v10288, 0
      %v10308 = vsel %vm232, %v10289, 0
      %v10311 = vsel %vm232, %v10290, 0
      %v10314 = vsel %vm232, %v10291, 0
      %v10317 = vsel %vm232, %v10292, 0
      %v10320 = vsel %vm232, %v10293, 0
      %v10323 = vsel %vm232, %v10294, 0
      %v10326 = vsel %vm232, %v10295, 0
      %v10329 = vsel %vm232, %v10296, 0
      %v10332 = vsel %vm232, %v10297, 0
      %v10335 = vsel %vm232, %v10298, 0
      %v10338 = vsel %vm232, %v10299, 0
      %v10341 = vsel %vm232, %v10300, 0
      %v10344 = vsel %vm232, %v10301, 0
      %v10347 = vsel %vm232, %v10302, 0
      %v10350 = vsel %vm232, %v10303, 0
      %v10353 = vsel %vm1231, %v10255, 0
      %10355 = vmatprep.subr.bf16.mxu0 0
      %10356 = vmatpush1.bf16.msra.mxu0 0
      %10357 = vmatprep.subr.bf16.mxu0 0
      %10358 = vmatpush1.bf16.msra.mxu0 0
      %10359 = vmatprep.subr.bf16.mxu0 0
      %10360 = vmatpush1.bf16.msra.mxu0 0
      %10361 = vmatprep.subr.bf16.mxu0 0
      %10362 = vmatpush1.bf16.msra.mxu0 0
      %10363 = vmatprep.subr.bf16.mxu0 0
      %10364 = vmatpush1.bf16.msra.mxu0 0
      %10365 = vmatprep.subr.bf16.mxu0 0
      %10366 = vmatpush1.bf16.msra.mxu0 0
      %10367 = vmatprep.subr.bf16.mxu0 0
      %10368 = vmatpush1.bf16.msra.mxu0 0
      %10369 = vmatprep.subr.bf16.mxu0 0
      %10370 = vmatpush1.bf16.msra.mxu0 %v10353
      %10371 = vmatprep.subr.bf16.mxu0 0
      %10372 = vmatpush2.bf16.msra.mxu0 0
      %10373 = vmatprep.subr.bf16.mxu0 0
      %10374 = vmatpush2.bf16.msra.mxu0 0
      %10375 = vmatprep.subr.bf16.mxu0 0
      %10376 = vmatpush2.bf16.msra.mxu0 0
      %10377 = vmatprep.subr.bf16.mxu0 0
      %10378 = vmatpush2.bf16.msra.mxu0 0
      %10379 = vmatprep.subr.bf16.mxu0 0
      %10380 = vmatpush2.bf16.msra.mxu0 0
      %10381 = vmatprep.subr.bf16.mxu0 0
      %10382 = vmatpush2.bf16.msra.mxu0 0
      %10383 = vmatprep.subr.bf16.mxu0 0
      %10384 = vmatpush2.bf16.msra.mxu0 0
      %10385 = vmatprep.subr.bf16.mxu0 0
      %10386 = vmatpush2.bf16.msra.mxu0 0
      %10387 = vmatprep.mubr.bf16.mxu0 0
      %10388 = vmatmul.mubr.bf16.gmra.mxu0 %v10305
      %v10389 = vpop.f32.mrf.mxu0
      %v10390 = vadd.f32 0.0, %v10389
      %v10391 = vpop.f32.mrf.mxu0
      %v10392 = vpop.f32.mrf.mxu0
      %v10393 = vadd.f32 0.0, %v10392
      %v10394 = vpop.f32.mrf.mxu0
      %10395 = vmatprep.mubr.bf16.mxu0 0
      %10396 = vmatmul.mubr.bf16.gmra.mxu0 %v10308
      %v10397 = vpop.f32.mrf.mxu0
      %v10398 = vadd.f32 0.0, %v10397
      %v10399 = vpop.f32.mrf.mxu0
      %v10400 = vpop.f32.mrf.mxu0
      %v10401 = vadd.f32 0.0, %v10400
      %v10402 = vpop.f32.mrf.mxu0
      %10403 = vmatprep.mubr.bf16.mxu0 0
      %10404 = vmatmul.mubr.bf16.gmra.mxu0 %v10311
      %v10405 = vpop.f32.mrf.mxu0
      %v10406 = vadd.f32 0.0, %v10405
      %v10407 = vpop.f32.mrf.mxu0
      %v10408 = vpop.f32.mrf.mxu0
      %v10409 = vadd.f32 0.0, %v10408
      %v10410 = vpop.f32.mrf.mxu0
      %10411 = vmatprep.mubr.bf16.mxu0 0
      %10412 = vmatmul.mubr.bf16.gmra.mxu0 %v10314
      %v10413 = vpop.f32.mrf.mxu0
      %v10414 = vadd.f32 0.0, %v10413
      %v10415 = vpop.f32.mrf.mxu0
      %v10416 = vpop.f32.mrf.mxu0
      %v10417 = vadd.f32 0.0, %v10416
      %v10418 = vpop.f32.mrf.mxu0
      %10419 = vmatprep.mubr.bf16.mxu0 0
      %10420 = vmatmul.mubr.bf16.gmra.mxu0 %v10317
      %v10421 = vpop.f32.mrf.mxu0
      %v10422 = vadd.f32 0.0, %v10421
      %v10423 = vpop.f32.mrf.mxu0
      %v10424 = vpop.f32.mrf.mxu0
      %v10425 = vadd.f32 0.0, %v10424
      %v10426 = vpop.f32.mrf.mxu0
      %10427 = vmatprep.mubr.bf16.mxu0 0
      %10428 = vmatmul.mubr.bf16.gmra.mxu0 %v10320
      %v10429 = vpop.f32.mrf.mxu0
      %v10430 = vadd.f32 0.0, %v10429
      %v10431 = vpop.f32.mrf.mxu0
      %v10432 = vpop.f32.mrf.mxu0
      %v10433 = vadd.f32 0.0, %v10432
      %v10434 = vpop.f32.mrf.mxu0
      %10435 = vmatprep.mubr.bf16.mxu0 0
      %10436 = vmatmul.mubr.bf16.gmra.mxu0 %v10323
      %v10437 = vpop.f32.mrf.mxu0
      %v10438 = vadd.f32 0.0, %v10437
      %v10439 = vpop.f32.mrf.mxu0
      %v10440 = vpop.f32.mrf.mxu0
      %v10441 = vadd.f32 0.0, %v10440
      %v10442 = vpop.f32.mrf.mxu0
      %10443 = vmatprep.mubr.bf16.mxu0 0
      %10444 = vmatmul.mubr.bf16.gmra.mxu0 %v10326
      %v10445 = vpop.f32.mrf.mxu0
      %v10446 = vadd.f32 0.0, %v10445
      %v10447 = vpop.f32.mrf.mxu0
      %v10448 = vpop.f32.mrf.mxu0
      %v10449 = vadd.f32 0.0, %v10448
      %v10450 = vpop.f32.mrf.mxu0
      %10451 = vmatprep.mubr.bf16.mxu0 0
      %10452 = vmatmul.mubr.bf16.gmra.mxu0 %v10329
      %v10453 = vpop.f32.mrf.mxu0
      %v10454 = vadd.f32 0.0, %v10453
      %v10455 = vpop.f32.mrf.mxu0
      %v10456 = vpop.f32.mrf.mxu0
      %v10457 = vadd.f32 0.0, %v10456
      %v10458 = vpop.f32.mrf.mxu0
      %10459 = vmatprep.mubr.bf16.mxu0 0
      %10460 = vmatmul.mubr.bf16.gmra.mxu0 %v10332
      %v10461 = vpop.f32.mrf.mxu0
      %v10462 = vadd.f32 0.0, %v10461
      %v10463 = vpop.f32.mrf.mxu0
      %v10464 = vpop.f32.mrf.mxu0
      %v10465 = vadd.f32 0.0, %v10464
      %v10466 = vpop.f32.mrf.mxu0
      %10467 = vmatprep.mubr.bf16.mxu0 0
      %10468 = vmatmul.mubr.bf16.gmra.mxu0 %v10335
      %v10469 = vpop.f32.mrf.mxu0
      %v10470 = vadd.f32 0.0, %v10469
      %v10471 = vpop.f32.mrf.mxu0
      %v10472 = vpop.f32.mrf.mxu0
      %v10473 = vadd.f32 0.0, %v10472
      %v10474 = vpop.f32.mrf.mxu0
      %10475 = vmatprep.mubr.bf16.mxu0 0
      %10476 = vmatmul.mubr.bf16.gmra.mxu0 %v10338
      %v10477 = vpop.f32.mrf.mxu0
      %v10478 = vadd.f32 0.0, %v10477
      %v10479 = vpop.f32.mrf.mxu0
      %v10480 = vpop.f32.mrf.mxu0
      %v10481 = vadd.f32 0.0, %v10480
      %v10482 = vpop.f32.mrf.mxu0
      %10483 = vmatprep.mubr.bf16.mxu0 0
      %10484 = vmatmul.mubr.bf16.gmra.mxu0 %v10341
      %v10485 = vpop.f32.mrf.mxu0
      %v10486 = vadd.f32 0.0, %v10485
      %v10487 = vpop.f32.mrf.mxu0
      %v10488 = vpop.f32.mrf.mxu0
      %v10489 = vadd.f32 0.0, %v10488
      %v10490 = vpop.f32.mrf.mxu0
      %10491 = vmatprep.mubr.bf16.mxu0 0
      %10492 = vmatmul.mubr.bf16.gmra.mxu0 %v10344
      %v10493 = vpop.f32.mrf.mxu0
      %v10494 = vadd.f32 0.0, %v10493
      %v10495 = vpop.f32.mrf.mxu0
      %v10496 = vpop.f32.mrf.mxu0
      %v10497 = vadd.f32 0.0, %v10496
      %v10498 = vpop.f32.mrf.mxu0
      %10499 = vmatprep.mubr.bf16.mxu0 0
      %10500 = vmatmul.mubr.bf16.gmra.mxu0 %v10347
      %v10501 = vpop.f32.mrf.mxu0
      %v10502 = vadd.f32 0.0, %v10501
      %v10503 = vpop.f32.mrf.mxu0
      %v10504 = vpop.f32.mrf.mxu0
      %v10505 = vadd.f32 0.0, %v10504
      %v10506 = vpop.f32.mrf.mxu0
      %10507 = vmatprep.mubr.bf16.mxu0 0
      %10508 = vmatmul.mubr.bf16.gmra.mxu0 %v10350
      %v10509 = vpop.f32.mrf.mxu0
      %v10510 = vadd.f32 0.0, %v10509
      %v10511 = vpop.f32.mrf.mxu0
      %v10512 = vpop.f32.mrf.mxu0
      %v10513 = vadd.f32 0.0, %v10512
      %v10514 = vpop.f32.mrf.mxu0
      %10515 = vdwg.mxu0
      %v10516 = vadd.f32 %v10046, %v10390
      %v10517 = vadd.f32 %v10047, %v10393
      %v10518 = vadd.f32 %v10048, %v10398
      %v10519 = vadd.f32 %v10049, %v10401
      %v10520 = vadd.f32 %v10050, %v10406
      %v10521 = vadd.f32 %v10051, %v10409
      %v10522 = vadd.f32 %v10052, %v10414
      %v10523 = vadd.f32 %v10053, %v10417
      %v10524 = vadd.f32 %v10054, %v10422
      %v10525 = vadd.f32 %v10055, %v10425
      %v10526 = vadd.f32 %v10056, %v10430
      %v10527 = vadd.f32 %v10057, %v10433
      %v10528 = vadd.f32 %v10058, %v10438
      %v10529 = vadd.f32 %v10059, %v10441
      %v10530 = vadd.f32 %v10060, %v10446
      %v10531 = vadd.f32 %v10061, %v10449
      %v10532 = vadd.f32 %v10062, %v10454
      %v10533 = vadd.f32 %v10063, %v10457
      %v10534 = vadd.f32 %v10064, %v10462
      %v10535 = vadd.f32 %v10065, %v10465
      %v10536 = vadd.f32 %v10066, %v10470
      %v10537 = vadd.f32 %v10067, %v10473
      %v10538 = vadd.f32 %v10068, %v10478
      %v10539 = vadd.f32 %v10069, %v10481
      %v10540 = vadd.f32 %v10070, %v10486
      %v10541 = vadd.f32 %v10071, %v10489
      %v10542 = vadd.f32 %v10072, %v10494
      %v10543 = vadd.f32 %v10073, %v10497
      %v10544 = vadd.f32 %v10074, %v10502
      %v10545 = vadd.f32 %v10075, %v10505
      %v10546 = vadd.f32 %v10076, %v10510
      %v10547 = vadd.f32 %v10077, %v10513
      %v10548 = vld [vmem:[%s3 + $0x2] sm:$0x1]
      %v10549 = vld [vmem:[%s3 + $0x3] sm:$0x1]
      %v10550 = vsel %vm232, %v10516, 0.0
      %v10551 = vsel %vm232, %v10517, 0.0
      %v10552 = vadd.f32 %v10550, %v10551
      %v10553 = vsel %vm232, %v10518, 0.0
      %v10554 = vadd.f32 %v10552, %v10553
      %v10555 = vsel %vm232, %v10519, 0.0
      %v10556 = vadd.f32 %v10554, %v10555
      %v10557 = vsel %vm232, %v10520, 0.0
      %v10558 = vadd.f32 %v10556, %v10557
      %v10559 = vsel %vm232, %v10521, 0.0
      %v10560 = vadd.f32 %v10558, %v10559
      %v10561 = vsel %vm232, %v10522, 0.0
      %v10562 = vadd.f32 %v10560, %v10561
      %v10563 = vsel %vm232, %v10523, 0.0
      %v10564 = vadd.f32 %v10562, %v10563
      %v10565 = vsel %vm232, %v10524, 0.0
      %v10566 = vadd.f32 %v10564, %v10565
      %v10567 = vsel %vm232, %v10525, 0.0
      %v10568 = vadd.f32 %v10566, %v10567
      %v10569 = vsel %vm232, %v10526, 0.0
      %v10570 = vadd.f32 %v10568, %v10569
      %v10571 = vsel %vm232, %v10527, 0.0
      %v10572 = vadd.f32 %v10570, %v10571
      %v10573 = vsel %vm232, %v10528, 0.0
      %v10574 = vadd.f32 %v10572, %v10573
      %v10575 = vsel %vm232, %v10529, 0.0
      %v10576 = vadd.f32 %v10574, %v10575
      %v10577 = vsel %vm232, %v10530, 0.0
      %v10578 = vadd.f32 %v10576, %v10577
      %v10579 = vsel %vm232, %v10531, 0.0
      %v10580 = vadd.f32 %v10578, %v10579
      %v10581 = vsel %vm232, %v10532, 0.0
      %v10582 = vadd.f32 %v10580, %v10581
      %v10583 = vsel %vm232, %v10533, 0.0
      %v10584 = vadd.f32 %v10582, %v10583
      %v10585 = vsel %vm232, %v10534, 0.0
      %v10586 = vadd.f32 %v10584, %v10585
      %v10587 = vsel %vm232, %v10535, 0.0
      %v10588 = vadd.f32 %v10586, %v10587
      %v10589 = vsel %vm232, %v10536, 0.0
      %v10590 = vadd.f32 %v10588, %v10589
      %v10591 = vsel %vm232, %v10537, 0.0
      %v10592 = vadd.f32 %v10590, %v10591
      %v10593 = vsel %vm232, %v10538, 0.0
      %v10594 = vadd.f32 %v10592, %v10593
      %v10595 = vsel %vm232, %v10539, 0.0
      %v10596 = vadd.f32 %v10594, %v10595
      %v10597 = vsel %vm232, %v10540, 0.0
      %v10598 = vadd.f32 %v10596, %v10597
      %v10599 = vsel %vm232, %v10541, 0.0
      %v10600 = vadd.f32 %v10598, %v10599
      %v10601 = vsel %vm232, %v10542, 0.0
      %v10602 = vadd.f32 %v10600, %v10601
      %v10603 = vsel %vm232, %v10543, 0.0
      %v10604 = vadd.f32 %v10602, %v10603
      %v10605 = vsel %vm232, %v10544, 0.0
      %v10606 = vadd.f32 %v10604, %v10605
      %v10607 = vsel %vm232, %v10545, 0.0
      %v10608 = vadd.f32 %v10606, %v10607
      %v10609 = vsel %vm232, %v10546, 0.0
      %v10610 = vadd.f32 %v10608, %v10609
      %v10611 = vsel %vm232, %v10547, 0.0
      %v10612 = vadd.f32 %v10610, %v10611
      %v10613 = vrot.slane %v10612, 4
      %v10614 = vadd.f32 %v10612, %v10613
      %v10615 = vrot.slane %v10614, 2
      %v10616 = vadd.f32 %v10614, %v10615
      %v10617 = vrot.slane %v10616, 1
      %v10618 = vadd.f32 %v10616, %v10617
      %v10619 = vmul.f32 %v10618, 0.00390625
      %v10620 = vmul.f32 %v10516, %v10516
      %v10621 = vmul.f32 %v10517, %v10517
      %v10622 = vmul.f32 %v10518, %v10518
      %v10623 = vmul.f32 %v10519, %v10519
      %v10624 = vmul.f32 %v10520, %v10520
      %v10625 = vmul.f32 %v10521, %v10521
      %v10626 = vmul.f32 %v10522, %v10522
      %v10627 = vmul.f32 %v10523, %v10523
      %v10628 = vmul.f32 %v10524, %v10524
      %v10629 = vmul.f32 %v10525, %v10525
      %v10630 = vmul.f32 %v10526, %v10526
      %v10631 = vmul.f32 %v10527, %v10527
      %v10632 = vmul.f32 %v10528, %v10528
      %v10633 = vmul.f32 %v10529, %v10529
      %v10634 = vmul.f32 %v10530, %v10530
      %v10635 = vmul.f32 %v10531, %v10531
      %v10636 = vmul.f32 %v10532, %v10532
      %v10637 = vmul.f32 %v10533, %v10533
      %v10638 = vmul.f32 %v10534, %v10534
      %v10639 = vmul.f32 %v10535, %v10535
      %v10640 = vmul.f32 %v10536, %v10536
      %v10641 = vmul.f32 %v10537, %v10537
      %v10642 = vmul.f32 %v10538, %v10538
      %v10643 = vmul.f32 %v10539, %v10539
      %v10644 = vmul.f32 %v10540, %v10540
      %v10645 = vmul.f32 %v10541, %v10541
      %v10646 = vmul.f32 %v10542, %v10542
      %v10647 = vmul.f32 %v10543, %v10543
      %v10648 = vmul.f32 %v10544, %v10544
      %v10649 = vmul.f32 %v10545, %v10545
      %v10650 = vmul.f32 %v10546, %v10546
      %v10651 = vmul.f32 %v10547, %v10547
      %v10652 = vsel %vm232, %v10620, 0.0
      %v10653 = vsel %vm232, %v10621, 0.0
      %v10654 = vadd.f32 %v10652, %v10653
      %v10655 = vsel %vm232, %v10622, 0.0
      %v10656 = vadd.f32 %v10654, %v10655
      %v10657 = vsel %vm232, %v10623, 0.0
      %v10658 = vadd.f32 %v10656, %v10657
      %v10659 = vsel %vm232, %v10624, 0.0
      %v10660 = vadd.f32 %v10658, %v10659
      %v10661 = vsel %vm232, %v10625, 0.0
      %v10662 = vadd.f32 %v10660, %v10661
      %v10663 = vsel %vm232, %v10626, 0.0
      %v10664 = vadd.f32 %v10662, %v10663
      %v10665 = vsel %vm232, %v10627, 0.0
      %v10666 = vadd.f32 %v10664, %v10665
      %v10667 = vsel %vm232, %v10628, 0.0
      %v10668 = vadd.f32 %v10666, %v10667
      %v10669 = vsel %vm232, %v10629, 0.0
      %v10670 = vadd.f32 %v10668, %v10669
      %v10671 = vsel %vm232, %v10630, 0.0
      %v10672 = vadd.f32 %v10670, %v10671
      %v10673 = vsel %vm232, %v10631, 0.0
      %v10674 = vadd.f32 %v10672, %v10673
      %v10675 = vsel %vm232, %v10632, 0.0
      %v10676 = vadd.f32 %v10674, %v10675
      %v10677 = vsel %vm232, %v10633, 0.0
      %v10678 = vadd.f32 %v10676, %v10677
      %v10679 = vsel %vm232, %v10634, 0.0
      %v10680 = vadd.f32 %v10678, %v10679
      %v10681 = vsel %vm232, %v10635, 0.0
      %v10682 = vadd.f32 %v10680, %v10681
      %v10683 = vsel %vm232, %v10636, 0.0
      %v10684 = vadd.f32 %v10682, %v10683
      %v10685 = vsel %vm232, %v10637, 0.0
      %v10686 = vadd.f32 %v10684, %v10685
      %v10687 = vsel %vm232, %v10638, 0.0
      %v10688 = vadd.f32 %v10686, %v10687
      %v10689 = vsel %vm232, %v10639, 0.0
      %v10690 = vadd.f32 %v10688, %v10689
      %v10691 = vsel %vm232, %v10640, 0.0
      %v10692 = vadd.f32 %v10690, %v10691
      %v10693 = vsel %vm232, %v10641, 0.0
      %v10694 = vadd.f32 %v10692, %v10693
      %v10695 = vsel %vm232, %v10642, 0.0
      %v10696 = vadd.f32 %v10694, %v10695
      %v10697 = vsel %vm232, %v10643, 0.0
      %v10698 = vadd.f32 %v10696, %v10697
      %v10699 = vsel %vm232, %v10644, 0.0
      %v10700 = vadd.f32 %v10698, %v10699
      %v10701 = vsel %vm232, %v10645, 0.0
      %v10702 = vadd.f32 %v10700, %v10701
      %v10703 = vsel %vm232, %v10646, 0.0
      %v10704 = vadd.f32 %v10702, %v10703
      %v10705 = vsel %vm232, %v10647, 0.0
      %v10706 = vadd.f32 %v10704, %v10705
      %v10707 = vsel %vm232, %v10648, 0.0
      %v10708 = vadd.f32 %v10706, %v10707
      %v10709 = vsel %vm232, %v10649, 0.0
      %v10710 = vadd.f32 %v10708, %v10709
      %v10711 = vsel %vm232, %v10650, 0.0
      %v10712 = vadd.f32 %v10710, %v10711
      %v10713 = vsel %vm232, %v10651, 0.0
      %v10714 = vadd.f32 %v10712, %v10713
      %v10715 = vrot.slane %v10714, 4
      %v10716 = vadd.f32 %v10714, %v10715
      %v10717 = vrot.slane %v10716, 2
      %v10718 = vadd.f32 %v10716, %v10717
      %v10719 = vrot.slane %v10718, 1
      %v10720 = vadd.f32 %v10718, %v10719
      %v10721 = vmul.f32 %v10720, 0.00390625
      %v10722 = vmul.f32 %v10619, %v10619
      %v10723 = vsub.f32 %v10721, %v10722
      %v10724 = vmax.f32 %v10723, 0.0
      %v10725 = vadd.f32 %v10724, 1e-05
      %v10726 = vrsqrt.pop %v10725
      %v10727 = vmul.f32 %v10548, %v10726
      %v10728 = vmul.f32 %v10619, %v10727
      %v10729 = vsub.f32 %v10549, %v10728
      %v10730 = vlaneseq
      %v10731 = vshrl.u32 %v10730, 7
      %v10732 = vsub.s32 0, %v10731
      %v10733 = vrot.slane %v10727, %v10732
      %v10734 = vmul.f32 %v10516, %v10733
      %v10735 = vmul.f32 %v10517, %v10733
      %v10736 = vmul.f32 %v10518, %v10733
      %v10737 = vmul.f32 %v10519, %v10733
      %v10738 = vmul.f32 %v10520, %v10733
      %v10739 = vmul.f32 %v10521, %v10733
      %v10740 = vmul.f32 %v10522, %v10733
      %v10741 = vmul.f32 %v10523, %v10733
      %v10742 = vmul.f32 %v10524, %v10733
      %v10743 = vmul.f32 %v10525, %v10733
      %v10744 = vmul.f32 %v10526, %v10733
      %v10745 = vmul.f32 %v10527, %v10733
      %v10746 = vmul.f32 %v10528, %v10733
      %v10747 = vmul.f32 %v10529, %v10733
      %v10748 = vmul.f32 %v10530, %v10733
      %v10749 = vmul.f32 %v10531, %v10733
      %v10750 = vmul.f32 %v10532, %v10733
      %v10751 = vmul.f32 %v10533, %v10733
      %v10752 = vmul.f32 %v10534, %v10733
      %v10753 = vmul.f32 %v10535, %v10733
      %v10754 = vmul.f32 %v10536, %v10733
      %v10755 = vmul.f32 %v10537, %v10733
      %v10756 = vmul.f32 %v10538, %v10733
      %v10757 = vmul.f32 %v10539, %v10733
      %v10758 = vmul.f32 %v10540, %v10733
      %v10759 = vmul.f32 %v10541, %v10733
      %v10760 = vmul.f32 %v10542, %v10733
      %v10761 = vmul.f32 %v10543, %v10733
      %v10762 = vmul.f32 %v10544, %v10733
      %v10763 = vmul.f32 %v10545, %v10733
      %v10764 = vmul.f32 %v10546, %v10733
      %v10765 = vmul.f32 %v10547, %v10733
      %v10766 = vlaneseq
      %v10767 = vshrl.u32 %v10766, 7
      %v10768 = vsub.s32 0, %v10767
      %v10769 = vrot.slane %v10729, %v10768
      %v10770 = vadd.f32 %v10734, %v10769
      %v10771 = vadd.f32 %v10735, %v10769
      %v10772 = vadd.f32 %v10736, %v10769
      %v10773 = vadd.f32 %v10737, %v10769
      %v10774 = vadd.f32 %v10738, %v10769
      %v10775 = vadd.f32 %v10739, %v10769
      %v10776 = vadd.f32 %v10740, %v10769
      %v10777 = vadd.f32 %v10741, %v10769
      %v10778 = vadd.f32 %v10742, %v10769
      %v10779 = vadd.f32 %v10743, %v10769
      %v10780 = vadd.f32 %v10744, %v10769
      %v10781 = vadd.f32 %v10745, %v10769
      %v10782 = vadd.f32 %v10746, %v10769
      %v10783 = vadd.f32 %v10747, %v10769
      %v10784 = vadd.f32 %v10748, %v10769
      %v10785 = vadd.f32 %v10749, %v10769
      %v10786 = vadd.f32 %v10750, %v10769
      %v10787 = vadd.f32 %v10751, %v10769
      %v10788 = vadd.f32 %v10752, %v10769
      %v10789 = vadd.f32 %v10753, %v10769
      %v10790 = vadd.f32 %v10754, %v10769
      %v10791 = vadd.f32 %v10755, %v10769
      %v10792 = vadd.f32 %v10756, %v10769
      %v10793 = vadd.f32 %v10757, %v10769
      %v10794 = vadd.f32 %v10758, %v10769
      %v10795 = vadd.f32 %v10759, %v10769
      %v10796 = vadd.f32 %v10760, %v10769
      %v10797 = vadd.f32 %v10761, %v10769
      %v10798 = vadd.f32 %v10762, %v10769
      %v10799 = vadd.f32 %v10763, %v10769
      %v10800 = vadd.f32 %v10764, %v10769
      %v10801 = vadd.f32 %v10765, %v10769
      %v10802 = vld [vmem:[%s192] sm:$0xff]
      %v10803 = vld [vmem:[%s192 + $0x8] sm:$0xff]
      %v10804 = vld [vmem:[%s192 + $0x10] sm:$0xff]
      %v10805 = vld [vmem:[%s192 + $0x18] sm:$0xff]
      %v10806 = vld [vmem:[%s192 + $0x20] sm:$0xff]
      %v10807 = vld [vmem:[%s192 + $0x28] sm:$0xff]
      %v10808 = vld [vmem:[%s192 + $0x30] sm:$0xff]
      %v10809 = vld [vmem:[%s192 + $0x38] sm:$0xff]
      %v10810 = vld [vmem:[%s192 + $0x40] sm:$0xff]
      %v10811 = vld [vmem:[%s192 + $0x48] sm:$0xff]
      %v10812 = vld [vmem:[%s192 + $0x50] sm:$0xff]
      %v10813 = vld [vmem:[%s192 + $0x58] sm:$0xff]
      %v10814 = vld [vmem:[%s192 + $0x60] sm:$0xff]
      %v10815 = vld [vmem:[%s192 + $0x68] sm:$0xff]
      %v10816 = vld [vmem:[%s192 + $0x70] sm:$0xff]
      %v10817 = vld [vmem:[%s192 + $0x78] sm:$0xff]
      %v10818 = vld [vmem:[%s192 + $0x80] sm:$0xff]
      %v10819 = vld [vmem:[%s192 + $0x88] sm:$0xff]
      %v10820 = vld [vmem:[%s192 + $0x90] sm:$0xff]
      %v10821 = vld [vmem:[%s192 + $0x98] sm:$0xff]
      %v10822 = vld [vmem:[%s192 + $0xa0] sm:$0xff]
      %v10823 = vld [vmem:[%s192 + $0xa8] sm:$0xff]
      %v10824 = vld [vmem:[%s192 + $0xb0] sm:$0xff]
      %v10825 = vld [vmem:[%s192 + $0xb8] sm:$0xff]
      %v10826 = vld [vmem:[%s192 + $0xc0] sm:$0xff]
      %v10827 = vld [vmem:[%s192 + $0xc8] sm:$0xff]
      %v10828 = vld [vmem:[%s192 + $0xd0] sm:$0xff]
      %v10829 = vld [vmem:[%s192 + $0xd8] sm:$0xff]
      %v10830 = vld [vmem:[%s192 + $0xe0] sm:$0xff]
      %v10831 = vld [vmem:[%s192 + $0xe8] sm:$0xff]
      %v10832 = vld [vmem:[%s192 + $0xf0] sm:$0xff]
      %v10833 = vld [vmem:[%s192 + $0xf8] sm:$0xff]
      %v10834 = vadd.f32 %v10770, %v10802
      %v10835 = vadd.f32 %v10771, %v10803
      %v10836 = vadd.f32 %v10772, %v10804
      %v10837 = vadd.f32 %v10773, %v10805
      %v10838 = vadd.f32 %v10774, %v10806
      %v10839 = vadd.f32 %v10775, %v10807
      %v10840 = vadd.f32 %v10776, %v10808
      %v10841 = vadd.f32 %v10777, %v10809
      %v10842 = vadd.f32 %v10778, %v10810
      %v10843 = vadd.f32 %v10779, %v10811
      %v10844 = vadd.f32 %v10780, %v10812
      %v10845 = vadd.f32 %v10781, %v10813
      %v10846 = vadd.f32 %v10782, %v10814
      %v10847 = vadd.f32 %v10783, %v10815
      %v10848 = vadd.f32 %v10784, %v10816
      %v10849 = vadd.f32 %v10785, %v10817
      %v10850 = vadd.f32 %v10786, %v10818
      %v10851 = vadd.f32 %v10787, %v10819
      %v10852 = vadd.f32 %v10788, %v10820
      %v10853 = vadd.f32 %v10789, %v10821
      %v10854 = vadd.f32 %v10790, %v10822
      %v10855 = vadd.f32 %v10791, %v10823
      %v10856 = vadd.f32 %v10792, %v10824
      %v10857 = vadd.f32 %v10793, %v10825
      %v10858 = vadd.f32 %v10794, %v10826
      %v10859 = vadd.f32 %v10795, %v10827
      %v10860 = vadd.f32 %v10796, %v10828
      %v10861 = vadd.f32 %v10797, %v10829
      %v10862 = vadd.f32 %v10798, %v10830
      %v10863 = vadd.f32 %v10799, %v10831
      %v10864 = vadd.f32 %v10800, %v10832
      %v10865 = vadd.f32 %v10801, %v10833
      %10866 = vst.msk [vmem:[%s197] sm:$0xff] %vm232, %v10834
      %10867 = vst.msk [vmem:[%s197 + $0x8] sm:$0xff] %vm232, %v10835
      %10868 = vst.msk [vmem:[%s197 + $0x10] sm:$0xff] %vm232, %v10836
      %10869 = vst.msk [vmem:[%s197 + $0x18] sm:$0xff] %vm232, %v10837
      %10870 = vst.msk [vmem:[%s197 + $0x20] sm:$0xff] %vm232, %v10838
      %10871 = vst.msk [vmem:[%s197 + $0x28] sm:$0xff] %vm232, %v10839
      %10872 = vst.msk [vmem:[%s197 + $0x30] sm:$0xff] %vm232, %v10840
      %10873 = vst.msk [vmem:[%s197 + $0x38] sm:$0xff] %vm232, %v10841
      %10874 = vst.msk [vmem:[%s197 + $0x40] sm:$0xff] %vm232, %v10842
      %10875 = vst.msk [vmem:[%s197 + $0x48] sm:$0xff] %vm232, %v10843
      %10876 = vst.msk [vmem:[%s197 + $0x50] sm:$0xff] %vm232, %v10844
      %10877 = vst.msk [vmem:[%s197 + $0x58] sm:$0xff] %vm232, %v10845
      %10878 = vst.msk [vmem:[%s197 + $0x60] sm:$0xff] %vm232, %v10846
      %10879 = vst.msk [vmem:[%s197 + $0x68] sm:$0xff] %vm232, %v10847
      %10880 = vst.msk [vmem:[%s197 + $0x70] sm:$0xff] %vm232, %v10848
      %10881 = vst.msk [vmem:[%s197 + $0x78] sm:$0xff] %vm232, %v10849
      %10882 = vst.msk [vmem:[%s197 + $0x80] sm:$0xff] %vm232, %v10850
      %10883 = vst.msk [vmem:[%s197 + $0x88] sm:$0xff] %vm232, %v10851
      %10884 = vst.msk [vmem:[%s197 + $0x90] sm:$0xff] %vm232, %v10852
      %10885 = vst.msk [vmem:[%s197 + $0x98] sm:$0xff] %vm232, %v10853
      %10886 = vst.msk [vmem:[%s197 + $0xa0] sm:$0xff] %vm232, %v10854
      %10887 = vst.msk [vmem:[%s197 + $0xa8] sm:$0xff] %vm232, %v10855
      %10888 = vst.msk [vmem:[%s197 + $0xb0] sm:$0xff] %vm232, %v10856
      %10889 = vst.msk [vmem:[%s197 + $0xb8] sm:$0xff] %vm232, %v10857
      %10890 = vst.msk [vmem:[%s197 + $0xc0] sm:$0xff] %vm232, %v10858
      %10891 = vst.msk [vmem:[%s197 + $0xc8] sm:$0xff] %vm232, %v10859
      %10892 = vst.msk [vmem:[%s197 + $0xd0] sm:$0xff] %vm232, %v10860
      %10893 = vst.msk [vmem:[%s197 + $0xd8] sm:$0xff] %vm232, %v10861
      %10894 = vst.msk [vmem:[%s197 + $0xe0] sm:$0xff] %vm232, %v10862
      %10895 = vst.msk [vmem:[%s197 + $0xe8] sm:$0xff] %vm232, %v10863
      %10896 = vst.msk [vmem:[%s197 + $0xf0] sm:$0xff] %vm232, %v10864
      %10897 = vst.msk [vmem:[%s197 + $0xf8] sm:$0xff] %vm232, %v10865
      %p10898 = scmp.lt.s32.totalorder %s15, 1
      %s10899 = scalar_select %p10898, %s15, 1
      %s10900 = smul.addr %s10899, 32
      %s10901 = smul.addr %s10900, 8
      %s10902 = scalar_lea.vmem %s4, %s10901
      // Predicated region
      $region37: #{res_layer_forward.1} parent=35 // pred_check
        %p10903 = pneg %p122
      $region38: #{res_layer_forward.1} parent=35 // pred_check_branch
        %10905 = sbr.rel (%p10903) target = $region40
      $region39: #{res_layer_forward.1} parent=35 // pred_region
        _
      $region40: #{res_layer_forward.1} parent=35 // pred_fallthru
        _
    $region36: #{res_layer_forward.1} parent=5 // pred_fallthru
      _
    %p10906 = scmp.le.s32.totalorder 2, %s10
    // Predicated region
    $region41: #{res_layer_forward.1} parent=5 // pred_check
      %p10907 = pneg %p10906
    $region42: #{res_layer_forward.1} parent=5 // pred_check_branch
      %10909 = sbr.rel (%p10907) target = $region44
    $region43: #{res_layer_forward.1} parent=5 // pred_region
      %s10910 = ssub.s32 %s10, 2
      // Predicated region
      $region45: #{res_layer_forward.1} parent=43 // pred_check
        %p10911 = pneg %p128
      $region46: #{res_layer_forward.1} parent=43 // pred_check_branch
        %10913 = sbr.rel (%p10911) target = $region48
      $region47: #{res_layer_forward.1} parent=43 // pred_region
        %p10914 = scmp.lt.s32.totalorder %s16, 1
        %s10915 = scalar_select %p10914, %s16, 1
        %s10916 = smul.addr %s10915, 32
        %s10917 = smul.addr %s10916, 8
        %s10918 = scalar_lea.vmem %s4, %s10917
      $region48: #{res_layer_forward.1} parent=43 // pred_fallthru
        _
    $region44: #{res_layer_forward.1} parent=5 // pred_fallthru
      _
  $region6: #{res_layer_forward.1} parent=0 // loop_footer
    %s14 = sadd.s32 1, %s10
  $region7: #{res_layer_forward.1} parent=0 // loop_footer_branch
    %9 = sbr.rel target = $region3
  $region8: #{res_layer_forward.1} parent=0 // loop_exit
    _

</llo_original>
